<compile_context>
chip_gen: v7x
topology: tpu7x:2x2x1
jax: 0.10.0
libtpu: 0.0.40
codegen_flags: <defaults>
</compile_context>

<pallas_src>
import math
import jax
import jax.numpy as jnp
from jax import lax
from jax.experimental import pallas as pl
from jax.experimental.pallas import tpu as pltpu

D_MODEL = 32
N_HEADS = 4
D_HEAD = D_MODEL // N_HEADS
D_FF = 64
N_LAYERS = 2
EPS = 1e-5


# ------------------------------ shared LayerNorm ------------------------------
def _layernorm(y, g, b):
    mu = jnp.mean(y, axis=-1, keepdims=True)
    var = jnp.mean((y - mu) ** 2, axis=-1, keepdims=True)
    return (y - mu) * lax.rsqrt(var + EPS) * g[None, :] + b[None, :]


# --------------------- kernel-side attention (folded Wv·Wo) --------------------
def _attn_folded(q_in, kv_in, wq, wk, bq, bk, wvo_all, bvo, off):
    """Multi-head attention with per-head folded value/output projection.

    wvo_all: (2*H, D, D) folded Wv[:,h]@Wo[h,:] per head (self heads at off=0,
             cross heads at off=N_HEADS).  bvo: (D,) = bv@Wo + bo (pre-folded).
    """
    q = jnp.dot(q_in, wq, preferred_element_type=jnp.float32) + bq[None, :]
    k = jnp.dot(kv_in, wk, preferred_element_type=jnp.float32) + bk[None, :]
    scale = 1.0 / math.sqrt(D_HEAD)
    # bias broadcast hoisted out of the head loop (softmax rows sum to 1, so the
    # folded bias contribution is head-independent).
    res = jnp.zeros(q_in.shape, jnp.float32) + bvo[None, :]
    for h in range(N_HEADS):
        sl = slice(h * D_HEAD, (h + 1) * D_HEAD)
        s = lax.dot_general(q[:, sl], k[:, sl], (((1,), (1,)), ((), ())),
                            preferred_element_type=jnp.float32) * scale
        s = s - jnp.max(s, axis=-1, keepdims=True)
        p = jnp.exp(s)
        p = p * pl.reciprocal(jnp.sum(p, axis=-1, keepdims=True), approx=True)
        vo = jnp.dot(kv_in, wvo_all[off + h], preferred_element_type=jnp.float32)  # (S, D)
        res = res + jnp.dot(p, vo, preferred_element_type=jnp.float32)             # (L, D)
    return res


# ---------------------------------- fused kernel ----------------------------------
def decoder_fused_kernel(x_ref, cross_ref, qkw_ref, qkb_ref, vow_ref, vob_ref,
                         w1_ref, b1_ref, w2_ref, b2_ref, ng_ref, nb_ref,
                         fg_ref, fb_ref, out_ref):
    x = x_ref[0].astype(jnp.float32)          # (L, D)
    cross = cross_ref[0].astype(jnp.float32)  # (S, D)

    for l in range(N_LAYERS):                 # static unroll (N_LAYERS=2)
        qkw = qkw_ref[l].astype(jnp.float32)  # (4, D, D): self Wq, self Wk, cross Wq, cross Wk
        qkb = qkb_ref[l].astype(jnp.float32)  # (4, D)
        vow = vow_ref[l].astype(jnp.float32)  # (2*H, D, D) folded Wv@Wo per head
        vob = vob_ref[l].astype(jnp.float32)  # (2, D)      folded bv@Wo + bo
        ng = ng_ref[l].astype(jnp.float32)    # (3, D)
        nb = nb_ref[l].astype(jnp.float32)    # (3, D)

        # self attention + residual + norm1  (dropout = identity in eval mode)
        x = x + _attn_folded(x, x, qkw[0], qkw[1], qkb[0], qkb[1], vow, vob[0], 0)
        x = _layernorm(x, ng[0], nb[0])
        # cross attention + residual + norm2
        x = x + _attn_folded(x, cross, qkw[2], qkw[3], qkb[2], qkb[3], vow, vob[1], N_HEADS)
        x = _layernorm(x, ng[1], nb[1])
        # pointwise Conv1d (kernel_size=1) feed-forward + residual + norm3
        y = jnp.maximum(jnp.dot(x, w1_ref[l], preferred_element_type=jnp.float32) + b1_ref[l], 0.0)
        y = jnp.dot(y, w2_ref[l], preferred_element_type=jnp.float32) + b2_ref[l]
        x = _layernorm(x + y, ng[2], nb[2])

    # final decoder norm (fused; no separate pallas_call / HBM round-trip)
    x = _layernorm(x, fg_ref[0], fb_ref[0])
    out_ref[0] = x.astype(out_ref.dtype)


# ------------------------- weight-prep: stack & fold params -------------------------
def fold_params(params):
    """Stack per-layer params on a leading axis and pre-fold Wv@Wo per head."""
    qkw, qkb, vow, vob = [], [], [], []
    w1s, b1s, w2s, b2s, ngs, nbs = [], [], [], [], [], []
    for lp in params["layers"]:
        aw, ab = lp["aw"], lp["ab"]   # (8,D,D),(8,D): [self Wq,Wk,Wv,Wo, cross Wq,Wk,Wv,Wo]
        qkw.append(jnp.stack([aw[0], aw[1], aw[4], aw[5]]))
        qkb.append(jnp.stack([ab[0], ab[1], ab[4], ab[5]]))
        heads, biases = [], []
        for off in (0, 4):
            wv, wo, bv, bo = aw[off + 2], aw[off + 3], ab[off + 2], ab[off + 3]
            for h in range(N_HEADS):
                sl = slice(h * D_HEAD, (h + 1) * D_HEAD)
                heads.append(wv[:, sl] @ wo[sl, :])   # (D, D) folded per-head V·O
            biases.append(bv @ wo + bo)               # (D,)   folded output bias
        vow.append(jnp.stack(heads))                  # (2*H, D, D)
        vob.append(jnp.stack(biases))                 # (2, D)
        w1s.append(lp["w1"]); b1s.append(lp["b1"])
        w2s.append(lp["w2"]); b2s.append(lp["b2"])
        ngs.append(lp["ng"]); nbs.append(lp["nb"])
    return dict(
        qkw=jnp.stack(qkw), qkb=jnp.stack(qkb),
        vow=jnp.stack(vow), vob=jnp.stack(vob),
        w1=jnp.stack(w1s), b1=jnp.stack(b1s),
        w2=jnp.stack(w2s), b2=jnp.stack(b2s),
        ng=jnp.stack(ngs), nb=jnp.stack(nbs),
        fg=params["norm_g"], fb=params["norm_b"],
    )


# ---------------------------------- wrapper ----------------------------------
def decoder_forward(x, cross, params, x_mask=None, cross_mask=None):
    # TODO(synk): attention masks (x_mask / cross_mask) not implemented; module default is None.
    assert x_mask is None and cross_mask is None
    assert len(params["layers"]) == N_LAYERS
    B, L, D = x.shape
    _, S, _ = cross.shape
    F = D_FF
    NL = N_LAYERS
    fp = fold_params(params)

    call = pl.pallas_call(
        decoder_fused_kernel,
        out_shape=jax.ShapeDtypeStruct((B, L, D), x.dtype),
        grid=(B,),
        in_specs=[
            pl.BlockSpec((1, L, D), lambda b: (b, 0, 0)),                 # x
            pl.BlockSpec((1, S, D), lambda b: (b, 0, 0)),                 # cross
            pl.BlockSpec((NL, 4, D, D), lambda b: (0, 0, 0, 0)),          # Q/K weights
            pl.BlockSpec((NL, 4, D), lambda b: (0, 0, 0)),                # Q/K biases
            pl.BlockSpec((NL, 2 * N_HEADS, D, D), lambda b: (0, 0, 0, 0)),# folded Wv@Wo
            pl.BlockSpec((NL, 2, D), lambda b: (0, 0, 0)),                # folded out biases
            pl.BlockSpec((NL, D, F), lambda b: (0, 0, 0)),                # conv1 weight
            pl.BlockSpec((NL, 1, F), lambda b: (0, 0, 0)),                # conv1 bias
            pl.BlockSpec((NL, F, D), lambda b: (0, 0, 0)),                # conv2 weight
            pl.BlockSpec((NL, 1, D), lambda b: (0, 0, 0)),                # conv2 bias
            pl.BlockSpec((NL, 3, D), lambda b: (0, 0, 0)),                # norm gammas
            pl.BlockSpec((NL, 3, D), lambda b: (0, 0, 0)),                # norm betas
            pl.BlockSpec((1, D), lambda b: (0, 0)),                       # final norm gamma
            pl.BlockSpec((1, D), lambda b: (0, 0)),                       # final norm beta
        ],
        out_specs=pl.BlockSpec((1, L, D), lambda b: (b, 0, 0)),
        compiler_params=pltpu.CompilerParams(dimension_semantics=("parallel",)),
    )
    return call(x, cross, fp["qkw"], fp["qkb"], fp["vow"], fp["vob"],
                fp["w1"], fp["b1"], fp["w2"], fp["b2"], fp["ng"], fp["nb"],
                fp["fg"], fp["fb"])


# --------------------------- params & pure-JAX reference ---------------------------
def init_params(key, n_layers=N_LAYERS):
    layers = []
    for _ in range(n_layers):
        key, k0, k1, k2, k3, k4, k5 = jax.random.split(key, 7)
        layers.append(dict(
            aw=0.05 * jax.random.normal(k0, (8, D_MODEL, D_MODEL), jnp.float32),
            ab=0.01 * jax.random.normal(k1, (8, D_MODEL), jnp.float32),
            w1=0.05 * jax.random.normal(k2, (D_MODEL, D_FF), jnp.float32),
            b1=0.01 * jax.random.normal(k3, (1, D_FF), jnp.float32),
            w2=0.05 * jax.random.normal(k4, (D_FF, D_MODEL), jnp.float32),
            b2=0.01 * jax.random.normal(k5, (1, D_MODEL), jnp.float32),
            ng=jnp.ones((3, D_MODEL), jnp.float32),
            nb=jnp.zeros((3, D_MODEL), jnp.float32),
        ))
    return dict(layers=layers,
                norm_g=jnp.ones((1, D_MODEL), jnp.float32),
                norm_b=jnp.zeros((1, D_MODEL), jnp.float32))


def _mha_ref(q_in, kv_in, aw, ab, off):
    """Reference (un-folded) multi-head attention, exact division."""
    q = q_in @ aw[off + 0] + ab[off + 0][None, :]
    k = kv_in @ aw[off + 1] + ab[off + 1][None, :]
    v = kv_in @ aw[off + 2] + ab[off + 2][None, :]
    wo = aw[off + 3]
    scale = 1.0 / math.sqrt(D_HEAD)
    res = jnp.zeros(q_in.shape, jnp.float32) + ab[off + 3][None, :]
    for h in range(N_HEADS):
        sl = slice(h * D_HEAD, (h + 1) * D_HEAD)
        s = (q[:, sl] @ k[:, sl].T) * scale
        s = s - jnp.max(s, axis=-1, keepdims=True)
        p = jnp.exp(s)
        p = p / jnp.sum(p, axis=-1, keepdims=True)
        res = res + (p @ v[:, sl]) @ wo[sl, :]
    return res


def ref_forward(x, cross, params):
    outs = []
    for b in range(x.shape[0]):
        xb = x[b].astype(jnp.float32)
        cb = cross[b].astype(jnp.float32)
        for lp in params["layers"]:
            xb = xb + _mha_ref(xb, xb, lp["aw"], lp["ab"], 0)
            xb = _layernorm(xb, lp["ng"][0], lp["nb"][0])
            xb = xb + _mha_ref(xb, cb, lp["aw"], lp["ab"], 4)
            xb = _layernorm(xb, lp["ng"][1], lp["nb"][1])
            y = jnp.maximum(xb @ lp["w1"] + lp["b1"], 0.0)
            y = y @ lp["w2"] + lp["b2"]
            xb = _layernorm(xb + y, lp["ng"][2], lp["nb"][2])
        xb = _layernorm(xb, params["norm_g"][0], params["norm_b"][0])
        outs.append(xb)
    return jnp.stack(outs)


if __name__ == "__main__":
    key = jax.random.PRNGKey(0)
    kx, kc, kp = jax.random.split(key, 3)
    B, L_DEC, L_ENC = 2, 8, 16
    x = jax.random.normal(kx, (B, L_DEC, D_MODEL), jnp.float32)
    cross = jax.random.normal(kc, (B, L_ENC, D_MODEL), jnp.float32)
    params = init_params(kp)

    out = decoder_forward(x, cross, params)
    out = jax.block_until_ready(out)

    ref = ref_forward(x, cross, params)
    assert out.shape == (B, L_DEC, D_MODEL)
    # tolerance absorbs the EUP approx-reciprocal softmax and the Wv@Wo fold reordering
    assert jnp.allclose(out, ref, atol=2e-3, rtol=2e-3), "mismatch vs pure-JAX reference"
    print("KERNEL_OK")
</pallas_src>

<mosaic_0001>
module attributes {stable_mosaic.version = 11 : i64} {
  func.func @decoder_fused_kernel(%arg0: i32, %arg1: memref<1x8x32xf32, #tpu.memory_space<vmem>>, %arg2: memref<1x16x32xf32, #tpu.memory_space<vmem>>, %arg3: memref<2x4x32x32xf32, #tpu.memory_space<vmem>>, %arg4: memref<2x4x32xf32, #tpu.memory_space<vmem>>, %arg5: memref<2x8x32x32xf32, #tpu.memory_space<vmem>>, %arg6: memref<2x2x32xf32, #tpu.memory_space<vmem>>, %arg7: memref<2x32x64xf32, #tpu.memory_space<vmem>>, %arg8: memref<2x1x64xf32, #tpu.memory_space<vmem>>, %arg9: memref<2x64x32xf32, #tpu.memory_space<vmem>>, %arg10: memref<2x1x32xf32, #tpu.memory_space<vmem>>, %arg11: memref<2x3x32xf32, #tpu.memory_space<vmem>>, %arg12: memref<2x3x32xf32, #tpu.memory_space<vmem>>, %arg13: memref<1x32xf32, #tpu.memory_space<vmem>>, %arg14: memref<1x32xf32, #tpu.memory_space<vmem>>, %arg15: memref<1x8x32xf32, #tpu.memory_space<vmem>>) attributes {dimension_semantics = [#tpu.dimension_semantics<parallel>], iteration_bounds = array<i64: 2>, scalar_prefetch = 0 : i64, scratch_operands = 0 : i64, tpu.core_type = #tpu.core_type<tc>, window_params = [{transform_indices = @transform_0, window_bounds = array<i64: 1, 8, 32>}, {transform_indices = @transform_1, window_bounds = array<i64: 1, 16, 32>}, {pipeline_mode = #tpu.pipeline_mode<synchronous>, transform_indices = @transform_2, window_bounds = array<i64: 2, 4, 32, 32>}, {pipeline_mode = #tpu.pipeline_mode<synchronous>, transform_indices = @transform_3, window_bounds = array<i64: 2, 4, 32>}, {pipeline_mode = #tpu.pipeline_mode<synchronous>, transform_indices = @transform_4, window_bounds = array<i64: 2, 8, 32, 32>}, {pipeline_mode = #tpu.pipeline_mode<synchronous>, transform_indices = @transform_5, window_bounds = array<i64: 2, 2, 32>}, {pipeline_mode = #tpu.pipeline_mode<synchronous>, transform_indices = @transform_6, window_bounds = array<i64: 2, 32, 64>}, {pipeline_mode = #tpu.pipeline_mode<synchronous>, transform_indices = @transform_7, window_bounds = array<i64: 2, 1, 64>}, {pipeline_mode = #tpu.pipeline_mode<synchronous>, transform_indices = @transform_8, window_bounds = array<i64: 2, 64, 32>}, {pipeline_mode = #tpu.pipeline_mode<synchronous>, transform_indices = @transform_9, window_bounds = array<i64: 2, 1, 32>}, {pipeline_mode = #tpu.pipeline_mode<synchronous>, transform_indices = @transform_10, window_bounds = array<i64: 2, 3, 32>}, {pipeline_mode = #tpu.pipeline_mode<synchronous>, transform_indices = @transform_11, window_bounds = array<i64: 2, 3, 32>}, {pipeline_mode = #tpu.pipeline_mode<synchronous>, transform_indices = @transform_12, window_bounds = array<i64: 1, 32>}, {pipeline_mode = #tpu.pipeline_mode<synchronous>, transform_indices = @transform_13, window_bounds = array<i64: 1, 32>}, {transform_indices = @transform_14, window_bounds = array<i64: 1, 8, 32>}]} {
    %c0 = arith.constant 0 : index
    %c0_0 = arith.constant 0 : index
    %c0_1 = arith.constant 0 : index
    %0 = vector.load %arg1[%c0, %c0_0, %c0_1] : memref<1x8x32xf32, #tpu.memory_space<vmem>>, vector<1x8x32xf32>
    %1 = vector.shape_cast %0 : vector<1x8x32xf32> to vector<8x32xf32>
    %c0_2 = arith.constant 0 : index
    %c0_3 = arith.constant 0 : index
    %c0_4 = arith.constant 0 : index
    %2 = vector.load %arg2[%c0_2, %c0_3, %c0_4] : memref<1x16x32xf32, #tpu.memory_space<vmem>>, vector<1x16x32xf32>
    %3 = vector.shape_cast %2 : vector<1x16x32xf32> to vector<16x32xf32>
    %c0_5 = arith.constant 0 : index
    %c0_6 = arith.constant 0 : index
    %c0_7 = arith.constant 0 : index
    %c0_8 = arith.constant 0 : index
    %4 = vector.load %arg3[%c0_5, %c0_6, %c0_7, %c0_8] : memref<2x4x32x32xf32, #tpu.memory_space<vmem>>, vector<1x4x32x32xf32>
    %5 = vector.shape_cast %4 : vector<1x4x32x32xf32> to vector<4x32x32xf32>
    %c0_9 = arith.constant 0 : index
    %c0_10 = arith.constant 0 : index
    %c0_11 = arith.constant 0 : index
    %6 = vector.load %arg4[%c0_9, %c0_10, %c0_11] : memref<2x4x32xf32, #tpu.memory_space<vmem>>, vector<1x4x32xf32>
    %7 = vector.shape_cast %6 : vector<1x4x32xf32> to vector<4x32xf32>
    %c0_12 = arith.constant 0 : index
    %c0_13 = arith.constant 0 : index
    %c0_14 = arith.constant 0 : index
    %c0_15 = arith.constant 0 : index
    %8 = vector.load %arg5[%c0_12, %c0_13, %c0_14, %c0_15] : memref<2x8x32x32xf32, #tpu.memory_space<vmem>>, vector<1x8x32x32xf32>
    %9 = vector.shape_cast %8 : vector<1x8x32x32xf32> to vector<8x32x32xf32>
    %c0_16 = arith.constant 0 : index
    %c0_17 = arith.constant 0 : index
    %c0_18 = arith.constant 0 : index
    %10 = vector.load %arg6[%c0_16, %c0_17, %c0_18] : memref<2x2x32xf32, #tpu.memory_space<vmem>>, vector<1x2x32xf32>
    %11 = vector.shape_cast %10 : vector<1x2x32xf32> to vector<2x32xf32>
    %c0_19 = arith.constant 0 : index
    %c0_20 = arith.constant 0 : index
    %c0_21 = arith.constant 0 : index
    %12 = vector.load %arg11[%c0_19, %c0_20, %c0_21] : memref<2x3x32xf32, #tpu.memory_space<vmem>>, vector<1x3x32xf32>
    %13 = vector.shape_cast %12 : vector<1x3x32xf32> to vector<3x32xf32>
    %c0_22 = arith.constant 0 : index
    %c0_23 = arith.constant 0 : index
    %c0_24 = arith.constant 0 : index
    %14 = vector.load %arg12[%c0_22, %c0_23, %c0_24] : memref<2x3x32xf32, #tpu.memory_space<vmem>>, vector<1x3x32xf32>
    %15 = vector.shape_cast %14 : vector<1x3x32xf32> to vector<3x32xf32>
    %16 = vector.extract_strided_slice %5 {offsets = [0, 0, 0], sizes = [1, 32, 32], strides = [1, 1, 1]} : vector<4x32x32xf32> to vector<1x32x32xf32>
    %17 = vector.shape_cast %16 : vector<1x32x32xf32> to vector<32x32xf32>
    %18 = vector.extract_strided_slice %5 {offsets = [1, 0, 0], sizes = [1, 32, 32], strides = [1, 1, 1]} : vector<4x32x32xf32> to vector<1x32x32xf32>
    %19 = vector.shape_cast %18 : vector<1x32x32xf32> to vector<32x32xf32>
    %20 = vector.extract_strided_slice %7 {offsets = [0, 0], sizes = [1, 32], strides = [1, 1]} : vector<4x32xf32> to vector<1x32xf32>
    %21 = vector.shape_cast %20 : vector<1x32xf32> to vector<32xf32>
    %22 = vector.extract_strided_slice %7 {offsets = [1, 0], sizes = [1, 32], strides = [1, 1]} : vector<4x32xf32> to vector<1x32xf32>
    %23 = vector.shape_cast %22 : vector<1x32xf32> to vector<32xf32>
    %24 = vector.extract_strided_slice %11 {offsets = [0, 0], sizes = [1, 32], strides = [1, 1]} : vector<2x32xf32> to vector<1x32xf32>
    %25 = vector.shape_cast %24 : vector<1x32xf32> to vector<32xf32>
    %cst = arith.constant dense<0.000000e+00> : vector<8x32xf32>
    %26 = tpu.matmul %1, %17, %cst {dimension_numbers = #tpu.dot_dimension_numbers<[1], [0], [0], [1], [0, 0, 1, 1], [], []>} : vector<8x32xf32>, vector<32x32xf32>, vector<8x32xf32> -> vector<8x32xf32>
    %27 = vector.shape_cast %21 : vector<32xf32> to vector<1x32xf32>
    %28 = vector.broadcast %27 : vector<1x32xf32> to vector<8x32xf32>
    %29 = arith.addf %26, %28 : vector<8x32xf32>
    %cst_25 = arith.constant dense<0.000000e+00> : vector<8x32xf32>
    %30 = tpu.matmul %1, %19, %cst_25 {dimension_numbers = #tpu.dot_dimension_numbers<[1], [0], [0], [1], [0, 0, 1, 1], [], []>} : vector<8x32xf32>, vector<32x32xf32>, vector<8x32xf32> -> vector<8x32xf32>
    %31 = vector.shape_cast %23 : vector<32xf32> to vector<1x32xf32>
    %32 = vector.broadcast %31 : vector<1x32xf32> to vector<8x32xf32>
    %33 = arith.addf %30, %32 : vector<8x32xf32>
    %cst_26 = arith.constant 0.000000e+00 : f32
    %34 = vector.broadcast %cst_26 : f32 to vector<8x32xf32>
    %35 = vector.shape_cast %25 : vector<32xf32> to vector<1x32xf32>
    %36 = vector.broadcast %35 : vector<1x32xf32> to vector<8x32xf32>
    %37 = arith.addf %34, %36 : vector<8x32xf32>
    %38 = vector.extract_strided_slice %29 {offsets = [0, 0], sizes = [8, 8], strides = [1, 1]} : vector<8x32xf32> to vector<8x8xf32>
    %39 = vector.extract_strided_slice %33 {offsets = [0, 0], sizes = [8, 8], strides = [1, 1]} : vector<8x32xf32> to vector<8x8xf32>
    %cst_27 = arith.constant dense<0.000000e+00> : vector<8x8xf32>
    %40 = tpu.matmul %38, %39, %cst_27 {dimension_numbers = #tpu.dot_dimension_numbers<[1], [1], [0], [0], [0, 0, 1, 0], [], []>} : vector<8x8xf32>, vector<8x8xf32>, vector<8x8xf32> -> vector<8x8xf32>
    %cst_28 = arith.constant 0.353553385 : f32
    %41 = vector.broadcast %cst_28 : f32 to vector<8x8xf32>
    %42 = arith.mulf %40, %41 : vector<8x8xf32>
    %cst_29 = arith.constant dense<0xFF800000> : vector<8xf32>
    %43 = vector.multi_reduction <maximumf>, %42, %cst_29 [1] : vector<8x8xf32> to vector<8xf32>
    %44 = vector.shape_cast %43 : vector<8xf32> to vector<8x1xf32>
    %45 = vector.broadcast %44 : vector<8x1xf32> to vector<8x8xf32>
    %46 = arith.subf %42, %45 : vector<8x8xf32>
    %47 = math.exp %46 : vector<8x8xf32>
    %cst_30 = arith.constant dense<0.000000e+00> : vector<8xf32>
    %48 = vector.multi_reduction <add>, %47, %cst_30 [1] : vector<8x8xf32> to vector<8xf32>
    %49 = vector.shape_cast %48 : vector<8xf32> to vector<8x1xf32>
    %50 = tpu.reciprocal %49 {approx = true} : vector<8x1xf32> -> vector<8x1xf32>
    %51 = vector.broadcast %50 : vector<8x1xf32> to vector<8x8xf32>
    %52 = arith.mulf %47, %51 : vector<8x8xf32>
    %53 = vector.extract_strided_slice %9 {offsets = [0, 0, 0], sizes = [1, 32, 32], strides = [1, 1, 1]} : vector<8x32x32xf32> to vector<1x32x32xf32>
    %54 = vector.shape_cast %53 : vector<1x32x32xf32> to vector<32x32xf32>
    %cst_31 = arith.constant dense<0.000000e+00> : vector<8x32xf32>
    %55 = tpu.matmul %1, %54, %cst_31 {dimension_numbers = #tpu.dot_dimension_numbers<[1], [0], [0], [1], [0, 0, 1, 1], [], []>} : vector<8x32xf32>, vector<32x32xf32>, vector<8x32xf32> -> vector<8x32xf32>
    %cst_32 = arith.constant dense<0.000000e+00> : vector<8x32xf32>
    %56 = tpu.matmul %52, %55, %cst_32 {dimension_numbers = #tpu.dot_dimension_numbers<[1], [0], [0], [1], [0, 0, 1, 1], [], []>} : vector<8x8xf32>, vector<8x32xf32>, vector<8x32xf32> -> vector<8x32xf32>
    %57 = arith.addf %37, %56 : vector<8x32xf32>
    %58 = vector.extract_strided_slice %29 {offsets = [0, 8], sizes = [8, 8], strides = [1, 1]} : vector<8x32xf32> to vector<8x8xf32>
    %59 = vector.extract_strided_slice %33 {offsets = [0, 8], sizes = [8, 8], strides = [1, 1]} : vector<8x32xf32> to vector<8x8xf32>
    %cst_33 = arith.constant dense<0.000000e+00> : vector<8x8xf32>
    %60 = tpu.matmul %58, %59, %cst_33 {dimension_numbers = #tpu.dot_dimension_numbers<[1], [1], [0], [0], [0, 0, 1, 0], [], []>} : vector<8x8xf32>, vector<8x8xf32>, vector<8x8xf32> -> vector<8x8xf32>
    %cst_34 = arith.constant 0.353553385 : f32
    %61 = vector.broadcast %cst_34 : f32 to vector<8x8xf32>
    %62 = arith.mulf %60, %61 : vector<8x8xf32>
    %cst_35 = arith.constant dense<0xFF800000> : vector<8xf32>
    %63 = vector.multi_reduction <maximumf>, %62, %cst_35 [1] : vector<8x8xf32> to vector<8xf32>
    %64 = vector.shape_cast %63 : vector<8xf32> to vector<8x1xf32>
    %65 = vector.broadcast %64 : vector<8x1xf32> to vector<8x8xf32>
    %66 = arith.subf %62, %65 : vector<8x8xf32>
    %67 = math.exp %66 : vector<8x8xf32>
    %cst_36 = arith.constant dense<0.000000e+00> : vector<8xf32>
    %68 = vector.multi_reduction <add>, %67, %cst_36 [1] : vector<8x8xf32> to vector<8xf32>
    %69 = vector.shape_cast %68 : vector<8xf32> to vector<8x1xf32>
    %70 = tpu.reciprocal %69 {approx = true} : vector<8x1xf32> -> vector<8x1xf32>
    %71 = vector.broadcast %70 : vector<8x1xf32> to vector<8x8xf32>
    %72 = arith.mulf %67, %71 : vector<8x8xf32>
    %73 = vector.extract_strided_slice %9 {offsets = [1, 0, 0], sizes = [1, 32, 32], strides = [1, 1, 1]} : vector<8x32x32xf32> to vector<1x32x32xf32>
    %74 = vector.shape_cast %73 : vector<1x32x32xf32> to vector<32x32xf32>
    %cst_37 = arith.constant dense<0.000000e+00> : vector<8x32xf32>
    %75 = tpu.matmul %1, %74, %cst_37 {dimension_numbers = #tpu.dot_dimension_numbers<[1], [0], [0], [1], [0, 0, 1, 1], [], []>} : vector<8x32xf32>, vector<32x32xf32>, vector<8x32xf32> -> vector<8x32xf32>
    %cst_38 = arith.constant dense<0.000000e+00> : vector<8x32xf32>
    %76 = tpu.matmul %72, %75, %cst_38 {dimension_numbers = #tpu.dot_dimension_numbers<[1], [0], [0], [1], [0, 0, 1, 1], [], []>} : vector<8x8xf32>, vector<8x32xf32>, vector<8x32xf32> -> vector<8x32xf32>
    %77 = arith.addf %57, %76 : vector<8x32xf32>
    %78 = vector.extract_strided_slice %29 {offsets = [0, 16], sizes = [8, 8], strides = [1, 1]} : vector<8x32xf32> to vector<8x8xf32>
    %79 = vector.extract_strided_slice %33 {offsets = [0, 16], sizes = [8, 8], strides = [1, 1]} : vector<8x32xf32> to vector<8x8xf32>
    %cst_39 = arith.constant dense<0.000000e+00> : vector<8x8xf32>
    %80 = tpu.matmul %78, %79, %cst_39 {dimension_numbers = #tpu.dot_dimension_numbers<[1], [1], [0], [0], [0, 0, 1, 0], [], []>} : vector<8x8xf32>, vector<8x8xf32>, vector<8x8xf32> -> vector<8x8xf32>
    %cst_40 = arith.constant 0.353553385 : f32
    %81 = vector.broadcast %cst_40 : f32 to vector<8x8xf32>
    %82 = arith.mulf %80, %81 : vector<8x8xf32>
    %cst_41 = arith.constant dense<0xFF800000> : vector<8xf32>
    %83 = vector.multi_reduction <maximumf>, %82, %cst_41 [1] : vector<8x8xf32> to vector<8xf32>
    %84 = vector.shape_cast %83 : vector<8xf32> to vector<8x1xf32>
    %85 = vector.broadcast %84 : vector<8x1xf32> to vector<8x8xf32>
    %86 = arith.subf %82, %85 : vector<8x8xf32>
    %87 = math.exp %86 : vector<8x8xf32>
    %cst_42 = arith.constant dense<0.000000e+00> : vector<8xf32>
    %88 = vector.multi_reduction <add>, %87, %cst_42 [1] : vector<8x8xf32> to vector<8xf32>
    %89 = vector.shape_cast %88 : vector<8xf32> to vector<8x1xf32>
    %90 = tpu.reciprocal %89 {approx = true} : vector<8x1xf32> -> vector<8x1xf32>
    %91 = vector.broadcast %90 : vector<8x1xf32> to vector<8x8xf32>
    %92 = arith.mulf %87, %91 : vector<8x8xf32>
    %93 = vector.extract_strided_slice %9 {offsets = [2, 0, 0], sizes = [1, 32, 32], strides = [1, 1, 1]} : vector<8x32x32xf32> to vector<1x32x32xf32>
    %94 = vector.shape_cast %93 : vector<1x32x32xf32> to vector<32x32xf32>
    %cst_43 = arith.constant dense<0.000000e+00> : vector<8x32xf32>
    %95 = tpu.matmul %1, %94, %cst_43 {dimension_numbers = #tpu.dot_dimension_numbers<[1], [0], [0], [1], [0, 0, 1, 1], [], []>} : vector<8x32xf32>, vector<32x32xf32>, vector<8x32xf32> -> vector<8x32xf32>
    %cst_44 = arith.constant dense<0.000000e+00> : vector<8x32xf32>
    %96 = tpu.matmul %92, %95, %cst_44 {dimension_numbers = #tpu.dot_dimension_numbers<[1], [0], [0], [1], [0, 0, 1, 1], [], []>} : vector<8x8xf32>, vector<8x32xf32>, vector<8x32xf32> -> vector<8x32xf32>
    %97 = arith.addf %77, %96 : vector<8x32xf32>
    %98 = vector.extract_strided_slice %29 {offsets = [0, 24], sizes = [8, 8], strides = [1, 1]} : vector<8x32xf32> to vector<8x8xf32>
    %99 = vector.extract_strided_slice %33 {offsets = [0, 24], sizes = [8, 8], strides = [1, 1]} : vector<8x32xf32> to vector<8x8xf32>
    %cst_45 = arith.constant dense<0.000000e+00> : vector<8x8xf32>
    %100 = tpu.matmul %98, %99, %cst_45 {dimension_numbers = #tpu.dot_dimension_numbers<[1], [1], [0], [0], [0, 0, 1, 0], [], []>} : vector<8x8xf32>, vector<8x8xf32>, vector<8x8xf32> -> vector<8x8xf32>
    %cst_46 = arith.constant 0.353553385 : f32
    %101 = vector.broadcast %cst_46 : f32 to vector<8x8xf32>
    %102 = arith.mulf %100, %101 : vector<8x8xf32>
    %cst_47 = arith.constant dense<0xFF800000> : vector<8xf32>
    %103 = vector.multi_reduction <maximumf>, %102, %cst_47 [1] : vector<8x8xf32> to vector<8xf32>
    %104 = vector.shape_cast %103 : vector<8xf32> to vector<8x1xf32>
    %105 = vector.broadcast %104 : vector<8x1xf32> to vector<8x8xf32>
    %106 = arith.subf %102, %105 : vector<8x8xf32>
    %107 = math.exp %106 : vector<8x8xf32>
    %cst_48 = arith.constant dense<0.000000e+00> : vector<8xf32>
    %108 = vector.multi_reduction <add>, %107, %cst_48 [1] : vector<8x8xf32> to vector<8xf32>
    %109 = vector.shape_cast %108 : vector<8xf32> to vector<8x1xf32>
    %110 = tpu.reciprocal %109 {approx = true} : vector<8x1xf32> -> vector<8x1xf32>
    %111 = vector.broadcast %110 : vector<8x1xf32> to vector<8x8xf32>
    %112 = arith.mulf %107, %111 : vector<8x8xf32>
    %113 = vector.extract_strided_slice %9 {offsets = [3, 0, 0], sizes = [1, 32, 32], strides = [1, 1, 1]} : vector<8x32x32xf32> to vector<1x32x32xf32>
    %114 = vector.shape_cast %113 : vector<1x32x32xf32> to vector<32x32xf32>
    %cst_49 = arith.constant dense<0.000000e+00> : vector<8x32xf32>
    %115 = tpu.matmul %1, %114, %cst_49 {dimension_numbers = #tpu.dot_dimension_numbers<[1], [0], [0], [1], [0, 0, 1, 1], [], []>} : vector<8x32xf32>, vector<32x32xf32>, vector<8x32xf32> -> vector<8x32xf32>
    %cst_50 = arith.constant dense<0.000000e+00> : vector<8x32xf32>
    %116 = tpu.matmul %112, %115, %cst_50 {dimension_numbers = #tpu.dot_dimension_numbers<[1], [0], [0], [1], [0, 0, 1, 1], [], []>} : vector<8x8xf32>, vector<8x32xf32>, vector<8x32xf32> -> vector<8x32xf32>
    %117 = arith.addf %97, %116 : vector<8x32xf32>
    %118 = arith.addf %1, %117 : vector<8x32xf32>
    %119 = vector.extract_strided_slice %13 {offsets = [0, 0], sizes = [1, 32], strides = [1, 1]} : vector<3x32xf32> to vector<1x32xf32>
    %120 = vector.shape_cast %119 : vector<1x32xf32> to vector<32xf32>
    %121 = vector.extract_strided_slice %15 {offsets = [0, 0], sizes = [1, 32], strides = [1, 1]} : vector<3x32xf32> to vector<1x32xf32>
    %122 = vector.shape_cast %121 : vector<1x32xf32> to vector<32xf32>
    %cst_51 = arith.constant dense<0.000000e+00> : vector<8xf32>
    %123 = vector.multi_reduction <add>, %118, %cst_51 [1] : vector<8x32xf32> to vector<8xf32>
    %124 = vector.shape_cast %123 : vector<8xf32> to vector<8x1xf32>
    %cst_52 = arith.constant 3.200000e+01 : f32
    %125 = vector.broadcast %cst_52 : f32 to vector<8x1xf32>
    %126 = arith.divf %124, %125 : vector<8x1xf32>
    %127 = vector.broadcast %126 : vector<8x1xf32> to vector<8x32xf32>
    %128 = arith.subf %118, %127 : vector<8x32xf32>
    %129 = arith.mulf %128, %128 : vector<8x32xf32>
    %cst_53 = arith.constant dense<0.000000e+00> : vector<8xf32>
    %130 = vector.multi_reduction <add>, %129, %cst_53 [1] : vector<8x32xf32> to vector<8xf32>
    %131 = vector.shape_cast %130 : vector<8xf32> to vector<8x1xf32>
    %cst_54 = arith.constant 3.200000e+01 : f32
    %132 = vector.broadcast %cst_54 : f32 to vector<8x1xf32>
    %133 = arith.divf %131, %132 : vector<8x1xf32>
    %134 = vector.broadcast %126 : vector<8x1xf32> to vector<8x32xf32>
    %135 = arith.subf %118, %134 : vector<8x32xf32>
    %cst_55 = arith.constant 9.99999974E-6 : f32
    %136 = vector.broadcast %cst_55 : f32 to vector<8x1xf32>
    %137 = arith.addf %133, %136 : vector<8x1xf32>
    %138 = math.rsqrt %137 : vector<8x1xf32>
    %139 = vector.broadcast %138 : vector<8x1xf32> to vector<8x32xf32>
    %140 = arith.mulf %135, %139 : vector<8x32xf32>
    %141 = vector.shape_cast %120 : vector<32xf32> to vector<1x32xf32>
    %142 = vector.broadcast %141 : vector<1x32xf32> to vector<8x32xf32>
    %143 = arith.mulf %140, %142 : vector<8x32xf32>
    %144 = vector.shape_cast %122 : vector<32xf32> to vector<1x32xf32>
    %145 = vector.broadcast %144 : vector<1x32xf32> to vector<8x32xf32>
    %146 = arith.addf %143, %145 : vector<8x32xf32>
    %147 = vector.extract_strided_slice %5 {offsets = [2, 0, 0], sizes = [1, 32, 32], strides = [1, 1, 1]} : vector<4x32x32xf32> to vector<1x32x32xf32>
    %148 = vector.shape_cast %147 : vector<1x32x32xf32> to vector<32x32xf32>
    %149 = vector.extract_strided_slice %5 {offsets = [3, 0, 0], sizes = [1, 32, 32], strides = [1, 1, 1]} : vector<4x32x32xf32> to vector<1x32x32xf32>
    %150 = vector.shape_cast %149 : vector<1x32x32xf32> to vector<32x32xf32>
    %151 = vector.extract_strided_slice %7 {offsets = [2, 0], sizes = [1, 32], strides = [1, 1]} : vector<4x32xf32> to vector<1x32xf32>
    %152 = vector.shape_cast %151 : vector<1x32xf32> to vector<32xf32>
    %153 = vector.extract_strided_slice %7 {offsets = [3, 0], sizes = [1, 32], strides = [1, 1]} : vector<4x32xf32> to vector<1x32xf32>
    %154 = vector.shape_cast %153 : vector<1x32xf32> to vector<32xf32>
    %155 = vector.extract_strided_slice %11 {offsets = [1, 0], sizes = [1, 32], strides = [1, 1]} : vector<2x32xf32> to vector<1x32xf32>
    %156 = vector.shape_cast %155 : vector<1x32xf32> to vector<32xf32>
    %cst_56 = arith.constant dense<0.000000e+00> : vector<8x32xf32>
    %157 = tpu.matmul %146, %148, %cst_56 {dimension_numbers = #tpu.dot_dimension_numbers<[1], [0], [0], [1], [0, 0, 1, 1], [], []>} : vector<8x32xf32>, vector<32x32xf32>, vector<8x32xf32> -> vector<8x32xf32>
    %158 = vector.shape_cast %152 : vector<32xf32> to vector<1x32xf32>
    %159 = vector.broadcast %158 : vector<1x32xf32> to vector<8x32xf32>
    %160 = arith.addf %157, %159 : vector<8x32xf32>
    %cst_57 = arith.constant dense<0.000000e+00> : vector<16x32xf32>
    %161 = tpu.matmul %3, %150, %cst_57 {dimension_numbers = #tpu.dot_dimension_numbers<[1], [0], [0], [1], [0, 0, 1, 1], [], []>} : vector<16x32xf32>, vector<32x32xf32>, vector<16x32xf32> -> vector<16x32xf32>
    %162 = vector.shape_cast %154 : vector<32xf32> to vector<1x32xf32>
    %163 = vector.broadcast %162 : vector<1x32xf32> to vector<16x32xf32>
    %164 = arith.addf %161, %163 : vector<16x32xf32>
    %cst_58 = arith.constant 0.000000e+00 : f32
    %165 = vector.broadcast %cst_58 : f32 to vector<8x32xf32>
    %166 = vector.shape_cast %156 : vector<32xf32> to vector<1x32xf32>
    %167 = vector.broadcast %166 : vector<1x32xf32> to vector<8x32xf32>
    %168 = arith.addf %165, %167 : vector<8x32xf32>
    %169 = vector.extract_strided_slice %160 {offsets = [0, 0], sizes = [8, 8], strides = [1, 1]} : vector<8x32xf32> to vector<8x8xf32>
    %170 = vector.extract_strided_slice %164 {offsets = [0, 0], sizes = [16, 8], strides = [1, 1]} : vector<16x32xf32> to vector<16x8xf32>
    %cst_59 = arith.constant dense<0.000000e+00> : vector<8x16xf32>
    %171 = tpu.matmul %169, %170, %cst_59 {dimension_numbers = #tpu.dot_dimension_numbers<[1], [1], [0], [0], [0, 0, 1, 0], [], []>} : vector<8x8xf32>, vector<16x8xf32>, vector<8x16xf32> -> vector<8x16xf32>
    %cst_60 = arith.constant 0.353553385 : f32
    %172 = vector.broadcast %cst_60 : f32 to vector<8x16xf32>
    %173 = arith.mulf %171, %172 : vector<8x16xf32>
    %cst_61 = arith.constant dense<0xFF800000> : vector<8xf32>
    %174 = vector.multi_reduction <maximumf>, %173, %cst_61 [1] : vector<8x16xf32> to vector<8xf32>
    %175 = vector.shape_cast %174 : vector<8xf32> to vector<8x1xf32>
    %176 = vector.broadcast %175 : vector<8x1xf32> to vector<8x16xf32>
    %177 = arith.subf %173, %176 : vector<8x16xf32>
    %178 = math.exp %177 : vector<8x16xf32>
    %cst_62 = arith.constant dense<0.000000e+00> : vector<8xf32>
    %179 = vector.multi_reduction <add>, %178, %cst_62 [1] : vector<8x16xf32> to vector<8xf32>
    %180 = vector.shape_cast %179 : vector<8xf32> to vector<8x1xf32>
    %181 = tpu.reciprocal %180 {approx = true} : vector<8x1xf32> -> vector<8x1xf32>
    %182 = vector.broadcast %181 : vector<8x1xf32> to vector<8x16xf32>
    %183 = arith.mulf %178, %182 : vector<8x16xf32>
    %184 = vector.extract_strided_slice %9 {offsets = [4, 0, 0], sizes = [1, 32, 32], strides = [1, 1, 1]} : vector<8x32x32xf32> to vector<1x32x32xf32>
    %185 = vector.shape_cast %184 : vector<1x32x32xf32> to vector<32x32xf32>
    %cst_63 = arith.constant dense<0.000000e+00> : vector<16x32xf32>
    %186 = tpu.matmul %3, %185, %cst_63 {dimension_numbers = #tpu.dot_dimension_numbers<[1], [0], [0], [1], [0, 0, 1, 1], [], []>} : vector<16x32xf32>, vector<32x32xf32>, vector<16x32xf32> -> vector<16x32xf32>
    %cst_64 = arith.constant dense<0.000000e+00> : vector<8x32xf32>
    %187 = tpu.matmul %183, %186, %cst_64 {dimension_numbers = #tpu.dot_dimension_numbers<[1], [0], [0], [1], [0, 0, 1, 1], [], []>} : vector<8x16xf32>, vector<16x32xf32>, vector<8x32xf32> -> vector<8x32xf32>
    %188 = arith.addf %168, %187 : vector<8x32xf32>
    %189 = vector.extract_strided_slice %160 {offsets = [0, 8], sizes = [8, 8], strides = [1, 1]} : vector<8x32xf32> to vector<8x8xf32>
    %190 = vector.extract_strided_slice %164 {offsets = [0, 8], sizes = [16, 8], strides = [1, 1]} : vector<16x32xf32> to vector<16x8xf32>
    %cst_65 = arith.constant dense<0.000000e+00> : vector<8x16xf32>
    %191 = tpu.matmul %189, %190, %cst_65 {dimension_numbers = #tpu.dot_dimension_numbers<[1], [1], [0], [0], [0, 0, 1, 0], [], []>} : vector<8x8xf32>, vector<16x8xf32>, vector<8x16xf32> -> vector<8x16xf32>
    %cst_66 = arith.constant 0.353553385 : f32
    %192 = vector.broadcast %cst_66 : f32 to vector<8x16xf32>
    %193 = arith.mulf %191, %192 : vector<8x16xf32>
    %cst_67 = arith.constant dense<0xFF800000> : vector<8xf32>
    %194 = vector.multi_reduction <maximumf>, %193, %cst_67 [1] : vector<8x16xf32> to vector<8xf32>
    %195 = vector.shape_cast %194 : vector<8xf32> to vector<8x1xf32>
    %196 = vector.broadcast %195 : vector<8x1xf32> to vector<8x16xf32>
    %197 = arith.subf %193, %196 : vector<8x16xf32>
    %198 = math.exp %197 : vector<8x16xf32>
    %cst_68 = arith.constant dense<0.000000e+00> : vector<8xf32>
    %199 = vector.multi_reduction <add>, %198, %cst_68 [1] : vector<8x16xf32> to vector<8xf32>
    %200 = vector.shape_cast %199 : vector<8xf32> to vector<8x1xf32>
    %201 = tpu.reciprocal %200 {approx = true} : vector<8x1xf32> -> vector<8x1xf32>
    %202 = vector.broadcast %201 : vector<8x1xf32> to vector<8x16xf32>
    %203 = arith.mulf %198, %202 : vector<8x16xf32>
    %204 = vector.extract_strided_slice %9 {offsets = [5, 0, 0], sizes = [1, 32, 32], strides = [1, 1, 1]} : vector<8x32x32xf32> to vector<1x32x32xf32>
    %205 = vector.shape_cast %204 : vector<1x32x32xf32> to vector<32x32xf32>
    %cst_69 = arith.constant dense<0.000000e+00> : vector<16x32xf32>
    %206 = tpu.matmul %3, %205, %cst_69 {dimension_numbers = #tpu.dot_dimension_numbers<[1], [0], [0], [1], [0, 0, 1, 1], [], []>} : vector<16x32xf32>, vector<32x32xf32>, vector<16x32xf32> -> vector<16x32xf32>
    %cst_70 = arith.constant dense<0.000000e+00> : vector<8x32xf32>
    %207 = tpu.matmul %203, %206, %cst_70 {dimension_numbers = #tpu.dot_dimension_numbers<[1], [0], [0], [1], [0, 0, 1, 1], [], []>} : vector<8x16xf32>, vector<16x32xf32>, vector<8x32xf32> -> vector<8x32xf32>
    %208 = arith.addf %188, %207 : vector<8x32xf32>
    %209 = vector.extract_strided_slice %160 {offsets = [0, 16], sizes = [8, 8], strides = [1, 1]} : vector<8x32xf32> to vector<8x8xf32>
    %210 = vector.extract_strided_slice %164 {offsets = [0, 16], sizes = [16, 8], strides = [1, 1]} : vector<16x32xf32> to vector<16x8xf32>
    %cst_71 = arith.constant dense<0.000000e+00> : vector<8x16xf32>
    %211 = tpu.matmul %209, %210, %cst_71 {dimension_numbers = #tpu.dot_dimension_numbers<[1], [1], [0], [0], [0, 0, 1, 0], [], []>} : vector<8x8xf32>, vector<16x8xf32>, vector<8x16xf32> -> vector<8x16xf32>
    %cst_72 = arith.constant 0.353553385 : f32
    %212 = vector.broadcast %cst_72 : f32 to vector<8x16xf32>
    %213 = arith.mulf %211, %212 : vector<8x16xf32>
    %cst_73 = arith.constant dense<0xFF800000> : vector<8xf32>
    %214 = vector.multi_reduction <maximumf>, %213, %cst_73 [1] : vector<8x16xf32> to vector<8xf32>
    %215 = vector.shape_cast %214 : vector<8xf32> to vector<8x1xf32>
    %216 = vector.broadcast %215 : vector<8x1xf32> to vector<8x16xf32>
    %217 = arith.subf %213, %216 : vector<8x16xf32>
    %218 = math.exp %217 : vector<8x16xf32>
    %cst_74 = arith.constant dense<0.000000e+00> : vector<8xf32>
    %219 = vector.multi_reduction <add>, %218, %cst_74 [1] : vector<8x16xf32> to vector<8xf32>
    %220 = vector.shape_cast %219 : vector<8xf32> to vector<8x1xf32>
    %221 = tpu.reciprocal %220 {approx = true} : vector<8x1xf32> -> vector<8x1xf32>
    %222 = vector.broadcast %221 : vector<8x1xf32> to vector<8x16xf32>
    %223 = arith.mulf %218, %222 : vector<8x16xf32>
    %224 = vector.extract_strided_slice %9 {offsets = [6, 0, 0], sizes = [1, 32, 32], strides = [1, 1, 1]} : vector<8x32x32xf32> to vector<1x32x32xf32>
    %225 = vector.shape_cast %224 : vector<1x32x32xf32> to vector<32x32xf32>
    %cst_75 = arith.constant dense<0.000000e+00> : vector<16x32xf32>
    %226 = tpu.matmul %3, %225, %cst_75 {dimension_numbers = #tpu.dot_dimension_numbers<[1], [0], [0], [1], [0, 0, 1, 1], [], []>} : vector<16x32xf32>, vector<32x32xf32>, vector<16x32xf32> -> vector<16x32xf32>
    %cst_76 = arith.constant dense<0.000000e+00> : vector<8x32xf32>
    %227 = tpu.matmul %223, %226, %cst_76 {dimension_numbers = #tpu.dot_dimension_numbers<[1], [0], [0], [1], [0, 0, 1, 1], [], []>} : vector<8x16xf32>, vector<16x32xf32>, vector<8x32xf32> -> vector<8x32xf32>
    %228 = arith.addf %208, %227 : vector<8x32xf32>
    %229 = vector.extract_strided_slice %160 {offsets = [0, 24], sizes = [8, 8], strides = [1, 1]} : vector<8x32xf32> to vector<8x8xf32>
    %230 = vector.extract_strided_slice %164 {offsets = [0, 24], sizes = [16, 8], strides = [1, 1]} : vector<16x32xf32> to vector<16x8xf32>
    %cst_77 = arith.constant dense<0.000000e+00> : vector<8x16xf32>
    %231 = tpu.matmul %229, %230, %cst_77 {dimension_numbers = #tpu.dot_dimension_numbers<[1], [1], [0], [0], [0, 0, 1, 0], [], []>} : vector<8x8xf32>, vector<16x8xf32>, vector<8x16xf32> -> vector<8x16xf32>
    %cst_78 = arith.constant 0.353553385 : f32
    %232 = vector.broadcast %cst_78 : f32 to vector<8x16xf32>
    %233 = arith.mulf %231, %232 : vector<8x16xf32>
    %cst_79 = arith.constant dense<0xFF800000> : vector<8xf32>
    %234 = vector.multi_reduction <maximumf>, %233, %cst_79 [1] : vector<8x16xf32> to vector<8xf32>
    %235 = vector.shape_cast %234 : vector<8xf32> to vector<8x1xf32>
    %236 = vector.broadcast %235 : vector<8x1xf32> to vector<8x16xf32>
    %237 = arith.subf %233, %236 : vector<8x16xf32>
    %238 = math.exp %237 : vector<8x16xf32>
    %cst_80 = arith.constant dense<0.000000e+00> : vector<8xf32>
    %239 = vector.multi_reduction <add>, %238, %cst_80 [1] : vector<8x16xf32> to vector<8xf32>
    %240 = vector.shape_cast %239 : vector<8xf32> to vector<8x1xf32>
    %241 = tpu.reciprocal %240 {approx = true} : vector<8x1xf32> -> vector<8x1xf32>
    %242 = vector.broadcast %241 : vector<8x1xf32> to vector<8x16xf32>
    %243 = arith.mulf %238, %242 : vector<8x16xf32>
    %244 = vector.extract_strided_slice %9 {offsets = [7, 0, 0], sizes = [1, 32, 32], strides = [1, 1, 1]} : vector<8x32x32xf32> to vector<1x32x32xf32>
    %245 = vector.shape_cast %244 : vector<1x32x32xf32> to vector<32x32xf32>
    %cst_81 = arith.constant dense<0.000000e+00> : vector<16x32xf32>
    %246 = tpu.matmul %3, %245, %cst_81 {dimension_numbers = #tpu.dot_dimension_numbers<[1], [0], [0], [1], [0, 0, 1, 1], [], []>} : vector<16x32xf32>, vector<32x32xf32>, vector<16x32xf32> -> vector<16x32xf32>
    %cst_82 = arith.constant dense<0.000000e+00> : vector<8x32xf32>
    %247 = tpu.matmul %243, %246, %cst_82 {dimension_numbers = #tpu.dot_dimension_numbers<[1], [0], [0], [1], [0, 0, 1, 1], [], []>} : vector<8x16xf32>, vector<16x32xf32>, vector<8x32xf32> -> vector<8x32xf32>
    %248 = arith.addf %228, %247 : vector<8x32xf32>
    %249 = arith.addf %146, %248 : vector<8x32xf32>
    %250 = vector.extract_strided_slice %13 {offsets = [1, 0], sizes = [1, 32], strides = [1, 1]} : vector<3x32xf32> to vector<1x32xf32>
    %251 = vector.shape_cast %250 : vector<1x32xf32> to vector<32xf32>
    %252 = vector.extract_strided_slice %15 {offsets = [1, 0], sizes = [1, 32], strides = [1, 1]} : vector<3x32xf32> to vector<1x32xf32>
    %253 = vector.shape_cast %252 : vector<1x32xf32> to vector<32xf32>
    %cst_83 = arith.constant dense<0.000000e+00> : vector<8xf32>
    %254 = vector.multi_reduction <add>, %249, %cst_83 [1] : vector<8x32xf32> to vector<8xf32>
    %255 = vector.shape_cast %254 : vector<8xf32> to vector<8x1xf32>
    %cst_84 = arith.constant 3.200000e+01 : f32
    %256 = vector.broadcast %cst_84 : f32 to vector<8x1xf32>
    %257 = arith.divf %255, %256 : vector<8x1xf32>
    %258 = vector.broadcast %257 : vector<8x1xf32> to vector<8x32xf32>
    %259 = arith.subf %249, %258 : vector<8x32xf32>
    %260 = arith.mulf %259, %259 : vector<8x32xf32>
    %cst_85 = arith.constant dense<0.000000e+00> : vector<8xf32>
    %261 = vector.multi_reduction <add>, %260, %cst_85 [1] : vector<8x32xf32> to vector<8xf32>
    %262 = vector.shape_cast %261 : vector<8xf32> to vector<8x1xf32>
    %cst_86 = arith.constant 3.200000e+01 : f32
    %263 = vector.broadcast %cst_86 : f32 to vector<8x1xf32>
    %264 = arith.divf %262, %263 : vector<8x1xf32>
    %265 = vector.broadcast %257 : vector<8x1xf32> to vector<8x32xf32>
    %266 = arith.subf %249, %265 : vector<8x32xf32>
    %cst_87 = arith.constant 9.99999974E-6 : f32
    %267 = vector.broadcast %cst_87 : f32 to vector<8x1xf32>
    %268 = arith.addf %264, %267 : vector<8x1xf32>
    %269 = math.rsqrt %268 : vector<8x1xf32>
    %270 = vector.broadcast %269 : vector<8x1xf32> to vector<8x32xf32>
    %271 = arith.mulf %266, %270 : vector<8x32xf32>
    %272 = vector.shape_cast %251 : vector<32xf32> to vector<1x32xf32>
    %273 = vector.broadcast %272 : vector<1x32xf32> to vector<8x32xf32>
    %274 = arith.mulf %271, %273 : vector<8x32xf32>
    %275 = vector.shape_cast %253 : vector<32xf32> to vector<1x32xf32>
    %276 = vector.broadcast %275 : vector<1x32xf32> to vector<8x32xf32>
    %277 = arith.addf %274, %276 : vector<8x32xf32>
    %c0_88 = arith.constant 0 : index
    %c0_89 = arith.constant 0 : index
    %c0_90 = arith.constant 0 : index
    %278 = vector.load %arg7[%c0_88, %c0_89, %c0_90] : memref<2x32x64xf32, #tpu.memory_space<vmem>>, vector<1x32x64xf32>
    %279 = vector.shape_cast %278 : vector<1x32x64xf32> to vector<32x64xf32>
    %cst_91 = arith.constant dense<0.000000e+00> : vector<8x64xf32>
    %280 = tpu.matmul %277, %279, %cst_91 {dimension_numbers = #tpu.dot_dimension_numbers<[1], [0], [0], [1], [0, 0, 1, 1], [], []>} : vector<8x32xf32>, vector<32x64xf32>, vector<8x64xf32> -> vector<8x64xf32>
    %c0_92 = arith.constant 0 : index
    %c0_93 = arith.constant 0 : index
    %c0_94 = arith.constant 0 : index
    %281 = vector.load %arg8[%c0_92, %c0_93, %c0_94] : memref<2x1x64xf32, #tpu.memory_space<vmem>>, vector<1x1x64xf32>
    %282 = vector.shape_cast %281 : vector<1x1x64xf32> to vector<1x64xf32>
    %283 = vector.broadcast %282 : vector<1x64xf32> to vector<8x64xf32>
    %284 = arith.addf %280, %283 : vector<8x64xf32>
    %cst_95 = arith.constant 0.000000e+00 : f32
    %285 = vector.broadcast %cst_95 : f32 to vector<8x64xf32>
    %286 = arith.maximumf %284, %285 : vector<8x64xf32>
    %c0_96 = arith.constant 0 : index
    %c0_97 = arith.constant 0 : index
    %c0_98 = arith.constant 0 : index
    %287 = vector.load %arg9[%c0_96, %c0_97, %c0_98] : memref<2x64x32xf32, #tpu.memory_space<vmem>>, vector<1x64x32xf32>
    %288 = vector.shape_cast %287 : vector<1x64x32xf32> to vector<64x32xf32>
    %cst_99 = arith.constant dense<0.000000e+00> : vector<8x32xf32>
    %289 = tpu.matmul %286, %288, %cst_99 {dimension_numbers = #tpu.dot_dimension_numbers<[1], [0], [0], [1], [0, 0, 1, 1], [], []>} : vector<8x64xf32>, vector<64x32xf32>, vector<8x32xf32> -> vector<8x32xf32>
    %c0_100 = arith.constant 0 : index
    %c0_101 = arith.constant 0 : index
    %c0_102 = arith.constant 0 : index
    %290 = vector.load %arg10[%c0_100, %c0_101, %c0_102] : memref<2x1x32xf32, #tpu.memory_space<vmem>>, vector<1x1x32xf32>
    %291 = vector.shape_cast %290 : vector<1x1x32xf32> to vector<1x32xf32>
    %292 = vector.broadcast %291 : vector<1x32xf32> to vector<8x32xf32>
    %293 = arith.addf %289, %292 : vector<8x32xf32>
    %294 = arith.addf %277, %293 : vector<8x32xf32>
    %295 = vector.extract_strided_slice %13 {offsets = [2, 0], sizes = [1, 32], strides = [1, 1]} : vector<3x32xf32> to vector<1x32xf32>
    %296 = vector.shape_cast %295 : vector<1x32xf32> to vector<32xf32>
    %297 = vector.extract_strided_slice %15 {offsets = [2, 0], sizes = [1, 32], strides = [1, 1]} : vector<3x32xf32> to vector<1x32xf32>
    %298 = vector.shape_cast %297 : vector<1x32xf32> to vector<32xf32>
    %cst_103 = arith.constant dense<0.000000e+00> : vector<8xf32>
    %299 = vector.multi_reduction <add>, %294, %cst_103 [1] : vector<8x32xf32> to vector<8xf32>
    %300 = vector.shape_cast %299 : vector<8xf32> to vector<8x1xf32>
    %cst_104 = arith.constant 3.200000e+01 : f32
    %301 = vector.broadcast %cst_104 : f32 to vector<8x1xf32>
    %302 = arith.divf %300, %301 : vector<8x1xf32>
    %303 = vector.broadcast %302 : vector<8x1xf32> to vector<8x32xf32>
    %304 = arith.subf %294, %303 : vector<8x32xf32>
    %305 = arith.mulf %304, %304 : vector<8x32xf32>
    %cst_105 = arith.constant dense<0.000000e+00> : vector<8xf32>
    %306 = vector.multi_reduction <add>, %305, %cst_105 [1] : vector<8x32xf32> to vector<8xf32>
    %307 = vector.shape_cast %306 : vector<8xf32> to vector<8x1xf32>
    %cst_106 = arith.constant 3.200000e+01 : f32
    %308 = vector.broadcast %cst_106 : f32 to vector<8x1xf32>
    %309 = arith.divf %307, %308 : vector<8x1xf32>
    %310 = vector.broadcast %302 : vector<8x1xf32> to vector<8x32xf32>
    %311 = arith.subf %294, %310 : vector<8x32xf32>
    %cst_107 = arith.constant 9.99999974E-6 : f32
    %312 = vector.broadcast %cst_107 : f32 to vector<8x1xf32>
    %313 = arith.addf %309, %312 : vector<8x1xf32>
    %314 = math.rsqrt %313 : vector<8x1xf32>
    %315 = vector.broadcast %314 : vector<8x1xf32> to vector<8x32xf32>
    %316 = arith.mulf %311, %315 : vector<8x32xf32>
    %317 = vector.shape_cast %296 : vector<32xf32> to vector<1x32xf32>
    %318 = vector.broadcast %317 : vector<1x32xf32> to vector<8x32xf32>
    %319 = arith.mulf %316, %318 : vector<8x32xf32>
    %320 = vector.shape_cast %298 : vector<32xf32> to vector<1x32xf32>
    %321 = vector.broadcast %320 : vector<1x32xf32> to vector<8x32xf32>
    %322 = arith.addf %319, %321 : vector<8x32xf32>
    %c1 = arith.constant 1 : index
    %c0_108 = arith.constant 0 : index
    %c0_109 = arith.constant 0 : index
    %c0_110 = arith.constant 0 : index
    %323 = vector.load %arg3[%c1, %c0_108, %c0_109, %c0_110] : memref<2x4x32x32xf32, #tpu.memory_space<vmem>>, vector<1x4x32x32xf32>
    %324 = vector.shape_cast %323 : vector<1x4x32x32xf32> to vector<4x32x32xf32>
    %c1_111 = arith.constant 1 : index
    %c0_112 = arith.constant 0 : index
    %c0_113 = arith.constant 0 : index
    %325 = vector.load %arg4[%c1_111, %c0_112, %c0_113] : memref<2x4x32xf32, #tpu.memory_space<vmem>>, vector<1x4x32xf32>
    %326 = vector.shape_cast %325 : vector<1x4x32xf32> to vector<4x32xf32>
    %c1_114 = arith.constant 1 : index
    %c0_115 = arith.constant 0 : index
    %c0_116 = arith.constant 0 : index
    %c0_117 = arith.constant 0 : index
    %327 = vector.load %arg5[%c1_114, %c0_115, %c0_116, %c0_117] : memref<2x8x32x32xf32, #tpu.memory_space<vmem>>, vector<1x8x32x32xf32>
    %328 = vector.shape_cast %327 : vector<1x8x32x32xf32> to vector<8x32x32xf32>
    %c1_118 = arith.constant 1 : index
    %c0_119 = arith.constant 0 : index
    %c0_120 = arith.constant 0 : index
    %329 = vector.load %arg6[%c1_118, %c0_119, %c0_120] : memref<2x2x32xf32, #tpu.memory_space<vmem>>, vector<1x2x32xf32>
    %330 = vector.shape_cast %329 : vector<1x2x32xf32> to vector<2x32xf32>
    %c1_121 = arith.constant 1 : index
    %c0_122 = arith.constant 0 : index
    %c0_123 = arith.constant 0 : index
    %331 = vector.load %arg11[%c1_121, %c0_122, %c0_123] : memref<2x3x32xf32, #tpu.memory_space<vmem>>, vector<1x3x32xf32>
    %332 = vector.shape_cast %331 : vector<1x3x32xf32> to vector<3x32xf32>
    %c1_124 = arith.constant 1 : index
    %c0_125 = arith.constant 0 : index
    %c0_126 = arith.constant 0 : index
    %333 = vector.load %arg12[%c1_124, %c0_125, %c0_126] : memref<2x3x32xf32, #tpu.memory_space<vmem>>, vector<1x3x32xf32>
    %334 = vector.shape_cast %333 : vector<1x3x32xf32> to vector<3x32xf32>
    %335 = vector.extract_strided_slice %324 {offsets = [0, 0, 0], sizes = [1, 32, 32], strides = [1, 1, 1]} : vector<4x32x32xf32> to vector<1x32x32xf32>
    %336 = vector.shape_cast %335 : vector<1x32x32xf32> to vector<32x32xf32>
    %337 = vector.extract_strided_slice %324 {offsets = [1, 0, 0], sizes = [1, 32, 32], strides = [1, 1, 1]} : vector<4x32x32xf32> to vector<1x32x32xf32>
    %338 = vector.shape_cast %337 : vector<1x32x32xf32> to vector<32x32xf32>
    %339 = vector.extract_strided_slice %326 {offsets = [0, 0], sizes = [1, 32], strides = [1, 1]} : vector<4x32xf32> to vector<1x32xf32>
    %340 = vector.shape_cast %339 : vector<1x32xf32> to vector<32xf32>
    %341 = vector.extract_strided_slice %326 {offsets = [1, 0], sizes = [1, 32], strides = [1, 1]} : vector<4x32xf32> to vector<1x32xf32>
    %342 = vector.shape_cast %341 : vector<1x32xf32> to vector<32xf32>
    %343 = vector.extract_strided_slice %330 {offsets = [0, 0], sizes = [1, 32], strides = [1, 1]} : vector<2x32xf32> to vector<1x32xf32>
    %344 = vector.shape_cast %343 : vector<1x32xf32> to vector<32xf32>
    %cst_127 = arith.constant dense<0.000000e+00> : vector<8x32xf32>
    %345 = tpu.matmul %322, %336, %cst_127 {dimension_numbers = #tpu.dot_dimension_numbers<[1], [0], [0], [1], [0, 0, 1, 1], [], []>} : vector<8x32xf32>, vector<32x32xf32>, vector<8x32xf32> -> vector<8x32xf32>
    %346 = vector.shape_cast %340 : vector<32xf32> to vector<1x32xf32>
    %347 = vector.broadcast %346 : vector<1x32xf32> to vector<8x32xf32>
    %348 = arith.addf %345, %347 : vector<8x32xf32>
    %cst_128 = arith.constant dense<0.000000e+00> : vector<8x32xf32>
    %349 = tpu.matmul %322, %338, %cst_128 {dimension_numbers = #tpu.dot_dimension_numbers<[1], [0], [0], [1], [0, 0, 1, 1], [], []>} : vector<8x32xf32>, vector<32x32xf32>, vector<8x32xf32> -> vector<8x32xf32>
    %350 = vector.shape_cast %342 : vector<32xf32> to vector<1x32xf32>
    %351 = vector.broadcast %350 : vector<1x32xf32> to vector<8x32xf32>
    %352 = arith.addf %349, %351 : vector<8x32xf32>
    %cst_129 = arith.constant 0.000000e+00 : f32
    %353 = vector.broadcast %cst_129 : f32 to vector<8x32xf32>
    %354 = vector.shape_cast %344 : vector<32xf32> to vector<1x32xf32>
    %355 = vector.broadcast %354 : vector<1x32xf32> to vector<8x32xf32>
    %356 = arith.addf %353, %355 : vector<8x32xf32>
    %357 = vector.extract_strided_slice %348 {offsets = [0, 0], sizes = [8, 8], strides = [1, 1]} : vector<8x32xf32> to vector<8x8xf32>
    %358 = vector.extract_strided_slice %352 {offsets = [0, 0], sizes = [8, 8], strides = [1, 1]} : vector<8x32xf32> to vector<8x8xf32>
    %cst_130 = arith.constant dense<0.000000e+00> : vector<8x8xf32>
    %359 = tpu.matmul %357, %358, %cst_130 {dimension_numbers = #tpu.dot_dimension_numbers<[1], [1], [0], [0], [0, 0, 1, 0], [], []>} : vector<8x8xf32>, vector<8x8xf32>, vector<8x8xf32> -> vector<8x8xf32>
    %cst_131 = arith.constant 0.353553385 : f32
    %360 = vector.broadcast %cst_131 : f32 to vector<8x8xf32>
    %361 = arith.mulf %359, %360 : vector<8x8xf32>
    %cst_132 = arith.constant dense<0xFF800000> : vector<8xf32>
    %362 = vector.multi_reduction <maximumf>, %361, %cst_132 [1] : vector<8x8xf32> to vector<8xf32>
    %363 = vector.shape_cast %362 : vector<8xf32> to vector<8x1xf32>
    %364 = vector.broadcast %363 : vector<8x1xf32> to vector<8x8xf32>
    %365 = arith.subf %361, %364 : vector<8x8xf32>
    %366 = math.exp %365 : vector<8x8xf32>
    %cst_133 = arith.constant dense<0.000000e+00> : vector<8xf32>
    %367 = vector.multi_reduction <add>, %366, %cst_133 [1] : vector<8x8xf32> to vector<8xf32>
    %368 = vector.shape_cast %367 : vector<8xf32> to vector<8x1xf32>
    %369 = tpu.reciprocal %368 {approx = true} : vector<8x1xf32> -> vector<8x1xf32>
    %370 = vector.broadcast %369 : vector<8x1xf32> to vector<8x8xf32>
    %371 = arith.mulf %366, %370 : vector<8x8xf32>
    %372 = vector.extract_strided_slice %328 {offsets = [0, 0, 0], sizes = [1, 32, 32], strides = [1, 1, 1]} : vector<8x32x32xf32> to vector<1x32x32xf32>
    %373 = vector.shape_cast %372 : vector<1x32x32xf32> to vector<32x32xf32>
    %cst_134 = arith.constant dense<0.000000e+00> : vector<8x32xf32>
    %374 = tpu.matmul %322, %373, %cst_134 {dimension_numbers = #tpu.dot_dimension_numbers<[1], [0], [0], [1], [0, 0, 1, 1], [], []>} : vector<8x32xf32>, vector<32x32xf32>, vector<8x32xf32> -> vector<8x32xf32>
    %cst_135 = arith.constant dense<0.000000e+00> : vector<8x32xf32>
    %375 = tpu.matmul %371, %374, %cst_135 {dimension_numbers = #tpu.dot_dimension_numbers<[1], [0], [0], [1], [0, 0, 1, 1], [], []>} : vector<8x8xf32>, vector<8x32xf32>, vector<8x32xf32> -> vector<8x32xf32>
    %376 = arith.addf %356, %375 : vector<8x32xf32>
    %377 = vector.extract_strided_slice %348 {offsets = [0, 8], sizes = [8, 8], strides = [1, 1]} : vector<8x32xf32> to vector<8x8xf32>
    %378 = vector.extract_strided_slice %352 {offsets = [0, 8], sizes = [8, 8], strides = [1, 1]} : vector<8x32xf32> to vector<8x8xf32>
    %cst_136 = arith.constant dense<0.000000e+00> : vector<8x8xf32>
    %379 = tpu.matmul %377, %378, %cst_136 {dimension_numbers = #tpu.dot_dimension_numbers<[1], [1], [0], [0], [0, 0, 1, 0], [], []>} : vector<8x8xf32>, vector<8x8xf32>, vector<8x8xf32> -> vector<8x8xf32>
    %cst_137 = arith.constant 0.353553385 : f32
    %380 = vector.broadcast %cst_137 : f32 to vector<8x8xf32>
    %381 = arith.mulf %379, %380 : vector<8x8xf32>
    %cst_138 = arith.constant dense<0xFF800000> : vector<8xf32>
    %382 = vector.multi_reduction <maximumf>, %381, %cst_138 [1] : vector<8x8xf32> to vector<8xf32>
    %383 = vector.shape_cast %382 : vector<8xf32> to vector<8x1xf32>
    %384 = vector.broadcast %383 : vector<8x1xf32> to vector<8x8xf32>
    %385 = arith.subf %381, %384 : vector<8x8xf32>
    %386 = math.exp %385 : vector<8x8xf32>
    %cst_139 = arith.constant dense<0.000000e+00> : vector<8xf32>
    %387 = vector.multi_reduction <add>, %386, %cst_139 [1] : vector<8x8xf32> to vector<8xf32>
    %388 = vector.shape_cast %387 : vector<8xf32> to vector<8x1xf32>
    %389 = tpu.reciprocal %388 {approx = true} : vector<8x1xf32> -> vector<8x1xf32>
    %390 = vector.broadcast %389 : vector<8x1xf32> to vector<8x8xf32>
    %391 = arith.mulf %386, %390 : vector<8x8xf32>
    %392 = vector.extract_strided_slice %328 {offsets = [1, 0, 0], sizes = [1, 32, 32], strides = [1, 1, 1]} : vector<8x32x32xf32> to vector<1x32x32xf32>
    %393 = vector.shape_cast %392 : vector<1x32x32xf32> to vector<32x32xf32>
    %cst_140 = arith.constant dense<0.000000e+00> : vector<8x32xf32>
    %394 = tpu.matmul %322, %393, %cst_140 {dimension_numbers = #tpu.dot_dimension_numbers<[1], [0], [0], [1], [0, 0, 1, 1], [], []>} : vector<8x32xf32>, vector<32x32xf32>, vector<8x32xf32> -> vector<8x32xf32>
    %cst_141 = arith.constant dense<0.000000e+00> : vector<8x32xf32>
    %395 = tpu.matmul %391, %394, %cst_141 {dimension_numbers = #tpu.dot_dimension_numbers<[1], [0], [0], [1], [0, 0, 1, 1], [], []>} : vector<8x8xf32>, vector<8x32xf32>, vector<8x32xf32> -> vector<8x32xf32>
    %396 = arith.addf %376, %395 : vector<8x32xf32>
    %397 = vector.extract_strided_slice %348 {offsets = [0, 16], sizes = [8, 8], strides = [1, 1]} : vector<8x32xf32> to vector<8x8xf32>
    %398 = vector.extract_strided_slice %352 {offsets = [0, 16], sizes = [8, 8], strides = [1, 1]} : vector<8x32xf32> to vector<8x8xf32>
    %cst_142 = arith.constant dense<0.000000e+00> : vector<8x8xf32>
    %399 = tpu.matmul %397, %398, %cst_142 {dimension_numbers = #tpu.dot_dimension_numbers<[1], [1], [0], [0], [0, 0, 1, 0], [], []>} : vector<8x8xf32>, vector<8x8xf32>, vector<8x8xf32> -> vector<8x8xf32>
    %cst_143 = arith.constant 0.353553385 : f32
    %400 = vector.broadcast %cst_143 : f32 to vector<8x8xf32>
    %401 = arith.mulf %399, %400 : vector<8x8xf32>
    %cst_144 = arith.constant dense<0xFF800000> : vector<8xf32>
    %402 = vector.multi_reduction <maximumf>, %401, %cst_144 [1] : vector<8x8xf32> to vector<8xf32>
    %403 = vector.shape_cast %402 : vector<8xf32> to vector<8x1xf32>
    %404 = vector.broadcast %403 : vector<8x1xf32> to vector<8x8xf32>
    %405 = arith.subf %401, %404 : vector<8x8xf32>
    %406 = math.exp %405 : vector<8x8xf32>
    %cst_145 = arith.constant dense<0.000000e+00> : vector<8xf32>
    %407 = vector.multi_reduction <add>, %406, %cst_145 [1] : vector<8x8xf32> to vector<8xf32>
    %408 = vector.shape_cast %407 : vector<8xf32> to vector<8x1xf32>
    %409 = tpu.reciprocal %408 {approx = true} : vector<8x1xf32> -> vector<8x1xf32>
    %410 = vector.broadcast %409 : vector<8x1xf32> to vector<8x8xf32>
    %411 = arith.mulf %406, %410 : vector<8x8xf32>
    %412 = vector.extract_strided_slice %328 {offsets = [2, 0, 0], sizes = [1, 32, 32], strides = [1, 1, 1]} : vector<8x32x32xf32> to vector<1x32x32xf32>
    %413 = vector.shape_cast %412 : vector<1x32x32xf32> to vector<32x32xf32>
    %cst_146 = arith.constant dense<0.000000e+00> : vector<8x32xf32>
    %414 = tpu.matmul %322, %413, %cst_146 {dimension_numbers = #tpu.dot_dimension_numbers<[1], [0], [0], [1], [0, 0, 1, 1], [], []>} : vector<8x32xf32>, vector<32x32xf32>, vector<8x32xf32> -> vector<8x32xf32>
    %cst_147 = arith.constant dense<0.000000e+00> : vector<8x32xf32>
    %415 = tpu.matmul %411, %414, %cst_147 {dimension_numbers = #tpu.dot_dimension_numbers<[1], [0], [0], [1], [0, 0, 1, 1], [], []>} : vector<8x8xf32>, vector<8x32xf32>, vector<8x32xf32> -> vector<8x32xf32>
    %416 = arith.addf %396, %415 : vector<8x32xf32>
    %417 = vector.extract_strided_slice %348 {offsets = [0, 24], sizes = [8, 8], strides = [1, 1]} : vector<8x32xf32> to vector<8x8xf32>
    %418 = vector.extract_strided_slice %352 {offsets = [0, 24], sizes = [8, 8], strides = [1, 1]} : vector<8x32xf32> to vector<8x8xf32>
    %cst_148 = arith.constant dense<0.000000e+00> : vector<8x8xf32>
    %419 = tpu.matmul %417, %418, %cst_148 {dimension_numbers = #tpu.dot_dimension_numbers<[1], [1], [0], [0], [0, 0, 1, 0], [], []>} : vector<8x8xf32>, vector<8x8xf32>, vector<8x8xf32> -> vector<8x8xf32>
    %cst_149 = arith.constant 0.353553385 : f32
    %420 = vector.broadcast %cst_149 : f32 to vector<8x8xf32>
    %421 = arith.mulf %419, %420 : vector<8x8xf32>
    %cst_150 = arith.constant dense<0xFF800000> : vector<8xf32>
    %422 = vector.multi_reduction <maximumf>, %421, %cst_150 [1] : vector<8x8xf32> to vector<8xf32>
    %423 = vector.shape_cast %422 : vector<8xf32> to vector<8x1xf32>
    %424 = vector.broadcast %423 : vector<8x1xf32> to vector<8x8xf32>
    %425 = arith.subf %421, %424 : vector<8x8xf32>
    %426 = math.exp %425 : vector<8x8xf32>
    %cst_151 = arith.constant dense<0.000000e+00> : vector<8xf32>
    %427 = vector.multi_reduction <add>, %426, %cst_151 [1] : vector<8x8xf32> to vector<8xf32>
    %428 = vector.shape_cast %427 : vector<8xf32> to vector<8x1xf32>
    %429 = tpu.reciprocal %428 {approx = true} : vector<8x1xf32> -> vector<8x1xf32>
    %430 = vector.broadcast %429 : vector<8x1xf32> to vector<8x8xf32>
    %431 = arith.mulf %426, %430 : vector<8x8xf32>
    %432 = vector.extract_strided_slice %328 {offsets = [3, 0, 0], sizes = [1, 32, 32], strides = [1, 1, 1]} : vector<8x32x32xf32> to vector<1x32x32xf32>
    %433 = vector.shape_cast %432 : vector<1x32x32xf32> to vector<32x32xf32>
    %cst_152 = arith.constant dense<0.000000e+00> : vector<8x32xf32>
    %434 = tpu.matmul %322, %433, %cst_152 {dimension_numbers = #tpu.dot_dimension_numbers<[1], [0], [0], [1], [0, 0, 1, 1], [], []>} : vector<8x32xf32>, vector<32x32xf32>, vector<8x32xf32> -> vector<8x32xf32>
    %cst_153 = arith.constant dense<0.000000e+00> : vector<8x32xf32>
    %435 = tpu.matmul %431, %434, %cst_153 {dimension_numbers = #tpu.dot_dimension_numbers<[1], [0], [0], [1], [0, 0, 1, 1], [], []>} : vector<8x8xf32>, vector<8x32xf32>, vector<8x32xf32> -> vector<8x32xf32>
    %436 = arith.addf %416, %435 : vector<8x32xf32>
    %437 = arith.addf %322, %436 : vector<8x32xf32>
    %438 = vector.extract_strided_slice %332 {offsets = [0, 0], sizes = [1, 32], strides = [1, 1]} : vector<3x32xf32> to vector<1x32xf32>
    %439 = vector.shape_cast %438 : vector<1x32xf32> to vector<32xf32>
    %440 = vector.extract_strided_slice %334 {offsets = [0, 0], sizes = [1, 32], strides = [1, 1]} : vector<3x32xf32> to vector<1x32xf32>
    %441 = vector.shape_cast %440 : vector<1x32xf32> to vector<32xf32>
    %cst_154 = arith.constant dense<0.000000e+00> : vector<8xf32>
    %442 = vector.multi_reduction <add>, %437, %cst_154 [1] : vector<8x32xf32> to vector<8xf32>
    %443 = vector.shape_cast %442 : vector<8xf32> to vector<8x1xf32>
    %cst_155 = arith.constant 3.200000e+01 : f32
    %444 = vector.broadcast %cst_155 : f32 to vector<8x1xf32>
    %445 = arith.divf %443, %444 : vector<8x1xf32>
    %446 = vector.broadcast %445 : vector<8x1xf32> to vector<8x32xf32>
    %447 = arith.subf %437, %446 : vector<8x32xf32>
    %448 = arith.mulf %447, %447 : vector<8x32xf32>
    %cst_156 = arith.constant dense<0.000000e+00> : vector<8xf32>
    %449 = vector.multi_reduction <add>, %448, %cst_156 [1] : vector<8x32xf32> to vector<8xf32>
    %450 = vector.shape_cast %449 : vector<8xf32> to vector<8x1xf32>
    %cst_157 = arith.constant 3.200000e+01 : f32
    %451 = vector.broadcast %cst_157 : f32 to vector<8x1xf32>
    %452 = arith.divf %450, %451 : vector<8x1xf32>
    %453 = vector.broadcast %445 : vector<8x1xf32> to vector<8x32xf32>
    %454 = arith.subf %437, %453 : vector<8x32xf32>
    %cst_158 = arith.constant 9.99999974E-6 : f32
    %455 = vector.broadcast %cst_158 : f32 to vector<8x1xf32>
    %456 = arith.addf %452, %455 : vector<8x1xf32>
    %457 = math.rsqrt %456 : vector<8x1xf32>
    %458 = vector.broadcast %457 : vector<8x1xf32> to vector<8x32xf32>
    %459 = arith.mulf %454, %458 : vector<8x32xf32>
    %460 = vector.shape_cast %439 : vector<32xf32> to vector<1x32xf32>
    %461 = vector.broadcast %460 : vector<1x32xf32> to vector<8x32xf32>
    %462 = arith.mulf %459, %461 : vector<8x32xf32>
    %463 = vector.shape_cast %441 : vector<32xf32> to vector<1x32xf32>
    %464 = vector.broadcast %463 : vector<1x32xf32> to vector<8x32xf32>
    %465 = arith.addf %462, %464 : vector<8x32xf32>
    %466 = vector.extract_strided_slice %324 {offsets = [2, 0, 0], sizes = [1, 32, 32], strides = [1, 1, 1]} : vector<4x32x32xf32> to vector<1x32x32xf32>
    %467 = vector.shape_cast %466 : vector<1x32x32xf32> to vector<32x32xf32>
    %468 = vector.extract_strided_slice %324 {offsets = [3, 0, 0], sizes = [1, 32, 32], strides = [1, 1, 1]} : vector<4x32x32xf32> to vector<1x32x32xf32>
    %469 = vector.shape_cast %468 : vector<1x32x32xf32> to vector<32x32xf32>
    %470 = vector.extract_strided_slice %326 {offsets = [2, 0], sizes = [1, 32], strides = [1, 1]} : vector<4x32xf32> to vector<1x32xf32>
    %471 = vector.shape_cast %470 : vector<1x32xf32> to vector<32xf32>
    %472 = vector.extract_strided_slice %326 {offsets = [3, 0], sizes = [1, 32], strides = [1, 1]} : vector<4x32xf32> to vector<1x32xf32>
    %473 = vector.shape_cast %472 : vector<1x32xf32> to vector<32xf32>
    %474 = vector.extract_strided_slice %330 {offsets = [1, 0], sizes = [1, 32], strides = [1, 1]} : vector<2x32xf32> to vector<1x32xf32>
    %475 = vector.shape_cast %474 : vector<1x32xf32> to vector<32xf32>
    %cst_159 = arith.constant dense<0.000000e+00> : vector<8x32xf32>
    %476 = tpu.matmul %465, %467, %cst_159 {dimension_numbers = #tpu.dot_dimension_numbers<[1], [0], [0], [1], [0, 0, 1, 1], [], []>} : vector<8x32xf32>, vector<32x32xf32>, vector<8x32xf32> -> vector<8x32xf32>
    %477 = vector.shape_cast %471 : vector<32xf32> to vector<1x32xf32>
    %478 = vector.broadcast %477 : vector<1x32xf32> to vector<8x32xf32>
    %479 = arith.addf %476, %478 : vector<8x32xf32>
    %cst_160 = arith.constant dense<0.000000e+00> : vector<16x32xf32>
    %480 = tpu.matmul %3, %469, %cst_160 {dimension_numbers = #tpu.dot_dimension_numbers<[1], [0], [0], [1], [0, 0, 1, 1], [], []>} : vector<16x32xf32>, vector<32x32xf32>, vector<16x32xf32> -> vector<16x32xf32>
    %481 = vector.shape_cast %473 : vector<32xf32> to vector<1x32xf32>
    %482 = vector.broadcast %481 : vector<1x32xf32> to vector<16x32xf32>
    %483 = arith.addf %480, %482 : vector<16x32xf32>
    %cst_161 = arith.constant 0.000000e+00 : f32
    %484 = vector.broadcast %cst_161 : f32 to vector<8x32xf32>
    %485 = vector.shape_cast %475 : vector<32xf32> to vector<1x32xf32>
    %486 = vector.broadcast %485 : vector<1x32xf32> to vector<8x32xf32>
    %487 = arith.addf %484, %486 : vector<8x32xf32>
    %488 = vector.extract_strided_slice %479 {offsets = [0, 0], sizes = [8, 8], strides = [1, 1]} : vector<8x32xf32> to vector<8x8xf32>
    %489 = vector.extract_strided_slice %483 {offsets = [0, 0], sizes = [16, 8], strides = [1, 1]} : vector<16x32xf32> to vector<16x8xf32>
    %cst_162 = arith.constant dense<0.000000e+00> : vector<8x16xf32>
    %490 = tpu.matmul %488, %489, %cst_162 {dimension_numbers = #tpu.dot_dimension_numbers<[1], [1], [0], [0], [0, 0, 1, 0], [], []>} : vector<8x8xf32>, vector<16x8xf32>, vector<8x16xf32> -> vector<8x16xf32>
    %cst_163 = arith.constant 0.353553385 : f32
    %491 = vector.broadcast %cst_163 : f32 to vector<8x16xf32>
    %492 = arith.mulf %490, %491 : vector<8x16xf32>
    %cst_164 = arith.constant dense<0xFF800000> : vector<8xf32>
    %493 = vector.multi_reduction <maximumf>, %492, %cst_164 [1] : vector<8x16xf32> to vector<8xf32>
    %494 = vector.shape_cast %493 : vector<8xf32> to vector<8x1xf32>
    %495 = vector.broadcast %494 : vector<8x1xf32> to vector<8x16xf32>
    %496 = arith.subf %492, %495 : vector<8x16xf32>
    %497 = math.exp %496 : vector<8x16xf32>
    %cst_165 = arith.constant dense<0.000000e+00> : vector<8xf32>
    %498 = vector.multi_reduction <add>, %497, %cst_165 [1] : vector<8x16xf32> to vector<8xf32>
    %499 = vector.shape_cast %498 : vector<8xf32> to vector<8x1xf32>
    %500 = tpu.reciprocal %499 {approx = true} : vector<8x1xf32> -> vector<8x1xf32>
    %501 = vector.broadcast %500 : vector<8x1xf32> to vector<8x16xf32>
    %502 = arith.mulf %497, %501 : vector<8x16xf32>
    %503 = vector.extract_strided_slice %328 {offsets = [4, 0, 0], sizes = [1, 32, 32], strides = [1, 1, 1]} : vector<8x32x32xf32> to vector<1x32x32xf32>
    %504 = vector.shape_cast %503 : vector<1x32x32xf32> to vector<32x32xf32>
    %cst_166 = arith.constant dense<0.000000e+00> : vector<16x32xf32>
    %505 = tpu.matmul %3, %504, %cst_166 {dimension_numbers = #tpu.dot_dimension_numbers<[1], [0], [0], [1], [0, 0, 1, 1], [], []>} : vector<16x32xf32>, vector<32x32xf32>, vector<16x32xf32> -> vector<16x32xf32>
    %cst_167 = arith.constant dense<0.000000e+00> : vector<8x32xf32>
    %506 = tpu.matmul %502, %505, %cst_167 {dimension_numbers = #tpu.dot_dimension_numbers<[1], [0], [0], [1], [0, 0, 1, 1], [], []>} : vector<8x16xf32>, vector<16x32xf32>, vector<8x32xf32> -> vector<8x32xf32>
    %507 = arith.addf %487, %506 : vector<8x32xf32>
    %508 = vector.extract_strided_slice %479 {offsets = [0, 8], sizes = [8, 8], strides = [1, 1]} : vector<8x32xf32> to vector<8x8xf32>
    %509 = vector.extract_strided_slice %483 {offsets = [0, 8], sizes = [16, 8], strides = [1, 1]} : vector<16x32xf32> to vector<16x8xf32>
    %cst_168 = arith.constant dense<0.000000e+00> : vector<8x16xf32>
    %510 = tpu.matmul %508, %509, %cst_168 {dimension_numbers = #tpu.dot_dimension_numbers<[1], [1], [0], [0], [0, 0, 1, 0], [], []>} : vector<8x8xf32>, vector<16x8xf32>, vector<8x16xf32> -> vector<8x16xf32>
    %cst_169 = arith.constant 0.353553385 : f32
    %511 = vector.broadcast %cst_169 : f32 to vector<8x16xf32>
    %512 = arith.mulf %510, %511 : vector<8x16xf32>
    %cst_170 = arith.constant dense<0xFF800000> : vector<8xf32>
    %513 = vector.multi_reduction <maximumf>, %512, %cst_170 [1] : vector<8x16xf32> to vector<8xf32>
    %514 = vector.shape_cast %513 : vector<8xf32> to vector<8x1xf32>
    %515 = vector.broadcast %514 : vector<8x1xf32> to vector<8x16xf32>
    %516 = arith.subf %512, %515 : vector<8x16xf32>
    %517 = math.exp %516 : vector<8x16xf32>
    %cst_171 = arith.constant dense<0.000000e+00> : vector<8xf32>
    %518 = vector.multi_reduction <add>, %517, %cst_171 [1] : vector<8x16xf32> to vector<8xf32>
    %519 = vector.shape_cast %518 : vector<8xf32> to vector<8x1xf32>
    %520 = tpu.reciprocal %519 {approx = true} : vector<8x1xf32> -> vector<8x1xf32>
    %521 = vector.broadcast %520 : vector<8x1xf32> to vector<8x16xf32>
    %522 = arith.mulf %517, %521 : vector<8x16xf32>
    %523 = vector.extract_strided_slice %328 {offsets = [5, 0, 0], sizes = [1, 32, 32], strides = [1, 1, 1]} : vector<8x32x32xf32> to vector<1x32x32xf32>
    %524 = vector.shape_cast %523 : vector<1x32x32xf32> to vector<32x32xf32>
    %cst_172 = arith.constant dense<0.000000e+00> : vector<16x32xf32>
    %525 = tpu.matmul %3, %524, %cst_172 {dimension_numbers = #tpu.dot_dimension_numbers<[1], [0], [0], [1], [0, 0, 1, 1], [], []>} : vector<16x32xf32>, vector<32x32xf32>, vector<16x32xf32> -> vector<16x32xf32>
    %cst_173 = arith.constant dense<0.000000e+00> : vector<8x32xf32>
    %526 = tpu.matmul %522, %525, %cst_173 {dimension_numbers = #tpu.dot_dimension_numbers<[1], [0], [0], [1], [0, 0, 1, 1], [], []>} : vector<8x16xf32>, vector<16x32xf32>, vector<8x32xf32> -> vector<8x32xf32>
    %527 = arith.addf %507, %526 : vector<8x32xf32>
    %528 = vector.extract_strided_slice %479 {offsets = [0, 16], sizes = [8, 8], strides = [1, 1]} : vector<8x32xf32> to vector<8x8xf32>
    %529 = vector.extract_strided_slice %483 {offsets = [0, 16], sizes = [16, 8], strides = [1, 1]} : vector<16x32xf32> to vector<16x8xf32>
    %cst_174 = arith.constant dense<0.000000e+00> : vector<8x16xf32>
    %530 = tpu.matmul %528, %529, %cst_174 {dimension_numbers = #tpu.dot_dimension_numbers<[1], [1], [0], [0], [0, 0, 1, 0], [], []>} : vector<8x8xf32>, vector<16x8xf32>, vector<8x16xf32> -> vector<8x16xf32>
    %cst_175 = arith.constant 0.353553385 : f32
    %531 = vector.broadcast %cst_175 : f32 to vector<8x16xf32>
    %532 = arith.mulf %530, %531 : vector<8x16xf32>
    %cst_176 = arith.constant dense<0xFF800000> : vector<8xf32>
    %533 = vector.multi_reduction <maximumf>, %532, %cst_176 [1] : vector<8x16xf32> to vector<8xf32>
    %534 = vector.shape_cast %533 : vector<8xf32> to vector<8x1xf32>
    %535 = vector.broadcast %534 : vector<8x1xf32> to vector<8x16xf32>
    %536 = arith.subf %532, %535 : vector<8x16xf32>
    %537 = math.exp %536 : vector<8x16xf32>
    %cst_177 = arith.constant dense<0.000000e+00> : vector<8xf32>
    %538 = vector.multi_reduction <add>, %537, %cst_177 [1] : vector<8x16xf32> to vector<8xf32>
    %539 = vector.shape_cast %538 : vector<8xf32> to vector<8x1xf32>
    %540 = tpu.reciprocal %539 {approx = true} : vector<8x1xf32> -> vector<8x1xf32>
    %541 = vector.broadcast %540 : vector<8x1xf32> to vector<8x16xf32>
    %542 = arith.mulf %537, %541 : vector<8x16xf32>
    %543 = vector.extract_strided_slice %328 {offsets = [6, 0, 0], sizes = [1, 32, 32], strides = [1, 1, 1]} : vector<8x32x32xf32> to vector<1x32x32xf32>
    %544 = vector.shape_cast %543 : vector<1x32x32xf32> to vector<32x32xf32>
    %cst_178 = arith.constant dense<0.000000e+00> : vector<16x32xf32>
    %545 = tpu.matmul %3, %544, %cst_178 {dimension_numbers = #tpu.dot_dimension_numbers<[1], [0], [0], [1], [0, 0, 1, 1], [], []>} : vector<16x32xf32>, vector<32x32xf32>, vector<16x32xf32> -> vector<16x32xf32>
    %cst_179 = arith.constant dense<0.000000e+00> : vector<8x32xf32>
    %546 = tpu.matmul %542, %545, %cst_179 {dimension_numbers = #tpu.dot_dimension_numbers<[1], [0], [0], [1], [0, 0, 1, 1], [], []>} : vector<8x16xf32>, vector<16x32xf32>, vector<8x32xf32> -> vector<8x32xf32>
    %547 = arith.addf %527, %546 : vector<8x32xf32>
    %548 = vector.extract_strided_slice %479 {offsets = [0, 24], sizes = [8, 8], strides = [1, 1]} : vector<8x32xf32> to vector<8x8xf32>
    %549 = vector.extract_strided_slice %483 {offsets = [0, 24], sizes = [16, 8], strides = [1, 1]} : vector<16x32xf32> to vector<16x8xf32>
    %cst_180 = arith.constant dense<0.000000e+00> : vector<8x16xf32>
    %550 = tpu.matmul %548, %549, %cst_180 {dimension_numbers = #tpu.dot_dimension_numbers<[1], [1], [0], [0], [0, 0, 1, 0], [], []>} : vector<8x8xf32>, vector<16x8xf32>, vector<8x16xf32> -> vector<8x16xf32>
    %cst_181 = arith.constant 0.353553385 : f32
    %551 = vector.broadcast %cst_181 : f32 to vector<8x16xf32>
    %552 = arith.mulf %550, %551 : vector<8x16xf32>
    %cst_182 = arith.constant dense<0xFF800000> : vector<8xf32>
    %553 = vector.multi_reduction <maximumf>, %552, %cst_182 [1] : vector<8x16xf32> to vector<8xf32>
    %554 = vector.shape_cast %553 : vector<8xf32> to vector<8x1xf32>
    %555 = vector.broadcast %554 : vector<8x1xf32> to vector<8x16xf32>
    %556 = arith.subf %552, %555 : vector<8x16xf32>
    %557 = math.exp %556 : vector<8x16xf32>
    %cst_183 = arith.constant dense<0.000000e+00> : vector<8xf32>
    %558 = vector.multi_reduction <add>, %557, %cst_183 [1] : vector<8x16xf32> to vector<8xf32>
    %559 = vector.shape_cast %558 : vector<8xf32> to vector<8x1xf32>
    %560 = tpu.reciprocal %559 {approx = true} : vector<8x1xf32> -> vector<8x1xf32>
    %561 = vector.broadcast %560 : vector<8x1xf32> to vector<8x16xf32>
    %562 = arith.mulf %557, %561 : vector<8x16xf32>
    %563 = vector.extract_strided_slice %328 {offsets = [7, 0, 0], sizes = [1, 32, 32], strides = [1, 1, 1]} : vector<8x32x32xf32> to vector<1x32x32xf32>
    %564 = vector.shape_cast %563 : vector<1x32x32xf32> to vector<32x32xf32>
    %cst_184 = arith.constant dense<0.000000e+00> : vector<16x32xf32>
    %565 = tpu.matmul %3, %564, %cst_184 {dimension_numbers = #tpu.dot_dimension_numbers<[1], [0], [0], [1], [0, 0, 1, 1], [], []>} : vector<16x32xf32>, vector<32x32xf32>, vector<16x32xf32> -> vector<16x32xf32>
    %cst_185 = arith.constant dense<0.000000e+00> : vector<8x32xf32>
    %566 = tpu.matmul %562, %565, %cst_185 {dimension_numbers = #tpu.dot_dimension_numbers<[1], [0], [0], [1], [0, 0, 1, 1], [], []>} : vector<8x16xf32>, vector<16x32xf32>, vector<8x32xf32> -> vector<8x32xf32>
    %567 = arith.addf %547, %566 : vector<8x32xf32>
    %568 = arith.addf %465, %567 : vector<8x32xf32>
    %569 = vector.extract_strided_slice %332 {offsets = [1, 0], sizes = [1, 32], strides = [1, 1]} : vector<3x32xf32> to vector<1x32xf32>
    %570 = vector.shape_cast %569 : vector<1x32xf32> to vector<32xf32>
    %571 = vector.extract_strided_slice %334 {offsets = [1, 0], sizes = [1, 32], strides = [1, 1]} : vector<3x32xf32> to vector<1x32xf32>
    %572 = vector.shape_cast %571 : vector<1x32xf32> to vector<32xf32>
    %cst_186 = arith.constant dense<0.000000e+00> : vector<8xf32>
    %573 = vector.multi_reduction <add>, %568, %cst_186 [1] : vector<8x32xf32> to vector<8xf32>
    %574 = vector.shape_cast %573 : vector<8xf32> to vector<8x1xf32>
    %cst_187 = arith.constant 3.200000e+01 : f32
    %575 = vector.broadcast %cst_187 : f32 to vector<8x1xf32>
    %576 = arith.divf %574, %575 : vector<8x1xf32>
    %577 = vector.broadcast %576 : vector<8x1xf32> to vector<8x32xf32>
    %578 = arith.subf %568, %577 : vector<8x32xf32>
    %579 = arith.mulf %578, %578 : vector<8x32xf32>
    %cst_188 = arith.constant dense<0.000000e+00> : vector<8xf32>
    %580 = vector.multi_reduction <add>, %579, %cst_188 [1] : vector<8x32xf32> to vector<8xf32>
    %581 = vector.shape_cast %580 : vector<8xf32> to vector<8x1xf32>
    %cst_189 = arith.constant 3.200000e+01 : f32
    %582 = vector.broadcast %cst_189 : f32 to vector<8x1xf32>
    %583 = arith.divf %581, %582 : vector<8x1xf32>
    %584 = vector.broadcast %576 : vector<8x1xf32> to vector<8x32xf32>
    %585 = arith.subf %568, %584 : vector<8x32xf32>
    %cst_190 = arith.constant 9.99999974E-6 : f32
    %586 = vector.broadcast %cst_190 : f32 to vector<8x1xf32>
    %587 = arith.addf %583, %586 : vector<8x1xf32>
    %588 = math.rsqrt %587 : vector<8x1xf32>
    %589 = vector.broadcast %588 : vector<8x1xf32> to vector<8x32xf32>
    %590 = arith.mulf %585, %589 : vector<8x32xf32>
    %591 = vector.shape_cast %570 : vector<32xf32> to vector<1x32xf32>
    %592 = vector.broadcast %591 : vector<1x32xf32> to vector<8x32xf32>
    %593 = arith.mulf %590, %592 : vector<8x32xf32>
    %594 = vector.shape_cast %572 : vector<32xf32> to vector<1x32xf32>
    %595 = vector.broadcast %594 : vector<1x32xf32> to vector<8x32xf32>
    %596 = arith.addf %593, %595 : vector<8x32xf32>
    %c1_191 = arith.constant 1 : index
    %c0_192 = arith.constant 0 : index
    %c0_193 = arith.constant 0 : index
    %597 = vector.load %arg7[%c1_191, %c0_192, %c0_193] : memref<2x32x64xf32, #tpu.memory_space<vmem>>, vector<1x32x64xf32>
    %598 = vector.shape_cast %597 : vector<1x32x64xf32> to vector<32x64xf32>
    %cst_194 = arith.constant dense<0.000000e+00> : vector<8x64xf32>
    %599 = tpu.matmul %596, %598, %cst_194 {dimension_numbers = #tpu.dot_dimension_numbers<[1], [0], [0], [1], [0, 0, 1, 1], [], []>} : vector<8x32xf32>, vector<32x64xf32>, vector<8x64xf32> -> vector<8x64xf32>
    %c1_195 = arith.constant 1 : index
    %c0_196 = arith.constant 0 : index
    %c0_197 = arith.constant 0 : index
    %600 = vector.load %arg8[%c1_195, %c0_196, %c0_197] : memref<2x1x64xf32, #tpu.memory_space<vmem>>, vector<1x1x64xf32>
    %601 = vector.shape_cast %600 : vector<1x1x64xf32> to vector<1x64xf32>
    %602 = vector.broadcast %601 : vector<1x64xf32> to vector<8x64xf32>
    %603 = arith.addf %599, %602 : vector<8x64xf32>
    %cst_198 = arith.constant 0.000000e+00 : f32
    %604 = vector.broadcast %cst_198 : f32 to vector<8x64xf32>
    %605 = arith.maximumf %603, %604 : vector<8x64xf32>
    %c1_199 = arith.constant 1 : index
    %c0_200 = arith.constant 0 : index
    %c0_201 = arith.constant 0 : index
    %606 = vector.load %arg9[%c1_199, %c0_200, %c0_201] : memref<2x64x32xf32, #tpu.memory_space<vmem>>, vector<1x64x32xf32>
    %607 = vector.shape_cast %606 : vector<1x64x32xf32> to vector<64x32xf32>
    %cst_202 = arith.constant dense<0.000000e+00> : vector<8x32xf32>
    %608 = tpu.matmul %605, %607, %cst_202 {dimension_numbers = #tpu.dot_dimension_numbers<[1], [0], [0], [1], [0, 0, 1, 1], [], []>} : vector<8x64xf32>, vector<64x32xf32>, vector<8x32xf32> -> vector<8x32xf32>
    %c1_203 = arith.constant 1 : index
    %c0_204 = arith.constant 0 : index
    %c0_205 = arith.constant 0 : index
    %609 = vector.load %arg10[%c1_203, %c0_204, %c0_205] : memref<2x1x32xf32, #tpu.memory_space<vmem>>, vector<1x1x32xf32>
    %610 = vector.shape_cast %609 : vector<1x1x32xf32> to vector<1x32xf32>
    %611 = vector.broadcast %610 : vector<1x32xf32> to vector<8x32xf32>
    %612 = arith.addf %608, %611 : vector<8x32xf32>
    %613 = arith.addf %596, %612 : vector<8x32xf32>
    %614 = vector.extract_strided_slice %332 {offsets = [2, 0], sizes = [1, 32], strides = [1, 1]} : vector<3x32xf32> to vector<1x32xf32>
    %615 = vector.shape_cast %614 : vector<1x32xf32> to vector<32xf32>
    %616 = vector.extract_strided_slice %334 {offsets = [2, 0], sizes = [1, 32], strides = [1, 1]} : vector<3x32xf32> to vector<1x32xf32>
    %617 = vector.shape_cast %616 : vector<1x32xf32> to vector<32xf32>
    %cst_206 = arith.constant dense<0.000000e+00> : vector<8xf32>
    %618 = vector.multi_reduction <add>, %613, %cst_206 [1] : vector<8x32xf32> to vector<8xf32>
    %619 = vector.shape_cast %618 : vector<8xf32> to vector<8x1xf32>
    %cst_207 = arith.constant 3.200000e+01 : f32
    %620 = vector.broadcast %cst_207 : f32 to vector<8x1xf32>
    %621 = arith.divf %619, %620 : vector<8x1xf32>
    %622 = vector.broadcast %621 : vector<8x1xf32> to vector<8x32xf32>
    %623 = arith.subf %613, %622 : vector<8x32xf32>
    %624 = arith.mulf %623, %623 : vector<8x32xf32>
    %cst_208 = arith.constant dense<0.000000e+00> : vector<8xf32>
    %625 = vector.multi_reduction <add>, %624, %cst_208 [1] : vector<8x32xf32> to vector<8xf32>
    %626 = vector.shape_cast %625 : vector<8xf32> to vector<8x1xf32>
    %cst_209 = arith.constant 3.200000e+01 : f32
    %627 = vector.broadcast %cst_209 : f32 to vector<8x1xf32>
    %628 = arith.divf %626, %627 : vector<8x1xf32>
    %629 = vector.broadcast %621 : vector<8x1xf32> to vector<8x32xf32>
    %630 = arith.subf %613, %629 : vector<8x32xf32>
    %cst_210 = arith.constant 9.99999974E-6 : f32
    %631 = vector.broadcast %cst_210 : f32 to vector<8x1xf32>
    %632 = arith.addf %628, %631 : vector<8x1xf32>
    %633 = math.rsqrt %632 : vector<8x1xf32>
    %634 = vector.broadcast %633 : vector<8x1xf32> to vector<8x32xf32>
    %635 = arith.mulf %630, %634 : vector<8x32xf32>
    %636 = vector.shape_cast %615 : vector<32xf32> to vector<1x32xf32>
    %637 = vector.broadcast %636 : vector<1x32xf32> to vector<8x32xf32>
    %638 = arith.mulf %635, %637 : vector<8x32xf32>
    %639 = vector.shape_cast %617 : vector<32xf32> to vector<1x32xf32>
    %640 = vector.broadcast %639 : vector<1x32xf32> to vector<8x32xf32>
    %641 = arith.addf %638, %640 : vector<8x32xf32>
    %c0_211 = arith.constant 0 : index
    %c0_212 = arith.constant 0 : index
    %642 = vector.load %arg13[%c0_211, %c0_212] : memref<1x32xf32, #tpu.memory_space<vmem>>, vector<1x32xf32>
    %643 = vector.shape_cast %642 : vector<1x32xf32> to vector<32xf32>
    %c0_213 = arith.constant 0 : index
    %c0_214 = arith.constant 0 : index
    %644 = vector.load %arg14[%c0_213, %c0_214] : memref<1x32xf32, #tpu.memory_space<vmem>>, vector<1x32xf32>
    %645 = vector.shape_cast %644 : vector<1x32xf32> to vector<32xf32>
    %cst_215 = arith.constant dense<0.000000e+00> : vector<8xf32>
    %646 = vector.multi_reduction <add>, %641, %cst_215 [1] : vector<8x32xf32> to vector<8xf32>
    %647 = vector.shape_cast %646 : vector<8xf32> to vector<8x1xf32>
    %cst_216 = arith.constant 3.200000e+01 : f32
    %648 = vector.broadcast %cst_216 : f32 to vector<8x1xf32>
    %649 = arith.divf %647, %648 : vector<8x1xf32>
    %650 = vector.broadcast %649 : vector<8x1xf32> to vector<8x32xf32>
    %651 = arith.subf %641, %650 : vector<8x32xf32>
    %652 = arith.mulf %651, %651 : vector<8x32xf32>
    %cst_217 = arith.constant dense<0.000000e+00> : vector<8xf32>
    %653 = vector.multi_reduction <add>, %652, %cst_217 [1] : vector<8x32xf32> to vector<8xf32>
    %654 = vector.shape_cast %653 : vector<8xf32> to vector<8x1xf32>
    %cst_218 = arith.constant 3.200000e+01 : f32
    %655 = vector.broadcast %cst_218 : f32 to vector<8x1xf32>
    %656 = arith.divf %654, %655 : vector<8x1xf32>
    %657 = vector.broadcast %649 : vector<8x1xf32> to vector<8x32xf32>
    %658 = arith.subf %641, %657 : vector<8x32xf32>
    %cst_219 = arith.constant 9.99999974E-6 : f32
    %659 = vector.broadcast %cst_219 : f32 to vector<8x1xf32>
    %660 = arith.addf %656, %659 : vector<8x1xf32>
    %661 = math.rsqrt %660 : vector<8x1xf32>
    %662 = vector.broadcast %661 : vector<8x1xf32> to vector<8x32xf32>
    %663 = arith.mulf %658, %662 : vector<8x32xf32>
    %664 = vector.shape_cast %643 : vector<32xf32> to vector<1x32xf32>
    %665 = vector.broadcast %664 : vector<1x32xf32> to vector<8x32xf32>
    %666 = arith.mulf %663, %665 : vector<8x32xf32>
    %667 = vector.shape_cast %645 : vector<32xf32> to vector<1x32xf32>
    %668 = vector.broadcast %667 : vector<1x32xf32> to vector<8x32xf32>
    %669 = arith.addf %666, %668 : vector<8x32xf32>
    %c0_220 = arith.constant 0 : index
    %c0_221 = arith.constant 0 : index
    %c0_222 = arith.constant 0 : index
    %670 = vector.load %arg15[%c0_220, %c0_221, %c0_222] : memref<1x8x32xf32, #tpu.memory_space<vmem>>, vector<1x8x32xf32>
    %671 = vector.shape_cast %670 : vector<1x8x32xf32> to vector<8x32xf32>
    %672 = vector.shape_cast %669 : vector<8x32xf32> to vector<1x8x32xf32>
    tpu.vector_store %arg15[%c0_220, %c0_221, %c0_222], %672 {strides = array<i32>} : memref<1x8x32xf32, #tpu.memory_space<vmem>>, vector<1x8x32xf32>,
    return
  }
  func.func @transform_0(%arg0: i32) -> (i32, i32, i32) {
    %c0_i32 = arith.constant 0 : i32
    %c0_i32_0 = arith.constant 0 : i32
    %c0_i32_1 = arith.constant 0 : i32
    return %arg0, %c0_i32, %c0_i32_0 : i32, i32, i32
  }
  func.func @transform_1(%arg0: i32) -> (i32, i32, i32) {
    %c0_i32 = arith.constant 0 : i32
    %c0_i32_0 = arith.constant 0 : i32
    %c0_i32_1 = arith.constant 0 : i32
    return %arg0, %c0_i32, %c0_i32_0 : i32, i32, i32
  }
  func.func @transform_2(%arg0: i32) -> (i32, i32, i32, i32) {
    %c0_i32 = arith.constant 0 : i32
    %c0_i32_0 = arith.constant 0 : i32
    %c0_i32_1 = arith.constant 0 : i32
    %c0_i32_2 = arith.constant 0 : i32
    %c0_i32_3 = arith.constant 0 : i32
    return %c0_i32, %c0_i32_0, %c0_i32_1, %c0_i32_2 : i32, i32, i32, i32
  }
  func.func @transform_3(%arg0: i32) -> (i32, i32, i32) {
    %c0_i32 = arith.constant 0 : i32
    %c0_i32_0 = arith.constant 0 : i32
    %c0_i32_1 = arith.constant 0 : i32
    %c0_i32_2 = arith.constant 0 : i32
    return %c0_i32, %c0_i32_0, %c0_i32_1 : i32, i32, i32
  }
  func.func @transform_4(%arg0: i32) -> (i32, i32, i32, i32) {
    %c0_i32 = arith.constant 0 : i32
    %c0_i32_0 = arith.constant 0 : i32
    %c0_i32_1 = arith.constant 0 : i32
    %c0_i32_2 = arith.constant 0 : i32
    %c0_i32_3 = arith.constant 0 : i32
    return %c0_i32, %c0_i32_0, %c0_i32_1, %c0_i32_2 : i32, i32, i32, i32
  }
  func.func @transform_5(%arg0: i32) -> (i32, i32, i32) {
    %c0_i32 = arith.constant 0 : i32
    %c0_i32_0 = arith.constant 0 : i32
    %c0_i32_1 = arith.constant 0 : i32
    %c0_i32_2 = arith.constant 0 : i32
    return %c0_i32, %c0_i32_0, %c0_i32_1 : i32, i32, i32
  }
  func.func @transform_6(%arg0: i32) -> (i32, i32, i32) {
    %c0_i32 = arith.constant 0 : i32
    %c0_i32_0 = arith.constant 0 : i32
    %c0_i32_1 = arith.constant 0 : i32
    %c0_i32_2 = arith.constant 0 : i32
    return %c0_i32, %c0_i32_0, %c0_i32_1 : i32, i32, i32
  }
  func.func @transform_7(%arg0: i32) -> (i32, i32, i32) {
    %c0_i32 = arith.constant 0 : i32
    %c0_i32_0 = arith.constant 0 : i32
    %c0_i32_1 = arith.constant 0 : i32
    %c0_i32_2 = arith.constant 0 : i32
    return %c0_i32, %c0_i32_0, %c0_i32_1 : i32, i32, i32
  }
  func.func @transform_8(%arg0: i32) -> (i32, i32, i32) {
    %c0_i32 = arith.constant 0 : i32
    %c0_i32_0 = arith.constant 0 : i32
    %c0_i32_1 = arith.constant 0 : i32
    %c0_i32_2 = arith.constant 0 : i32
    return %c0_i32, %c0_i32_0, %c0_i32_1 : i32, i32, i32
  }
  func.func @transform_9(%arg0: i32) -> (i32, i32, i32) {
    %c0_i32 = arith.constant 0 : i32
    %c0_i32_0 = arith.constant 0 : i32
    %c0_i32_1 = arith.constant 0 : i32
    %c0_i32_2 = arith.constant 0 : i32
    return %c0_i32, %c0_i32_0, %c0_i32_1 : i32, i32, i32
  }
  func.func @transform_10(%arg0: i32) -> (i32, i32, i32) {
    %c0_i32 = arith.constant 0 : i32
    %c0_i32_0 = arith.constant 0 : i32
    %c0_i32_1 = arith.constant 0 : i32
    %c0_i32_2 = arith.constant 0 : i32
    return %c0_i32, %c0_i32_0, %c0_i32_1 : i32, i32, i32
  }
  func.func @transform_11(%arg0: i32) -> (i32, i32, i32) {
    %c0_i32 = arith.constant 0 : i32
    %c0_i32_0 = arith.constant 0 : i32
    %c0_i32_1 = arith.constant 0 : i32
    %c0_i32_2 = arith.constant 0 : i32
    return %c0_i32, %c0_i32_0, %c0_i32_1 : i32, i32, i32
  }
  func.func @transform_12(%arg0: i32) -> (i32, i32) {
    %c0_i32 = arith.constant 0 : i32
    %c0_i32_0 = arith.constant 0 : i32
    %c0_i32_1 = arith.constant 0 : i32
    return %c0_i32, %c0_i32_0 : i32, i32
  }
  func.func @transform_13(%arg0: i32) -> (i32, i32) {
    %c0_i32 = arith.constant 0 : i32
    %c0_i32_0 = arith.constant 0 : i32
    %c0_i32_1 = arith.constant 0 : i32
    return %c0_i32, %c0_i32_0 : i32, i32
  }
  func.func @transform_14(%arg0: i32) -> (i32, i32, i32) {
    %c0_i32 = arith.constant 0 : i32
    %c0_i32_0 = arith.constant 0 : i32
    %c0_i32_1 = arith.constant 0 : i32
    return %arg0, %c0_i32, %c0_i32_0 : i32, i32, i32
  }
}

</mosaic_0001>

<llo_original>
// kernel: tpu_custom_call.1
$region0: #{tpu_custom_call.1}
  #allocation0 [shape = 'u32[]', space=smem, size = 0x4, offset = 0x4, fixed_abs, tag = 'smem constant byte address 0x4 - core index']
  #allocation1 [shape = 'u32[144,128]{1,0:T(1,128)}', space=vmem, size = 0x12000, scoped, tag = 'internal scratch']
  %s0 = inlined_call_operand.vmem [shape: f32[2,8,32], index: 0, kind: input, shape index: {}]
  %s1 = inlined_call_operand.vmem [shape: f32[2,16,32], index: 1, kind: input, shape index: {}]
  %s2 = inlined_call_operand.hbm [shape: f32[2,4,32,32], index: 2, kind: input, shape index: {}]
  %s3 = inlined_call_operand.vmem [shape: f32[2,4,32], index: 3, kind: input, shape index: {}]
  %s4 = inlined_call_operand.hbm [shape: f32[2,8,32,32], index: 4, kind: input, shape index: {}]
  %s5 = inlined_call_operand.vmem [shape: f32[2,2,32], index: 5, kind: input, shape index: {}]
  %s6 = inlined_call_operand.vmem [shape: f32[2,32,64], index: 6, kind: input, shape index: {}]
  %s7 = inlined_call_operand.vmem [shape: f32[2,1,64], index: 7, kind: input, shape index: {}]
  %s8 = inlined_call_operand.vmem [shape: f32[2,64,32], index: 8, kind: input, shape index: {}]
  %s9 = inlined_call_operand.vmem [shape: f32[2,1,32], index: 9, kind: input, shape index: {}]
  %s10 = inlined_call_operand.vmem [shape: f32[2,3,32], index: 10, kind: input, shape index: {}]
  %s11 = inlined_call_operand.vmem [shape: f32[2,3,32], index: 11, kind: input, shape index: {}]
  %s12 = inlined_call_operand.vmem [shape: f32[1,32], index: 12, kind: input, shape index: {}]
  %s13 = inlined_call_operand.vmem [shape: f32[1,32], index: 13, kind: input, shape index: {}]
  %s14 = inlined_call_operand.hbm [shape: f32[2,8,32], index: 14, kind: output, shape index: {}]
  %s15 = sld [smem:[#allocation0]]
  $region97: #{tpu_custom_call.1} parent=0
    _
  %s17 = ssub.s32 1, %s15
  %s18 = scalar_select 0, %s17, %s15
  $region1: #{tpu_custom_call.1} parent=0
    #allocation2 [shape = 'u8[131072]{0}', space=vmem, size = 0x20000, scoped, tag = 'input window, operand 2, single buffered']
    #allocation3 [shape = 's32[2]{0}', space=sflag, size = 0x8, scoped, tag = 'scoped memory for tpu_custom_call.1']
    #allocation4 [shape = 's32[2]{0}', space=sflag, size = 0x8, scoped, tag = 'scoped memory for tpu_custom_call.1']
    #allocation5 [shape = 'u8[262144]{0}', space=vmem, size = 0x40000, scoped, tag = 'input window, operand 4, single buffered']
    #allocation6 [shape = 's32[1]{0}', space=sflag, size = 0x4, scoped, tag = 'scoped memory for tpu_custom_call.1']
    #allocation7 [shape = 'u8[8192]{0}', space=vmem, size = 0x2000, scoped, tag = 'output window, operand 0']
    %19 = vsyncpa [#allocation3], 0
    %20 = vsyncpa [#allocation6], 0
    %21 = vsyncpa [#allocation4], 0
    %s22 = scalar_lea.sflag [#allocation4], 1
    %23 = vsyncpa %s22, 0
    loop: start=0, step=1, limit=4
    $region2: #{tpu_custom_call.1} parent=1 // loop_pre_header
      _
    $region3: #{tpu_custom_call.1} parent=1 // loop_header
      %s25 = sphi 0, %s29
      %p26 = scmp.ge.s32.totalorder %s25, 4
      %s35 = sphi 0, %s37
      %s38 = sphi 0, %s35
      %s39 = sphi 0, %s38
      %s55 = sphi 0, %s39
      %s61 = sphi 0, %s63
      %s64 = sphi 0, %s61
      %s65 = sphi 0, %s64
      %s81 = sphi 0, %s65
      %s85 = sphi 0, %s85
      %s87 = sphi 0, %s85
      %s88 = sphi 0, %s87
      %s102 = sphi 0, %s88
      %s106 = sphi 0, %s106
      %s108 = sphi 0, %s106
      %s109 = sphi 0, %s108
      %s123 = sphi 0, %s109
      %s127 = sphi 0, %s127
      %s129 = sphi 0, %s127
      %s130 = sphi 0, %s129
      %s144 = sphi 0, %s130
      %s148 = sphi 0, %s148
      %s150 = sphi 0, %s148
      %s151 = sphi 0, %s150
      %s165 = sphi 0, %s151
      %s169 = sphi 0, %s169
      %s171 = sphi 0, %s169
      %s172 = sphi 0, %s171
      %s186 = sphi 0, %s172
      %s190 = sphi 0, %s190
      %s192 = sphi 0, %s190
      %s193 = sphi 0, %s192
      %s207 = sphi 0, %s193
      %s211 = sphi 0, %s211
      %s213 = sphi 0, %s211
      %s214 = sphi 0, %s213
      %s228 = sphi 0, %s214
      %s232 = sphi 0, %s232
      %s234 = sphi 0, %s232
      %s235 = sphi 0, %s234
      %s249 = sphi 0, %s235
      %s253 = sphi 0, %s253
      %s255 = sphi 0, %s253
      %s256 = sphi 0, %s255
      %s270 = sphi 0, %s256
      %s274 = sphi 0, %s274
      %s276 = sphi 0, %s274
      %s277 = sphi 0, %s276
      %s291 = sphi 0, %s277
      %s295 = sphi 0, %s295
      %s297 = sphi 0, %s295
      %s298 = sphi 0, %s297
      %s312 = sphi 0, %s298
      %s316 = sphi 0, %s316
      %s318 = sphi 0, %s316
      %s319 = sphi 0, %s318
      %s333 = sphi 0, %s319
      %s339 = sphi 0, %s341
      %s342 = sphi 0, %s339
      %s343 = sphi 0, %s342
      %s359 = sphi 0, %s343
    $region4: #{tpu_custom_call.1} parent=1 // loop_header_branch
      %28 = sbr.rel (%p26) target = $region8
    $region5: #{tpu_custom_call.1} parent=1 // loop_body
      %s30 = ssub.s32 %s25, 1
      %s31 = ssub.s32 %s25, 2
      %s32 = sadd.s32 %s25, 1
      %s33 = ssub.s32 %s25, %s32
      %p34 = scmp.eq.s32.totalorder %s33, 0
      %s36 = sadd.s32 %s35, 1
      %s37 = scalar_select %p34, %s35, %s36
      %p40 = pneg %p34
      %p41 = scmp.eq.s32.totalorder %s25, 1
      %p42 = por %p40, %p41
      %p43 = scmp.ne.s32.totalorder %s35, %s38
      %p44 = scmp.eq.s32.totalorder %s25, 0
      %p45 = por %p43, %p44
      %p46 = scmp.ne.s32.totalorder %s35, %s38
      %p47 = scmp.eq.s32.totalorder %s30, 1
      %p48 = por %p46, %p47
      %p49 = scmp.ne.s32.totalorder %s38, %s39
      %p50 = scmp.eq.s32.totalorder %s30, 0
      %p51 = por %p49, %p50
      %p52 = scmp.ne.s32.totalorder %s38, %s39
      %p53 = scmp.eq.s32.totalorder %s31, 1
      %p54 = por %p52, %p53
      %p56 = scmp.ne.s32.totalorder %s39, %s55
      %p57 = scmp.eq.s32.totalorder %s31, 0
      %p58 = por %p56, %p57
      %s59 = ssub.s32 %s25, %s32
      %p60 = scmp.eq.s32.totalorder %s59, 0
      %s62 = sadd.s32 %s61, 1
      %s63 = scalar_select %p60, %s61, %s62
      %p66 = pneg %p60
      %p67 = scmp.eq.s32.totalorder %s25, 1
      %p68 = por %p66, %p67
      %p69 = scmp.ne.s32.totalorder %s61, %s64
      %p70 = scmp.eq.s32.totalorder %s25, 0
      %p71 = por %p69, %p70
      %p72 = scmp.ne.s32.totalorder %s61, %s64
      %p73 = scmp.eq.s32.totalorder %s30, 1
      %p74 = por %p72, %p73
      %p75 = scmp.ne.s32.totalorder %s64, %s65
      %p76 = scmp.eq.s32.totalorder %s30, 0
      %p77 = por %p75, %p76
      %p78 = scmp.ne.s32.totalorder %s64, %s65
      %p79 = scmp.eq.s32.totalorder %s31, 1
      %p80 = por %p78, %p79
      %p82 = scmp.ne.s32.totalorder %s65, %s81
      %p83 = scmp.eq.s32.totalorder %s31, 0
      %p84 = por %p82, %p83
      %s86 = sadd.s32 %s85, 1
      %p89 = scmp.eq.s32.totalorder %s25, 1
      %p90 = scmp.ne.s32.totalorder %s85, %s87
      %p91 = scmp.eq.s32.totalorder %s25, 0
      %p92 = por %p90, %p91
      %p93 = scmp.ne.s32.totalorder %s85, %s87
      %p94 = scmp.eq.s32.totalorder %s30, 1
      %p95 = por %p93, %p94
      %p96 = scmp.ne.s32.totalorder %s87, %s88
      %p97 = scmp.eq.s32.totalorder %s30, 0
      %p98 = por %p96, %p97
      %p99 = scmp.ne.s32.totalorder %s87, %s88
      %p100 = scmp.eq.s32.totalorder %s31, 1
      %p101 = por %p99, %p100
      %p103 = scmp.ne.s32.totalorder %s88, %s102
      %p104 = scmp.eq.s32.totalorder %s31, 0
      %p105 = por %p103, %p104
      %s107 = sadd.s32 %s106, 1
      %p110 = scmp.eq.s32.totalorder %s25, 1
      %p111 = scmp.ne.s32.totalorder %s106, %s108
      %p112 = scmp.eq.s32.totalorder %s25, 0
      %p113 = por %p111, %p112
      %p114 = scmp.ne.s32.totalorder %s106, %s108
      %p115 = scmp.eq.s32.totalorder %s30, 1
      %p116 = por %p114, %p115
      %p117 = scmp.ne.s32.totalorder %s108, %s109
      %p118 = scmp.eq.s32.totalorder %s30, 0
      %p119 = por %p117, %p118
      %p120 = scmp.ne.s32.totalorder %s108, %s109
      %p121 = scmp.eq.s32.totalorder %s31, 1
      %p122 = por %p120, %p121
      %p124 = scmp.ne.s32.totalorder %s109, %s123
      %p125 = scmp.eq.s32.totalorder %s31, 0
      %p126 = por %p124, %p125
      %s128 = sadd.s32 %s127, 1
      %p131 = scmp.eq.s32.totalorder %s25, 1
      %p132 = scmp.ne.s32.totalorder %s127, %s129
      %p133 = scmp.eq.s32.totalorder %s25, 0
      %p134 = por %p132, %p133
      %p135 = scmp.ne.s32.totalorder %s127, %s129
      %p136 = scmp.eq.s32.totalorder %s30, 1
      %p137 = por %p135, %p136
      %p138 = scmp.ne.s32.totalorder %s129, %s130
      %p139 = scmp.eq.s32.totalorder %s30, 0
      %p140 = por %p138, %p139
      %p141 = scmp.ne.s32.totalorder %s129, %s130
      %p142 = scmp.eq.s32.totalorder %s31, 1
      %p143 = por %p141, %p142
      %p145 = scmp.ne.s32.totalorder %s130, %s144
      %p146 = scmp.eq.s32.totalorder %s31, 0
      %p147 = por %p145, %p146
      %s149 = sadd.s32 %s148, 1
      %p152 = scmp.eq.s32.totalorder %s25, 1
      %p153 = scmp.ne.s32.totalorder %s148, %s150
      %p154 = scmp.eq.s32.totalorder %s25, 0
      %p155 = por %p153, %p154
      %p156 = scmp.ne.s32.totalorder %s148, %s150
      %p157 = scmp.eq.s32.totalorder %s30, 1
      %p158 = por %p156, %p157
      %p159 = scmp.ne.s32.totalorder %s150, %s151
      %p160 = scmp.eq.s32.totalorder %s30, 0
      %p161 = por %p159, %p160
      %p162 = scmp.ne.s32.totalorder %s150, %s151
      %p163 = scmp.eq.s32.totalorder %s31, 1
      %p164 = por %p162, %p163
      %p166 = scmp.ne.s32.totalorder %s151, %s165
      %p167 = scmp.eq.s32.totalorder %s31, 0
      %p168 = por %p166, %p167
      %s170 = sadd.s32 %s169, 1
      %p173 = scmp.eq.s32.totalorder %s25, 1
      %p174 = scmp.ne.s32.totalorder %s169, %s171
      %p175 = scmp.eq.s32.totalorder %s25, 0
      %p176 = por %p174, %p175
      %p177 = scmp.ne.s32.totalorder %s169, %s171
      %p178 = scmp.eq.s32.totalorder %s30, 1
      %p179 = por %p177, %p178
      %p180 = scmp.ne.s32.totalorder %s171, %s172
      %p181 = scmp.eq.s32.totalorder %s30, 0
      %p182 = por %p180, %p181
      %p183 = scmp.ne.s32.totalorder %s171, %s172
      %p184 = scmp.eq.s32.totalorder %s31, 1
      %p185 = por %p183, %p184
      %p187 = scmp.ne.s32.totalorder %s172, %s186
      %p188 = scmp.eq.s32.totalorder %s31, 0
      %p189 = por %p187, %p188
      %s191 = sadd.s32 %s190, 1
      %p194 = scmp.eq.s32.totalorder %s25, 1
      %p195 = scmp.ne.s32.totalorder %s190, %s192
      %p196 = scmp.eq.s32.totalorder %s25, 0
      %p197 = por %p195, %p196
      %p198 = scmp.ne.s32.totalorder %s190, %s192
      %p199 = scmp.eq.s32.totalorder %s30, 1
      %p200 = por %p198, %p199
      %p201 = scmp.ne.s32.totalorder %s192, %s193
      %p202 = scmp.eq.s32.totalorder %s30, 0
      %p203 = por %p201, %p202
      %p204 = scmp.ne.s32.totalorder %s192, %s193
      %p205 = scmp.eq.s32.totalorder %s31, 1
      %p206 = por %p204, %p205
      %p208 = scmp.ne.s32.totalorder %s193, %s207
      %p209 = scmp.eq.s32.totalorder %s31, 0
      %p210 = por %p208, %p209
      %s212 = sadd.s32 %s211, 1
      %p215 = scmp.eq.s32.totalorder %s25, 1
      %p216 = scmp.ne.s32.totalorder %s211, %s213
      %p217 = scmp.eq.s32.totalorder %s25, 0
      %p218 = por %p216, %p217
      %p219 = scmp.ne.s32.totalorder %s211, %s213
      %p220 = scmp.eq.s32.totalorder %s30, 1
      %p221 = por %p219, %p220
      %p222 = scmp.ne.s32.totalorder %s213, %s214
      %p223 = scmp.eq.s32.totalorder %s30, 0
      %p224 = por %p222, %p223
      %p225 = scmp.ne.s32.totalorder %s213, %s214
      %p226 = scmp.eq.s32.totalorder %s31, 1
      %p227 = por %p225, %p226
      %p229 = scmp.ne.s32.totalorder %s214, %s228
      %p230 = scmp.eq.s32.totalorder %s31, 0
      %p231 = por %p229, %p230
      %s233 = sadd.s32 %s232, 1
      %p236 = scmp.eq.s32.totalorder %s25, 1
      %p237 = scmp.ne.s32.totalorder %s232, %s234
      %p238 = scmp.eq.s32.totalorder %s25, 0
      %p239 = por %p237, %p238
      %p240 = scmp.ne.s32.totalorder %s232, %s234
      %p241 = scmp.eq.s32.totalorder %s30, 1
      %p242 = por %p240, %p241
      %p243 = scmp.ne.s32.totalorder %s234, %s235
      %p244 = scmp.eq.s32.totalorder %s30, 0
      %p245 = por %p243, %p244
      %p246 = scmp.ne.s32.totalorder %s234, %s235
      %p247 = scmp.eq.s32.totalorder %s31, 1
      %p248 = por %p246, %p247
      %p250 = scmp.ne.s32.totalorder %s235, %s249
      %p251 = scmp.eq.s32.totalorder %s31, 0
      %p252 = por %p250, %p251
      %s254 = sadd.s32 %s253, 1
      %p257 = scmp.eq.s32.totalorder %s25, 1
      %p258 = scmp.ne.s32.totalorder %s253, %s255
      %p259 = scmp.eq.s32.totalorder %s25, 0
      %p260 = por %p258, %p259
      %p261 = scmp.ne.s32.totalorder %s253, %s255
      %p262 = scmp.eq.s32.totalorder %s30, 1
      %p263 = por %p261, %p262
      %p264 = scmp.ne.s32.totalorder %s255, %s256
      %p265 = scmp.eq.s32.totalorder %s30, 0
      %p266 = por %p264, %p265
      %p267 = scmp.ne.s32.totalorder %s255, %s256
      %p268 = scmp.eq.s32.totalorder %s31, 1
      %p269 = por %p267, %p268
      %p271 = scmp.ne.s32.totalorder %s256, %s270
      %p272 = scmp.eq.s32.totalorder %s31, 0
      %p273 = por %p271, %p272
      %s275 = sadd.s32 %s274, 1
      %p278 = scmp.eq.s32.totalorder %s25, 1
      %p279 = scmp.ne.s32.totalorder %s274, %s276
      %p280 = scmp.eq.s32.totalorder %s25, 0
      %p281 = por %p279, %p280
      %p282 = scmp.ne.s32.totalorder %s274, %s276
      %p283 = scmp.eq.s32.totalorder %s30, 1
      %p284 = por %p282, %p283
      %p285 = scmp.ne.s32.totalorder %s276, %s277
      %p286 = scmp.eq.s32.totalorder %s30, 0
      %p287 = por %p285, %p286
      %p288 = scmp.ne.s32.totalorder %s276, %s277
      %p289 = scmp.eq.s32.totalorder %s31, 1
      %p290 = por %p288, %p289
      %p292 = scmp.ne.s32.totalorder %s277, %s291
      %p293 = scmp.eq.s32.totalorder %s31, 0
      %p294 = por %p292, %p293
      %s296 = sadd.s32 %s295, 1
      %p299 = scmp.eq.s32.totalorder %s25, 1
      %p300 = scmp.ne.s32.totalorder %s295, %s297
      %p301 = scmp.eq.s32.totalorder %s25, 0
      %p302 = por %p300, %p301
      %p303 = scmp.ne.s32.totalorder %s295, %s297
      %p304 = scmp.eq.s32.totalorder %s30, 1
      %p305 = por %p303, %p304
      %p306 = scmp.ne.s32.totalorder %s297, %s298
      %p307 = scmp.eq.s32.totalorder %s30, 0
      %p308 = por %p306, %p307
      %p309 = scmp.ne.s32.totalorder %s297, %s298
      %p310 = scmp.eq.s32.totalorder %s31, 1
      %p311 = por %p309, %p310
      %p313 = scmp.ne.s32.totalorder %s298, %s312
      %p314 = scmp.eq.s32.totalorder %s31, 0
      %p315 = por %p313, %p314
      %s317 = sadd.s32 %s316, 1
      %p320 = scmp.eq.s32.totalorder %s25, 1
      %p321 = scmp.ne.s32.totalorder %s316, %s318
      %p322 = scmp.eq.s32.totalorder %s25, 0
      %p323 = por %p321, %p322
      %p324 = scmp.ne.s32.totalorder %s316, %s318
      %p325 = scmp.eq.s32.totalorder %s30, 1
      %p326 = por %p324, %p325
      %p327 = scmp.ne.s32.totalorder %s318, %s319
      %p328 = scmp.eq.s32.totalorder %s30, 0
      %p329 = por %p327, %p328
      %p330 = scmp.ne.s32.totalorder %s318, %s319
      %p331 = scmp.eq.s32.totalorder %s31, 1
      %p332 = por %p330, %p331
      %p334 = scmp.ne.s32.totalorder %s319, %s333
      %p335 = scmp.eq.s32.totalorder %s31, 0
      %p336 = por %p334, %p335
      %s337 = ssub.s32 %s25, %s32
      %p338 = scmp.eq.s32.totalorder %s337, 0
      %s340 = sadd.s32 %s339, 1
      %s341 = scalar_select %p338, %s339, %s340
      %p344 = pneg %p338
      %p345 = scmp.eq.s32.totalorder %s25, 1
      %p346 = por %p344, %p345
      %p347 = scmp.ne.s32.totalorder %s339, %s342
      %p348 = scmp.eq.s32.totalorder %s25, 0
      %p349 = por %p347, %p348
      %p350 = scmp.ne.s32.totalorder %s339, %s342
      %p351 = scmp.eq.s32.totalorder %s30, 1
      %p352 = por %p350, %p351
      %p353 = scmp.ne.s32.totalorder %s342, %s343
      %p354 = scmp.eq.s32.totalorder %s30, 0
      %p355 = por %p353, %p354
      %p356 = scmp.ne.s32.totalorder %s342, %s343
      %p357 = scmp.eq.s32.totalorder %s31, 1
      %p358 = por %p356, %p357
      %p360 = scmp.ne.s32.totalorder %s343, %s359
      %p361 = scmp.eq.s32.totalorder %s31, 0
      %p362 = por %p360, %p361
      %p363 = scmp.le.s32.totalorder 1, %s25
      %p364 = scmp.lt.s32.totalorder %s25, 3
      %p365 = pnand %p363, %p364
      %p366 = pneg %p365
      // Predicated region
      $region9: #{tpu_custom_call.1} parent=5 // pred_check
        _
      $region10: #{tpu_custom_call.1} parent=5 // pred_check_branch
        %368 = sbr.rel (%p365) target = $region12
      $region11: #{tpu_custom_call.1} parent=5 // pred_region
        %s369 = ssub.s32 %s25, 1
        // Predicated region
        $region13: #{tpu_custom_call.1} parent=11 // pred_check
          %p370 = pneg %p98
        $region14: #{tpu_custom_call.1} parent=11 // pred_check_branch
          %372 = sbr.rel (%p370) target = $region16
        $region15: #{tpu_custom_call.1} parent=11 // pred_region
          %s374 = ssub.s32 4096, 4096
          %375 = vsyncadd [#allocation3], %s374
          %s376 = sshll.u32 [#allocation2], 4
          %s377 = int_to_ptr.vmem [resolvable:$true] %s376
          %382 = dma.hbm_to_vmem [thread:$0]  %s2, 4096, %s377, [#allocation3], 128, 128, 8
        $region16: #{tpu_custom_call.1} parent=11 // pred_fallthru
          _
        // Predicated region
        $region17: #{tpu_custom_call.1} parent=11 // pred_check
          %p383 = pneg %p119
        $region18: #{tpu_custom_call.1} parent=11 // pred_check_branch
          %385 = sbr.rel (%p383) target = $region20
        $region19: #{tpu_custom_call.1} parent=11 // pred_region
          _
        $region20: #{tpu_custom_call.1} parent=11 // pred_fallthru
          _
        // Predicated region
        $region21: #{tpu_custom_call.1} parent=11 // pred_check
          %p386 = pneg %p140
        $region22: #{tpu_custom_call.1} parent=11 // pred_check_branch
          %388 = sbr.rel (%p386) target = $region24
        $region23: #{tpu_custom_call.1} parent=11 // pred_region
          %s390 = ssub.s32 8192, 8192
          %391 = vsyncadd [#allocation6], %s390
          %s392 = sshll.u32 [#allocation5], 4
          %s393 = int_to_ptr.vmem [resolvable:$true] %s392
          %398 = dma.hbm_to_vmem [thread:$0]  %s4, 8192, %s393, [#allocation6], 128, 128, 8
        $region24: #{tpu_custom_call.1} parent=11 // pred_fallthru
          _
        // Predicated region
        $region25: #{tpu_custom_call.1} parent=11 // pred_check
          %p399 = pneg %p161
        $region26: #{tpu_custom_call.1} parent=11 // pred_check_branch
          %401 = sbr.rel (%p399) target = $region28
        $region27: #{tpu_custom_call.1} parent=11 // pred_region
          _
        $region28: #{tpu_custom_call.1} parent=11 // pred_fallthru
          _
        // Predicated region
        $region29: #{tpu_custom_call.1} parent=11 // pred_check
          %p402 = pneg %p182
        $region30: #{tpu_custom_call.1} parent=11 // pred_check_branch
          %404 = sbr.rel (%p402) target = $region32
        $region31: #{tpu_custom_call.1} parent=11 // pred_region
          _
        $region32: #{tpu_custom_call.1} parent=11 // pred_fallthru
          _
        // Predicated region
        $region33: #{tpu_custom_call.1} parent=11 // pred_check
          %p405 = pneg %p203
        $region34: #{tpu_custom_call.1} parent=11 // pred_check_branch
          %407 = sbr.rel (%p405) target = $region36
        $region35: #{tpu_custom_call.1} parent=11 // pred_region
          _
        $region36: #{tpu_custom_call.1} parent=11 // pred_fallthru
          _
        // Predicated region
        $region37: #{tpu_custom_call.1} parent=11 // pred_check
          %p408 = pneg %p224
        $region38: #{tpu_custom_call.1} parent=11 // pred_check_branch
          %410 = sbr.rel (%p408) target = $region40
        $region39: #{tpu_custom_call.1} parent=11 // pred_region
          _
        $region40: #{tpu_custom_call.1} parent=11 // pred_fallthru
          _
        // Predicated region
        $region41: #{tpu_custom_call.1} parent=11 // pred_check
          %p411 = pneg %p245
        $region42: #{tpu_custom_call.1} parent=11 // pred_check_branch
          %413 = sbr.rel (%p411) target = $region44
        $region43: #{tpu_custom_call.1} parent=11 // pred_region
          _
        $region44: #{tpu_custom_call.1} parent=11 // pred_fallthru
          _
        // Predicated region
        $region45: #{tpu_custom_call.1} parent=11 // pred_check
          %p414 = pneg %p266
        $region46: #{tpu_custom_call.1} parent=11 // pred_check_branch
          %416 = sbr.rel (%p414) target = $region48
        $region47: #{tpu_custom_call.1} parent=11 // pred_region
          _
        $region48: #{tpu_custom_call.1} parent=11 // pred_fallthru
          _
        // Predicated region
        $region49: #{tpu_custom_call.1} parent=11 // pred_check
          %p417 = pneg %p287
        $region50: #{tpu_custom_call.1} parent=11 // pred_check_branch
          %419 = sbr.rel (%p417) target = $region52
        $region51: #{tpu_custom_call.1} parent=11 // pred_region
          _
        $region52: #{tpu_custom_call.1} parent=11 // pred_fallthru
          _
        // Predicated region
        $region53: #{tpu_custom_call.1} parent=11 // pred_check
          %p420 = pneg %p308
        $region54: #{tpu_custom_call.1} parent=11 // pred_check_branch
          %422 = sbr.rel (%p420) target = $region56
        $region55: #{tpu_custom_call.1} parent=11 // pred_region
          _
        $region56: #{tpu_custom_call.1} parent=11 // pred_fallthru
          _
        // Predicated region
        $region57: #{tpu_custom_call.1} parent=11 // pred_check
          %p423 = pneg %p329
        $region58: #{tpu_custom_call.1} parent=11 // pred_check_branch
          %425 = sbr.rel (%p423) target = $region60
        $region59: #{tpu_custom_call.1} parent=11 // pred_region
          _
        $region60: #{tpu_custom_call.1} parent=11 // pred_fallthru
          _
      $region12: #{tpu_custom_call.1} parent=5 // pred_fallthru
        _
      %p426 = scmp.lt.s32.totalorder %s25, 2
      // Predicated region
      $region61: #{tpu_custom_call.1} parent=5 // pred_check
        %p427 = pneg %p426
      $region62: #{tpu_custom_call.1} parent=5 // pred_check_branch
        %429 = sbr.rel (%p427) target = $region64
      $region63: #{tpu_custom_call.1} parent=5 // pred_region
        // Predicated region
        $region65: #{tpu_custom_call.1} parent=63 // pred_check
          %p430 = pneg %p45
        $region66: #{tpu_custom_call.1} parent=63 // pred_check_branch
          %432 = sbr.rel (%p430) target = $region68
        $region67: #{tpu_custom_call.1} parent=63 // pred_region
          %p433 = scmp.lt.s32.totalorder %s25, 1
          %s434 = scalar_select %p433, %s25, 1
          %s435 = smul.addr %s434, 8
          %s436 = scalar_lea.vmem %s0, %s435
        $region68: #{tpu_custom_call.1} parent=63 // pred_fallthru
          _
        // Predicated region
        $region69: #{tpu_custom_call.1} parent=63 // pred_check
          %p437 = pneg %p71
        $region70: #{tpu_custom_call.1} parent=63 // pred_check_branch
          %439 = sbr.rel (%p437) target = $region72
        $region71: #{tpu_custom_call.1} parent=63 // pred_region
          %p440 = scmp.lt.s32.totalorder %s25, 1
          %s441 = scalar_select %p440, %s25, 1
          %s442 = smul.addr %s441, 2
          %s443 = smul.addr %s442, 8
          %s444 = scalar_lea.vmem %s1, %s443
        $region72: #{tpu_custom_call.1} parent=63 // pred_fallthru
          _
      $region64: #{tpu_custom_call.1} parent=5 // pred_fallthru
        _
      %p445 = scmp.le.s32.totalorder 1, %s25
      %p446 = scmp.lt.s32.totalorder %s25, 3
      %p447 = pnand %p445, %p446
      %p448 = pneg %p447
      // Predicated region
      $region73: #{tpu_custom_call.1} parent=5 // pred_check
        _
      $region74: #{tpu_custom_call.1} parent=5 // pred_check_branch
        %450 = sbr.rel (%p447) target = $region76
      $region75: #{tpu_custom_call.1} parent=5 // pred_region
        %s451 = ssub.s32 %s25, 1
        // Predicated region
        $region77: #{tpu_custom_call.1} parent=75 // pred_check
          %p452 = pneg %p98
        $region78: #{tpu_custom_call.1} parent=75 // pred_check_branch
          %454 = sbr.rel (%p452) target = $region80
        $region79: #{tpu_custom_call.1} parent=75 // pred_region
          %455 = dma.done [#allocation3], 4096
        $region80: #{tpu_custom_call.1} parent=75 // pred_fallthru
          _
        // Predicated region
        $region81: #{tpu_custom_call.1} parent=75 // pred_check
          %p456 = pneg %p140
        $region82: #{tpu_custom_call.1} parent=75 // pred_check_branch
          %458 = sbr.rel (%p456) target = $region84
        $region83: #{tpu_custom_call.1} parent=75 // pred_region
          %459 = dma.done [#allocation6], 8192
        $region84: #{tpu_custom_call.1} parent=75 // pred_fallthru
          _
        %p460 = scmp.lt.s32.totalorder %s30, 1
        %s461 = scalar_select %p460, %s30, 1
        %s462 = smul.addr %s461, 8
        %s463 = scalar_lea.vmem %s0, %s462
        %p464 = pneg %p51
        %p465 = pneg %p48
        %p466 = scmp.lt.s32.totalorder %s30, 1
        %s467 = scalar_select %p466, %s30, 1
        %s468 = smul.addr %s467, 2
        %s469 = smul.addr %s468, 8
        %s470 = scalar_lea.vmem %s1, %s469
        %p471 = pneg %p77
        %p472 = pneg %p74
        %p473 = pneg %p98
        %p474 = pneg %p95
        %p475 = pneg %p119
        %p476 = pneg %p116
        %p477 = pneg %p140
        %p478 = pneg %p137
        %p479 = pneg %p161
        %p480 = pneg %p158
        %p481 = pneg %p182
        %p482 = pneg %p179
        %p483 = pneg %p203
        %p484 = pneg %p200
        %p485 = pneg %p224
        %p486 = pneg %p221
        %p487 = pneg %p245
        %p488 = pneg %p242
        %p489 = pneg %p266
        %p490 = pneg %p263
        %p491 = pneg %p287
        %p492 = pneg %p284
        %p493 = pneg %p308
        %p494 = pneg %p305
        %p495 = pneg %p329
        %p496 = pneg %p326
        %p497 = pneg %p355
        %p498 = pneg %p352
        %s499 = sand.u32 %s342, 1
        %s500 = scalar_lea.sflag [#allocation4], %s499
        %s501 = sand.u32 %s342, 1
        %s502 = smul.addr %s501, 8
        %s503 = scalar_lea.vmem [#allocation7], %s502
        %p504 = scmp.lt.s32.totalorder %s30, 1
        %s505 = scalar_select %p504, %s30, 1
        %s506 = smul.addr %s505, 8
        %s507 = scalar_lea.vmem %s0, %s506
        %p508 = scmp.lt.s32.totalorder %s30, 1
        %s509 = scalar_select %p508, %s30, 1
        %s510 = smul.addr %s509, 2
        %s511 = smul.addr %s510, 8
        %s512 = scalar_lea.vmem %s1, %s511
        %v513 = vld [vmem:[%s507] sm:$0xff]
        %v514 = vld [vmem:[%s512] sm:$0xff]
        %v515 = vld [vmem:[%s512 + $0x8] sm:$0xff]
        %v516 = vld [vmem:[#allocation2] sm:$0xff]
        %v517 = vld [vmem:[#allocation2 + $0x8] sm:$0xff]
        %v518 = vld [vmem:[#allocation2 + $0x10] sm:$0xff]
        %v519 = vld [vmem:[#allocation2 + $0x18] sm:$0xff]
        %v520 = vld [vmem:[#allocation2 + $0x20] sm:$0xff]
        %v521 = vld [vmem:[#allocation2 + $0x28] sm:$0xff]
        %v522 = vld [vmem:[#allocation2 + $0x30] sm:$0xff]
        %v523 = vld [vmem:[#allocation2 + $0x38] sm:$0xff]
        %v524 = vld [vmem:[#allocation2 + $0x40] sm:$0xff]
        %v525 = vld [vmem:[#allocation2 + $0x48] sm:$0xff]
        %v526 = vld [vmem:[#allocation2 + $0x50] sm:$0xff]
        %v527 = vld [vmem:[#allocation2 + $0x58] sm:$0xff]
        %v528 = vld [vmem:[#allocation2 + $0x60] sm:$0xff]
        %v529 = vld [vmem:[#allocation2 + $0x68] sm:$0xff]
        %v530 = vld [vmem:[#allocation2 + $0x70] sm:$0xff]
        %v531 = vld [vmem:[#allocation2 + $0x78] sm:$0xff]
        %v532 = vld [vmem:[%s3] sm:$0xf]
        %v533 = vld [vmem:[#allocation5] sm:$0xff]
        %v534 = vld [vmem:[#allocation5 + $0x8] sm:$0xff]
        %v535 = vld [vmem:[#allocation5 + $0x10] sm:$0xff]
        %v536 = vld [vmem:[#allocation5 + $0x18] sm:$0xff]
        %v537 = vld [vmem:[#allocation5 + $0x20] sm:$0xff]
        %v538 = vld [vmem:[#allocation5 + $0x28] sm:$0xff]
        %v539 = vld [vmem:[#allocation5 + $0x30] sm:$0xff]
        %v540 = vld [vmem:[#allocation5 + $0x38] sm:$0xff]
        %v541 = vld [vmem:[#allocation5 + $0x40] sm:$0xff]
        %v542 = vld [vmem:[#allocation5 + $0x48] sm:$0xff]
        %v543 = vld [vmem:[#allocation5 + $0x50] sm:$0xff]
        %v544 = vld [vmem:[#allocation5 + $0x58] sm:$0xff]
        %v545 = vld [vmem:[#allocation5 + $0x60] sm:$0xff]
        %v546 = vld [vmem:[#allocation5 + $0x68] sm:$0xff]
        %v547 = vld [vmem:[#allocation5 + $0x70] sm:$0xff]
        %v548 = vld [vmem:[#allocation5 + $0x78] sm:$0xff]
        %v549 = vld [vmem:[#allocation5 + $0x80] sm:$0xff]
        %v550 = vld [vmem:[#allocation5 + $0x88] sm:$0xff]
        %v551 = vld [vmem:[#allocation5 + $0x90] sm:$0xff]
        %v552 = vld [vmem:[#allocation5 + $0x98] sm:$0xff]
        %v553 = vld [vmem:[#allocation5 + $0xa0] sm:$0xff]
        %v554 = vld [vmem:[#allocation5 + $0xa8] sm:$0xff]
        %v555 = vld [vmem:[#allocation5 + $0xb0] sm:$0xff]
        %v556 = vld [vmem:[#allocation5 + $0xb8] sm:$0xff]
        %v557 = vld [vmem:[#allocation5 + $0xc0] sm:$0xff]
        %v558 = vld [vmem:[#allocation5 + $0xc8] sm:$0xff]
        %v559 = vld [vmem:[#allocation5 + $0xd0] sm:$0xff]
        %v560 = vld [vmem:[#allocation5 + $0xd8] sm:$0xff]
        %v561 = vld [vmem:[#allocation5 + $0xe0] sm:$0xff]
        %v562 = vld [vmem:[#allocation5 + $0xe8] sm:$0xff]
        %v563 = vld [vmem:[#allocation5 + $0xf0] sm:$0xff]
        %v564 = vld [vmem:[#allocation5 + $0xf8] sm:$0xff]
        %v565 = vld [vmem:[%s5] sm:$0x3]
        %v566 = vld [vmem:[%s10] sm:$0x7]
        %v567 = vld [vmem:[%s11] sm:$0x7]
        %v568 = vlaneseq
        %v569 = vshrl.u32 %v568, 7
        %v570 = vsub.s32 0, %v569
        %v571 = vrot.slane %v532, %v570
        %vm572 = vcmask 261120
        %v574 = vsel %vm572, %v513, 0
        %576 = vmatprep.subr.mxu0 0.0
        %577 = vmatpush1.msra.mxu0 %v516
        %578 = vmatprep.subr.mxu0 0.0
        %579 = vmatpush1.msra.mxu0 %v517
        %580 = vmatprep.subr.mxu0 0.0
        %581 = vmatpush1.msra.mxu0 %v518
        %582 = vmatprep.subr.mxu0 0.0
        %583 = vmatpush1.msra.mxu0 %v519
        %584 = vmatprep.subr.mxu0 0.0
        %585 = vmatpush1.msra.mxu0 0.0
        %586 = vmatprep.subr.mxu0 0.0
        %587 = vmatpush1.msra.mxu0 0.0
        %588 = vmatprep.subr.mxu0 0.0
        %589 = vmatpush1.msra.mxu0 0.0
        %590 = vmatprep.subr.mxu0 0.0
        %591 = vmatpush1.msra.mxu0 0.0
        %592 = vmatprep.subr.mxu0 0.0
        %593 = vmatpush1.msra.mxu0 0.0
        %594 = vmatprep.subr.mxu0 0.0
        %595 = vmatpush1.msra.mxu0 0.0
        %596 = vmatprep.subr.mxu0 0.0
        %597 = vmatpush1.msra.mxu0 0.0
        %598 = vmatprep.subr.mxu0 0.0
        %599 = vmatpush1.msra.mxu0 0.0
        %600 = vmatprep.subr.mxu0 0.0
        %601 = vmatpush1.msra.mxu0 0.0
        %602 = vmatprep.subr.mxu0 0.0
        %603 = vmatpush1.msra.mxu0 0.0
        %604 = vmatprep.subr.mxu0 0.0
        %605 = vmatpush1.msra.mxu0 0.0
        %606 = vmatprep.subr.mxu0 0.0
        %607 = vmatpush1.msra.mxu0 0.0
        %608 = vmatprep.subr.mxu0 0.0
        %609 = vmatpush1.msra.mxu0 0.0
        %610 = vmatprep.subr.mxu0 0.0
        %611 = vmatpush1.msra.mxu0 0.0
        %612 = vmatprep.subr.mxu0 0.0
        %613 = vmatpush1.msra.mxu0 0.0
        %614 = vmatprep.subr.mxu0 0.0
        %615 = vmatpush1.msra.mxu0 0.0
        %616 = vmatprep.subr.mxu0 0.0
        %617 = vmatpush1.msra.mxu0 0.0
        %618 = vmatprep.subr.mxu0 0.0
        %619 = vmatpush1.msra.mxu0 0.0
        %620 = vmatprep.subr.mxu0 0.0
        %621 = vmatpush1.msra.mxu0 0.0
        %622 = vmatprep.subr.mxu0 0.0
        %623 = vmatpush1.msra.mxu0 0.0
        %624 = vmatprep.subr.mxu0 0.0
        %625 = vmatpush1.msra.mxu0 0.0
        %626 = vmatprep.subr.mxu0 0.0
        %627 = vmatpush1.msra.mxu0 0.0
        %628 = vmatprep.subr.mxu0 0.0
        %629 = vmatpush1.msra.mxu0 0.0
        %630 = vmatprep.subr.mxu0 0.0
        %631 = vmatpush1.msra.mxu0 0.0
        %632 = vmatprep.subr.mxu0 0.0
        %633 = vmatpush1.msra.mxu0 0.0
        %634 = vmatprep.subr.mxu0 0.0
        %635 = vmatpush1.msra.mxu0 0.0
        %636 = vmatprep.subr.mxu0 0.0
        %637 = vmatpush1.msra.mxu0 0.0
        %638 = vmatprep.subr.mxu0 0.0
        %639 = vmatpush1.msra.mxu0 0.0
        %640 = vmatprep.mubr.f32.mxu0 0.0
        %641 = vmatmul.mubr.f32.gmra.mrb[0].mxu0 %v574
        %v642 = vpop.f32.mrb[0].mxu0
        %v643 = vadd.f32 %v571, %v642
        %v644 = vpop.f32.mrb[0].mxu0
        %645 = vdwg.mxu0
        %v646 = vlaneseq
        %v647 = vshrl.u32 %v646, 7
        %v648 = vsub.s32 1, %v647
        %v649 = vrot.slane %v532, %v648
        %650 = vmatprep.subr.mxu0 0.0
        %651 = vmatpush1.msra.mxu0 %v520
        %652 = vmatprep.subr.mxu0 0.0
        %653 = vmatpush1.msra.mxu0 %v521
        %654 = vmatprep.subr.mxu0 0.0
        %655 = vmatpush1.msra.mxu0 %v522
        %656 = vmatprep.subr.mxu0 0.0
        %657 = vmatpush1.msra.mxu0 %v523
        %658 = vmatprep.subr.mxu0 0.0
        %659 = vmatpush1.msra.mxu0 0.0
        %660 = vmatprep.subr.mxu0 0.0
        %661 = vmatpush1.msra.mxu0 0.0
        %662 = vmatprep.subr.mxu0 0.0
        %663 = vmatpush1.msra.mxu0 0.0
        %664 = vmatprep.subr.mxu0 0.0
        %665 = vmatpush1.msra.mxu0 0.0
        %666 = vmatprep.subr.mxu0 0.0
        %667 = vmatpush1.msra.mxu0 0.0
        %668 = vmatprep.subr.mxu0 0.0
        %669 = vmatpush1.msra.mxu0 0.0
        %670 = vmatprep.subr.mxu0 0.0
        %671 = vmatpush1.msra.mxu0 0.0
        %672 = vmatprep.subr.mxu0 0.0
        %673 = vmatpush1.msra.mxu0 0.0
        %674 = vmatprep.subr.mxu0 0.0
        %675 = vmatpush1.msra.mxu0 0.0
        %676 = vmatprep.subr.mxu0 0.0
        %677 = vmatpush1.msra.mxu0 0.0
        %678 = vmatprep.subr.mxu0 0.0
        %679 = vmatpush1.msra.mxu0 0.0
        %680 = vmatprep.subr.mxu0 0.0
        %681 = vmatpush1.msra.mxu0 0.0
        %682 = vmatprep.subr.mxu0 0.0
        %683 = vmatpush1.msra.mxu0 0.0
        %684 = vmatprep.subr.mxu0 0.0
        %685 = vmatpush1.msra.mxu0 0.0
        %686 = vmatprep.subr.mxu0 0.0
        %687 = vmatpush1.msra.mxu0 0.0
        %688 = vmatprep.subr.mxu0 0.0
        %689 = vmatpush1.msra.mxu0 0.0
        %690 = vmatprep.subr.mxu0 0.0
        %691 = vmatpush1.msra.mxu0 0.0
        %692 = vmatprep.subr.mxu0 0.0
        %693 = vmatpush1.msra.mxu0 0.0
        %694 = vmatprep.subr.mxu0 0.0
        %695 = vmatpush1.msra.mxu0 0.0
        %696 = vmatprep.subr.mxu0 0.0
        %697 = vmatpush1.msra.mxu0 0.0
        %698 = vmatprep.subr.mxu0 0.0
        %699 = vmatpush1.msra.mxu0 0.0
        %700 = vmatprep.subr.mxu0 0.0
        %701 = vmatpush1.msra.mxu0 0.0
        %702 = vmatprep.subr.mxu0 0.0
        %703 = vmatpush1.msra.mxu0 0.0
        %704 = vmatprep.subr.mxu0 0.0
        %705 = vmatpush1.msra.mxu0 0.0
        %706 = vmatprep.subr.mxu0 0.0
        %707 = vmatpush1.msra.mxu0 0.0
        %708 = vmatprep.subr.mxu0 0.0
        %709 = vmatpush1.msra.mxu0 0.0
        %710 = vmatprep.subr.mxu0 0.0
        %711 = vmatpush1.msra.mxu0 0.0
        %712 = vmatprep.subr.mxu0 0.0
        %713 = vmatpush1.msra.mxu0 0.0
        %714 = vmatprep.mubr.f32.mxu0 0.0
        %715 = vmatmul.mubr.f32.gmra.mrb[0].mxu0 %v574
        %v716 = vpop.f32.mrb[0].mxu0
        %v717 = vadd.f32 %v649, %v716
        %v718 = vpop.f32.mrb[0].mxu0
        %719 = vdwg.mxu0
        %v720 = vlaneseq
        %v721 = vshrl.u32 %v720, 7
        %v722 = vsub.s32 0, %v721
        %v723 = vrot.slane %v565, %v722
        %v724 = vadd.f32 %v723, 0.0
        %vm725 = vcmask 64512
        %v727 = vsel %vm725, %v643, 0
        %v730 = vsel %vm725, %v717, 0
        %732 = vmatprep.subr.mxu0 0.0
        %733 = vmatpush1.xpose.msra.mxu0 %v730
        %734 = vmatprep.subr.mxu0 0.0
        %735 = vmatpush1.xpose.msra.mxu0 0.0
        %736 = vmatprep.subr.mxu0 0.0
        %737 = vmatpush1.xpose.msra.mxu0 0.0
        %738 = vmatprep.subr.mxu0 0.0
        %739 = vmatpush1.xpose.msra.mxu0 0.0
        %740 = vmatprep.subr.mxu0 0.0
        %741 = vmatpush1.xpose.msra.mxu0 0.0
        %742 = vmatprep.subr.mxu0 0.0
        %743 = vmatpush1.xpose.msra.mxu0 0.0
        %744 = vmatprep.subr.mxu0 0.0
        %745 = vmatpush1.xpose.msra.mxu0 0.0
        %746 = vmatprep.subr.mxu0 0.0
        %747 = vmatpush1.xpose.msra.mxu0 0.0
        %748 = vmatprep.subr.mxu0 0.0
        %749 = vmatpush1.xpose.msra.mxu0 0.0
        %750 = vmatprep.subr.mxu0 0.0
        %751 = vmatpush1.xpose.msra.mxu0 0.0
        %752 = vmatprep.subr.mxu0 0.0
        %753 = vmatpush1.xpose.msra.mxu0 0.0
        %754 = vmatprep.subr.mxu0 0.0
        %755 = vmatpush1.xpose.msra.mxu0 0.0
        %756 = vmatprep.subr.mxu0 0.0
        %757 = vmatpush1.xpose.msra.mxu0 0.0
        %758 = vmatprep.subr.mxu0 0.0
        %759 = vmatpush1.xpose.msra.mxu0 0.0
        %760 = vmatprep.subr.mxu0 0.0
        %761 = vmatpush1.xpose.msra.mxu0 0.0
        %762 = vmatprep.subr.mxu0 0.0
        %763 = vmatpush1.xpose.msra.mxu0 0.0
        %764 = vmatprep.subr.mxu0 0.0
        %765 = vmatpush1.xpose.msra.mxu0 0.0
        %766 = vmatprep.subr.mxu0 0.0
        %767 = vmatpush1.xpose.msra.mxu0 0.0
        %768 = vmatprep.subr.mxu0 0.0
        %769 = vmatpush1.xpose.msra.mxu0 0.0
        %770 = vmatprep.subr.mxu0 0.0
        %771 = vmatpush1.xpose.msra.mxu0 0.0
        %772 = vmatprep.subr.mxu0 0.0
        %773 = vmatpush1.xpose.msra.mxu0 0.0
        %774 = vmatprep.subr.mxu0 0.0
        %775 = vmatpush1.xpose.msra.mxu0 0.0
        %776 = vmatprep.subr.mxu0 0.0
        %777 = vmatpush1.xpose.msra.mxu0 0.0
        %778 = vmatprep.subr.mxu0 0.0
        %779 = vmatpush1.xpose.msra.mxu0 0.0
        %780 = vmatprep.subr.mxu0 0.0
        %781 = vmatpush1.xpose.msra.mxu0 0.0
        %782 = vmatprep.subr.mxu0 0.0
        %783 = vmatpush1.xpose.msra.mxu0 0.0
        %784 = vmatprep.subr.mxu0 0.0
        %785 = vmatpush1.xpose.msra.mxu0 0.0
        %786 = vmatprep.subr.mxu0 0.0
        %787 = vmatpush1.xpose.msra.mxu0 0.0
        %788 = vmatprep.subr.mxu0 0.0
        %789 = vmatpush1.xpose.msra.mxu0 0.0
        %790 = vmatprep.subr.mxu0 0.0
        %791 = vmatpush1.xpose.msra.mxu0 0.0
        %792 = vmatprep.subr.mxu0 0.0
        %793 = vmatpush1.xpose.msra.mxu0 0.0
        %794 = vmatprep.subr.mxu0 0.0
        %795 = vmatpush1.xpose.msra.mxu0 0.0
        %796 = vmatprep.mubr.f32.mxu0 0.0
        %797 = vmatmul.mubr.f32.gmra.mrb[0].mxu0 %v727
        %v798 = vpop.f32.mrb[0].mxu0
        %v799 = vadd.f32 0.0, %v798
        %v800 = vpop.f32.mrb[0].mxu0
        %801 = vdwg.mxu0
        %v802 = vmul.f32 %v799, 0.35355338
        %v803 = vsel %vm725, %v802, -inf
        %804 = vmax.xlane.f32.xlu0 %v803
        %v805 = vpop.xlane.xlu0 %804
        %v806 = vsub.f32 %v802, %v805
        %v807 = vmul.f32 %v806, 1.442695
        %v808 = vpow.pop %v807
        %v809 = vsel %vm725, %v808, 0.0
        %810 = vadd.xlane.f32.xlu0 %v809
        %v811 = vpop.xlane.xlu0 %810
        %v812 = vrcp.pop %v811
        %v813 = vmul.f32 %v808, %v812
        %814 = vmatprep.subr.mxu0 0.0
        %815 = vmatpush1.msra.mxu0 %v533
        %816 = vmatprep.subr.mxu0 0.0
        %817 = vmatpush1.msra.mxu0 %v534
        %818 = vmatprep.subr.mxu0 0.0
        %819 = vmatpush1.msra.mxu0 %v535
        %820 = vmatprep.subr.mxu0 0.0
        %821 = vmatpush1.msra.mxu0 %v536
        %822 = vmatprep.subr.mxu0 0.0
        %823 = vmatpush1.msra.mxu0 0.0
        %824 = vmatprep.subr.mxu0 0.0
        %825 = vmatpush1.msra.mxu0 0.0
        %826 = vmatprep.subr.mxu0 0.0
        %827 = vmatpush1.msra.mxu0 0.0
        %828 = vmatprep.subr.mxu0 0.0
        %829 = vmatpush1.msra.mxu0 0.0
        %830 = vmatprep.subr.mxu0 0.0
        %831 = vmatpush1.msra.mxu0 0.0
        %832 = vmatprep.subr.mxu0 0.0
        %833 = vmatpush1.msra.mxu0 0.0
        %834 = vmatprep.subr.mxu0 0.0
        %835 = vmatpush1.msra.mxu0 0.0
        %836 = vmatprep.subr.mxu0 0.0
        %837 = vmatpush1.msra.mxu0 0.0
        %838 = vmatprep.subr.mxu0 0.0
        %839 = vmatpush1.msra.mxu0 0.0
        %840 = vmatprep.subr.mxu0 0.0
        %841 = vmatpush1.msra.mxu0 0.0
        %842 = vmatprep.subr.mxu0 0.0
        %843 = vmatpush1.msra.mxu0 0.0
        %844 = vmatprep.subr.mxu0 0.0
        %845 = vmatpush1.msra.mxu0 0.0
        %846 = vmatprep.subr.mxu0 0.0
        %847 = vmatpush1.msra.mxu0 0.0
        %848 = vmatprep.subr.mxu0 0.0
        %849 = vmatpush1.msra.mxu0 0.0
        %850 = vmatprep.subr.mxu0 0.0
        %851 = vmatpush1.msra.mxu0 0.0
        %852 = vmatprep.subr.mxu0 0.0
        %853 = vmatpush1.msra.mxu0 0.0
        %854 = vmatprep.subr.mxu0 0.0
        %855 = vmatpush1.msra.mxu0 0.0
        %856 = vmatprep.subr.mxu0 0.0
        %857 = vmatpush1.msra.mxu0 0.0
        %858 = vmatprep.subr.mxu0 0.0
        %859 = vmatpush1.msra.mxu0 0.0
        %860 = vmatprep.subr.mxu0 0.0
        %861 = vmatpush1.msra.mxu0 0.0
        %862 = vmatprep.subr.mxu0 0.0
        %863 = vmatpush1.msra.mxu0 0.0
        %864 = vmatprep.subr.mxu0 0.0
        %865 = vmatpush1.msra.mxu0 0.0
        %866 = vmatprep.subr.mxu0 0.0
        %867 = vmatpush1.msra.mxu0 0.0
        %868 = vmatprep.subr.mxu0 0.0
        %869 = vmatpush1.msra.mxu0 0.0
        %870 = vmatprep.subr.mxu0 0.0
        %871 = vmatpush1.msra.mxu0 0.0
        %872 = vmatprep.subr.mxu0 0.0
        %873 = vmatpush1.msra.mxu0 0.0
        %874 = vmatprep.subr.mxu0 0.0
        %875 = vmatpush1.msra.mxu0 0.0
        %876 = vmatprep.subr.mxu0 0.0
        %877 = vmatpush1.msra.mxu0 0.0
        %878 = vmatprep.mubr.f32.mxu0 0.0
        %879 = vmatmul.mubr.f32.gmra.mrb[0].mxu0 %v574
        %v880 = vpop.f32.mrb[0].mxu0
        %v881 = vadd.f32 0.0, %v880
        %v882 = vpop.f32.mrb[0].mxu0
        %883 = vdwg.mxu0
        %v885 = vsel %vm725, %v813, 0
        %887 = vmatprep.subr.mxu0 0.0
        %888 = vmatpush1.msra.mxu0 %v881
        %889 = vmatprep.subr.mxu0 0.0
        %890 = vmatpush1.msra.mxu0 0.0
        %891 = vmatprep.subr.mxu0 0.0
        %892 = vmatpush1.msra.mxu0 0.0
        %893 = vmatprep.subr.mxu0 0.0
        %894 = vmatpush1.msra.mxu0 0.0
        %895 = vmatprep.subr.mxu0 0.0
        %896 = vmatpush1.msra.mxu0 0.0
        %897 = vmatprep.subr.mxu0 0.0
        %898 = vmatpush1.msra.mxu0 0.0
        %899 = vmatprep.subr.mxu0 0.0
        %900 = vmatpush1.msra.mxu0 0.0
        %901 = vmatprep.subr.mxu0 0.0
        %902 = vmatpush1.msra.mxu0 0.0
        %903 = vmatprep.subr.mxu0 0.0
        %904 = vmatpush1.msra.mxu0 0.0
        %905 = vmatprep.subr.mxu0 0.0
        %906 = vmatpush1.msra.mxu0 0.0
        %907 = vmatprep.subr.mxu0 0.0
        %908 = vmatpush1.msra.mxu0 0.0
        %909 = vmatprep.subr.mxu0 0.0
        %910 = vmatpush1.msra.mxu0 0.0
        %911 = vmatprep.subr.mxu0 0.0
        %912 = vmatpush1.msra.mxu0 0.0
        %913 = vmatprep.subr.mxu0 0.0
        %914 = vmatpush1.msra.mxu0 0.0
        %915 = vmatprep.subr.mxu0 0.0
        %916 = vmatpush1.msra.mxu0 0.0
        %917 = vmatprep.subr.mxu0 0.0
        %918 = vmatpush1.msra.mxu0 0.0
        %919 = vmatprep.subr.mxu0 0.0
        %920 = vmatpush1.msra.mxu0 0.0
        %921 = vmatprep.subr.mxu0 0.0
        %922 = vmatpush1.msra.mxu0 0.0
        %923 = vmatprep.subr.mxu0 0.0
        %924 = vmatpush1.msra.mxu0 0.0
        %925 = vmatprep.subr.mxu0 0.0
        %926 = vmatpush1.msra.mxu0 0.0
        %927 = vmatprep.subr.mxu0 0.0
        %928 = vmatpush1.msra.mxu0 0.0
        %929 = vmatprep.subr.mxu0 0.0
        %930 = vmatpush1.msra.mxu0 0.0
        %931 = vmatprep.subr.mxu0 0.0
        %932 = vmatpush1.msra.mxu0 0.0
        %933 = vmatprep.subr.mxu0 0.0
        %934 = vmatpush1.msra.mxu0 0.0
        %935 = vmatprep.subr.mxu0 0.0
        %936 = vmatpush1.msra.mxu0 0.0
        %937 = vmatprep.subr.mxu0 0.0
        %938 = vmatpush1.msra.mxu0 0.0
        %939 = vmatprep.subr.mxu0 0.0
        %940 = vmatpush1.msra.mxu0 0.0
        %941 = vmatprep.subr.mxu0 0.0
        %942 = vmatpush1.msra.mxu0 0.0
        %943 = vmatprep.subr.mxu0 0.0
        %944 = vmatpush1.msra.mxu0 0.0
        %945 = vmatprep.subr.mxu0 0.0
        %946 = vmatpush1.msra.mxu0 0.0
        %947 = vmatprep.subr.mxu0 0.0
        %948 = vmatpush1.msra.mxu0 0.0
        %949 = vmatprep.subr.mxu0 0.0
        %950 = vmatpush1.msra.mxu0 0.0
        %951 = vmatprep.mubr.f32.mxu0 0.0
        %952 = vmatmul.mubr.f32.gmra.mrb[0].mxu0 %v885
        %v953 = vpop.f32.mrb[0].mxu0
        %v954 = vadd.f32 0.0, %v953
        %v955 = vpop.f32.mrb[0].mxu0
        %956 = vdwg.mxu0
        %v957 = vadd.f32 %v724, %v954
        %958 = vrot.lane.b32.xlu0 %v643, 120
        %v959 = vpop.permute.xlu0 %958
        %960 = vrot.lane.b32.xlu0 %v717, 120
        %v961 = vpop.permute.xlu0 %960
        %v962 = vsel %vm725, %v959, 0
        %v964 = vsel %vm725, %v961, 0
        %966 = vmatprep.subr.mxu0 0.0
        %967 = vmatpush1.xpose.msra.mxu0 %v964
        %968 = vmatprep.subr.mxu0 0.0
        %969 = vmatpush1.xpose.msra.mxu0 0.0
        %970 = vmatprep.subr.mxu0 0.0
        %971 = vmatpush1.xpose.msra.mxu0 0.0
        %972 = vmatprep.subr.mxu0 0.0
        %973 = vmatpush1.xpose.msra.mxu0 0.0
        %974 = vmatprep.subr.mxu0 0.0
        %975 = vmatpush1.xpose.msra.mxu0 0.0
        %976 = vmatprep.subr.mxu0 0.0
        %977 = vmatpush1.xpose.msra.mxu0 0.0
        %978 = vmatprep.subr.mxu0 0.0
        %979 = vmatpush1.xpose.msra.mxu0 0.0
        %980 = vmatprep.subr.mxu0 0.0
        %981 = vmatpush1.xpose.msra.mxu0 0.0
        %982 = vmatprep.subr.mxu0 0.0
        %983 = vmatpush1.xpose.msra.mxu0 0.0
        %984 = vmatprep.subr.mxu0 0.0
        %985 = vmatpush1.xpose.msra.mxu0 0.0
        %986 = vmatprep.subr.mxu0 0.0
        %987 = vmatpush1.xpose.msra.mxu0 0.0
        %988 = vmatprep.subr.mxu0 0.0
        %989 = vmatpush1.xpose.msra.mxu0 0.0
        %990 = vmatprep.subr.mxu0 0.0
        %991 = vmatpush1.xpose.msra.mxu0 0.0
        %992 = vmatprep.subr.mxu0 0.0
        %993 = vmatpush1.xpose.msra.mxu0 0.0
        %994 = vmatprep.subr.mxu0 0.0
        %995 = vmatpush1.xpose.msra.mxu0 0.0
        %996 = vmatprep.subr.mxu0 0.0
        %997 = vmatpush1.xpose.msra.mxu0 0.0
        %998 = vmatprep.subr.mxu0 0.0
        %999 = vmatpush1.xpose.msra.mxu0 0.0
        %1000 = vmatprep.subr.mxu0 0.0
        %1001 = vmatpush1.xpose.msra.mxu0 0.0
        %1002 = vmatprep.subr.mxu0 0.0
        %1003 = vmatpush1.xpose.msra.mxu0 0.0
        %1004 = vmatprep.subr.mxu0 0.0
        %1005 = vmatpush1.xpose.msra.mxu0 0.0
        %1006 = vmatprep.subr.mxu0 0.0
        %1007 = vmatpush1.xpose.msra.mxu0 0.0
        %1008 = vmatprep.subr.mxu0 0.0
        %1009 = vmatpush1.xpose.msra.mxu0 0.0
        %1010 = vmatprep.subr.mxu0 0.0
        %1011 = vmatpush1.xpose.msra.mxu0 0.0
        %1012 = vmatprep.subr.mxu0 0.0
        %1013 = vmatpush1.xpose.msra.mxu0 0.0
        %1014 = vmatprep.subr.mxu0 0.0
        %1015 = vmatpush1.xpose.msra.mxu0 0.0
        %1016 = vmatprep.subr.mxu0 0.0
        %1017 = vmatpush1.xpose.msra.mxu0 0.0
        %1018 = vmatprep.subr.mxu0 0.0
        %1019 = vmatpush1.xpose.msra.mxu0 0.0
        %1020 = vmatprep.subr.mxu0 0.0
        %1021 = vmatpush1.xpose.msra.mxu0 0.0
        %1022 = vmatprep.subr.mxu0 0.0
        %1023 = vmatpush1.xpose.msra.mxu0 0.0
        %1024 = vmatprep.subr.mxu0 0.0
        %1025 = vmatpush1.xpose.msra.mxu0 0.0
        %1026 = vmatprep.subr.mxu0 0.0
        %1027 = vmatpush1.xpose.msra.mxu0 0.0
        %1028 = vmatprep.subr.mxu0 0.0
        %1029 = vmatpush1.xpose.msra.mxu0 0.0
        %1030 = vmatprep.mubr.f32.mxu0 0.0
        %1031 = vmatmul.mubr.f32.gmra.mrb[0].mxu0 %v962
        %v1032 = vpop.f32.mrb[0].mxu0
        %v1033 = vadd.f32 0.0, %v1032
        %v1034 = vpop.f32.mrb[0].mxu0
        %1035 = vdwg.mxu0
        %v1036 = vmul.f32 %v1033, 0.35355338
        %v1037 = vsel %vm725, %v1036, -inf
        %1038 = vmax.xlane.f32.xlu0 %v1037
        %v1039 = vpop.xlane.xlu0 %1038
        %v1040 = vsub.f32 %v1036, %v1039
        %v1041 = vmul.f32 %v1040, 1.442695
        %v1042 = vpow.pop %v1041
        %v1043 = vsel %vm725, %v1042, 0.0
        %1044 = vadd.xlane.f32.xlu0 %v1043
        %v1045 = vpop.xlane.xlu0 %1044
        %v1046 = vrcp.pop %v1045
        %v1047 = vmul.f32 %v1042, %v1046
        %1048 = vmatprep.subr.mxu0 0.0
        %1049 = vmatpush1.msra.mxu0 %v537
        %1050 = vmatprep.subr.mxu0 0.0
        %1051 = vmatpush1.msra.mxu0 %v538
        %1052 = vmatprep.subr.mxu0 0.0
        %1053 = vmatpush1.msra.mxu0 %v539
        %1054 = vmatprep.subr.mxu0 0.0
        %1055 = vmatpush1.msra.mxu0 %v540
        %1056 = vmatprep.subr.mxu0 0.0
        %1057 = vmatpush1.msra.mxu0 0.0
        %1058 = vmatprep.subr.mxu0 0.0
        %1059 = vmatpush1.msra.mxu0 0.0
        %1060 = vmatprep.subr.mxu0 0.0
        %1061 = vmatpush1.msra.mxu0 0.0
        %1062 = vmatprep.subr.mxu0 0.0
        %1063 = vmatpush1.msra.mxu0 0.0
        %1064 = vmatprep.subr.mxu0 0.0
        %1065 = vmatpush1.msra.mxu0 0.0
        %1066 = vmatprep.subr.mxu0 0.0
        %1067 = vmatpush1.msra.mxu0 0.0
        %1068 = vmatprep.subr.mxu0 0.0
        %1069 = vmatpush1.msra.mxu0 0.0
        %1070 = vmatprep.subr.mxu0 0.0
        %1071 = vmatpush1.msra.mxu0 0.0
        %1072 = vmatprep.subr.mxu0 0.0
        %1073 = vmatpush1.msra.mxu0 0.0
        %1074 = vmatprep.subr.mxu0 0.0
        %1075 = vmatpush1.msra.mxu0 0.0
        %1076 = vmatprep.subr.mxu0 0.0
        %1077 = vmatpush1.msra.mxu0 0.0
        %1078 = vmatprep.subr.mxu0 0.0
        %1079 = vmatpush1.msra.mxu0 0.0
        %1080 = vmatprep.subr.mxu0 0.0
        %1081 = vmatpush1.msra.mxu0 0.0
        %1082 = vmatprep.subr.mxu0 0.0
        %1083 = vmatpush1.msra.mxu0 0.0
        %1084 = vmatprep.subr.mxu0 0.0
        %1085 = vmatpush1.msra.mxu0 0.0
        %1086 = vmatprep.subr.mxu0 0.0
        %1087 = vmatpush1.msra.mxu0 0.0
        %1088 = vmatprep.subr.mxu0 0.0
        %1089 = vmatpush1.msra.mxu0 0.0
        %1090 = vmatprep.subr.mxu0 0.0
        %1091 = vmatpush1.msra.mxu0 0.0
        %1092 = vmatprep.subr.mxu0 0.0
        %1093 = vmatpush1.msra.mxu0 0.0
        %1094 = vmatprep.subr.mxu0 0.0
        %1095 = vmatpush1.msra.mxu0 0.0
        %1096 = vmatprep.subr.mxu0 0.0
        %1097 = vmatpush1.msra.mxu0 0.0
        %1098 = vmatprep.subr.mxu0 0.0
        %1099 = vmatpush1.msra.mxu0 0.0
        %1100 = vmatprep.subr.mxu0 0.0
        %1101 = vmatpush1.msra.mxu0 0.0
        %1102 = vmatprep.subr.mxu0 0.0
        %1103 = vmatpush1.msra.mxu0 0.0
        %1104 = vmatprep.subr.mxu0 0.0
        %1105 = vmatpush1.msra.mxu0 0.0
        %1106 = vmatprep.subr.mxu0 0.0
        %1107 = vmatpush1.msra.mxu0 0.0
        %1108 = vmatprep.subr.mxu0 0.0
        %1109 = vmatpush1.msra.mxu0 0.0
        %1110 = vmatprep.subr.mxu0 0.0
        %1111 = vmatpush1.msra.mxu0 0.0
        %1112 = vmatprep.mubr.f32.mxu0 0.0
        %1113 = vmatmul.mubr.f32.gmra.mrb[0].mxu0 %v574
        %v1114 = vpop.f32.mrb[0].mxu0
        %v1115 = vadd.f32 0.0, %v1114
        %v1116 = vpop.f32.mrb[0].mxu0
        %1117 = vdwg.mxu0
        %v1119 = vsel %vm725, %v1047, 0
        %1121 = vmatprep.subr.mxu0 0.0
        %1122 = vmatpush1.msra.mxu0 %v1115
        %1123 = vmatprep.subr.mxu0 0.0
        %1124 = vmatpush1.msra.mxu0 0.0
        %1125 = vmatprep.subr.mxu0 0.0
        %1126 = vmatpush1.msra.mxu0 0.0
        %1127 = vmatprep.subr.mxu0 0.0
        %1128 = vmatpush1.msra.mxu0 0.0
        %1129 = vmatprep.subr.mxu0 0.0
        %1130 = vmatpush1.msra.mxu0 0.0
        %1131 = vmatprep.subr.mxu0 0.0
        %1132 = vmatpush1.msra.mxu0 0.0
        %1133 = vmatprep.subr.mxu0 0.0
        %1134 = vmatpush1.msra.mxu0 0.0
        %1135 = vmatprep.subr.mxu0 0.0
        %1136 = vmatpush1.msra.mxu0 0.0
        %1137 = vmatprep.subr.mxu0 0.0
        %1138 = vmatpush1.msra.mxu0 0.0
        %1139 = vmatprep.subr.mxu0 0.0
        %1140 = vmatpush1.msra.mxu0 0.0
        %1141 = vmatprep.subr.mxu0 0.0
        %1142 = vmatpush1.msra.mxu0 0.0
        %1143 = vmatprep.subr.mxu0 0.0
        %1144 = vmatpush1.msra.mxu0 0.0
        %1145 = vmatprep.subr.mxu0 0.0
        %1146 = vmatpush1.msra.mxu0 0.0
        %1147 = vmatprep.subr.mxu0 0.0
        %1148 = vmatpush1.msra.mxu0 0.0
        %1149 = vmatprep.subr.mxu0 0.0
        %1150 = vmatpush1.msra.mxu0 0.0
        %1151 = vmatprep.subr.mxu0 0.0
        %1152 = vmatpush1.msra.mxu0 0.0
        %1153 = vmatprep.subr.mxu0 0.0
        %1154 = vmatpush1.msra.mxu0 0.0
        %1155 = vmatprep.subr.mxu0 0.0
        %1156 = vmatpush1.msra.mxu0 0.0
        %1157 = vmatprep.subr.mxu0 0.0
        %1158 = vmatpush1.msra.mxu0 0.0
        %1159 = vmatprep.subr.mxu0 0.0
        %1160 = vmatpush1.msra.mxu0 0.0
        %1161 = vmatprep.subr.mxu0 0.0
        %1162 = vmatpush1.msra.mxu0 0.0
        %1163 = vmatprep.subr.mxu0 0.0
        %1164 = vmatpush1.msra.mxu0 0.0
        %1165 = vmatprep.subr.mxu0 0.0
        %1166 = vmatpush1.msra.mxu0 0.0
        %1167 = vmatprep.subr.mxu0 0.0
        %1168 = vmatpush1.msra.mxu0 0.0
        %1169 = vmatprep.subr.mxu0 0.0
        %1170 = vmatpush1.msra.mxu0 0.0
        %1171 = vmatprep.subr.mxu0 0.0
        %1172 = vmatpush1.msra.mxu0 0.0
        %1173 = vmatprep.subr.mxu0 0.0
        %1174 = vmatpush1.msra.mxu0 0.0
        %1175 = vmatprep.subr.mxu0 0.0
        %1176 = vmatpush1.msra.mxu0 0.0
        %1177 = vmatprep.subr.mxu0 0.0
        %1178 = vmatpush1.msra.mxu0 0.0
        %1179 = vmatprep.subr.mxu0 0.0
        %1180 = vmatpush1.msra.mxu0 0.0
        %1181 = vmatprep.subr.mxu0 0.0
        %1182 = vmatpush1.msra.mxu0 0.0
        %1183 = vmatprep.subr.mxu0 0.0
        %1184 = vmatpush1.msra.mxu0 0.0
        %1185 = vmatprep.mubr.f32.mxu0 0.0
        %1186 = vmatmul.mubr.f32.gmra.mrb[0].mxu0 %v1119
        %v1187 = vpop.f32.mrb[0].mxu0
        %v1188 = vadd.f32 0.0, %v1187
        %v1189 = vpop.f32.mrb[0].mxu0
        %1190 = vdwg.mxu0
        %v1191 = vadd.f32 %v957, %v1188
        %1192 = vrot.lane.b32.xlu0 %v643, 112
        %v1193 = vpop.permute.xlu0 %1192
        %1194 = vrot.lane.b32.xlu0 %v717, 112
        %v1195 = vpop.permute.xlu0 %1194
        %v1196 = vsel %vm725, %v1193, 0
        %v1198 = vsel %vm725, %v1195, 0
        %1200 = vmatprep.subr.mxu0 0.0
        %1201 = vmatpush1.xpose.msra.mxu0 %v1198
        %1202 = vmatprep.subr.mxu0 0.0
        %1203 = vmatpush1.xpose.msra.mxu0 0.0
        %1204 = vmatprep.subr.mxu0 0.0
        %1205 = vmatpush1.xpose.msra.mxu0 0.0
        %1206 = vmatprep.subr.mxu0 0.0
        %1207 = vmatpush1.xpose.msra.mxu0 0.0
        %1208 = vmatprep.subr.mxu0 0.0
        %1209 = vmatpush1.xpose.msra.mxu0 0.0
        %1210 = vmatprep.subr.mxu0 0.0
        %1211 = vmatpush1.xpose.msra.mxu0 0.0
        %1212 = vmatprep.subr.mxu0 0.0
        %1213 = vmatpush1.xpose.msra.mxu0 0.0
        %1214 = vmatprep.subr.mxu0 0.0
        %1215 = vmatpush1.xpose.msra.mxu0 0.0
        %1216 = vmatprep.subr.mxu0 0.0
        %1217 = vmatpush1.xpose.msra.mxu0 0.0
        %1218 = vmatprep.subr.mxu0 0.0
        %1219 = vmatpush1.xpose.msra.mxu0 0.0
        %1220 = vmatprep.subr.mxu0 0.0
        %1221 = vmatpush1.xpose.msra.mxu0 0.0
        %1222 = vmatprep.subr.mxu0 0.0
        %1223 = vmatpush1.xpose.msra.mxu0 0.0
        %1224 = vmatprep.subr.mxu0 0.0
        %1225 = vmatpush1.xpose.msra.mxu0 0.0
        %1226 = vmatprep.subr.mxu0 0.0
        %1227 = vmatpush1.xpose.msra.mxu0 0.0
        %1228 = vmatprep.subr.mxu0 0.0
        %1229 = vmatpush1.xpose.msra.mxu0 0.0
        %1230 = vmatprep.subr.mxu0 0.0
        %1231 = vmatpush1.xpose.msra.mxu0 0.0
        %1232 = vmatprep.subr.mxu0 0.0
        %1233 = vmatpush1.xpose.msra.mxu0 0.0
        %1234 = vmatprep.subr.mxu0 0.0
        %1235 = vmatpush1.xpose.msra.mxu0 0.0
        %1236 = vmatprep.subr.mxu0 0.0
        %1237 = vmatpush1.xpose.msra.mxu0 0.0
        %1238 = vmatprep.subr.mxu0 0.0
        %1239 = vmatpush1.xpose.msra.mxu0 0.0
        %1240 = vmatprep.subr.mxu0 0.0
        %1241 = vmatpush1.xpose.msra.mxu0 0.0
        %1242 = vmatprep.subr.mxu0 0.0
        %1243 = vmatpush1.xpose.msra.mxu0 0.0
        %1244 = vmatprep.subr.mxu0 0.0
        %1245 = vmatpush1.xpose.msra.mxu0 0.0
        %1246 = vmatprep.subr.mxu0 0.0
        %1247 = vmatpush1.xpose.msra.mxu0 0.0
        %1248 = vmatprep.subr.mxu0 0.0
        %1249 = vmatpush1.xpose.msra.mxu0 0.0
        %1250 = vmatprep.subr.mxu0 0.0
        %1251 = vmatpush1.xpose.msra.mxu0 0.0
        %1252 = vmatprep.subr.mxu0 0.0
        %1253 = vmatpush1.xpose.msra.mxu0 0.0
        %1254 = vmatprep.subr.mxu0 0.0
        %1255 = vmatpush1.xpose.msra.mxu0 0.0
        %1256 = vmatprep.subr.mxu0 0.0
        %1257 = vmatpush1.xpose.msra.mxu0 0.0
        %1258 = vmatprep.subr.mxu0 0.0
        %1259 = vmatpush1.xpose.msra.mxu0 0.0
        %1260 = vmatprep.subr.mxu0 0.0
        %1261 = vmatpush1.xpose.msra.mxu0 0.0
        %1262 = vmatprep.subr.mxu0 0.0
        %1263 = vmatpush1.xpose.msra.mxu0 0.0
        %1264 = vmatprep.mubr.f32.mxu0 0.0
        %1265 = vmatmul.mubr.f32.gmra.mrb[0].mxu0 %v1196
        %v1266 = vpop.f32.mrb[0].mxu0
        %v1267 = vadd.f32 0.0, %v1266
        %v1268 = vpop.f32.mrb[0].mxu0
        %1269 = vdwg.mxu0
        %v1270 = vmul.f32 %v1267, 0.35355338
        %v1271 = vsel %vm725, %v1270, -inf
        %1272 = vmax.xlane.f32.xlu0 %v1271
        %v1273 = vpop.xlane.xlu0 %1272
        %v1274 = vsub.f32 %v1270, %v1273
        %v1275 = vmul.f32 %v1274, 1.442695
        %v1276 = vpow.pop %v1275
        %v1277 = vsel %vm725, %v1276, 0.0
        %1278 = vadd.xlane.f32.xlu0 %v1277
        %v1279 = vpop.xlane.xlu0 %1278
        %v1280 = vrcp.pop %v1279
        %v1281 = vmul.f32 %v1276, %v1280
        %1282 = vmatprep.subr.mxu0 0.0
        %1283 = vmatpush1.msra.mxu0 %v541
        %1284 = vmatprep.subr.mxu0 0.0
        %1285 = vmatpush1.msra.mxu0 %v542
        %1286 = vmatprep.subr.mxu0 0.0
        %1287 = vmatpush1.msra.mxu0 %v543
        %1288 = vmatprep.subr.mxu0 0.0
        %1289 = vmatpush1.msra.mxu0 %v544
        %1290 = vmatprep.subr.mxu0 0.0
        %1291 = vmatpush1.msra.mxu0 0.0
        %1292 = vmatprep.subr.mxu0 0.0
        %1293 = vmatpush1.msra.mxu0 0.0
        %1294 = vmatprep.subr.mxu0 0.0
        %1295 = vmatpush1.msra.mxu0 0.0
        %1296 = vmatprep.subr.mxu0 0.0
        %1297 = vmatpush1.msra.mxu0 0.0
        %1298 = vmatprep.subr.mxu0 0.0
        %1299 = vmatpush1.msra.mxu0 0.0
        %1300 = vmatprep.subr.mxu0 0.0
        %1301 = vmatpush1.msra.mxu0 0.0
        %1302 = vmatprep.subr.mxu0 0.0
        %1303 = vmatpush1.msra.mxu0 0.0
        %1304 = vmatprep.subr.mxu0 0.0
        %1305 = vmatpush1.msra.mxu0 0.0
        %1306 = vmatprep.subr.mxu0 0.0
        %1307 = vmatpush1.msra.mxu0 0.0
        %1308 = vmatprep.subr.mxu0 0.0
        %1309 = vmatpush1.msra.mxu0 0.0
        %1310 = vmatprep.subr.mxu0 0.0
        %1311 = vmatpush1.msra.mxu0 0.0
        %1312 = vmatprep.subr.mxu0 0.0
        %1313 = vmatpush1.msra.mxu0 0.0
        %1314 = vmatprep.subr.mxu0 0.0
        %1315 = vmatpush1.msra.mxu0 0.0
        %1316 = vmatprep.subr.mxu0 0.0
        %1317 = vmatpush1.msra.mxu0 0.0
        %1318 = vmatprep.subr.mxu0 0.0
        %1319 = vmatpush1.msra.mxu0 0.0
        %1320 = vmatprep.subr.mxu0 0.0
        %1321 = vmatpush1.msra.mxu0 0.0
        %1322 = vmatprep.subr.mxu0 0.0
        %1323 = vmatpush1.msra.mxu0 0.0
        %1324 = vmatprep.subr.mxu0 0.0
        %1325 = vmatpush1.msra.mxu0 0.0
        %1326 = vmatprep.subr.mxu0 0.0
        %1327 = vmatpush1.msra.mxu0 0.0
        %1328 = vmatprep.subr.mxu0 0.0
        %1329 = vmatpush1.msra.mxu0 0.0
        %1330 = vmatprep.subr.mxu0 0.0
        %1331 = vmatpush1.msra.mxu0 0.0
        %1332 = vmatprep.subr.mxu0 0.0
        %1333 = vmatpush1.msra.mxu0 0.0
        %1334 = vmatprep.subr.mxu0 0.0
        %1335 = vmatpush1.msra.mxu0 0.0
        %1336 = vmatprep.subr.mxu0 0.0
        %1337 = vmatpush1.msra.mxu0 0.0
        %1338 = vmatprep.subr.mxu0 0.0
        %1339 = vmatpush1.msra.mxu0 0.0
        %1340 = vmatprep.subr.mxu0 0.0
        %1341 = vmatpush1.msra.mxu0 0.0
        %1342 = vmatprep.subr.mxu0 0.0
        %1343 = vmatpush1.msra.mxu0 0.0
        %1344 = vmatprep.subr.mxu0 0.0
        %1345 = vmatpush1.msra.mxu0 0.0
        %1346 = vmatprep.mubr.f32.mxu0 0.0
        %1347 = vmatmul.mubr.f32.gmra.mrb[0].mxu0 %v574
        %v1348 = vpop.f32.mrb[0].mxu0
        %v1349 = vadd.f32 0.0, %v1348
        %v1350 = vpop.f32.mrb[0].mxu0
        %1351 = vdwg.mxu0
        %v1353 = vsel %vm725, %v1281, 0
        %1355 = vmatprep.subr.mxu0 0.0
        %1356 = vmatpush1.msra.mxu0 %v1349
        %1357 = vmatprep.subr.mxu0 0.0
        %1358 = vmatpush1.msra.mxu0 0.0
        %1359 = vmatprep.subr.mxu0 0.0
        %1360 = vmatpush1.msra.mxu0 0.0
        %1361 = vmatprep.subr.mxu0 0.0
        %1362 = vmatpush1.msra.mxu0 0.0
        %1363 = vmatprep.subr.mxu0 0.0
        %1364 = vmatpush1.msra.mxu0 0.0
        %1365 = vmatprep.subr.mxu0 0.0
        %1366 = vmatpush1.msra.mxu0 0.0
        %1367 = vmatprep.subr.mxu0 0.0
        %1368 = vmatpush1.msra.mxu0 0.0
        %1369 = vmatprep.subr.mxu0 0.0
        %1370 = vmatpush1.msra.mxu0 0.0
        %1371 = vmatprep.subr.mxu0 0.0
        %1372 = vmatpush1.msra.mxu0 0.0
        %1373 = vmatprep.subr.mxu0 0.0
        %1374 = vmatpush1.msra.mxu0 0.0
        %1375 = vmatprep.subr.mxu0 0.0
        %1376 = vmatpush1.msra.mxu0 0.0
        %1377 = vmatprep.subr.mxu0 0.0
        %1378 = vmatpush1.msra.mxu0 0.0
        %1379 = vmatprep.subr.mxu0 0.0
        %1380 = vmatpush1.msra.mxu0 0.0
        %1381 = vmatprep.subr.mxu0 0.0
        %1382 = vmatpush1.msra.mxu0 0.0
        %1383 = vmatprep.subr.mxu0 0.0
        %1384 = vmatpush1.msra.mxu0 0.0
        %1385 = vmatprep.subr.mxu0 0.0
        %1386 = vmatpush1.msra.mxu0 0.0
        %1387 = vmatprep.subr.mxu0 0.0
        %1388 = vmatpush1.msra.mxu0 0.0
        %1389 = vmatprep.subr.mxu0 0.0
        %1390 = vmatpush1.msra.mxu0 0.0
        %1391 = vmatprep.subr.mxu0 0.0
        %1392 = vmatpush1.msra.mxu0 0.0
        %1393 = vmatprep.subr.mxu0 0.0
        %1394 = vmatpush1.msra.mxu0 0.0
        %1395 = vmatprep.subr.mxu0 0.0
        %1396 = vmatpush1.msra.mxu0 0.0
        %1397 = vmatprep.subr.mxu0 0.0
        %1398 = vmatpush1.msra.mxu0 0.0
        %1399 = vmatprep.subr.mxu0 0.0
        %1400 = vmatpush1.msra.mxu0 0.0
        %1401 = vmatprep.subr.mxu0 0.0
        %1402 = vmatpush1.msra.mxu0 0.0
        %1403 = vmatprep.subr.mxu0 0.0
        %1404 = vmatpush1.msra.mxu0 0.0
        %1405 = vmatprep.subr.mxu0 0.0
        %1406 = vmatpush1.msra.mxu0 0.0
        %1407 = vmatprep.subr.mxu0 0.0
        %1408 = vmatpush1.msra.mxu0 0.0
        %1409 = vmatprep.subr.mxu0 0.0
        %1410 = vmatpush1.msra.mxu0 0.0
        %1411 = vmatprep.subr.mxu0 0.0
        %1412 = vmatpush1.msra.mxu0 0.0
        %1413 = vmatprep.subr.mxu0 0.0
        %1414 = vmatpush1.msra.mxu0 0.0
        %1415 = vmatprep.subr.mxu0 0.0
        %1416 = vmatpush1.msra.mxu0 0.0
        %1417 = vmatprep.subr.mxu0 0.0
        %1418 = vmatpush1.msra.mxu0 0.0
        %1419 = vmatprep.mubr.f32.mxu0 0.0
        %1420 = vmatmul.mubr.f32.gmra.mrb[0].mxu0 %v1353
        %v1421 = vpop.f32.mrb[0].mxu0
        %v1422 = vadd.f32 0.0, %v1421
        %v1423 = vpop.f32.mrb[0].mxu0
        %1424 = vdwg.mxu0
        %v1425 = vadd.f32 %v1191, %v1422
        %1426 = vrot.lane.b32.xlu0 %v643, 104
        %v1427 = vpop.permute.xlu0 %1426
        %1428 = vrot.lane.b32.xlu0 %v717, 104
        %v1429 = vpop.permute.xlu0 %1428
        %v1430 = vsel %vm725, %v1427, 0
        %v1432 = vsel %vm725, %v1429, 0
        %1434 = vmatprep.subr.mxu0 0.0
        %1435 = vmatpush1.xpose.msra.mxu0 %v1432
        %1436 = vmatprep.subr.mxu0 0.0
        %1437 = vmatpush1.xpose.msra.mxu0 0.0
        %1438 = vmatprep.subr.mxu0 0.0
        %1439 = vmatpush1.xpose.msra.mxu0 0.0
        %1440 = vmatprep.subr.mxu0 0.0
        %1441 = vmatpush1.xpose.msra.mxu0 0.0
        %1442 = vmatprep.subr.mxu0 0.0
        %1443 = vmatpush1.xpose.msra.mxu0 0.0
        %1444 = vmatprep.subr.mxu0 0.0
        %1445 = vmatpush1.xpose.msra.mxu0 0.0
        %1446 = vmatprep.subr.mxu0 0.0
        %1447 = vmatpush1.xpose.msra.mxu0 0.0
        %1448 = vmatprep.subr.mxu0 0.0
        %1449 = vmatpush1.xpose.msra.mxu0 0.0
        %1450 = vmatprep.subr.mxu0 0.0
        %1451 = vmatpush1.xpose.msra.mxu0 0.0
        %1452 = vmatprep.subr.mxu0 0.0
        %1453 = vmatpush1.xpose.msra.mxu0 0.0
        %1454 = vmatprep.subr.mxu0 0.0
        %1455 = vmatpush1.xpose.msra.mxu0 0.0
        %1456 = vmatprep.subr.mxu0 0.0
        %1457 = vmatpush1.xpose.msra.mxu0 0.0
        %1458 = vmatprep.subr.mxu0 0.0
        %1459 = vmatpush1.xpose.msra.mxu0 0.0
        %1460 = vmatprep.subr.mxu0 0.0
        %1461 = vmatpush1.xpose.msra.mxu0 0.0
        %1462 = vmatprep.subr.mxu0 0.0
        %1463 = vmatpush1.xpose.msra.mxu0 0.0
        %1464 = vmatprep.subr.mxu0 0.0
        %1465 = vmatpush1.xpose.msra.mxu0 0.0
        %1466 = vmatprep.subr.mxu0 0.0
        %1467 = vmatpush1.xpose.msra.mxu0 0.0
        %1468 = vmatprep.subr.mxu0 0.0
        %1469 = vmatpush1.xpose.msra.mxu0 0.0
        %1470 = vmatprep.subr.mxu0 0.0
        %1471 = vmatpush1.xpose.msra.mxu0 0.0
        %1472 = vmatprep.subr.mxu0 0.0
        %1473 = vmatpush1.xpose.msra.mxu0 0.0
        %1474 = vmatprep.subr.mxu0 0.0
        %1475 = vmatpush1.xpose.msra.mxu0 0.0
        %1476 = vmatprep.subr.mxu0 0.0
        %1477 = vmatpush1.xpose.msra.mxu0 0.0
        %1478 = vmatprep.subr.mxu0 0.0
        %1479 = vmatpush1.xpose.msra.mxu0 0.0
        %1480 = vmatprep.subr.mxu0 0.0
        %1481 = vmatpush1.xpose.msra.mxu0 0.0
        %1482 = vmatprep.subr.mxu0 0.0
        %1483 = vmatpush1.xpose.msra.mxu0 0.0
        %1484 = vmatprep.subr.mxu0 0.0
        %1485 = vmatpush1.xpose.msra.mxu0 0.0
        %1486 = vmatprep.subr.mxu0 0.0
        %1487 = vmatpush1.xpose.msra.mxu0 0.0
        %1488 = vmatprep.subr.mxu0 0.0
        %1489 = vmatpush1.xpose.msra.mxu0 0.0
        %1490 = vmatprep.subr.mxu0 0.0
        %1491 = vmatpush1.xpose.msra.mxu0 0.0
        %1492 = vmatprep.subr.mxu0 0.0
        %1493 = vmatpush1.xpose.msra.mxu0 0.0
        %1494 = vmatprep.subr.mxu0 0.0
        %1495 = vmatpush1.xpose.msra.mxu0 0.0
        %1496 = vmatprep.subr.mxu0 0.0
        %1497 = vmatpush1.xpose.msra.mxu0 0.0
        %1498 = vmatprep.mubr.f32.mxu0 0.0
        %1499 = vmatmul.mubr.f32.gmra.mrb[0].mxu0 %v1430
        %v1500 = vpop.f32.mrb[0].mxu0
        %v1501 = vadd.f32 0.0, %v1500
        %v1502 = vpop.f32.mrb[0].mxu0
        %1503 = vdwg.mxu0
        %v1504 = vmul.f32 %v1501, 0.35355338
        %v1505 = vsel %vm725, %v1504, -inf
        %1506 = vmax.xlane.f32.xlu0 %v1505
        %v1507 = vpop.xlane.xlu0 %1506
        %v1508 = vsub.f32 %v1504, %v1507
        %v1509 = vmul.f32 %v1508, 1.442695
        %v1510 = vpow.pop %v1509
        %v1511 = vsel %vm725, %v1510, 0.0
        %1512 = vadd.xlane.f32.xlu0 %v1511
        %v1513 = vpop.xlane.xlu0 %1512
        %v1514 = vrcp.pop %v1513
        %v1515 = vmul.f32 %v1510, %v1514
        %1516 = vmatprep.subr.mxu0 0.0
        %1517 = vmatpush1.msra.mxu0 %v545
        %1518 = vmatprep.subr.mxu0 0.0
        %1519 = vmatpush1.msra.mxu0 %v546
        %1520 = vmatprep.subr.mxu0 0.0
        %1521 = vmatpush1.msra.mxu0 %v547
        %1522 = vmatprep.subr.mxu0 0.0
        %1523 = vmatpush1.msra.mxu0 %v548
        %1524 = vmatprep.subr.mxu0 0.0
        %1525 = vmatpush1.msra.mxu0 0.0
        %1526 = vmatprep.subr.mxu0 0.0
        %1527 = vmatpush1.msra.mxu0 0.0
        %1528 = vmatprep.subr.mxu0 0.0
        %1529 = vmatpush1.msra.mxu0 0.0
        %1530 = vmatprep.subr.mxu0 0.0
        %1531 = vmatpush1.msra.mxu0 0.0
        %1532 = vmatprep.subr.mxu0 0.0
        %1533 = vmatpush1.msra.mxu0 0.0
        %1534 = vmatprep.subr.mxu0 0.0
        %1535 = vmatpush1.msra.mxu0 0.0
        %1536 = vmatprep.subr.mxu0 0.0
        %1537 = vmatpush1.msra.mxu0 0.0
        %1538 = vmatprep.subr.mxu0 0.0
        %1539 = vmatpush1.msra.mxu0 0.0
        %1540 = vmatprep.subr.mxu0 0.0
        %1541 = vmatpush1.msra.mxu0 0.0
        %1542 = vmatprep.subr.mxu0 0.0
        %1543 = vmatpush1.msra.mxu0 0.0
        %1544 = vmatprep.subr.mxu0 0.0
        %1545 = vmatpush1.msra.mxu0 0.0
        %1546 = vmatprep.subr.mxu0 0.0
        %1547 = vmatpush1.msra.mxu0 0.0
        %1548 = vmatprep.subr.mxu0 0.0
        %1549 = vmatpush1.msra.mxu0 0.0
        %1550 = vmatprep.subr.mxu0 0.0
        %1551 = vmatpush1.msra.mxu0 0.0
        %1552 = vmatprep.subr.mxu0 0.0
        %1553 = vmatpush1.msra.mxu0 0.0
        %1554 = vmatprep.subr.mxu0 0.0
        %1555 = vmatpush1.msra.mxu0 0.0
        %1556 = vmatprep.subr.mxu0 0.0
        %1557 = vmatpush1.msra.mxu0 0.0
        %1558 = vmatprep.subr.mxu0 0.0
        %1559 = vmatpush1.msra.mxu0 0.0
        %1560 = vmatprep.subr.mxu0 0.0
        %1561 = vmatpush1.msra.mxu0 0.0
        %1562 = vmatprep.subr.mxu0 0.0
        %1563 = vmatpush1.msra.mxu0 0.0
        %1564 = vmatprep.subr.mxu0 0.0
        %1565 = vmatpush1.msra.mxu0 0.0
        %1566 = vmatprep.subr.mxu0 0.0
        %1567 = vmatpush1.msra.mxu0 0.0
        %1568 = vmatprep.subr.mxu0 0.0
        %1569 = vmatpush1.msra.mxu0 0.0
        %1570 = vmatprep.subr.mxu0 0.0
        %1571 = vmatpush1.msra.mxu0 0.0
        %1572 = vmatprep.subr.mxu0 0.0
        %1573 = vmatpush1.msra.mxu0 0.0
        %1574 = vmatprep.subr.mxu0 0.0
        %1575 = vmatpush1.msra.mxu0 0.0
        %1576 = vmatprep.subr.mxu0 0.0
        %1577 = vmatpush1.msra.mxu0 0.0
        %1578 = vmatprep.subr.mxu0 0.0
        %1579 = vmatpush1.msra.mxu0 0.0
        %1580 = vmatprep.mubr.f32.mxu0 0.0
        %1581 = vmatmul.mubr.f32.gmra.mrb[0].mxu0 %v574
        %v1582 = vpop.f32.mrb[0].mxu0
        %v1583 = vadd.f32 0.0, %v1582
        %v1584 = vpop.f32.mrb[0].mxu0
        %1585 = vdwg.mxu0
        %v1587 = vsel %vm725, %v1515, 0
        %1589 = vmatprep.subr.mxu0 0.0
        %1590 = vmatpush1.msra.mxu0 %v1583
        %1591 = vmatprep.subr.mxu0 0.0
        %1592 = vmatpush1.msra.mxu0 0.0
        %1593 = vmatprep.subr.mxu0 0.0
        %1594 = vmatpush1.msra.mxu0 0.0
        %1595 = vmatprep.subr.mxu0 0.0
        %1596 = vmatpush1.msra.mxu0 0.0
        %1597 = vmatprep.subr.mxu0 0.0
        %1598 = vmatpush1.msra.mxu0 0.0
        %1599 = vmatprep.subr.mxu0 0.0
        %1600 = vmatpush1.msra.mxu0 0.0
        %1601 = vmatprep.subr.mxu0 0.0
        %1602 = vmatpush1.msra.mxu0 0.0
        %1603 = vmatprep.subr.mxu0 0.0
        %1604 = vmatpush1.msra.mxu0 0.0
        %1605 = vmatprep.subr.mxu0 0.0
        %1606 = vmatpush1.msra.mxu0 0.0
        %1607 = vmatprep.subr.mxu0 0.0
        %1608 = vmatpush1.msra.mxu0 0.0
        %1609 = vmatprep.subr.mxu0 0.0
        %1610 = vmatpush1.msra.mxu0 0.0
        %1611 = vmatprep.subr.mxu0 0.0
        %1612 = vmatpush1.msra.mxu0 0.0
        %1613 = vmatprep.subr.mxu0 0.0
        %1614 = vmatpush1.msra.mxu0 0.0
        %1615 = vmatprep.subr.mxu0 0.0
        %1616 = vmatpush1.msra.mxu0 0.0
        %1617 = vmatprep.subr.mxu0 0.0
        %1618 = vmatpush1.msra.mxu0 0.0
        %1619 = vmatprep.subr.mxu0 0.0
        %1620 = vmatpush1.msra.mxu0 0.0
        %1621 = vmatprep.subr.mxu0 0.0
        %1622 = vmatpush1.msra.mxu0 0.0
        %1623 = vmatprep.subr.mxu0 0.0
        %1624 = vmatpush1.msra.mxu0 0.0
        %1625 = vmatprep.subr.mxu0 0.0
        %1626 = vmatpush1.msra.mxu0 0.0
        %1627 = vmatprep.subr.mxu0 0.0
        %1628 = vmatpush1.msra.mxu0 0.0
        %1629 = vmatprep.subr.mxu0 0.0
        %1630 = vmatpush1.msra.mxu0 0.0
        %1631 = vmatprep.subr.mxu0 0.0
        %1632 = vmatpush1.msra.mxu0 0.0
        %1633 = vmatprep.subr.mxu0 0.0
        %1634 = vmatpush1.msra.mxu0 0.0
        %1635 = vmatprep.subr.mxu0 0.0
        %1636 = vmatpush1.msra.mxu0 0.0
        %1637 = vmatprep.subr.mxu0 0.0
        %1638 = vmatpush1.msra.mxu0 0.0
        %1639 = vmatprep.subr.mxu0 0.0
        %1640 = vmatpush1.msra.mxu0 0.0
        %1641 = vmatprep.subr.mxu0 0.0
        %1642 = vmatpush1.msra.mxu0 0.0
        %1643 = vmatprep.subr.mxu0 0.0
        %1644 = vmatpush1.msra.mxu0 0.0
        %1645 = vmatprep.subr.mxu0 0.0
        %1646 = vmatpush1.msra.mxu0 0.0
        %1647 = vmatprep.subr.mxu0 0.0
        %1648 = vmatpush1.msra.mxu0 0.0
        %1649 = vmatprep.subr.mxu0 0.0
        %1650 = vmatpush1.msra.mxu0 0.0
        %1651 = vmatprep.subr.mxu0 0.0
        %1652 = vmatpush1.msra.mxu0 0.0
        %1653 = vmatprep.mubr.f32.mxu0 0.0
        %1654 = vmatmul.mubr.f32.gmra.mrb[0].mxu0 %v1587
        %v1655 = vpop.f32.mrb[0].mxu0
        %v1656 = vadd.f32 0.0, %v1655
        %v1657 = vpop.f32.mrb[0].mxu0
        %1658 = vdwg.mxu0
        %v1659 = vadd.f32 %v1425, %v1656
        %v1660 = vadd.f32 %v513, %v1659
        %v1661 = vsel %vm572, %v1660, 0.0
        %1662 = vadd.xlane.f32.xlu0 %v1661
        %v1663 = vpop.xlane.xlu0 %1662
        %v1664 = vrcp.pop 32.0
        %v1665 = vmul.f32 %v1663, %v1664
        %v1666 = vsub.f32 %v1660, %v1665
        %v1667 = vmul.f32 %v1666, %v1666
        %v1668 = vsel %vm572, %v1667, 0.0
        %1669 = vadd.xlane.f32.xlu0 %v1668
        %v1670 = vpop.xlane.xlu0 %1669
        %v1671 = vmul.f32 %v1670, %v1664
        %v1672 = vadd.f32 %v1671, 1e-05
        %v1673 = vrsqrt.pop %v1672
        %v1674 = vmul.f32 %v1666, %v1673
        %v1675 = vlaneseq
        %v1676 = vshrl.u32 %v1675, 7
        %v1677 = vsub.s32 0, %v1676
        %v1678 = vrot.slane %v566, %v1677
        %v1679 = vmul.f32 %v1674, %v1678
        %v1680 = vlaneseq
        %v1681 = vshrl.u32 %v1680, 7
        %v1682 = vsub.s32 0, %v1681
        %v1683 = vrot.slane %v567, %v1682
        %v1684 = vadd.f32 %v1679, %v1683
        %v1685 = vlaneseq
        %v1686 = vshrl.u32 %v1685, 7
        %v1687 = vsub.s32 2, %v1686
        %v1688 = vrot.slane %v532, %v1687
        %v1690 = vsel %vm572, %v1684, 0
        %1692 = vmatprep.subr.mxu0 0.0
        %1693 = vmatpush1.msra.mxu0 %v524
        %1694 = vmatprep.subr.mxu0 0.0
        %1695 = vmatpush1.msra.mxu0 %v525
        %1696 = vmatprep.subr.mxu0 0.0
        %1697 = vmatpush1.msra.mxu0 %v526
        %1698 = vmatprep.subr.mxu0 0.0
        %1699 = vmatpush1.msra.mxu0 %v527
        %1700 = vmatprep.subr.mxu0 0.0
        %1701 = vmatpush1.msra.mxu0 0.0
        %1702 = vmatprep.subr.mxu0 0.0
        %1703 = vmatpush1.msra.mxu0 0.0
        %1704 = vmatprep.subr.mxu0 0.0
        %1705 = vmatpush1.msra.mxu0 0.0
        %1706 = vmatprep.subr.mxu0 0.0
        %1707 = vmatpush1.msra.mxu0 0.0
        %1708 = vmatprep.subr.mxu0 0.0
        %1709 = vmatpush1.msra.mxu0 0.0
        %1710 = vmatprep.subr.mxu0 0.0
        %1711 = vmatpush1.msra.mxu0 0.0
        %1712 = vmatprep.subr.mxu0 0.0
        %1713 = vmatpush1.msra.mxu0 0.0
        %1714 = vmatprep.subr.mxu0 0.0
        %1715 = vmatpush1.msra.mxu0 0.0
        %1716 = vmatprep.subr.mxu0 0.0
        %1717 = vmatpush1.msra.mxu0 0.0
        %1718 = vmatprep.subr.mxu0 0.0
        %1719 = vmatpush1.msra.mxu0 0.0
        %1720 = vmatprep.subr.mxu0 0.0
        %1721 = vmatpush1.msra.mxu0 0.0
        %1722 = vmatprep.subr.mxu0 0.0
        %1723 = vmatpush1.msra.mxu0 0.0
        %1724 = vmatprep.subr.mxu0 0.0
        %1725 = vmatpush1.msra.mxu0 0.0
        %1726 = vmatprep.subr.mxu0 0.0
        %1727 = vmatpush1.msra.mxu0 0.0
        %1728 = vmatprep.subr.mxu0 0.0
        %1729 = vmatpush1.msra.mxu0 0.0
        %1730 = vmatprep.subr.mxu0 0.0
        %1731 = vmatpush1.msra.mxu0 0.0
        %1732 = vmatprep.subr.mxu0 0.0
        %1733 = vmatpush1.msra.mxu0 0.0
        %1734 = vmatprep.subr.mxu0 0.0
        %1735 = vmatpush1.msra.mxu0 0.0
        %1736 = vmatprep.subr.mxu0 0.0
        %1737 = vmatpush1.msra.mxu0 0.0
        %1738 = vmatprep.subr.mxu0 0.0
        %1739 = vmatpush1.msra.mxu0 0.0
        %1740 = vmatprep.subr.mxu0 0.0
        %1741 = vmatpush1.msra.mxu0 0.0
        %1742 = vmatprep.subr.mxu0 0.0
        %1743 = vmatpush1.msra.mxu0 0.0
        %1744 = vmatprep.subr.mxu0 0.0
        %1745 = vmatpush1.msra.mxu0 0.0
        %1746 = vmatprep.subr.mxu0 0.0
        %1747 = vmatpush1.msra.mxu0 0.0
        %1748 = vmatprep.subr.mxu0 0.0
        %1749 = vmatpush1.msra.mxu0 0.0
        %1750 = vmatprep.subr.mxu0 0.0
        %1751 = vmatpush1.msra.mxu0 0.0
        %1752 = vmatprep.subr.mxu0 0.0
        %1753 = vmatpush1.msra.mxu0 0.0
        %1754 = vmatprep.subr.mxu0 0.0
        %1755 = vmatpush1.msra.mxu0 0.0
        %1756 = vmatprep.mubr.f32.mxu0 0.0
        %1757 = vmatmul.mubr.f32.gmra.mrb[0].mxu0 %v1690
        %v1758 = vpop.f32.mrb[0].mxu0
        %v1759 = vadd.f32 %v1688, %v1758
        %v1760 = vpop.f32.mrb[0].mxu0
        %1761 = vdwg.mxu0
        %v1762 = vlaneseq
        %v1763 = vshrl.u32 %v1762, 7
        %v1764 = vsub.s32 3, %v1763
        %v1765 = vrot.slane %v532, %v1764
        %v1767 = vsel %vm572, %v514, 0
        %v1770 = vsel %vm572, %v515, 0
        %1772 = vmatprep.subr.mxu0 0.0
        %1773 = vmatpush1.msra.mxu0 %v528
        %1774 = vmatprep.subr.mxu0 0.0
        %1775 = vmatpush1.msra.mxu0 %v529
        %1776 = vmatprep.subr.mxu0 0.0
        %1777 = vmatpush1.msra.mxu0 %v530
        %1778 = vmatprep.subr.mxu0 0.0
        %1779 = vmatpush1.msra.mxu0 %v531
        %1780 = vmatprep.subr.mxu0 0.0
        %1781 = vmatpush1.msra.mxu0 0.0
        %1782 = vmatprep.subr.mxu0 0.0
        %1783 = vmatpush1.msra.mxu0 0.0
        %1784 = vmatprep.subr.mxu0 0.0
        %1785 = vmatpush1.msra.mxu0 0.0
        %1786 = vmatprep.subr.mxu0 0.0
        %1787 = vmatpush1.msra.mxu0 0.0
        %1788 = vmatprep.subr.mxu0 0.0
        %1789 = vmatpush1.msra.mxu0 0.0
        %1790 = vmatprep.subr.mxu0 0.0
        %1791 = vmatpush1.msra.mxu0 0.0
        %1792 = vmatprep.subr.mxu0 0.0
        %1793 = vmatpush1.msra.mxu0 0.0
        %1794 = vmatprep.subr.mxu0 0.0
        %1795 = vmatpush1.msra.mxu0 0.0
        %1796 = vmatprep.subr.mxu0 0.0
        %1797 = vmatpush1.msra.mxu0 0.0
        %1798 = vmatprep.subr.mxu0 0.0
        %1799 = vmatpush1.msra.mxu0 0.0
        %1800 = vmatprep.subr.mxu0 0.0
        %1801 = vmatpush1.msra.mxu0 0.0
        %1802 = vmatprep.subr.mxu0 0.0
        %1803 = vmatpush1.msra.mxu0 0.0
        %1804 = vmatprep.subr.mxu0 0.0
        %1805 = vmatpush1.msra.mxu0 0.0
        %1806 = vmatprep.subr.mxu0 0.0
        %1807 = vmatpush1.msra.mxu0 0.0
        %1808 = vmatprep.subr.mxu0 0.0
        %1809 = vmatpush1.msra.mxu0 0.0
        %1810 = vmatprep.subr.mxu0 0.0
        %1811 = vmatpush1.msra.mxu0 0.0
        %1812 = vmatprep.subr.mxu0 0.0
        %1813 = vmatpush1.msra.mxu0 0.0
        %1814 = vmatprep.subr.mxu0 0.0
        %1815 = vmatpush1.msra.mxu0 0.0
        %1816 = vmatprep.subr.mxu0 0.0
        %1817 = vmatpush1.msra.mxu0 0.0
        %1818 = vmatprep.subr.mxu0 0.0
        %1819 = vmatpush1.msra.mxu0 0.0
        %1820 = vmatprep.subr.mxu0 0.0
        %1821 = vmatpush1.msra.mxu0 0.0
        %1822 = vmatprep.subr.mxu0 0.0
        %1823 = vmatpush1.msra.mxu0 0.0
        %1824 = vmatprep.subr.mxu0 0.0
        %1825 = vmatpush1.msra.mxu0 0.0
        %1826 = vmatprep.subr.mxu0 0.0
        %1827 = vmatpush1.msra.mxu0 0.0
        %1828 = vmatprep.subr.mxu0 0.0
        %1829 = vmatpush1.msra.mxu0 0.0
        %1830 = vmatprep.subr.mxu0 0.0
        %1831 = vmatpush1.msra.mxu0 0.0
        %1832 = vmatprep.subr.mxu0 0.0
        %1833 = vmatpush1.msra.mxu0 0.0
        %1834 = vmatprep.subr.mxu0 0.0
        %1835 = vmatpush1.msra.mxu0 0.0
        %1836 = vmatprep.mubr.f32.mxu0 0.0
        %1837 = vmatmul.mubr.f32.gmra.mrb[0].mxu0 %v1767
        %v1838 = vpop.f32.mrb[0].mxu0
        %v1839 = vadd.f32 %v1765, %v1838
        %v1840 = vpop.f32.mrb[0].mxu0
        %1841 = vmatprep.mubr.f32.mxu0 0.0
        %1842 = vmatmul.mubr.f32.gmra.mrb[0].mxu0 %v1770
        %v1843 = vpop.f32.mrb[0].mxu0
        %v1844 = vadd.f32 %v1765, %v1843
        %v1845 = vpop.f32.mrb[0].mxu0
        %1846 = vdwg.mxu0
        %v1847 = vlaneseq
        %v1848 = vshrl.u32 %v1847, 7
        %v1849 = vsub.s32 1, %v1848
        %v1850 = vrot.slane %v565, %v1849
        %v1851 = vadd.f32 %v1850, 0.0
        %v1853 = vsel %vm725, %v1759, 0
        %v1856 = vsel %vm725, %v1839, 0
        %v1859 = vsel %vm725, %v1844, 0
        %1861 = vmatprep.subr.mxu0 0.0
        %1862 = vmatpush1.xpose.msra.mxu0 %v1856
        %1863 = vmatprep.subr.mxu0 0.0
        %1864 = vmatpush1.xpose.msra.mxu0 %v1859
        %1865 = vmatprep.subr.mxu0 0.0
        %1866 = vmatpush1.xpose.msra.mxu0 0.0
        %1867 = vmatprep.subr.mxu0 0.0
        %1868 = vmatpush1.xpose.msra.mxu0 0.0
        %1869 = vmatprep.subr.mxu0 0.0
        %1870 = vmatpush1.xpose.msra.mxu0 0.0
        %1871 = vmatprep.subr.mxu0 0.0
        %1872 = vmatpush1.xpose.msra.mxu0 0.0
        %1873 = vmatprep.subr.mxu0 0.0
        %1874 = vmatpush1.xpose.msra.mxu0 0.0
        %1875 = vmatprep.subr.mxu0 0.0
        %1876 = vmatpush1.xpose.msra.mxu0 0.0
        %1877 = vmatprep.subr.mxu0 0.0
        %1878 = vmatpush1.xpose.msra.mxu0 0.0
        %1879 = vmatprep.subr.mxu0 0.0
        %1880 = vmatpush1.xpose.msra.mxu0 0.0
        %1881 = vmatprep.subr.mxu0 0.0
        %1882 = vmatpush1.xpose.msra.mxu0 0.0
        %1883 = vmatprep.subr.mxu0 0.0
        %1884 = vmatpush1.xpose.msra.mxu0 0.0
        %1885 = vmatprep.subr.mxu0 0.0
        %1886 = vmatpush1.xpose.msra.mxu0 0.0
        %1887 = vmatprep.subr.mxu0 0.0
        %1888 = vmatpush1.xpose.msra.mxu0 0.0
        %1889 = vmatprep.subr.mxu0 0.0
        %1890 = vmatpush1.xpose.msra.mxu0 0.0
        %1891 = vmatprep.subr.mxu0 0.0
        %1892 = vmatpush1.xpose.msra.mxu0 0.0
        %1893 = vmatprep.subr.mxu0 0.0
        %1894 = vmatpush1.xpose.msra.mxu0 0.0
        %1895 = vmatprep.subr.mxu0 0.0
        %1896 = vmatpush1.xpose.msra.mxu0 0.0
        %1897 = vmatprep.subr.mxu0 0.0
        %1898 = vmatpush1.xpose.msra.mxu0 0.0
        %1899 = vmatprep.subr.mxu0 0.0
        %1900 = vmatpush1.xpose.msra.mxu0 0.0
        %1901 = vmatprep.subr.mxu0 0.0
        %1902 = vmatpush1.xpose.msra.mxu0 0.0
        %1903 = vmatprep.subr.mxu0 0.0
        %1904 = vmatpush1.xpose.msra.mxu0 0.0
        %1905 = vmatprep.subr.mxu0 0.0
        %1906 = vmatpush1.xpose.msra.mxu0 0.0
        %1907 = vmatprep.subr.mxu0 0.0
        %1908 = vmatpush1.xpose.msra.mxu0 0.0
        %1909 = vmatprep.subr.mxu0 0.0
        %1910 = vmatpush1.xpose.msra.mxu0 0.0
        %1911 = vmatprep.subr.mxu0 0.0
        %1912 = vmatpush1.xpose.msra.mxu0 0.0
        %1913 = vmatprep.subr.mxu0 0.0
        %1914 = vmatpush1.xpose.msra.mxu0 0.0
        %1915 = vmatprep.subr.mxu0 0.0
        %1916 = vmatpush1.xpose.msra.mxu0 0.0
        %1917 = vmatprep.subr.mxu0 0.0
        %1918 = vmatpush1.xpose.msra.mxu0 0.0
        %1919 = vmatprep.subr.mxu0 0.0
        %1920 = vmatpush1.xpose.msra.mxu0 0.0
        %1921 = vmatprep.subr.mxu0 0.0
        %1922 = vmatpush1.xpose.msra.mxu0 0.0
        %1923 = vmatprep.subr.mxu0 0.0
        %1924 = vmatpush1.xpose.msra.mxu0 0.0
        %1925 = vmatprep.mubr.f32.mxu0 0.0
        %1926 = vmatmul.mubr.f32.gmra.mrb[0].mxu0 %v1853
        %v1927 = vpop.f32.mrb[0].mxu0
        %v1928 = vadd.f32 0.0, %v1927
        %v1929 = vpop.f32.mrb[0].mxu0
        %1930 = vdwg.mxu0
        %v1931 = vmul.f32 %v1928, 0.35355338
        %vm1932 = vcmask 130048
        %v1933 = vsel %vm1932, %v1931, -inf
        %1934 = vmax.xlane.f32.xlu0 %v1933
        %v1935 = vpop.xlane.xlu0 %1934
        %v1936 = vsub.f32 %v1931, %v1935
        %v1937 = vmul.f32 %v1936, 1.442695
        %v1938 = vpow.pop %v1937
        %v1939 = vsel %vm1932, %v1938, 0.0
        %1940 = vadd.xlane.f32.xlu0 %v1939
        %v1941 = vpop.xlane.xlu0 %1940
        %v1942 = vrcp.pop %v1941
        %v1943 = vmul.f32 %v1938, %v1942
        %1944 = vmatprep.subr.mxu0 0.0
        %1945 = vmatpush1.msra.mxu0 %v549
        %1946 = vmatprep.subr.mxu0 0.0
        %1947 = vmatpush1.msra.mxu0 %v550
        %1948 = vmatprep.subr.mxu0 0.0
        %1949 = vmatpush1.msra.mxu0 %v551
        %1950 = vmatprep.subr.mxu0 0.0
        %1951 = vmatpush1.msra.mxu0 %v552
        %1952 = vmatprep.subr.mxu0 0.0
        %1953 = vmatpush1.msra.mxu0 0.0
        %1954 = vmatprep.subr.mxu0 0.0
        %1955 = vmatpush1.msra.mxu0 0.0
        %1956 = vmatprep.subr.mxu0 0.0
        %1957 = vmatpush1.msra.mxu0 0.0
        %1958 = vmatprep.subr.mxu0 0.0
        %1959 = vmatpush1.msra.mxu0 0.0
        %1960 = vmatprep.subr.mxu0 0.0
        %1961 = vmatpush1.msra.mxu0 0.0
        %1962 = vmatprep.subr.mxu0 0.0
        %1963 = vmatpush1.msra.mxu0 0.0
        %1964 = vmatprep.subr.mxu0 0.0
        %1965 = vmatpush1.msra.mxu0 0.0
        %1966 = vmatprep.subr.mxu0 0.0
        %1967 = vmatpush1.msra.mxu0 0.0
        %1968 = vmatprep.subr.mxu0 0.0
        %1969 = vmatpush1.msra.mxu0 0.0
        %1970 = vmatprep.subr.mxu0 0.0
        %1971 = vmatpush1.msra.mxu0 0.0
        %1972 = vmatprep.subr.mxu0 0.0
        %1973 = vmatpush1.msra.mxu0 0.0
        %1974 = vmatprep.subr.mxu0 0.0
        %1975 = vmatpush1.msra.mxu0 0.0
        %1976 = vmatprep.subr.mxu0 0.0
        %1977 = vmatpush1.msra.mxu0 0.0
        %1978 = vmatprep.subr.mxu0 0.0
        %1979 = vmatpush1.msra.mxu0 0.0
        %1980 = vmatprep.subr.mxu0 0.0
        %1981 = vmatpush1.msra.mxu0 0.0
        %1982 = vmatprep.subr.mxu0 0.0
        %1983 = vmatpush1.msra.mxu0 0.0
        %1984 = vmatprep.subr.mxu0 0.0
        %1985 = vmatpush1.msra.mxu0 0.0
        %1986 = vmatprep.subr.mxu0 0.0
        %1987 = vmatpush1.msra.mxu0 0.0
        %1988 = vmatprep.subr.mxu0 0.0
        %1989 = vmatpush1.msra.mxu0 0.0
        %1990 = vmatprep.subr.mxu0 0.0
        %1991 = vmatpush1.msra.mxu0 0.0
        %1992 = vmatprep.subr.mxu0 0.0
        %1993 = vmatpush1.msra.mxu0 0.0
        %1994 = vmatprep.subr.mxu0 0.0
        %1995 = vmatpush1.msra.mxu0 0.0
        %1996 = vmatprep.subr.mxu0 0.0
        %1997 = vmatpush1.msra.mxu0 0.0
        %1998 = vmatprep.subr.mxu0 0.0
        %1999 = vmatpush1.msra.mxu0 0.0
        %2000 = vmatprep.subr.mxu0 0.0
        %2001 = vmatpush1.msra.mxu0 0.0
        %2002 = vmatprep.subr.mxu0 0.0
        %2003 = vmatpush1.msra.mxu0 0.0
        %2004 = vmatprep.subr.mxu0 0.0
        %2005 = vmatpush1.msra.mxu0 0.0
        %2006 = vmatprep.subr.mxu0 0.0
        %2007 = vmatpush1.msra.mxu0 0.0
        %2008 = vmatprep.mubr.f32.mxu0 0.0
        %2009 = vmatmul.mubr.f32.gmra.mrb[0].mxu0 %v1767
        %v2010 = vpop.f32.mrb[0].mxu0
        %v2011 = vadd.f32 0.0, %v2010
        %v2012 = vpop.f32.mrb[0].mxu0
        %2013 = vmatprep.mubr.f32.mxu0 0.0
        %2014 = vmatmul.mubr.f32.gmra.mrb[0].mxu0 %v1770
        %v2015 = vpop.f32.mrb[0].mxu0
        %v2016 = vadd.f32 0.0, %v2015
        %v2017 = vpop.f32.mrb[0].mxu0
        %2018 = vdwg.mxu0
        %v2020 = vsel %vm1932, %v1943, 0
        %2022 = vmatprep.subr.mxu0 0.0
        %2023 = vmatpush1.msra.mxu0 %v2011
        %2024 = vmatprep.subr.mxu0 0.0
        %2025 = vmatpush1.msra.mxu0 %v2016
        %2026 = vmatprep.subr.mxu0 0.0
        %2027 = vmatpush1.msra.mxu0 0.0
        %2028 = vmatprep.subr.mxu0 0.0
        %2029 = vmatpush1.msra.mxu0 0.0
        %2030 = vmatprep.subr.mxu0 0.0
        %2031 = vmatpush1.msra.mxu0 0.0
        %2032 = vmatprep.subr.mxu0 0.0
        %2033 = vmatpush1.msra.mxu0 0.0
        %2034 = vmatprep.subr.mxu0 0.0
        %2035 = vmatpush1.msra.mxu0 0.0
        %2036 = vmatprep.subr.mxu0 0.0
        %2037 = vmatpush1.msra.mxu0 0.0
        %2038 = vmatprep.subr.mxu0 0.0
        %2039 = vmatpush1.msra.mxu0 0.0
        %2040 = vmatprep.subr.mxu0 0.0
        %2041 = vmatpush1.msra.mxu0 0.0
        %2042 = vmatprep.subr.mxu0 0.0
        %2043 = vmatpush1.msra.mxu0 0.0
        %2044 = vmatprep.subr.mxu0 0.0
        %2045 = vmatpush1.msra.mxu0 0.0
        %2046 = vmatprep.subr.mxu0 0.0
        %2047 = vmatpush1.msra.mxu0 0.0
        %2048 = vmatprep.subr.mxu0 0.0
        %2049 = vmatpush1.msra.mxu0 0.0
        %2050 = vmatprep.subr.mxu0 0.0
        %2051 = vmatpush1.msra.mxu0 0.0
        %2052 = vmatprep.subr.mxu0 0.0
        %2053 = vmatpush1.msra.mxu0 0.0
        %2054 = vmatprep.subr.mxu0 0.0
        %2055 = vmatpush1.msra.mxu0 0.0
        %2056 = vmatprep.subr.mxu0 0.0
        %2057 = vmatpush1.msra.mxu0 0.0
        %2058 = vmatprep.subr.mxu0 0.0
        %2059 = vmatpush1.msra.mxu0 0.0
        %2060 = vmatprep.subr.mxu0 0.0
        %2061 = vmatpush1.msra.mxu0 0.0
        %2062 = vmatprep.subr.mxu0 0.0
        %2063 = vmatpush1.msra.mxu0 0.0
        %2064 = vmatprep.subr.mxu0 0.0
        %2065 = vmatpush1.msra.mxu0 0.0
        %2066 = vmatprep.subr.mxu0 0.0
        %2067 = vmatpush1.msra.mxu0 0.0
        %2068 = vmatprep.subr.mxu0 0.0
        %2069 = vmatpush1.msra.mxu0 0.0
        %2070 = vmatprep.subr.mxu0 0.0
        %2071 = vmatpush1.msra.mxu0 0.0
        %2072 = vmatprep.subr.mxu0 0.0
        %2073 = vmatpush1.msra.mxu0 0.0
        %2074 = vmatprep.subr.mxu0 0.0
        %2075 = vmatpush1.msra.mxu0 0.0
        %2076 = vmatprep.subr.mxu0 0.0
        %2077 = vmatpush1.msra.mxu0 0.0
        %2078 = vmatprep.subr.mxu0 0.0
        %2079 = vmatpush1.msra.mxu0 0.0
        %2080 = vmatprep.subr.mxu0 0.0
        %2081 = vmatpush1.msra.mxu0 0.0
        %2082 = vmatprep.subr.mxu0 0.0
        %2083 = vmatpush1.msra.mxu0 0.0
        %2084 = vmatprep.subr.mxu0 0.0
        %2085 = vmatpush1.msra.mxu0 0.0
        %2086 = vmatprep.mubr.f32.mxu0 0.0
        %2087 = vmatmul.mubr.f32.gmra.mrb[0].mxu0 %v2020
        %v2088 = vpop.f32.mrb[0].mxu0
        %v2089 = vadd.f32 0.0, %v2088
        %v2090 = vpop.f32.mrb[0].mxu0
        %2091 = vdwg.mxu0
        %v2092 = vadd.f32 %v1851, %v2089
        %2093 = vrot.lane.b32.xlu0 %v1759, 120
        %v2094 = vpop.permute.xlu0 %2093
        %2095 = vrot.lane.b32.xlu0 %v1839, 120
        %v2096 = vpop.permute.xlu0 %2095
        %2097 = vrot.lane.b32.xlu0 %v1844, 120
        %v2098 = vpop.permute.xlu0 %2097
        %v2099 = vsel %vm725, %v2094, 0
        %v2101 = vsel %vm725, %v2096, 0
        %v2103 = vsel %vm725, %v2098, 0
        %2105 = vmatprep.subr.mxu0 0.0
        %2106 = vmatpush1.xpose.msra.mxu0 %v2101
        %2107 = vmatprep.subr.mxu0 0.0
        %2108 = vmatpush1.xpose.msra.mxu0 %v2103
        %2109 = vmatprep.subr.mxu0 0.0
        %2110 = vmatpush1.xpose.msra.mxu0 0.0
        %2111 = vmatprep.subr.mxu0 0.0
        %2112 = vmatpush1.xpose.msra.mxu0 0.0
        %2113 = vmatprep.subr.mxu0 0.0
        %2114 = vmatpush1.xpose.msra.mxu0 0.0
        %2115 = vmatprep.subr.mxu0 0.0
        %2116 = vmatpush1.xpose.msra.mxu0 0.0
        %2117 = vmatprep.subr.mxu0 0.0
        %2118 = vmatpush1.xpose.msra.mxu0 0.0
        %2119 = vmatprep.subr.mxu0 0.0
        %2120 = vmatpush1.xpose.msra.mxu0 0.0
        %2121 = vmatprep.subr.mxu0 0.0
        %2122 = vmatpush1.xpose.msra.mxu0 0.0
        %2123 = vmatprep.subr.mxu0 0.0
        %2124 = vmatpush1.xpose.msra.mxu0 0.0
        %2125 = vmatprep.subr.mxu0 0.0
        %2126 = vmatpush1.xpose.msra.mxu0 0.0
        %2127 = vmatprep.subr.mxu0 0.0
        %2128 = vmatpush1.xpose.msra.mxu0 0.0
        %2129 = vmatprep.subr.mxu0 0.0
        %2130 = vmatpush1.xpose.msra.mxu0 0.0
        %2131 = vmatprep.subr.mxu0 0.0
        %2132 = vmatpush1.xpose.msra.mxu0 0.0
        %2133 = vmatprep.subr.mxu0 0.0
        %2134 = vmatpush1.xpose.msra.mxu0 0.0
        %2135 = vmatprep.subr.mxu0 0.0
        %2136 = vmatpush1.xpose.msra.mxu0 0.0
        %2137 = vmatprep.subr.mxu0 0.0
        %2138 = vmatpush1.xpose.msra.mxu0 0.0
        %2139 = vmatprep.subr.mxu0 0.0
        %2140 = vmatpush1.xpose.msra.mxu0 0.0
        %2141 = vmatprep.subr.mxu0 0.0
        %2142 = vmatpush1.xpose.msra.mxu0 0.0
        %2143 = vmatprep.subr.mxu0 0.0
        %2144 = vmatpush1.xpose.msra.mxu0 0.0
        %2145 = vmatprep.subr.mxu0 0.0
        %2146 = vmatpush1.xpose.msra.mxu0 0.0
        %2147 = vmatprep.subr.mxu0 0.0
        %2148 = vmatpush1.xpose.msra.mxu0 0.0
        %2149 = vmatprep.subr.mxu0 0.0
        %2150 = vmatpush1.xpose.msra.mxu0 0.0
        %2151 = vmatprep.subr.mxu0 0.0
        %2152 = vmatpush1.xpose.msra.mxu0 0.0
        %2153 = vmatprep.subr.mxu0 0.0
        %2154 = vmatpush1.xpose.msra.mxu0 0.0
        %2155 = vmatprep.subr.mxu0 0.0
        %2156 = vmatpush1.xpose.msra.mxu0 0.0
        %2157 = vmatprep.subr.mxu0 0.0
        %2158 = vmatpush1.xpose.msra.mxu0 0.0
        %2159 = vmatprep.subr.mxu0 0.0
        %2160 = vmatpush1.xpose.msra.mxu0 0.0
        %2161 = vmatprep.subr.mxu0 0.0
        %2162 = vmatpush1.xpose.msra.mxu0 0.0
        %2163 = vmatprep.subr.mxu0 0.0
        %2164 = vmatpush1.xpose.msra.mxu0 0.0
        %2165 = vmatprep.subr.mxu0 0.0
        %2166 = vmatpush1.xpose.msra.mxu0 0.0
        %2167 = vmatprep.subr.mxu0 0.0
        %2168 = vmatpush1.xpose.msra.mxu0 0.0
        %2169 = vmatprep.mubr.f32.mxu0 0.0
        %2170 = vmatmul.mubr.f32.gmra.mrb[0].mxu0 %v2099
        %v2171 = vpop.f32.mrb[0].mxu0
        %v2172 = vadd.f32 0.0, %v2171
        %v2173 = vpop.f32.mrb[0].mxu0
        %2174 = vdwg.mxu0
        %v2175 = vmul.f32 %v2172, 0.35355338
        %v2176 = vsel %vm1932, %v2175, -inf
        %2177 = vmax.xlane.f32.xlu0 %v2176
        %v2178 = vpop.xlane.xlu0 %2177
        %v2179 = vsub.f32 %v2175, %v2178
        %v2180 = vmul.f32 %v2179, 1.442695
        %v2181 = vpow.pop %v2180
        %v2182 = vsel %vm1932, %v2181, 0.0
        %2183 = vadd.xlane.f32.xlu0 %v2182
        %v2184 = vpop.xlane.xlu0 %2183
        %v2185 = vrcp.pop %v2184
        %v2186 = vmul.f32 %v2181, %v2185
        %2187 = vmatprep.subr.mxu0 0.0
        %2188 = vmatpush1.msra.mxu0 %v553
        %2189 = vmatprep.subr.mxu0 0.0
        %2190 = vmatpush1.msra.mxu0 %v554
        %2191 = vmatprep.subr.mxu0 0.0
        %2192 = vmatpush1.msra.mxu0 %v555
        %2193 = vmatprep.subr.mxu0 0.0
        %2194 = vmatpush1.msra.mxu0 %v556
        %2195 = vmatprep.subr.mxu0 0.0
        %2196 = vmatpush1.msra.mxu0 0.0
        %2197 = vmatprep.subr.mxu0 0.0
        %2198 = vmatpush1.msra.mxu0 0.0
        %2199 = vmatprep.subr.mxu0 0.0
        %2200 = vmatpush1.msra.mxu0 0.0
        %2201 = vmatprep.subr.mxu0 0.0
        %2202 = vmatpush1.msra.mxu0 0.0
        %2203 = vmatprep.subr.mxu0 0.0
        %2204 = vmatpush1.msra.mxu0 0.0
        %2205 = vmatprep.subr.mxu0 0.0
        %2206 = vmatpush1.msra.mxu0 0.0
        %2207 = vmatprep.subr.mxu0 0.0
        %2208 = vmatpush1.msra.mxu0 0.0
        %2209 = vmatprep.subr.mxu0 0.0
        %2210 = vmatpush1.msra.mxu0 0.0
        %2211 = vmatprep.subr.mxu0 0.0
        %2212 = vmatpush1.msra.mxu0 0.0
        %2213 = vmatprep.subr.mxu0 0.0
        %2214 = vmatpush1.msra.mxu0 0.0
        %2215 = vmatprep.subr.mxu0 0.0
        %2216 = vmatpush1.msra.mxu0 0.0
        %2217 = vmatprep.subr.mxu0 0.0
        %2218 = vmatpush1.msra.mxu0 0.0
        %2219 = vmatprep.subr.mxu0 0.0
        %2220 = vmatpush1.msra.mxu0 0.0
        %2221 = vmatprep.subr.mxu0 0.0
        %2222 = vmatpush1.msra.mxu0 0.0
        %2223 = vmatprep.subr.mxu0 0.0
        %2224 = vmatpush1.msra.mxu0 0.0
        %2225 = vmatprep.subr.mxu0 0.0
        %2226 = vmatpush1.msra.mxu0 0.0
        %2227 = vmatprep.subr.mxu0 0.0
        %2228 = vmatpush1.msra.mxu0 0.0
        %2229 = vmatprep.subr.mxu0 0.0
        %2230 = vmatpush1.msra.mxu0 0.0
        %2231 = vmatprep.subr.mxu0 0.0
        %2232 = vmatpush1.msra.mxu0 0.0
        %2233 = vmatprep.subr.mxu0 0.0
        %2234 = vmatpush1.msra.mxu0 0.0
        %2235 = vmatprep.subr.mxu0 0.0
        %2236 = vmatpush1.msra.mxu0 0.0
        %2237 = vmatprep.subr.mxu0 0.0
        %2238 = vmatpush1.msra.mxu0 0.0
        %2239 = vmatprep.subr.mxu0 0.0
        %2240 = vmatpush1.msra.mxu0 0.0
        %2241 = vmatprep.subr.mxu0 0.0
        %2242 = vmatpush1.msra.mxu0 0.0
        %2243 = vmatprep.subr.mxu0 0.0
        %2244 = vmatpush1.msra.mxu0 0.0
        %2245 = vmatprep.subr.mxu0 0.0
        %2246 = vmatpush1.msra.mxu0 0.0
        %2247 = vmatprep.subr.mxu0 0.0
        %2248 = vmatpush1.msra.mxu0 0.0
        %2249 = vmatprep.subr.mxu0 0.0
        %2250 = vmatpush1.msra.mxu0 0.0
        %2251 = vmatprep.mubr.f32.mxu0 0.0
        %2252 = vmatmul.mubr.f32.gmra.mrb[0].mxu0 %v1767
        %v2253 = vpop.f32.mrb[0].mxu0
        %v2254 = vadd.f32 0.0, %v2253
        %v2255 = vpop.f32.mrb[0].mxu0
        %2256 = vmatprep.mubr.f32.mxu0 0.0
        %2257 = vmatmul.mubr.f32.gmra.mrb[0].mxu0 %v1770
        %v2258 = vpop.f32.mrb[0].mxu0
        %v2259 = vadd.f32 0.0, %v2258
        %v2260 = vpop.f32.mrb[0].mxu0
        %2261 = vdwg.mxu0
        %v2263 = vsel %vm1932, %v2186, 0
        %2265 = vmatprep.subr.mxu0 0.0
        %2266 = vmatpush1.msra.mxu0 %v2254
        %2267 = vmatprep.subr.mxu0 0.0
        %2268 = vmatpush1.msra.mxu0 %v2259
        %2269 = vmatprep.subr.mxu0 0.0
        %2270 = vmatpush1.msra.mxu0 0.0
        %2271 = vmatprep.subr.mxu0 0.0
        %2272 = vmatpush1.msra.mxu0 0.0
        %2273 = vmatprep.subr.mxu0 0.0
        %2274 = vmatpush1.msra.mxu0 0.0
        %2275 = vmatprep.subr.mxu0 0.0
        %2276 = vmatpush1.msra.mxu0 0.0
        %2277 = vmatprep.subr.mxu0 0.0
        %2278 = vmatpush1.msra.mxu0 0.0
        %2279 = vmatprep.subr.mxu0 0.0
        %2280 = vmatpush1.msra.mxu0 0.0
        %2281 = vmatprep.subr.mxu0 0.0
        %2282 = vmatpush1.msra.mxu0 0.0
        %2283 = vmatprep.subr.mxu0 0.0
        %2284 = vmatpush1.msra.mxu0 0.0
        %2285 = vmatprep.subr.mxu0 0.0
        %2286 = vmatpush1.msra.mxu0 0.0
        %2287 = vmatprep.subr.mxu0 0.0
        %2288 = vmatpush1.msra.mxu0 0.0
        %2289 = vmatprep.subr.mxu0 0.0
        %2290 = vmatpush1.msra.mxu0 0.0
        %2291 = vmatprep.subr.mxu0 0.0
        %2292 = vmatpush1.msra.mxu0 0.0
        %2293 = vmatprep.subr.mxu0 0.0
        %2294 = vmatpush1.msra.mxu0 0.0
        %2295 = vmatprep.subr.mxu0 0.0
        %2296 = vmatpush1.msra.mxu0 0.0
        %2297 = vmatprep.subr.mxu0 0.0
        %2298 = vmatpush1.msra.mxu0 0.0
        %2299 = vmatprep.subr.mxu0 0.0
        %2300 = vmatpush1.msra.mxu0 0.0
        %2301 = vmatprep.subr.mxu0 0.0
        %2302 = vmatpush1.msra.mxu0 0.0
        %2303 = vmatprep.subr.mxu0 0.0
        %2304 = vmatpush1.msra.mxu0 0.0
        %2305 = vmatprep.subr.mxu0 0.0
        %2306 = vmatpush1.msra.mxu0 0.0
        %2307 = vmatprep.subr.mxu0 0.0
        %2308 = vmatpush1.msra.mxu0 0.0
        %2309 = vmatprep.subr.mxu0 0.0
        %2310 = vmatpush1.msra.mxu0 0.0
        %2311 = vmatprep.subr.mxu0 0.0
        %2312 = vmatpush1.msra.mxu0 0.0
        %2313 = vmatprep.subr.mxu0 0.0
        %2314 = vmatpush1.msra.mxu0 0.0
        %2315 = vmatprep.subr.mxu0 0.0
        %2316 = vmatpush1.msra.mxu0 0.0
        %2317 = vmatprep.subr.mxu0 0.0
        %2318 = vmatpush1.msra.mxu0 0.0
        %2319 = vmatprep.subr.mxu0 0.0
        %2320 = vmatpush1.msra.mxu0 0.0
        %2321 = vmatprep.subr.mxu0 0.0
        %2322 = vmatpush1.msra.mxu0 0.0
        %2323 = vmatprep.subr.mxu0 0.0
        %2324 = vmatpush1.msra.mxu0 0.0
        %2325 = vmatprep.subr.mxu0 0.0
        %2326 = vmatpush1.msra.mxu0 0.0
        %2327 = vmatprep.subr.mxu0 0.0
        %2328 = vmatpush1.msra.mxu0 0.0
        %2329 = vmatprep.mubr.f32.mxu0 0.0
        %2330 = vmatmul.mubr.f32.gmra.mrb[0].mxu0 %v2263
        %v2331 = vpop.f32.mrb[0].mxu0
        %v2332 = vadd.f32 0.0, %v2331
        %v2333 = vpop.f32.mrb[0].mxu0
        %2334 = vdwg.mxu0
        %v2335 = vadd.f32 %v2092, %v2332
        %2336 = vrot.lane.b32.xlu0 %v1759, 112
        %v2337 = vpop.permute.xlu0 %2336
        %2338 = vrot.lane.b32.xlu0 %v1839, 112
        %v2339 = vpop.permute.xlu0 %2338
        %2340 = vrot.lane.b32.xlu0 %v1844, 112
        %v2341 = vpop.permute.xlu0 %2340
        %v2342 = vsel %vm725, %v2337, 0
        %v2344 = vsel %vm725, %v2339, 0
        %v2346 = vsel %vm725, %v2341, 0
        %2348 = vmatprep.subr.mxu0 0.0
        %2349 = vmatpush1.xpose.msra.mxu0 %v2344
        %2350 = vmatprep.subr.mxu0 0.0
        %2351 = vmatpush1.xpose.msra.mxu0 %v2346
        %2352 = vmatprep.subr.mxu0 0.0
        %2353 = vmatpush1.xpose.msra.mxu0 0.0
        %2354 = vmatprep.subr.mxu0 0.0
        %2355 = vmatpush1.xpose.msra.mxu0 0.0
        %2356 = vmatprep.subr.mxu0 0.0
        %2357 = vmatpush1.xpose.msra.mxu0 0.0
        %2358 = vmatprep.subr.mxu0 0.0
        %2359 = vmatpush1.xpose.msra.mxu0 0.0
        %2360 = vmatprep.subr.mxu0 0.0
        %2361 = vmatpush1.xpose.msra.mxu0 0.0
        %2362 = vmatprep.subr.mxu0 0.0
        %2363 = vmatpush1.xpose.msra.mxu0 0.0
        %2364 = vmatprep.subr.mxu0 0.0
        %2365 = vmatpush1.xpose.msra.mxu0 0.0
        %2366 = vmatprep.subr.mxu0 0.0
        %2367 = vmatpush1.xpose.msra.mxu0 0.0
        %2368 = vmatprep.subr.mxu0 0.0
        %2369 = vmatpush1.xpose.msra.mxu0 0.0
        %2370 = vmatprep.subr.mxu0 0.0
        %2371 = vmatpush1.xpose.msra.mxu0 0.0
        %2372 = vmatprep.subr.mxu0 0.0
        %2373 = vmatpush1.xpose.msra.mxu0 0.0
        %2374 = vmatprep.subr.mxu0 0.0
        %2375 = vmatpush1.xpose.msra.mxu0 0.0
        %2376 = vmatprep.subr.mxu0 0.0
        %2377 = vmatpush1.xpose.msra.mxu0 0.0
        %2378 = vmatprep.subr.mxu0 0.0
        %2379 = vmatpush1.xpose.msra.mxu0 0.0
        %2380 = vmatprep.subr.mxu0 0.0
        %2381 = vmatpush1.xpose.msra.mxu0 0.0
        %2382 = vmatprep.subr.mxu0 0.0
        %2383 = vmatpush1.xpose.msra.mxu0 0.0
        %2384 = vmatprep.subr.mxu0 0.0
        %2385 = vmatpush1.xpose.msra.mxu0 0.0
        %2386 = vmatprep.subr.mxu0 0.0
        %2387 = vmatpush1.xpose.msra.mxu0 0.0
        %2388 = vmatprep.subr.mxu0 0.0
        %2389 = vmatpush1.xpose.msra.mxu0 0.0
        %2390 = vmatprep.subr.mxu0 0.0
        %2391 = vmatpush1.xpose.msra.mxu0 0.0
        %2392 = vmatprep.subr.mxu0 0.0
        %2393 = vmatpush1.xpose.msra.mxu0 0.0
        %2394 = vmatprep.subr.mxu0 0.0
        %2395 = vmatpush1.xpose.msra.mxu0 0.0
        %2396 = vmatprep.subr.mxu0 0.0
        %2397 = vmatpush1.xpose.msra.mxu0 0.0
        %2398 = vmatprep.subr.mxu0 0.0
        %2399 = vmatpush1.xpose.msra.mxu0 0.0
        %2400 = vmatprep.subr.mxu0 0.0
        %2401 = vmatpush1.xpose.msra.mxu0 0.0
        %2402 = vmatprep.subr.mxu0 0.0
        %2403 = vmatpush1.xpose.msra.mxu0 0.0
        %2404 = vmatprep.subr.mxu0 0.0
        %2405 = vmatpush1.xpose.msra.mxu0 0.0
        %2406 = vmatprep.subr.mxu0 0.0
        %2407 = vmatpush1.xpose.msra.mxu0 0.0
        %2408 = vmatprep.subr.mxu0 0.0
        %2409 = vmatpush1.xpose.msra.mxu0 0.0
        %2410 = vmatprep.subr.mxu0 0.0
        %2411 = vmatpush1.xpose.msra.mxu0 0.0
        %2412 = vmatprep.mubr.f32.mxu0 0.0
        %2413 = vmatmul.mubr.f32.gmra.mrb[0].mxu0 %v2342
        %v2414 = vpop.f32.mrb[0].mxu0
        %v2415 = vadd.f32 0.0, %v2414
        %v2416 = vpop.f32.mrb[0].mxu0
        %2417 = vdwg.mxu0
        %v2418 = vmul.f32 %v2415, 0.35355338
        %v2419 = vsel %vm1932, %v2418, -inf
        %2420 = vmax.xlane.f32.xlu0 %v2419
        %v2421 = vpop.xlane.xlu0 %2420
        %v2422 = vsub.f32 %v2418, %v2421
        %v2423 = vmul.f32 %v2422, 1.442695
        %v2424 = vpow.pop %v2423
        %v2425 = vsel %vm1932, %v2424, 0.0
        %2426 = vadd.xlane.f32.xlu0 %v2425
        %v2427 = vpop.xlane.xlu0 %2426
        %v2428 = vrcp.pop %v2427
        %v2429 = vmul.f32 %v2424, %v2428
        %2430 = vmatprep.subr.mxu0 0.0
        %2431 = vmatpush1.msra.mxu0 %v557
        %2432 = vmatprep.subr.mxu0 0.0
        %2433 = vmatpush1.msra.mxu0 %v558
        %2434 = vmatprep.subr.mxu0 0.0
        %2435 = vmatpush1.msra.mxu0 %v559
        %2436 = vmatprep.subr.mxu0 0.0
        %2437 = vmatpush1.msra.mxu0 %v560
        %2438 = vmatprep.subr.mxu0 0.0
        %2439 = vmatpush1.msra.mxu0 0.0
        %2440 = vmatprep.subr.mxu0 0.0
        %2441 = vmatpush1.msra.mxu0 0.0
        %2442 = vmatprep.subr.mxu0 0.0
        %2443 = vmatpush1.msra.mxu0 0.0
        %2444 = vmatprep.subr.mxu0 0.0
        %2445 = vmatpush1.msra.mxu0 0.0
        %2446 = vmatprep.subr.mxu0 0.0
        %2447 = vmatpush1.msra.mxu0 0.0
        %2448 = vmatprep.subr.mxu0 0.0
        %2449 = vmatpush1.msra.mxu0 0.0
        %2450 = vmatprep.subr.mxu0 0.0
        %2451 = vmatpush1.msra.mxu0 0.0
        %2452 = vmatprep.subr.mxu0 0.0
        %2453 = vmatpush1.msra.mxu0 0.0
        %2454 = vmatprep.subr.mxu0 0.0
        %2455 = vmatpush1.msra.mxu0 0.0
        %2456 = vmatprep.subr.mxu0 0.0
        %2457 = vmatpush1.msra.mxu0 0.0
        %2458 = vmatprep.subr.mxu0 0.0
        %2459 = vmatpush1.msra.mxu0 0.0
        %2460 = vmatprep.subr.mxu0 0.0
        %2461 = vmatpush1.msra.mxu0 0.0
        %2462 = vmatprep.subr.mxu0 0.0
        %2463 = vmatpush1.msra.mxu0 0.0
        %2464 = vmatprep.subr.mxu0 0.0
        %2465 = vmatpush1.msra.mxu0 0.0
        %2466 = vmatprep.subr.mxu0 0.0
        %2467 = vmatpush1.msra.mxu0 0.0
        %2468 = vmatprep.subr.mxu0 0.0
        %2469 = vmatpush1.msra.mxu0 0.0
        %2470 = vmatprep.subr.mxu0 0.0
        %2471 = vmatpush1.msra.mxu0 0.0
        %2472 = vmatprep.subr.mxu0 0.0
        %2473 = vmatpush1.msra.mxu0 0.0
        %2474 = vmatprep.subr.mxu0 0.0
        %2475 = vmatpush1.msra.mxu0 0.0
        %2476 = vmatprep.subr.mxu0 0.0
        %2477 = vmatpush1.msra.mxu0 0.0
        %2478 = vmatprep.subr.mxu0 0.0
        %2479 = vmatpush1.msra.mxu0 0.0
        %2480 = vmatprep.subr.mxu0 0.0
        %2481 = vmatpush1.msra.mxu0 0.0
        %2482 = vmatprep.subr.mxu0 0.0
        %2483 = vmatpush1.msra.mxu0 0.0
        %2484 = vmatprep.subr.mxu0 0.0
        %2485 = vmatpush1.msra.mxu0 0.0
        %2486 = vmatprep.subr.mxu0 0.0
        %2487 = vmatpush1.msra.mxu0 0.0
        %2488 = vmatprep.subr.mxu0 0.0
        %2489 = vmatpush1.msra.mxu0 0.0
        %2490 = vmatprep.subr.mxu0 0.0
        %2491 = vmatpush1.msra.mxu0 0.0
        %2492 = vmatprep.subr.mxu0 0.0
        %2493 = vmatpush1.msra.mxu0 0.0
        %2494 = vmatprep.mubr.f32.mxu0 0.0
        %2495 = vmatmul.mubr.f32.gmra.mrb[0].mxu0 %v1767
        %v2496 = vpop.f32.mrb[0].mxu0
        %v2497 = vadd.f32 0.0, %v2496
        %v2498 = vpop.f32.mrb[0].mxu0
        %2499 = vmatprep.mubr.f32.mxu0 0.0
        %2500 = vmatmul.mubr.f32.gmra.mrb[0].mxu0 %v1770
        %v2501 = vpop.f32.mrb[0].mxu0
        %v2502 = vadd.f32 0.0, %v2501
        %v2503 = vpop.f32.mrb[0].mxu0
        %2504 = vdwg.mxu0
        %v2506 = vsel %vm1932, %v2429, 0
        %2508 = vmatprep.subr.mxu0 0.0
        %2509 = vmatpush1.msra.mxu0 %v2497
        %2510 = vmatprep.subr.mxu0 0.0
        %2511 = vmatpush1.msra.mxu0 %v2502
        %2512 = vmatprep.subr.mxu0 0.0
        %2513 = vmatpush1.msra.mxu0 0.0
        %2514 = vmatprep.subr.mxu0 0.0
        %2515 = vmatpush1.msra.mxu0 0.0
        %2516 = vmatprep.subr.mxu0 0.0
        %2517 = vmatpush1.msra.mxu0 0.0
        %2518 = vmatprep.subr.mxu0 0.0
        %2519 = vmatpush1.msra.mxu0 0.0
        %2520 = vmatprep.subr.mxu0 0.0
        %2521 = vmatpush1.msra.mxu0 0.0
        %2522 = vmatprep.subr.mxu0 0.0
        %2523 = vmatpush1.msra.mxu0 0.0
        %2524 = vmatprep.subr.mxu0 0.0
        %2525 = vmatpush1.msra.mxu0 0.0
        %2526 = vmatprep.subr.mxu0 0.0
        %2527 = vmatpush1.msra.mxu0 0.0
        %2528 = vmatprep.subr.mxu0 0.0
        %2529 = vmatpush1.msra.mxu0 0.0
        %2530 = vmatprep.subr.mxu0 0.0
        %2531 = vmatpush1.msra.mxu0 0.0
        %2532 = vmatprep.subr.mxu0 0.0
        %2533 = vmatpush1.msra.mxu0 0.0
        %2534 = vmatprep.subr.mxu0 0.0
        %2535 = vmatpush1.msra.mxu0 0.0
        %2536 = vmatprep.subr.mxu0 0.0
        %2537 = vmatpush1.msra.mxu0 0.0
        %2538 = vmatprep.subr.mxu0 0.0
        %2539 = vmatpush1.msra.mxu0 0.0
        %2540 = vmatprep.subr.mxu0 0.0
        %2541 = vmatpush1.msra.mxu0 0.0
        %2542 = vmatprep.subr.mxu0 0.0
        %2543 = vmatpush1.msra.mxu0 0.0
        %2544 = vmatprep.subr.mxu0 0.0
        %2545 = vmatpush1.msra.mxu0 0.0
        %2546 = vmatprep.subr.mxu0 0.0
        %2547 = vmatpush1.msra.mxu0 0.0
        %2548 = vmatprep.subr.mxu0 0.0
        %2549 = vmatpush1.msra.mxu0 0.0
        %2550 = vmatprep.subr.mxu0 0.0
        %2551 = vmatpush1.msra.mxu0 0.0
        %2552 = vmatprep.subr.mxu0 0.0
        %2553 = vmatpush1.msra.mxu0 0.0
        %2554 = vmatprep.subr.mxu0 0.0
        %2555 = vmatpush1.msra.mxu0 0.0
        %2556 = vmatprep.subr.mxu0 0.0
        %2557 = vmatpush1.msra.mxu0 0.0
        %2558 = vmatprep.subr.mxu0 0.0
        %2559 = vmatpush1.msra.mxu0 0.0
        %2560 = vmatprep.subr.mxu0 0.0
        %2561 = vmatpush1.msra.mxu0 0.0
        %2562 = vmatprep.subr.mxu0 0.0
        %2563 = vmatpush1.msra.mxu0 0.0
        %2564 = vmatprep.subr.mxu0 0.0
        %2565 = vmatpush1.msra.mxu0 0.0
        %2566 = vmatprep.subr.mxu0 0.0
        %2567 = vmatpush1.msra.mxu0 0.0
        %2568 = vmatprep.subr.mxu0 0.0
        %2569 = vmatpush1.msra.mxu0 0.0
        %2570 = vmatprep.subr.mxu0 0.0
        %2571 = vmatpush1.msra.mxu0 0.0
        %2572 = vmatprep.mubr.f32.mxu0 0.0
        %2573 = vmatmul.mubr.f32.gmra.mrb[0].mxu0 %v2506
        %v2574 = vpop.f32.mrb[0].mxu0
        %v2575 = vadd.f32 0.0, %v2574
        %v2576 = vpop.f32.mrb[0].mxu0
        %2577 = vdwg.mxu0
        %v2578 = vadd.f32 %v2335, %v2575
        %2579 = vrot.lane.b32.xlu0 %v1759, 104
        %v2580 = vpop.permute.xlu0 %2579
        %2581 = vrot.lane.b32.xlu0 %v1839, 104
        %v2582 = vpop.permute.xlu0 %2581
        %2583 = vrot.lane.b32.xlu0 %v1844, 104
        %v2584 = vpop.permute.xlu0 %2583
        %v2585 = vsel %vm725, %v2580, 0
        %v2587 = vsel %vm725, %v2582, 0
        %v2589 = vsel %vm725, %v2584, 0
        %2591 = vmatprep.subr.mxu0 0.0
        %2592 = vmatpush1.xpose.msra.mxu0 %v2587
        %2593 = vmatprep.subr.mxu0 0.0
        %2594 = vmatpush1.xpose.msra.mxu0 %v2589
        %2595 = vmatprep.subr.mxu0 0.0
        %2596 = vmatpush1.xpose.msra.mxu0 0.0
        %2597 = vmatprep.subr.mxu0 0.0
        %2598 = vmatpush1.xpose.msra.mxu0 0.0
        %2599 = vmatprep.subr.mxu0 0.0
        %2600 = vmatpush1.xpose.msra.mxu0 0.0
        %2601 = vmatprep.subr.mxu0 0.0
        %2602 = vmatpush1.xpose.msra.mxu0 0.0
        %2603 = vmatprep.subr.mxu0 0.0
        %2604 = vmatpush1.xpose.msra.mxu0 0.0
        %2605 = vmatprep.subr.mxu0 0.0
        %2606 = vmatpush1.xpose.msra.mxu0 0.0
        %2607 = vmatprep.subr.mxu0 0.0
        %2608 = vmatpush1.xpose.msra.mxu0 0.0
        %2609 = vmatprep.subr.mxu0 0.0
        %2610 = vmatpush1.xpose.msra.mxu0 0.0
        %2611 = vmatprep.subr.mxu0 0.0
        %2612 = vmatpush1.xpose.msra.mxu0 0.0
        %2613 = vmatprep.subr.mxu0 0.0
        %2614 = vmatpush1.xpose.msra.mxu0 0.0
        %2615 = vmatprep.subr.mxu0 0.0
        %2616 = vmatpush1.xpose.msra.mxu0 0.0
        %2617 = vmatprep.subr.mxu0 0.0
        %2618 = vmatpush1.xpose.msra.mxu0 0.0
        %2619 = vmatprep.subr.mxu0 0.0
        %2620 = vmatpush1.xpose.msra.mxu0 0.0
        %2621 = vmatprep.subr.mxu0 0.0
        %2622 = vmatpush1.xpose.msra.mxu0 0.0
        %2623 = vmatprep.subr.mxu0 0.0
        %2624 = vmatpush1.xpose.msra.mxu0 0.0
        %2625 = vmatprep.subr.mxu0 0.0
        %2626 = vmatpush1.xpose.msra.mxu0 0.0
        %2627 = vmatprep.subr.mxu0 0.0
        %2628 = vmatpush1.xpose.msra.mxu0 0.0
        %2629 = vmatprep.subr.mxu0 0.0
        %2630 = vmatpush1.xpose.msra.mxu0 0.0
        %2631 = vmatprep.subr.mxu0 0.0
        %2632 = vmatpush1.xpose.msra.mxu0 0.0
        %2633 = vmatprep.subr.mxu0 0.0
        %2634 = vmatpush1.xpose.msra.mxu0 0.0
        %2635 = vmatprep.subr.mxu0 0.0
        %2636 = vmatpush1.xpose.msra.mxu0 0.0
        %2637 = vmatprep.subr.mxu0 0.0
        %2638 = vmatpush1.xpose.msra.mxu0 0.0
        %2639 = vmatprep.subr.mxu0 0.0
        %2640 = vmatpush1.xpose.msra.mxu0 0.0
        %2641 = vmatprep.subr.mxu0 0.0
        %2642 = vmatpush1.xpose.msra.mxu0 0.0
        %2643 = vmatprep.subr.mxu0 0.0
        %2644 = vmatpush1.xpose.msra.mxu0 0.0
        %2645 = vmatprep.subr.mxu0 0.0
        %2646 = vmatpush1.xpose.msra.mxu0 0.0
        %2647 = vmatprep.subr.mxu0 0.0
        %2648 = vmatpush1.xpose.msra.mxu0 0.0
        %2649 = vmatprep.subr.mxu0 0.0
        %2650 = vmatpush1.xpose.msra.mxu0 0.0
        %2651 = vmatprep.subr.mxu0 0.0
        %2652 = vmatpush1.xpose.msra.mxu0 0.0
        %2653 = vmatprep.subr.mxu0 0.0
        %2654 = vmatpush1.xpose.msra.mxu0 0.0
        %2655 = vmatprep.mubr.f32.mxu0 0.0
        %2656 = vmatmul.mubr.f32.gmra.mrb[0].mxu0 %v2585
        %v2657 = vpop.f32.mrb[0].mxu0
        %v2658 = vadd.f32 0.0, %v2657
        %v2659 = vpop.f32.mrb[0].mxu0
        %2660 = vdwg.mxu0
        %v2661 = vmul.f32 %v2658, 0.35355338
        %v2662 = vsel %vm1932, %v2661, -inf
        %2663 = vmax.xlane.f32.xlu0 %v2662
        %v2664 = vpop.xlane.xlu0 %2663
        %v2665 = vsub.f32 %v2661, %v2664
        %v2666 = vmul.f32 %v2665, 1.442695
        %v2667 = vpow.pop %v2666
        %v2668 = vsel %vm1932, %v2667, 0.0
        %2669 = vadd.xlane.f32.xlu0 %v2668
        %v2670 = vpop.xlane.xlu0 %2669
        %v2671 = vrcp.pop %v2670
        %v2672 = vmul.f32 %v2667, %v2671
        %2673 = vmatprep.subr.mxu0 0.0
        %2674 = vmatpush1.msra.mxu0 %v561
        %2675 = vmatprep.subr.mxu0 0.0
        %2676 = vmatpush1.msra.mxu0 %v562
        %2677 = vmatprep.subr.mxu0 0.0
        %2678 = vmatpush1.msra.mxu0 %v563
        %2679 = vmatprep.subr.mxu0 0.0
        %2680 = vmatpush1.msra.mxu0 %v564
        %2681 = vmatprep.subr.mxu0 0.0
        %2682 = vmatpush1.msra.mxu0 0.0
        %2683 = vmatprep.subr.mxu0 0.0
        %2684 = vmatpush1.msra.mxu0 0.0
        %2685 = vmatprep.subr.mxu0 0.0
        %2686 = vmatpush1.msra.mxu0 0.0
        %2687 = vmatprep.subr.mxu0 0.0
        %2688 = vmatpush1.msra.mxu0 0.0
        %2689 = vmatprep.subr.mxu0 0.0
        %2690 = vmatpush1.msra.mxu0 0.0
        %2691 = vmatprep.subr.mxu0 0.0
        %2692 = vmatpush1.msra.mxu0 0.0
        %2693 = vmatprep.subr.mxu0 0.0
        %2694 = vmatpush1.msra.mxu0 0.0
        %2695 = vmatprep.subr.mxu0 0.0
        %2696 = vmatpush1.msra.mxu0 0.0
        %2697 = vmatprep.subr.mxu0 0.0
        %2698 = vmatpush1.msra.mxu0 0.0
        %2699 = vmatprep.subr.mxu0 0.0
        %2700 = vmatpush1.msra.mxu0 0.0
        %2701 = vmatprep.subr.mxu0 0.0
        %2702 = vmatpush1.msra.mxu0 0.0
        %2703 = vmatprep.subr.mxu0 0.0
        %2704 = vmatpush1.msra.mxu0 0.0
        %2705 = vmatprep.subr.mxu0 0.0
        %2706 = vmatpush1.msra.mxu0 0.0
        %2707 = vmatprep.subr.mxu0 0.0
        %2708 = vmatpush1.msra.mxu0 0.0
        %2709 = vmatprep.subr.mxu0 0.0
        %2710 = vmatpush1.msra.mxu0 0.0
        %2711 = vmatprep.subr.mxu0 0.0
        %2712 = vmatpush1.msra.mxu0 0.0
        %2713 = vmatprep.subr.mxu0 0.0
        %2714 = vmatpush1.msra.mxu0 0.0
        %2715 = vmatprep.subr.mxu0 0.0
        %2716 = vmatpush1.msra.mxu0 0.0
        %2717 = vmatprep.subr.mxu0 0.0
        %2718 = vmatpush1.msra.mxu0 0.0
        %2719 = vmatprep.subr.mxu0 0.0
        %2720 = vmatpush1.msra.mxu0 0.0
        %2721 = vmatprep.subr.mxu0 0.0
        %2722 = vmatpush1.msra.mxu0 0.0
        %2723 = vmatprep.subr.mxu0 0.0
        %2724 = vmatpush1.msra.mxu0 0.0
        %2725 = vmatprep.subr.mxu0 0.0
        %2726 = vmatpush1.msra.mxu0 0.0
        %2727 = vmatprep.subr.mxu0 0.0
        %2728 = vmatpush1.msra.mxu0 0.0
        %2729 = vmatprep.subr.mxu0 0.0
        %2730 = vmatpush1.msra.mxu0 0.0
        %2731 = vmatprep.subr.mxu0 0.0
        %2732 = vmatpush1.msra.mxu0 0.0
        %2733 = vmatprep.subr.mxu0 0.0
        %2734 = vmatpush1.msra.mxu0 0.0
        %2735 = vmatprep.subr.mxu0 0.0
        %2736 = vmatpush1.msra.mxu0 0.0
        %2737 = vmatprep.mubr.f32.mxu0 0.0
        %2738 = vmatmul.mubr.f32.gmra.mrb[0].mxu0 %v1767
        %v2739 = vpop.f32.mrb[0].mxu0
        %v2740 = vadd.f32 0.0, %v2739
        %v2741 = vpop.f32.mrb[0].mxu0
        %2742 = vmatprep.mubr.f32.mxu0 0.0
        %2743 = vmatmul.mubr.f32.gmra.mrb[0].mxu0 %v1770
        %v2744 = vpop.f32.mrb[0].mxu0
        %v2745 = vadd.f32 0.0, %v2744
        %v2746 = vpop.f32.mrb[0].mxu0
        %2747 = vdwg.mxu0
        %v2749 = vsel %vm1932, %v2672, 0
        %2751 = vmatprep.subr.mxu0 0.0
        %2752 = vmatpush1.msra.mxu0 %v2740
        %2753 = vmatprep.subr.mxu0 0.0
        %2754 = vmatpush1.msra.mxu0 %v2745
        %2755 = vmatprep.subr.mxu0 0.0
        %2756 = vmatpush1.msra.mxu0 0.0
        %2757 = vmatprep.subr.mxu0 0.0
        %2758 = vmatpush1.msra.mxu0 0.0
        %2759 = vmatprep.subr.mxu0 0.0
        %2760 = vmatpush1.msra.mxu0 0.0
        %2761 = vmatprep.subr.mxu0 0.0
        %2762 = vmatpush1.msra.mxu0 0.0
        %2763 = vmatprep.subr.mxu0 0.0
        %2764 = vmatpush1.msra.mxu0 0.0
        %2765 = vmatprep.subr.mxu0 0.0
        %2766 = vmatpush1.msra.mxu0 0.0
        %2767 = vmatprep.subr.mxu0 0.0
        %2768 = vmatpush1.msra.mxu0 0.0
        %2769 = vmatprep.subr.mxu0 0.0
        %2770 = vmatpush1.msra.mxu0 0.0
        %2771 = vmatprep.subr.mxu0 0.0
        %2772 = vmatpush1.msra.mxu0 0.0
        %2773 = vmatprep.subr.mxu0 0.0
        %2774 = vmatpush1.msra.mxu0 0.0
        %2775 = vmatprep.subr.mxu0 0.0
        %2776 = vmatpush1.msra.mxu0 0.0
        %2777 = vmatprep.subr.mxu0 0.0
        %2778 = vmatpush1.msra.mxu0 0.0
        %2779 = vmatprep.subr.mxu0 0.0
        %2780 = vmatpush1.msra.mxu0 0.0
        %2781 = vmatprep.subr.mxu0 0.0
        %2782 = vmatpush1.msra.mxu0 0.0
        %2783 = vmatprep.subr.mxu0 0.0
        %2784 = vmatpush1.msra.mxu0 0.0
        %2785 = vmatprep.subr.mxu0 0.0
        %2786 = vmatpush1.msra.mxu0 0.0
        %2787 = vmatprep.subr.mxu0 0.0
        %2788 = vmatpush1.msra.mxu0 0.0
        %2789 = vmatprep.subr.mxu0 0.0
        %2790 = vmatpush1.msra.mxu0 0.0
        %2791 = vmatprep.subr.mxu0 0.0
        %2792 = vmatpush1.msra.mxu0 0.0
        %2793 = vmatprep.subr.mxu0 0.0
        %2794 = vmatpush1.msra.mxu0 0.0
        %2795 = vmatprep.subr.mxu0 0.0
        %2796 = vmatpush1.msra.mxu0 0.0
        %2797 = vmatprep.subr.mxu0 0.0
        %2798 = vmatpush1.msra.mxu0 0.0
        %2799 = vmatprep.subr.mxu0 0.0
        %2800 = vmatpush1.msra.mxu0 0.0
        %2801 = vmatprep.subr.mxu0 0.0
        %2802 = vmatpush1.msra.mxu0 0.0
        %2803 = vmatprep.subr.mxu0 0.0
        %2804 = vmatpush1.msra.mxu0 0.0
        %2805 = vmatprep.subr.mxu0 0.0
        %2806 = vmatpush1.msra.mxu0 0.0
        %2807 = vmatprep.subr.mxu0 0.0
        %2808 = vmatpush1.msra.mxu0 0.0
        %2809 = vmatprep.subr.mxu0 0.0
        %2810 = vmatpush1.msra.mxu0 0.0
        %2811 = vmatprep.subr.mxu0 0.0
        %2812 = vmatpush1.msra.mxu0 0.0
        %2813 = vmatprep.subr.mxu0 0.0
        %2814 = vmatpush1.msra.mxu0 0.0
        %2815 = vmatprep.mubr.f32.mxu0 0.0
        %2816 = vmatmul.mubr.f32.gmra.mrb[0].mxu0 %v2749
        %v2817 = vpop.f32.mrb[0].mxu0
        %v2818 = vadd.f32 0.0, %v2817
        %v2819 = vpop.f32.mrb[0].mxu0
        %2820 = vdwg.mxu0
        %v2821 = vadd.f32 %v2578, %v2818
        %v2822 = vadd.f32 %v1684, %v2821
        %v2823 = vsel %vm572, %v2822, 0.0
        %2824 = vadd.xlane.f32.xlu0 %v2823
        %v2825 = vpop.xlane.xlu0 %2824
        %v2826 = vmul.f32 %v2825, %v1664
        %v2827 = vsub.f32 %v2822, %v2826
        %v2828 = vmul.f32 %v2827, %v2827
        %v2829 = vsel %vm572, %v2828, 0.0
        %2830 = vadd.xlane.f32.xlu0 %v2829
        %v2831 = vpop.xlane.xlu0 %2830
        %v2832 = vmul.f32 %v2831, %v1664
        %v2833 = vadd.f32 %v2832, 1e-05
        %v2834 = vrsqrt.pop %v2833
        %v2835 = vmul.f32 %v2827, %v2834
        %v2836 = vlaneseq
        %v2837 = vshrl.u32 %v2836, 7
        %v2838 = vsub.s32 1, %v2837
        %v2839 = vrot.slane %v566, %v2838
        %v2840 = vmul.f32 %v2835, %v2839
        %v2841 = vlaneseq
        %v2842 = vshrl.u32 %v2841, 7
        %v2843 = vsub.s32 1, %v2842
        %v2844 = vrot.slane %v567, %v2843
        %v2845 = vadd.f32 %v2840, %v2844
        %v2846 = vld [vmem:[%s6] sm:$0xff]
        %v2847 = vld [vmem:[%s6 + $0x8] sm:$0xff]
        %v2848 = vld [vmem:[%s6 + $0x10] sm:$0xff]
        %v2849 = vld [vmem:[%s6 + $0x18] sm:$0xff]
        %v2850 = vld [vmem:[%s7] sm:$0x1]
        %v2852 = vlaneseq
        %v2853 = vshrl.u32 %v2852, 7
        %v2854 = vsub.s32 0, %v2853
        %v2855 = vrot.slane %v2850, %v2854
        %v2858 = vsel %vm572, %v2845, 0
        %2860 = vmatprep.subr.mxu0 0.0
        %2861 = vmatpush1.msra.mxu0 %v2846
        %2862 = vmatprep.subr.mxu0 0.0
        %2863 = vmatpush1.msra.mxu0 %v2847
        %2864 = vmatprep.subr.mxu0 0.0
        %2865 = vmatpush1.msra.mxu0 %v2848
        %2866 = vmatprep.subr.mxu0 0.0
        %2867 = vmatpush1.msra.mxu0 %v2849
        %2868 = vmatprep.subr.mxu0 0.0
        %2869 = vmatpush1.msra.mxu0 0.0
        %2870 = vmatprep.subr.mxu0 0.0
        %2871 = vmatpush1.msra.mxu0 0.0
        %2872 = vmatprep.subr.mxu0 0.0
        %2873 = vmatpush1.msra.mxu0 0.0
        %2874 = vmatprep.subr.mxu0 0.0
        %2875 = vmatpush1.msra.mxu0 0.0
        %2876 = vmatprep.subr.mxu0 0.0
        %2877 = vmatpush1.msra.mxu0 0.0
        %2878 = vmatprep.subr.mxu0 0.0
        %2879 = vmatpush1.msra.mxu0 0.0
        %2880 = vmatprep.subr.mxu0 0.0
        %2881 = vmatpush1.msra.mxu0 0.0
        %2882 = vmatprep.subr.mxu0 0.0
        %2883 = vmatpush1.msra.mxu0 0.0
        %2884 = vmatprep.subr.mxu0 0.0
        %2885 = vmatpush1.msra.mxu0 0.0
        %2886 = vmatprep.subr.mxu0 0.0
        %2887 = vmatpush1.msra.mxu0 0.0
        %2888 = vmatprep.subr.mxu0 0.0
        %2889 = vmatpush1.msra.mxu0 0.0
        %2890 = vmatprep.subr.mxu0 0.0
        %2891 = vmatpush1.msra.mxu0 0.0
        %2892 = vmatprep.subr.mxu0 0.0
        %2893 = vmatpush1.msra.mxu0 0.0
        %2894 = vmatprep.subr.mxu0 0.0
        %2895 = vmatpush1.msra.mxu0 0.0
        %2896 = vmatprep.subr.mxu0 0.0
        %2897 = vmatpush1.msra.mxu0 0.0
        %2898 = vmatprep.subr.mxu0 0.0
        %2899 = vmatpush1.msra.mxu0 0.0
        %2900 = vmatprep.subr.mxu0 0.0
        %2901 = vmatpush1.msra.mxu0 0.0
        %2902 = vmatprep.subr.mxu0 0.0
        %2903 = vmatpush1.msra.mxu0 0.0
        %2904 = vmatprep.subr.mxu0 0.0
        %2905 = vmatpush1.msra.mxu0 0.0
        %2906 = vmatprep.subr.mxu0 0.0
        %2907 = vmatpush1.msra.mxu0 0.0
        %2908 = vmatprep.subr.mxu0 0.0
        %2909 = vmatpush1.msra.mxu0 0.0
        %2910 = vmatprep.subr.mxu0 0.0
        %2911 = vmatpush1.msra.mxu0 0.0
        %2912 = vmatprep.subr.mxu0 0.0
        %2913 = vmatpush1.msra.mxu0 0.0
        %2914 = vmatprep.subr.mxu0 0.0
        %2915 = vmatpush1.msra.mxu0 0.0
        %2916 = vmatprep.subr.mxu0 0.0
        %2917 = vmatpush1.msra.mxu0 0.0
        %2918 = vmatprep.subr.mxu0 0.0
        %2919 = vmatpush1.msra.mxu0 0.0
        %2920 = vmatprep.subr.mxu0 0.0
        %2921 = vmatpush1.msra.mxu0 0.0
        %2922 = vmatprep.subr.mxu0 0.0
        %2923 = vmatpush1.msra.mxu0 0.0
        %2924 = vmatprep.mubr.f32.mxu0 0.0
        %2925 = vmatmul.mubr.f32.gmra.mrb[0].mxu0 %v2858
        %v2926 = vpop.f32.mrb[0].mxu0
        %v2927 = vadd.f32 %v2855, %v2926
        %v2928 = vpop.f32.mrb[0].mxu0
        %2929 = vdwg.mxu0
        %v2930 = vmax.f32 %v2927, 0.0
        %v2931 = vld [vmem:[%s8] sm:$0xff]
        %v2932 = vld [vmem:[%s8 + $0x8] sm:$0xff]
        %v2933 = vld [vmem:[%s8 + $0x10] sm:$0xff]
        %v2934 = vld [vmem:[%s8 + $0x18] sm:$0xff]
        %v2935 = vld [vmem:[%s8 + $0x20] sm:$0xff]
        %v2936 = vld [vmem:[%s8 + $0x28] sm:$0xff]
        %v2937 = vld [vmem:[%s8 + $0x30] sm:$0xff]
        %v2938 = vld [vmem:[%s8 + $0x38] sm:$0xff]
        %v2939 = vld [vmem:[%s9] sm:$0x1]
        %v2941 = vlaneseq
        %v2942 = vshrl.u32 %v2941, 7
        %v2943 = vsub.s32 0, %v2942
        %v2944 = vrot.slane %v2939, %v2943
        %vm2946 = vcmask 523264
        %v2948 = vsel %vm2946, %v2930, 0
        %2950 = vmatprep.subr.mxu0 0.0
        %2951 = vmatpush1.msra.mxu0 %v2931
        %2952 = vmatprep.subr.mxu0 0.0
        %2953 = vmatpush1.msra.mxu0 %v2932
        %2954 = vmatprep.subr.mxu0 0.0
        %2955 = vmatpush1.msra.mxu0 %v2933
        %2956 = vmatprep.subr.mxu0 0.0
        %2957 = vmatpush1.msra.mxu0 %v2934
        %2958 = vmatprep.subr.mxu0 0.0
        %2959 = vmatpush1.msra.mxu0 %v2935
        %2960 = vmatprep.subr.mxu0 0.0
        %2961 = vmatpush1.msra.mxu0 %v2936
        %2962 = vmatprep.subr.mxu0 0.0
        %2963 = vmatpush1.msra.mxu0 %v2937
        %2964 = vmatprep.subr.mxu0 0.0
        %2965 = vmatpush1.msra.mxu0 %v2938
        %2966 = vmatprep.subr.mxu0 0.0
        %2967 = vmatpush1.msra.mxu0 0.0
        %2968 = vmatprep.subr.mxu0 0.0
        %2969 = vmatpush1.msra.mxu0 0.0
        %2970 = vmatprep.subr.mxu0 0.0
        %2971 = vmatpush1.msra.mxu0 0.0
        %2972 = vmatprep.subr.mxu0 0.0
        %2973 = vmatpush1.msra.mxu0 0.0
        %2974 = vmatprep.subr.mxu0 0.0
        %2975 = vmatpush1.msra.mxu0 0.0
        %2976 = vmatprep.subr.mxu0 0.0
        %2977 = vmatpush1.msra.mxu0 0.0
        %2978 = vmatprep.subr.mxu0 0.0
        %2979 = vmatpush1.msra.mxu0 0.0
        %2980 = vmatprep.subr.mxu0 0.0
        %2981 = vmatpush1.msra.mxu0 0.0
        %2982 = vmatprep.subr.mxu0 0.0
        %2983 = vmatpush1.msra.mxu0 0.0
        %2984 = vmatprep.subr.mxu0 0.0
        %2985 = vmatpush1.msra.mxu0 0.0
        %2986 = vmatprep.subr.mxu0 0.0
        %2987 = vmatpush1.msra.mxu0 0.0
        %2988 = vmatprep.subr.mxu0 0.0
        %2989 = vmatpush1.msra.mxu0 0.0
        %2990 = vmatprep.subr.mxu0 0.0
        %2991 = vmatpush1.msra.mxu0 0.0
        %2992 = vmatprep.subr.mxu0 0.0
        %2993 = vmatpush1.msra.mxu0 0.0
        %2994 = vmatprep.subr.mxu0 0.0
        %2995 = vmatpush1.msra.mxu0 0.0
        %2996 = vmatprep.subr.mxu0 0.0
        %2997 = vmatpush1.msra.mxu0 0.0
        %2998 = vmatprep.subr.mxu0 0.0
        %2999 = vmatpush1.msra.mxu0 0.0
        %3000 = vmatprep.subr.mxu0 0.0
        %3001 = vmatpush1.msra.mxu0 0.0
        %3002 = vmatprep.subr.mxu0 0.0
        %3003 = vmatpush1.msra.mxu0 0.0
        %3004 = vmatprep.subr.mxu0 0.0
        %3005 = vmatpush1.msra.mxu0 0.0
        %3006 = vmatprep.subr.mxu0 0.0
        %3007 = vmatpush1.msra.mxu0 0.0
        %3008 = vmatprep.subr.mxu0 0.0
        %3009 = vmatpush1.msra.mxu0 0.0
        %3010 = vmatprep.subr.mxu0 0.0
        %3011 = vmatpush1.msra.mxu0 0.0
        %3012 = vmatprep.subr.mxu0 0.0
        %3013 = vmatpush1.msra.mxu0 0.0
        %3014 = vmatprep.mubr.f32.mxu0 0.0
        %3015 = vmatmul.mubr.f32.gmra.mrb[0].mxu0 %v2948
        %v3016 = vpop.f32.mrb[0].mxu0
        %v3017 = vadd.f32 %v2944, %v3016
        %v3018 = vpop.f32.mrb[0].mxu0
        %3019 = vdwg.mxu0
        %v3020 = vadd.f32 %v2845, %v3017
        %v3021 = vsel %vm572, %v3020, 0.0
        %3022 = vadd.xlane.f32.xlu0 %v3021
        %v3023 = vpop.xlane.xlu0 %3022
        %v3024 = vmul.f32 %v3023, %v1664
        %v3025 = vsub.f32 %v3020, %v3024
        %v3026 = vmul.f32 %v3025, %v3025
        %v3027 = vsel %vm572, %v3026, 0.0
        %3028 = vadd.xlane.f32.xlu0 %v3027
        %v3029 = vpop.xlane.xlu0 %3028
        %v3030 = vmul.f32 %v3029, %v1664
        %v3031 = vadd.f32 %v3030, 1e-05
        %v3032 = vrsqrt.pop %v3031
        %v3033 = vmul.f32 %v3025, %v3032
        %v3034 = vlaneseq
        %v3035 = vshrl.u32 %v3034, 7
        %v3036 = vsub.s32 2, %v3035
        %v3037 = vrot.slane %v566, %v3036
        %v3038 = vmul.f32 %v3033, %v3037
        %v3039 = vlaneseq
        %v3040 = vshrl.u32 %v3039, 7
        %v3041 = vsub.s32 2, %v3040
        %v3042 = vrot.slane %v567, %v3041
        %v3043 = vadd.f32 %v3038, %v3042
        %s3044 = scalar_lea.vmem [#allocation2], 128
        %v3045 = vld [vmem:[%s3044] sm:$0xff]
        %v3046 = vld [vmem:[%s3044 + $0x8] sm:$0xff]
        %v3047 = vld [vmem:[%s3044 + $0x10] sm:$0xff]
        %v3048 = vld [vmem:[%s3044 + $0x18] sm:$0xff]
        %v3049 = vld [vmem:[%s3044 + $0x20] sm:$0xff]
        %v3050 = vld [vmem:[%s3044 + $0x28] sm:$0xff]
        %v3051 = vld [vmem:[%s3044 + $0x30] sm:$0xff]
        %v3052 = vld [vmem:[%s3044 + $0x38] sm:$0xff]
        %v3053 = vld [vmem:[%s3044 + $0x40] sm:$0xff]
        %v3054 = vld [vmem:[%s3044 + $0x48] sm:$0xff]
        %v3055 = vld [vmem:[%s3044 + $0x50] sm:$0xff]
        %v3056 = vld [vmem:[%s3044 + $0x58] sm:$0xff]
        %v3057 = vld [vmem:[%s3044 + $0x60] sm:$0xff]
        %v3058 = vld [vmem:[%s3044 + $0x68] sm:$0xff]
        %v3059 = vld [vmem:[%s3044 + $0x70] sm:$0xff]
        %v3060 = vld [vmem:[%s3044 + $0x78] sm:$0xff]
        %s3061 = scalar_lea.vmem %s3, 4
        %v3062 = vld [vmem:[%s3061] sm:$0xf]
        %s3063 = scalar_lea.vmem [#allocation5], 256
        %v3064 = vld [vmem:[%s3063] sm:$0xff]
        %v3065 = vld [vmem:[%s3063 + $0x8] sm:$0xff]
        %v3066 = vld [vmem:[%s3063 + $0x10] sm:$0xff]
        %v3067 = vld [vmem:[%s3063 + $0x18] sm:$0xff]
        %v3068 = vld [vmem:[%s3063 + $0x20] sm:$0xff]
        %v3069 = vld [vmem:[%s3063 + $0x28] sm:$0xff]
        %v3070 = vld [vmem:[%s3063 + $0x30] sm:$0xff]
        %v3071 = vld [vmem:[%s3063 + $0x38] sm:$0xff]
        %v3072 = vld [vmem:[%s3063 + $0x40] sm:$0xff]
        %v3073 = vld [vmem:[%s3063 + $0x48] sm:$0xff]
        %v3074 = vld [vmem:[%s3063 + $0x50] sm:$0xff]
        %v3075 = vld [vmem:[%s3063 + $0x58] sm:$0xff]
        %v3076 = vld [vmem:[%s3063 + $0x60] sm:$0xff]
        %v3077 = vld [vmem:[%s3063 + $0x68] sm:$0xff]
        %v3078 = vld [vmem:[%s3063 + $0x70] sm:$0xff]
        %v3079 = vld [vmem:[%s3063 + $0x78] sm:$0xff]
        %v3080 = vld [vmem:[%s3063 + $0x80] sm:$0xff]
        %v3081 = vld [vmem:[%s3063 + $0x88] sm:$0xff]
        %v3082 = vld [vmem:[%s3063 + $0x90] sm:$0xff]
        %v3083 = vld [vmem:[%s3063 + $0x98] sm:$0xff]
        %v3084 = vld [vmem:[%s3063 + $0xa0] sm:$0xff]
        %v3085 = vld [vmem:[%s3063 + $0xa8] sm:$0xff]
        %v3086 = vld [vmem:[%s3063 + $0xb0] sm:$0xff]
        %v3087 = vld [vmem:[%s3063 + $0xb8] sm:$0xff]
        %v3088 = vld [vmem:[%s3063 + $0xc0] sm:$0xff]
        %v3089 = vld [vmem:[%s3063 + $0xc8] sm:$0xff]
        %v3090 = vld [vmem:[%s3063 + $0xd0] sm:$0xff]
        %v3091 = vld [vmem:[%s3063 + $0xd8] sm:$0xff]
        %v3092 = vld [vmem:[%s3063 + $0xe0] sm:$0xff]
        %v3093 = vld [vmem:[%s3063 + $0xe8] sm:$0xff]
        %v3094 = vld [vmem:[%s3063 + $0xf0] sm:$0xff]
        %v3095 = vld [vmem:[%s3063 + $0xf8] sm:$0xff]
        %s3096 = scalar_lea.vmem %s5, 2
        %v3097 = vld [vmem:[%s3096] sm:$0x3]
        %s3098 = scalar_lea.vmem %s10, 4
        %v3099 = vld [vmem:[%s3098] sm:$0x7]
        %s3100 = scalar_lea.vmem %s11, 4
        %v3101 = vld [vmem:[%s3100] sm:$0x7]
        %v3102 = vlaneseq
        %v3103 = vshrl.u32 %v3102, 7
        %v3104 = vsub.s32 0, %v3103
        %v3105 = vrot.slane %v3062, %v3104
        %v3107 = vsel %vm572, %v3043, 0
        %3109 = vmatprep.subr.mxu0 0.0
        %3110 = vmatpush1.msra.mxu0 %v3045
        %3111 = vmatprep.subr.mxu0 0.0
        %3112 = vmatpush1.msra.mxu0 %v3046
        %3113 = vmatprep.subr.mxu0 0.0
        %3114 = vmatpush1.msra.mxu0 %v3047
        %3115 = vmatprep.subr.mxu0 0.0
        %3116 = vmatpush1.msra.mxu0 %v3048
        %3117 = vmatprep.subr.mxu0 0.0
        %3118 = vmatpush1.msra.mxu0 0.0
        %3119 = vmatprep.subr.mxu0 0.0
        %3120 = vmatpush1.msra.mxu0 0.0
        %3121 = vmatprep.subr.mxu0 0.0
        %3122 = vmatpush1.msra.mxu0 0.0
        %3123 = vmatprep.subr.mxu0 0.0
        %3124 = vmatpush1.msra.mxu0 0.0
        %3125 = vmatprep.subr.mxu0 0.0
        %3126 = vmatpush1.msra.mxu0 0.0
        %3127 = vmatprep.subr.mxu0 0.0
        %3128 = vmatpush1.msra.mxu0 0.0
        %3129 = vmatprep.subr.mxu0 0.0
        %3130 = vmatpush1.msra.mxu0 0.0
        %3131 = vmatprep.subr.mxu0 0.0
        %3132 = vmatpush1.msra.mxu0 0.0
        %3133 = vmatprep.subr.mxu0 0.0
        %3134 = vmatpush1.msra.mxu0 0.0
        %3135 = vmatprep.subr.mxu0 0.0
        %3136 = vmatpush1.msra.mxu0 0.0
        %3137 = vmatprep.subr.mxu0 0.0
        %3138 = vmatpush1.msra.mxu0 0.0
        %3139 = vmatprep.subr.mxu0 0.0
        %3140 = vmatpush1.msra.mxu0 0.0
        %3141 = vmatprep.subr.mxu0 0.0
        %3142 = vmatpush1.msra.mxu0 0.0
        %3143 = vmatprep.subr.mxu0 0.0
        %3144 = vmatpush1.msra.mxu0 0.0
        %3145 = vmatprep.subr.mxu0 0.0
        %3146 = vmatpush1.msra.mxu0 0.0
        %3147 = vmatprep.subr.mxu0 0.0
        %3148 = vmatpush1.msra.mxu0 0.0
        %3149 = vmatprep.subr.mxu0 0.0
        %3150 = vmatpush1.msra.mxu0 0.0
        %3151 = vmatprep.subr.mxu0 0.0
        %3152 = vmatpush1.msra.mxu0 0.0
        %3153 = vmatprep.subr.mxu0 0.0
        %3154 = vmatpush1.msra.mxu0 0.0
        %3155 = vmatprep.subr.mxu0 0.0
        %3156 = vmatpush1.msra.mxu0 0.0
        %3157 = vmatprep.subr.mxu0 0.0
        %3158 = vmatpush1.msra.mxu0 0.0
        %3159 = vmatprep.subr.mxu0 0.0
        %3160 = vmatpush1.msra.mxu0 0.0
        %3161 = vmatprep.subr.mxu0 0.0
        %3162 = vmatpush1.msra.mxu0 0.0
        %3163 = vmatprep.subr.mxu0 0.0
        %3164 = vmatpush1.msra.mxu0 0.0
        %3165 = vmatprep.subr.mxu0 0.0
        %3166 = vmatpush1.msra.mxu0 0.0
        %3167 = vmatprep.subr.mxu0 0.0
        %3168 = vmatpush1.msra.mxu0 0.0
        %3169 = vmatprep.subr.mxu0 0.0
        %3170 = vmatpush1.msra.mxu0 0.0
        %3171 = vmatprep.subr.mxu0 0.0
        %3172 = vmatpush1.msra.mxu0 0.0
        %3173 = vmatprep.mubr.f32.mxu0 0.0
        %3174 = vmatmul.mubr.f32.gmra.mrb[0].mxu0 %v3107
        %v3175 = vpop.f32.mrb[0].mxu0
        %v3176 = vadd.f32 %v3105, %v3175
        %v3177 = vpop.f32.mrb[0].mxu0
        %3178 = vdwg.mxu0
        %v3179 = vlaneseq
        %v3180 = vshrl.u32 %v3179, 7
        %v3181 = vsub.s32 1, %v3180
        %v3182 = vrot.slane %v3062, %v3181
        %3183 = vmatprep.subr.mxu0 0.0
        %3184 = vmatpush1.msra.mxu0 %v3049
        %3185 = vmatprep.subr.mxu0 0.0
        %3186 = vmatpush1.msra.mxu0 %v3050
        %3187 = vmatprep.subr.mxu0 0.0
        %3188 = vmatpush1.msra.mxu0 %v3051
        %3189 = vmatprep.subr.mxu0 0.0
        %3190 = vmatpush1.msra.mxu0 %v3052
        %3191 = vmatprep.subr.mxu0 0.0
        %3192 = vmatpush1.msra.mxu0 0.0
        %3193 = vmatprep.subr.mxu0 0.0
        %3194 = vmatpush1.msra.mxu0 0.0
        %3195 = vmatprep.subr.mxu0 0.0
        %3196 = vmatpush1.msra.mxu0 0.0
        %3197 = vmatprep.subr.mxu0 0.0
        %3198 = vmatpush1.msra.mxu0 0.0
        %3199 = vmatprep.subr.mxu0 0.0
        %3200 = vmatpush1.msra.mxu0 0.0
        %3201 = vmatprep.subr.mxu0 0.0
        %3202 = vmatpush1.msra.mxu0 0.0
        %3203 = vmatprep.subr.mxu0 0.0
        %3204 = vmatpush1.msra.mxu0 0.0
        %3205 = vmatprep.subr.mxu0 0.0
        %3206 = vmatpush1.msra.mxu0 0.0
        %3207 = vmatprep.subr.mxu0 0.0
        %3208 = vmatpush1.msra.mxu0 0.0
        %3209 = vmatprep.subr.mxu0 0.0
        %3210 = vmatpush1.msra.mxu0 0.0
        %3211 = vmatprep.subr.mxu0 0.0
        %3212 = vmatpush1.msra.mxu0 0.0
        %3213 = vmatprep.subr.mxu0 0.0
        %3214 = vmatpush1.msra.mxu0 0.0
        %3215 = vmatprep.subr.mxu0 0.0
        %3216 = vmatpush1.msra.mxu0 0.0
        %3217 = vmatprep.subr.mxu0 0.0
        %3218 = vmatpush1.msra.mxu0 0.0
        %3219 = vmatprep.subr.mxu0 0.0
        %3220 = vmatpush1.msra.mxu0 0.0
        %3221 = vmatprep.subr.mxu0 0.0
        %3222 = vmatpush1.msra.mxu0 0.0
        %3223 = vmatprep.subr.mxu0 0.0
        %3224 = vmatpush1.msra.mxu0 0.0
        %3225 = vmatprep.subr.mxu0 0.0
        %3226 = vmatpush1.msra.mxu0 0.0
        %3227 = vmatprep.subr.mxu0 0.0
        %3228 = vmatpush1.msra.mxu0 0.0
        %3229 = vmatprep.subr.mxu0 0.0
        %3230 = vmatpush1.msra.mxu0 0.0
        %3231 = vmatprep.subr.mxu0 0.0
        %3232 = vmatpush1.msra.mxu0 0.0
        %3233 = vmatprep.subr.mxu0 0.0
        %3234 = vmatpush1.msra.mxu0 0.0
        %3235 = vmatprep.subr.mxu0 0.0
        %3236 = vmatpush1.msra.mxu0 0.0
        %3237 = vmatprep.subr.mxu0 0.0
        %3238 = vmatpush1.msra.mxu0 0.0
        %3239 = vmatprep.subr.mxu0 0.0
        %3240 = vmatpush1.msra.mxu0 0.0
        %3241 = vmatprep.subr.mxu0 0.0
        %3242 = vmatpush1.msra.mxu0 0.0
        %3243 = vmatprep.subr.mxu0 0.0
        %3244 = vmatpush1.msra.mxu0 0.0
        %3245 = vmatprep.subr.mxu0 0.0
        %3246 = vmatpush1.msra.mxu0 0.0
        %3247 = vmatprep.mubr.f32.mxu0 0.0
        %3248 = vmatmul.mubr.f32.gmra.mrb[0].mxu0 %v3107
        %v3249 = vpop.f32.mrb[0].mxu0
        %v3250 = vadd.f32 %v3182, %v3249
        %v3251 = vpop.f32.mrb[0].mxu0
        %3252 = vdwg.mxu0
        %v3253 = vlaneseq
        %v3254 = vshrl.u32 %v3253, 7
        %v3255 = vsub.s32 0, %v3254
        %v3256 = vrot.slane %v3097, %v3255
        %v3257 = vadd.f32 %v3256, 0.0
        %v3259 = vsel %vm725, %v3176, 0
        %v3262 = vsel %vm725, %v3250, 0
        %3264 = vmatprep.subr.mxu0 0.0
        %3265 = vmatpush1.xpose.msra.mxu0 %v3262
        %3266 = vmatprep.subr.mxu0 0.0
        %3267 = vmatpush1.xpose.msra.mxu0 0.0
        %3268 = vmatprep.subr.mxu0 0.0
        %3269 = vmatpush1.xpose.msra.mxu0 0.0
        %3270 = vmatprep.subr.mxu0 0.0
        %3271 = vmatpush1.xpose.msra.mxu0 0.0
        %3272 = vmatprep.subr.mxu0 0.0
        %3273 = vmatpush1.xpose.msra.mxu0 0.0
        %3274 = vmatprep.subr.mxu0 0.0
        %3275 = vmatpush1.xpose.msra.mxu0 0.0
        %3276 = vmatprep.subr.mxu0 0.0
        %3277 = vmatpush1.xpose.msra.mxu0 0.0
        %3278 = vmatprep.subr.mxu0 0.0
        %3279 = vmatpush1.xpose.msra.mxu0 0.0
        %3280 = vmatprep.subr.mxu0 0.0
        %3281 = vmatpush1.xpose.msra.mxu0 0.0
        %3282 = vmatprep.subr.mxu0 0.0
        %3283 = vmatpush1.xpose.msra.mxu0 0.0
        %3284 = vmatprep.subr.mxu0 0.0
        %3285 = vmatpush1.xpose.msra.mxu0 0.0
        %3286 = vmatprep.subr.mxu0 0.0
        %3287 = vmatpush1.xpose.msra.mxu0 0.0
        %3288 = vmatprep.subr.mxu0 0.0
        %3289 = vmatpush1.xpose.msra.mxu0 0.0
        %3290 = vmatprep.subr.mxu0 0.0
        %3291 = vmatpush1.xpose.msra.mxu0 0.0
        %3292 = vmatprep.subr.mxu0 0.0
        %3293 = vmatpush1.xpose.msra.mxu0 0.0
        %3294 = vmatprep.subr.mxu0 0.0
        %3295 = vmatpush1.xpose.msra.mxu0 0.0
        %3296 = vmatprep.subr.mxu0 0.0
        %3297 = vmatpush1.xpose.msra.mxu0 0.0
        %3298 = vmatprep.subr.mxu0 0.0
        %3299 = vmatpush1.xpose.msra.mxu0 0.0
        %3300 = vmatprep.subr.mxu0 0.0
        %3301 = vmatpush1.xpose.msra.mxu0 0.0
        %3302 = vmatprep.subr.mxu0 0.0
        %3303 = vmatpush1.xpose.msra.mxu0 0.0
        %3304 = vmatprep.subr.mxu0 0.0
        %3305 = vmatpush1.xpose.msra.mxu0 0.0
        %3306 = vmatprep.subr.mxu0 0.0
        %3307 = vmatpush1.xpose.msra.mxu0 0.0
        %3308 = vmatprep.subr.mxu0 0.0
        %3309 = vmatpush1.xpose.msra.mxu0 0.0
        %3310 = vmatprep.subr.mxu0 0.0
        %3311 = vmatpush1.xpose.msra.mxu0 0.0
        %3312 = vmatprep.subr.mxu0 0.0
        %3313 = vmatpush1.xpose.msra.mxu0 0.0
        %3314 = vmatprep.subr.mxu0 0.0
        %3315 = vmatpush1.xpose.msra.mxu0 0.0
        %3316 = vmatprep.subr.mxu0 0.0
        %3317 = vmatpush1.xpose.msra.mxu0 0.0
        %3318 = vmatprep.subr.mxu0 0.0
        %3319 = vmatpush1.xpose.msra.mxu0 0.0
        %3320 = vmatprep.subr.mxu0 0.0
        %3321 = vmatpush1.xpose.msra.mxu0 0.0
        %3322 = vmatprep.subr.mxu0 0.0
        %3323 = vmatpush1.xpose.msra.mxu0 0.0
        %3324 = vmatprep.subr.mxu0 0.0
        %3325 = vmatpush1.xpose.msra.mxu0 0.0
        %3326 = vmatprep.subr.mxu0 0.0
        %3327 = vmatpush1.xpose.msra.mxu0 0.0
        %3328 = vmatprep.mubr.f32.mxu0 0.0
        %3329 = vmatmul.mubr.f32.gmra.mrb[0].mxu0 %v3259
        %v3330 = vpop.f32.mrb[0].mxu0
        %v3331 = vadd.f32 0.0, %v3330
        %v3332 = vpop.f32.mrb[0].mxu0
        %3333 = vdwg.mxu0
        %v3334 = vmul.f32 %v3331, 0.35355338
        %v3335 = vsel %vm725, %v3334, -inf
        %3336 = vmax.xlane.f32.xlu0 %v3335
        %v3337 = vpop.xlane.xlu0 %3336
        %v3338 = vsub.f32 %v3334, %v3337
        %v3339 = vmul.f32 %v3338, 1.442695
        %v3340 = vpow.pop %v3339
        %v3341 = vsel %vm725, %v3340, 0.0
        %3342 = vadd.xlane.f32.xlu0 %v3341
        %v3343 = vpop.xlane.xlu0 %3342
        %v3344 = vrcp.pop %v3343
        %v3345 = vmul.f32 %v3340, %v3344
        %3346 = vmatprep.subr.mxu0 0.0
        %3347 = vmatpush1.msra.mxu0 %v3064
        %3348 = vmatprep.subr.mxu0 0.0
        %3349 = vmatpush1.msra.mxu0 %v3065
        %3350 = vmatprep.subr.mxu0 0.0
        %3351 = vmatpush1.msra.mxu0 %v3066
        %3352 = vmatprep.subr.mxu0 0.0
        %3353 = vmatpush1.msra.mxu0 %v3067
        %3354 = vmatprep.subr.mxu0 0.0
        %3355 = vmatpush1.msra.mxu0 0.0
        %3356 = vmatprep.subr.mxu0 0.0
        %3357 = vmatpush1.msra.mxu0 0.0
        %3358 = vmatprep.subr.mxu0 0.0
        %3359 = vmatpush1.msra.mxu0 0.0
        %3360 = vmatprep.subr.mxu0 0.0
        %3361 = vmatpush1.msra.mxu0 0.0
        %3362 = vmatprep.subr.mxu0 0.0
        %3363 = vmatpush1.msra.mxu0 0.0
        %3364 = vmatprep.subr.mxu0 0.0
        %3365 = vmatpush1.msra.mxu0 0.0
        %3366 = vmatprep.subr.mxu0 0.0
        %3367 = vmatpush1.msra.mxu0 0.0
        %3368 = vmatprep.subr.mxu0 0.0
        %3369 = vmatpush1.msra.mxu0 0.0
        %3370 = vmatprep.subr.mxu0 0.0
        %3371 = vmatpush1.msra.mxu0 0.0
        %3372 = vmatprep.subr.mxu0 0.0
        %3373 = vmatpush1.msra.mxu0 0.0
        %3374 = vmatprep.subr.mxu0 0.0
        %3375 = vmatpush1.msra.mxu0 0.0
        %3376 = vmatprep.subr.mxu0 0.0
        %3377 = vmatpush1.msra.mxu0 0.0
        %3378 = vmatprep.subr.mxu0 0.0
        %3379 = vmatpush1.msra.mxu0 0.0
        %3380 = vmatprep.subr.mxu0 0.0
        %3381 = vmatpush1.msra.mxu0 0.0
        %3382 = vmatprep.subr.mxu0 0.0
        %3383 = vmatpush1.msra.mxu0 0.0
        %3384 = vmatprep.subr.mxu0 0.0
        %3385 = vmatpush1.msra.mxu0 0.0
        %3386 = vmatprep.subr.mxu0 0.0
        %3387 = vmatpush1.msra.mxu0 0.0
        %3388 = vmatprep.subr.mxu0 0.0
        %3389 = vmatpush1.msra.mxu0 0.0
        %3390 = vmatprep.subr.mxu0 0.0
        %3391 = vmatpush1.msra.mxu0 0.0
        %3392 = vmatprep.subr.mxu0 0.0
        %3393 = vmatpush1.msra.mxu0 0.0
        %3394 = vmatprep.subr.mxu0 0.0
        %3395 = vmatpush1.msra.mxu0 0.0
        %3396 = vmatprep.subr.mxu0 0.0
        %3397 = vmatpush1.msra.mxu0 0.0
        %3398 = vmatprep.subr.mxu0 0.0
        %3399 = vmatpush1.msra.mxu0 0.0
        %3400 = vmatprep.subr.mxu0 0.0
        %3401 = vmatpush1.msra.mxu0 0.0
        %3402 = vmatprep.subr.mxu0 0.0
        %3403 = vmatpush1.msra.mxu0 0.0
        %3404 = vmatprep.subr.mxu0 0.0
        %3405 = vmatpush1.msra.mxu0 0.0
        %3406 = vmatprep.subr.mxu0 0.0
        %3407 = vmatpush1.msra.mxu0 0.0
        %3408 = vmatprep.subr.mxu0 0.0
        %3409 = vmatpush1.msra.mxu0 0.0
        %3410 = vmatprep.mubr.f32.mxu0 0.0
        %3411 = vmatmul.mubr.f32.gmra.mrb[0].mxu0 %v3107
        %v3412 = vpop.f32.mrb[0].mxu0
        %v3413 = vadd.f32 0.0, %v3412
        %v3414 = vpop.f32.mrb[0].mxu0
        %3415 = vdwg.mxu0
        %v3417 = vsel %vm725, %v3345, 0
        %3419 = vmatprep.subr.mxu0 0.0
        %3420 = vmatpush1.msra.mxu0 %v3413
        %3421 = vmatprep.subr.mxu0 0.0
        %3422 = vmatpush1.msra.mxu0 0.0
        %3423 = vmatprep.subr.mxu0 0.0
        %3424 = vmatpush1.msra.mxu0 0.0
        %3425 = vmatprep.subr.mxu0 0.0
        %3426 = vmatpush1.msra.mxu0 0.0
        %3427 = vmatprep.subr.mxu0 0.0
        %3428 = vmatpush1.msra.mxu0 0.0
        %3429 = vmatprep.subr.mxu0 0.0
        %3430 = vmatpush1.msra.mxu0 0.0
        %3431 = vmatprep.subr.mxu0 0.0
        %3432 = vmatpush1.msra.mxu0 0.0
        %3433 = vmatprep.subr.mxu0 0.0
        %3434 = vmatpush1.msra.mxu0 0.0
        %3435 = vmatprep.subr.mxu0 0.0
        %3436 = vmatpush1.msra.mxu0 0.0
        %3437 = vmatprep.subr.mxu0 0.0
        %3438 = vmatpush1.msra.mxu0 0.0
        %3439 = vmatprep.subr.mxu0 0.0
        %3440 = vmatpush1.msra.mxu0 0.0
        %3441 = vmatprep.subr.mxu0 0.0
        %3442 = vmatpush1.msra.mxu0 0.0
        %3443 = vmatprep.subr.mxu0 0.0
        %3444 = vmatpush1.msra.mxu0 0.0
        %3445 = vmatprep.subr.mxu0 0.0
        %3446 = vmatpush1.msra.mxu0 0.0
        %3447 = vmatprep.subr.mxu0 0.0
        %3448 = vmatpush1.msra.mxu0 0.0
        %3449 = vmatprep.subr.mxu0 0.0
        %3450 = vmatpush1.msra.mxu0 0.0
        %3451 = vmatprep.subr.mxu0 0.0
        %3452 = vmatpush1.msra.mxu0 0.0
        %3453 = vmatprep.subr.mxu0 0.0
        %3454 = vmatpush1.msra.mxu0 0.0
        %3455 = vmatprep.subr.mxu0 0.0
        %3456 = vmatpush1.msra.mxu0 0.0
        %3457 = vmatprep.subr.mxu0 0.0
        %3458 = vmatpush1.msra.mxu0 0.0
        %3459 = vmatprep.subr.mxu0 0.0
        %3460 = vmatpush1.msra.mxu0 0.0
        %3461 = vmatprep.subr.mxu0 0.0
        %3462 = vmatpush1.msra.mxu0 0.0
        %3463 = vmatprep.subr.mxu0 0.0
        %3464 = vmatpush1.msra.mxu0 0.0
        %3465 = vmatprep.subr.mxu0 0.0
        %3466 = vmatpush1.msra.mxu0 0.0
        %3467 = vmatprep.subr.mxu0 0.0
        %3468 = vmatpush1.msra.mxu0 0.0
        %3469 = vmatprep.subr.mxu0 0.0
        %3470 = vmatpush1.msra.mxu0 0.0
        %3471 = vmatprep.subr.mxu0 0.0
        %3472 = vmatpush1.msra.mxu0 0.0
        %3473 = vmatprep.subr.mxu0 0.0
        %3474 = vmatpush1.msra.mxu0 0.0
        %3475 = vmatprep.subr.mxu0 0.0
        %3476 = vmatpush1.msra.mxu0 0.0
        %3477 = vmatprep.subr.mxu0 0.0
        %3478 = vmatpush1.msra.mxu0 0.0
        %3479 = vmatprep.subr.mxu0 0.0
        %3480 = vmatpush1.msra.mxu0 0.0
        %3481 = vmatprep.subr.mxu0 0.0
        %3482 = vmatpush1.msra.mxu0 0.0
        %3483 = vmatprep.mubr.f32.mxu0 0.0
        %3484 = vmatmul.mubr.f32.gmra.mrb[0].mxu0 %v3417
        %v3485 = vpop.f32.mrb[0].mxu0
        %v3486 = vadd.f32 0.0, %v3485
        %v3487 = vpop.f32.mrb[0].mxu0
        %3488 = vdwg.mxu0
        %v3489 = vadd.f32 %v3257, %v3486
        %3490 = vrot.lane.b32.xlu0 %v3176, 120
        %v3491 = vpop.permute.xlu0 %3490
        %3492 = vrot.lane.b32.xlu0 %v3250, 120
        %v3493 = vpop.permute.xlu0 %3492
        %v3494 = vsel %vm725, %v3491, 0
        %v3496 = vsel %vm725, %v3493, 0
        %3498 = vmatprep.subr.mxu0 0.0
        %3499 = vmatpush1.xpose.msra.mxu0 %v3496
        %3500 = vmatprep.subr.mxu0 0.0
        %3501 = vmatpush1.xpose.msra.mxu0 0.0
        %3502 = vmatprep.subr.mxu0 0.0
        %3503 = vmatpush1.xpose.msra.mxu0 0.0
        %3504 = vmatprep.subr.mxu0 0.0
        %3505 = vmatpush1.xpose.msra.mxu0 0.0
        %3506 = vmatprep.subr.mxu0 0.0
        %3507 = vmatpush1.xpose.msra.mxu0 0.0
        %3508 = vmatprep.subr.mxu0 0.0
        %3509 = vmatpush1.xpose.msra.mxu0 0.0
        %3510 = vmatprep.subr.mxu0 0.0
        %3511 = vmatpush1.xpose.msra.mxu0 0.0
        %3512 = vmatprep.subr.mxu0 0.0
        %3513 = vmatpush1.xpose.msra.mxu0 0.0
        %3514 = vmatprep.subr.mxu0 0.0
        %3515 = vmatpush1.xpose.msra.mxu0 0.0
        %3516 = vmatprep.subr.mxu0 0.0
        %3517 = vmatpush1.xpose.msra.mxu0 0.0
        %3518 = vmatprep.subr.mxu0 0.0
        %3519 = vmatpush1.xpose.msra.mxu0 0.0
        %3520 = vmatprep.subr.mxu0 0.0
        %3521 = vmatpush1.xpose.msra.mxu0 0.0
        %3522 = vmatprep.subr.mxu0 0.0
        %3523 = vmatpush1.xpose.msra.mxu0 0.0
        %3524 = vmatprep.subr.mxu0 0.0
        %3525 = vmatpush1.xpose.msra.mxu0 0.0
        %3526 = vmatprep.subr.mxu0 0.0
        %3527 = vmatpush1.xpose.msra.mxu0 0.0
        %3528 = vmatprep.subr.mxu0 0.0
        %3529 = vmatpush1.xpose.msra.mxu0 0.0
        %3530 = vmatprep.subr.mxu0 0.0
        %3531 = vmatpush1.xpose.msra.mxu0 0.0
        %3532 = vmatprep.subr.mxu0 0.0
        %3533 = vmatpush1.xpose.msra.mxu0 0.0
        %3534 = vmatprep.subr.mxu0 0.0
        %3535 = vmatpush1.xpose.msra.mxu0 0.0
        %3536 = vmatprep.subr.mxu0 0.0
        %3537 = vmatpush1.xpose.msra.mxu0 0.0
        %3538 = vmatprep.subr.mxu0 0.0
        %3539 = vmatpush1.xpose.msra.mxu0 0.0
        %3540 = vmatprep.subr.mxu0 0.0
        %3541 = vmatpush1.xpose.msra.mxu0 0.0
        %3542 = vmatprep.subr.mxu0 0.0
        %3543 = vmatpush1.xpose.msra.mxu0 0.0
        %3544 = vmatprep.subr.mxu0 0.0
        %3545 = vmatpush1.xpose.msra.mxu0 0.0
        %3546 = vmatprep.subr.mxu0 0.0
        %3547 = vmatpush1.xpose.msra.mxu0 0.0
        %3548 = vmatprep.subr.mxu0 0.0
        %3549 = vmatpush1.xpose.msra.mxu0 0.0
        %3550 = vmatprep.subr.mxu0 0.0
        %3551 = vmatpush1.xpose.msra.mxu0 0.0
        %3552 = vmatprep.subr.mxu0 0.0
        %3553 = vmatpush1.xpose.msra.mxu0 0.0
        %3554 = vmatprep.subr.mxu0 0.0
        %3555 = vmatpush1.xpose.msra.mxu0 0.0
        %3556 = vmatprep.subr.mxu0 0.0
        %3557 = vmatpush1.xpose.msra.mxu0 0.0
        %3558 = vmatprep.subr.mxu0 0.0
        %3559 = vmatpush1.xpose.msra.mxu0 0.0
        %3560 = vmatprep.subr.mxu0 0.0
        %3561 = vmatpush1.xpose.msra.mxu0 0.0
        %3562 = vmatprep.mubr.f32.mxu0 0.0
        %3563 = vmatmul.mubr.f32.gmra.mrb[0].mxu0 %v3494
        %v3564 = vpop.f32.mrb[0].mxu0
        %v3565 = vadd.f32 0.0, %v3564
        %v3566 = vpop.f32.mrb[0].mxu0
        %3567 = vdwg.mxu0
        %v3568 = vmul.f32 %v3565, 0.35355338
        %v3569 = vsel %vm725, %v3568, -inf
        %3570 = vmax.xlane.f32.xlu0 %v3569
        %v3571 = vpop.xlane.xlu0 %3570
        %v3572 = vsub.f32 %v3568, %v3571
        %v3573 = vmul.f32 %v3572, 1.442695
        %v3574 = vpow.pop %v3573
        %v3575 = vsel %vm725, %v3574, 0.0
        %3576 = vadd.xlane.f32.xlu0 %v3575
        %v3577 = vpop.xlane.xlu0 %3576
        %v3578 = vrcp.pop %v3577
        %v3579 = vmul.f32 %v3574, %v3578
        %3580 = vmatprep.subr.mxu0 0.0
        %3581 = vmatpush1.msra.mxu0 %v3068
        %3582 = vmatprep.subr.mxu0 0.0
        %3583 = vmatpush1.msra.mxu0 %v3069
        %3584 = vmatprep.subr.mxu0 0.0
        %3585 = vmatpush1.msra.mxu0 %v3070
        %3586 = vmatprep.subr.mxu0 0.0
        %3587 = vmatpush1.msra.mxu0 %v3071
        %3588 = vmatprep.subr.mxu0 0.0
        %3589 = vmatpush1.msra.mxu0 0.0
        %3590 = vmatprep.subr.mxu0 0.0
        %3591 = vmatpush1.msra.mxu0 0.0
        %3592 = vmatprep.subr.mxu0 0.0
        %3593 = vmatpush1.msra.mxu0 0.0
        %3594 = vmatprep.subr.mxu0 0.0
        %3595 = vmatpush1.msra.mxu0 0.0
        %3596 = vmatprep.subr.mxu0 0.0
        %3597 = vmatpush1.msra.mxu0 0.0
        %3598 = vmatprep.subr.mxu0 0.0
        %3599 = vmatpush1.msra.mxu0 0.0
        %3600 = vmatprep.subr.mxu0 0.0
        %3601 = vmatpush1.msra.mxu0 0.0
        %3602 = vmatprep.subr.mxu0 0.0
        %3603 = vmatpush1.msra.mxu0 0.0
        %3604 = vmatprep.subr.mxu0 0.0
        %3605 = vmatpush1.msra.mxu0 0.0
        %3606 = vmatprep.subr.mxu0 0.0
        %3607 = vmatpush1.msra.mxu0 0.0
        %3608 = vmatprep.subr.mxu0 0.0
        %3609 = vmatpush1.msra.mxu0 0.0
        %3610 = vmatprep.subr.mxu0 0.0
        %3611 = vmatpush1.msra.mxu0 0.0
        %3612 = vmatprep.subr.mxu0 0.0
        %3613 = vmatpush1.msra.mxu0 0.0
        %3614 = vmatprep.subr.mxu0 0.0
        %3615 = vmatpush1.msra.mxu0 0.0
        %3616 = vmatprep.subr.mxu0 0.0
        %3617 = vmatpush1.msra.mxu0 0.0
        %3618 = vmatprep.subr.mxu0 0.0
        %3619 = vmatpush1.msra.mxu0 0.0
        %3620 = vmatprep.subr.mxu0 0.0
        %3621 = vmatpush1.msra.mxu0 0.0
        %3622 = vmatprep.subr.mxu0 0.0
        %3623 = vmatpush1.msra.mxu0 0.0
        %3624 = vmatprep.subr.mxu0 0.0
        %3625 = vmatpush1.msra.mxu0 0.0
        %3626 = vmatprep.subr.mxu0 0.0
        %3627 = vmatpush1.msra.mxu0 0.0
        %3628 = vmatprep.subr.mxu0 0.0
        %3629 = vmatpush1.msra.mxu0 0.0
        %3630 = vmatprep.subr.mxu0 0.0
        %3631 = vmatpush1.msra.mxu0 0.0
        %3632 = vmatprep.subr.mxu0 0.0
        %3633 = vmatpush1.msra.mxu0 0.0
        %3634 = vmatprep.subr.mxu0 0.0
        %3635 = vmatpush1.msra.mxu0 0.0
        %3636 = vmatprep.subr.mxu0 0.0
        %3637 = vmatpush1.msra.mxu0 0.0
        %3638 = vmatprep.subr.mxu0 0.0
        %3639 = vmatpush1.msra.mxu0 0.0
        %3640 = vmatprep.subr.mxu0 0.0
        %3641 = vmatpush1.msra.mxu0 0.0
        %3642 = vmatprep.subr.mxu0 0.0
        %3643 = vmatpush1.msra.mxu0 0.0
        %3644 = vmatprep.mubr.f32.mxu0 0.0
        %3645 = vmatmul.mubr.f32.gmra.mrb[0].mxu0 %v3107
        %v3646 = vpop.f32.mrb[0].mxu0
        %v3647 = vadd.f32 0.0, %v3646
        %v3648 = vpop.f32.mrb[0].mxu0
        %3649 = vdwg.mxu0
        %v3651 = vsel %vm725, %v3579, 0
        %3653 = vmatprep.subr.mxu0 0.0
        %3654 = vmatpush1.msra.mxu0 %v3647
        %3655 = vmatprep.subr.mxu0 0.0
        %3656 = vmatpush1.msra.mxu0 0.0
        %3657 = vmatprep.subr.mxu0 0.0
        %3658 = vmatpush1.msra.mxu0 0.0
        %3659 = vmatprep.subr.mxu0 0.0
        %3660 = vmatpush1.msra.mxu0 0.0
        %3661 = vmatprep.subr.mxu0 0.0
        %3662 = vmatpush1.msra.mxu0 0.0
        %3663 = vmatprep.subr.mxu0 0.0
        %3664 = vmatpush1.msra.mxu0 0.0
        %3665 = vmatprep.subr.mxu0 0.0
        %3666 = vmatpush1.msra.mxu0 0.0
        %3667 = vmatprep.subr.mxu0 0.0
        %3668 = vmatpush1.msra.mxu0 0.0
        %3669 = vmatprep.subr.mxu0 0.0
        %3670 = vmatpush1.msra.mxu0 0.0
        %3671 = vmatprep.subr.mxu0 0.0
        %3672 = vmatpush1.msra.mxu0 0.0
        %3673 = vmatprep.subr.mxu0 0.0
        %3674 = vmatpush1.msra.mxu0 0.0
        %3675 = vmatprep.subr.mxu0 0.0
        %3676 = vmatpush1.msra.mxu0 0.0
        %3677 = vmatprep.subr.mxu0 0.0
        %3678 = vmatpush1.msra.mxu0 0.0
        %3679 = vmatprep.subr.mxu0 0.0
        %3680 = vmatpush1.msra.mxu0 0.0
        %3681 = vmatprep.subr.mxu0 0.0
        %3682 = vmatpush1.msra.mxu0 0.0
        %3683 = vmatprep.subr.mxu0 0.0
        %3684 = vmatpush1.msra.mxu0 0.0
        %3685 = vmatprep.subr.mxu0 0.0
        %3686 = vmatpush1.msra.mxu0 0.0
        %3687 = vmatprep.subr.mxu0 0.0
        %3688 = vmatpush1.msra.mxu0 0.0
        %3689 = vmatprep.subr.mxu0 0.0
        %3690 = vmatpush1.msra.mxu0 0.0
        %3691 = vmatprep.subr.mxu0 0.0
        %3692 = vmatpush1.msra.mxu0 0.0
        %3693 = vmatprep.subr.mxu0 0.0
        %3694 = vmatpush1.msra.mxu0 0.0
        %3695 = vmatprep.subr.mxu0 0.0
        %3696 = vmatpush1.msra.mxu0 0.0
        %3697 = vmatprep.subr.mxu0 0.0
        %3698 = vmatpush1.msra.mxu0 0.0
        %3699 = vmatprep.subr.mxu0 0.0
        %3700 = vmatpush1.msra.mxu0 0.0
        %3701 = vmatprep.subr.mxu0 0.0
        %3702 = vmatpush1.msra.mxu0 0.0
        %3703 = vmatprep.subr.mxu0 0.0
        %3704 = vmatpush1.msra.mxu0 0.0
        %3705 = vmatprep.subr.mxu0 0.0
        %3706 = vmatpush1.msra.mxu0 0.0
        %3707 = vmatprep.subr.mxu0 0.0
        %3708 = vmatpush1.msra.mxu0 0.0
        %3709 = vmatprep.subr.mxu0 0.0
        %3710 = vmatpush1.msra.mxu0 0.0
        %3711 = vmatprep.subr.mxu0 0.0
        %3712 = vmatpush1.msra.mxu0 0.0
        %3713 = vmatprep.subr.mxu0 0.0
        %3714 = vmatpush1.msra.mxu0 0.0
        %3715 = vmatprep.subr.mxu0 0.0
        %3716 = vmatpush1.msra.mxu0 0.0
        %3717 = vmatprep.mubr.f32.mxu0 0.0
        %3718 = vmatmul.mubr.f32.gmra.mrb[0].mxu0 %v3651
        %v3719 = vpop.f32.mrb[0].mxu0
        %v3720 = vadd.f32 0.0, %v3719
        %v3721 = vpop.f32.mrb[0].mxu0
        %3722 = vdwg.mxu0
        %v3723 = vadd.f32 %v3489, %v3720
        %3724 = vrot.lane.b32.xlu0 %v3176, 112
        %v3725 = vpop.permute.xlu0 %3724
        %3726 = vrot.lane.b32.xlu0 %v3250, 112
        %v3727 = vpop.permute.xlu0 %3726
        %v3728 = vsel %vm725, %v3725, 0
        %v3730 = vsel %vm725, %v3727, 0
        %3732 = vmatprep.subr.mxu0 0.0
        %3733 = vmatpush1.xpose.msra.mxu0 %v3730
        %3734 = vmatprep.subr.mxu0 0.0
        %3735 = vmatpush1.xpose.msra.mxu0 0.0
        %3736 = vmatprep.subr.mxu0 0.0
        %3737 = vmatpush1.xpose.msra.mxu0 0.0
        %3738 = vmatprep.subr.mxu0 0.0
        %3739 = vmatpush1.xpose.msra.mxu0 0.0
        %3740 = vmatprep.subr.mxu0 0.0
        %3741 = vmatpush1.xpose.msra.mxu0 0.0
        %3742 = vmatprep.subr.mxu0 0.0
        %3743 = vmatpush1.xpose.msra.mxu0 0.0
        %3744 = vmatprep.subr.mxu0 0.0
        %3745 = vmatpush1.xpose.msra.mxu0 0.0
        %3746 = vmatprep.subr.mxu0 0.0
        %3747 = vmatpush1.xpose.msra.mxu0 0.0
        %3748 = vmatprep.subr.mxu0 0.0
        %3749 = vmatpush1.xpose.msra.mxu0 0.0
        %3750 = vmatprep.subr.mxu0 0.0
        %3751 = vmatpush1.xpose.msra.mxu0 0.0
        %3752 = vmatprep.subr.mxu0 0.0
        %3753 = vmatpush1.xpose.msra.mxu0 0.0
        %3754 = vmatprep.subr.mxu0 0.0
        %3755 = vmatpush1.xpose.msra.mxu0 0.0
        %3756 = vmatprep.subr.mxu0 0.0
        %3757 = vmatpush1.xpose.msra.mxu0 0.0
        %3758 = vmatprep.subr.mxu0 0.0
        %3759 = vmatpush1.xpose.msra.mxu0 0.0
        %3760 = vmatprep.subr.mxu0 0.0
        %3761 = vmatpush1.xpose.msra.mxu0 0.0
        %3762 = vmatprep.subr.mxu0 0.0
        %3763 = vmatpush1.xpose.msra.mxu0 0.0
        %3764 = vmatprep.subr.mxu0 0.0
        %3765 = vmatpush1.xpose.msra.mxu0 0.0
        %3766 = vmatprep.subr.mxu0 0.0
        %3767 = vmatpush1.xpose.msra.mxu0 0.0
        %3768 = vmatprep.subr.mxu0 0.0
        %3769 = vmatpush1.xpose.msra.mxu0 0.0
        %3770 = vmatprep.subr.mxu0 0.0
        %3771 = vmatpush1.xpose.msra.mxu0 0.0
        %3772 = vmatprep.subr.mxu0 0.0
        %3773 = vmatpush1.xpose.msra.mxu0 0.0
        %3774 = vmatprep.subr.mxu0 0.0
        %3775 = vmatpush1.xpose.msra.mxu0 0.0
        %3776 = vmatprep.subr.mxu0 0.0
        %3777 = vmatpush1.xpose.msra.mxu0 0.0
        %3778 = vmatprep.subr.mxu0 0.0
        %3779 = vmatpush1.xpose.msra.mxu0 0.0
        %3780 = vmatprep.subr.mxu0 0.0
        %3781 = vmatpush1.xpose.msra.mxu0 0.0
        %3782 = vmatprep.subr.mxu0 0.0
        %3783 = vmatpush1.xpose.msra.mxu0 0.0
        %3784 = vmatprep.subr.mxu0 0.0
        %3785 = vmatpush1.xpose.msra.mxu0 0.0
        %3786 = vmatprep.subr.mxu0 0.0
        %3787 = vmatpush1.xpose.msra.mxu0 0.0
        %3788 = vmatprep.subr.mxu0 0.0
        %3789 = vmatpush1.xpose.msra.mxu0 0.0
        %3790 = vmatprep.subr.mxu0 0.0
        %3791 = vmatpush1.xpose.msra.mxu0 0.0
        %3792 = vmatprep.subr.mxu0 0.0
        %3793 = vmatpush1.xpose.msra.mxu0 0.0
        %3794 = vmatprep.subr.mxu0 0.0
        %3795 = vmatpush1.xpose.msra.mxu0 0.0
        %3796 = vmatprep.mubr.f32.mxu0 0.0
        %3797 = vmatmul.mubr.f32.gmra.mrb[0].mxu0 %v3728
        %v3798 = vpop.f32.mrb[0].mxu0
        %v3799 = vadd.f32 0.0, %v3798
        %v3800 = vpop.f32.mrb[0].mxu0
        %3801 = vdwg.mxu0
        %v3802 = vmul.f32 %v3799, 0.35355338
        %v3803 = vsel %vm725, %v3802, -inf
        %3804 = vmax.xlane.f32.xlu0 %v3803
        %v3805 = vpop.xlane.xlu0 %3804
        %v3806 = vsub.f32 %v3802, %v3805
        %v3807 = vmul.f32 %v3806, 1.442695
        %v3808 = vpow.pop %v3807
        %v3809 = vsel %vm725, %v3808, 0.0
        %3810 = vadd.xlane.f32.xlu0 %v3809
        %v3811 = vpop.xlane.xlu0 %3810
        %v3812 = vrcp.pop %v3811
        %v3813 = vmul.f32 %v3808, %v3812
        %3814 = vmatprep.subr.mxu0 0.0
        %3815 = vmatpush1.msra.mxu0 %v3072
        %3816 = vmatprep.subr.mxu0 0.0
        %3817 = vmatpush1.msra.mxu0 %v3073
        %3818 = vmatprep.subr.mxu0 0.0
        %3819 = vmatpush1.msra.mxu0 %v3074
        %3820 = vmatprep.subr.mxu0 0.0
        %3821 = vmatpush1.msra.mxu0 %v3075
        %3822 = vmatprep.subr.mxu0 0.0
        %3823 = vmatpush1.msra.mxu0 0.0
        %3824 = vmatprep.subr.mxu0 0.0
        %3825 = vmatpush1.msra.mxu0 0.0
        %3826 = vmatprep.subr.mxu0 0.0
        %3827 = vmatpush1.msra.mxu0 0.0
        %3828 = vmatprep.subr.mxu0 0.0
        %3829 = vmatpush1.msra.mxu0 0.0
        %3830 = vmatprep.subr.mxu0 0.0
        %3831 = vmatpush1.msra.mxu0 0.0
        %3832 = vmatprep.subr.mxu0 0.0
        %3833 = vmatpush1.msra.mxu0 0.0
        %3834 = vmatprep.subr.mxu0 0.0
        %3835 = vmatpush1.msra.mxu0 0.0
        %3836 = vmatprep.subr.mxu0 0.0
        %3837 = vmatpush1.msra.mxu0 0.0
        %3838 = vmatprep.subr.mxu0 0.0
        %3839 = vmatpush1.msra.mxu0 0.0
        %3840 = vmatprep.subr.mxu0 0.0
        %3841 = vmatpush1.msra.mxu0 0.0
        %3842 = vmatprep.subr.mxu0 0.0
        %3843 = vmatpush1.msra.mxu0 0.0
        %3844 = vmatprep.subr.mxu0 0.0
        %3845 = vmatpush1.msra.mxu0 0.0
        %3846 = vmatprep.subr.mxu0 0.0
        %3847 = vmatpush1.msra.mxu0 0.0
        %3848 = vmatprep.subr.mxu0 0.0
        %3849 = vmatpush1.msra.mxu0 0.0
        %3850 = vmatprep.subr.mxu0 0.0
        %3851 = vmatpush1.msra.mxu0 0.0
        %3852 = vmatprep.subr.mxu0 0.0
        %3853 = vmatpush1.msra.mxu0 0.0
        %3854 = vmatprep.subr.mxu0 0.0
        %3855 = vmatpush1.msra.mxu0 0.0
        %3856 = vmatprep.subr.mxu0 0.0
        %3857 = vmatpush1.msra.mxu0 0.0
        %3858 = vmatprep.subr.mxu0 0.0
        %3859 = vmatpush1.msra.mxu0 0.0
        %3860 = vmatprep.subr.mxu0 0.0
        %3861 = vmatpush1.msra.mxu0 0.0
        %3862 = vmatprep.subr.mxu0 0.0
        %3863 = vmatpush1.msra.mxu0 0.0
        %3864 = vmatprep.subr.mxu0 0.0
        %3865 = vmatpush1.msra.mxu0 0.0
        %3866 = vmatprep.subr.mxu0 0.0
        %3867 = vmatpush1.msra.mxu0 0.0
        %3868 = vmatprep.subr.mxu0 0.0
        %3869 = vmatpush1.msra.mxu0 0.0
        %3870 = vmatprep.subr.mxu0 0.0
        %3871 = vmatpush1.msra.mxu0 0.0
        %3872 = vmatprep.subr.mxu0 0.0
        %3873 = vmatpush1.msra.mxu0 0.0
        %3874 = vmatprep.subr.mxu0 0.0
        %3875 = vmatpush1.msra.mxu0 0.0
        %3876 = vmatprep.subr.mxu0 0.0
        %3877 = vmatpush1.msra.mxu0 0.0
        %3878 = vmatprep.mubr.f32.mxu0 0.0
        %3879 = vmatmul.mubr.f32.gmra.mrb[0].mxu0 %v3107
        %v3880 = vpop.f32.mrb[0].mxu0
        %v3881 = vadd.f32 0.0, %v3880
        %v3882 = vpop.f32.mrb[0].mxu0
        %3883 = vdwg.mxu0
        %v3885 = vsel %vm725, %v3813, 0
        %3887 = vmatprep.subr.mxu0 0.0
        %3888 = vmatpush1.msra.mxu0 %v3881
        %3889 = vmatprep.subr.mxu0 0.0
        %3890 = vmatpush1.msra.mxu0 0.0
        %3891 = vmatprep.subr.mxu0 0.0
        %3892 = vmatpush1.msra.mxu0 0.0
        %3893 = vmatprep.subr.mxu0 0.0
        %3894 = vmatpush1.msra.mxu0 0.0
        %3895 = vmatprep.subr.mxu0 0.0
        %3896 = vmatpush1.msra.mxu0 0.0
        %3897 = vmatprep.subr.mxu0 0.0
        %3898 = vmatpush1.msra.mxu0 0.0
        %3899 = vmatprep.subr.mxu0 0.0
        %3900 = vmatpush1.msra.mxu0 0.0
        %3901 = vmatprep.subr.mxu0 0.0
        %3902 = vmatpush1.msra.mxu0 0.0
        %3903 = vmatprep.subr.mxu0 0.0
        %3904 = vmatpush1.msra.mxu0 0.0
        %3905 = vmatprep.subr.mxu0 0.0
        %3906 = vmatpush1.msra.mxu0 0.0
        %3907 = vmatprep.subr.mxu0 0.0
        %3908 = vmatpush1.msra.mxu0 0.0
        %3909 = vmatprep.subr.mxu0 0.0
        %3910 = vmatpush1.msra.mxu0 0.0
        %3911 = vmatprep.subr.mxu0 0.0
        %3912 = vmatpush1.msra.mxu0 0.0
        %3913 = vmatprep.subr.mxu0 0.0
        %3914 = vmatpush1.msra.mxu0 0.0
        %3915 = vmatprep.subr.mxu0 0.0
        %3916 = vmatpush1.msra.mxu0 0.0
        %3917 = vmatprep.subr.mxu0 0.0
        %3918 = vmatpush1.msra.mxu0 0.0
        %3919 = vmatprep.subr.mxu0 0.0
        %3920 = vmatpush1.msra.mxu0 0.0
        %3921 = vmatprep.subr.mxu0 0.0
        %3922 = vmatpush1.msra.mxu0 0.0
        %3923 = vmatprep.subr.mxu0 0.0
        %3924 = vmatpush1.msra.mxu0 0.0
        %3925 = vmatprep.subr.mxu0 0.0
        %3926 = vmatpush1.msra.mxu0 0.0
        %3927 = vmatprep.subr.mxu0 0.0
        %3928 = vmatpush1.msra.mxu0 0.0
        %3929 = vmatprep.subr.mxu0 0.0
        %3930 = vmatpush1.msra.mxu0 0.0
        %3931 = vmatprep.subr.mxu0 0.0
        %3932 = vmatpush1.msra.mxu0 0.0
        %3933 = vmatprep.subr.mxu0 0.0
        %3934 = vmatpush1.msra.mxu0 0.0
        %3935 = vmatprep.subr.mxu0 0.0
        %3936 = vmatpush1.msra.mxu0 0.0
        %3937 = vmatprep.subr.mxu0 0.0
        %3938 = vmatpush1.msra.mxu0 0.0
        %3939 = vmatprep.subr.mxu0 0.0
        %3940 = vmatpush1.msra.mxu0 0.0
        %3941 = vmatprep.subr.mxu0 0.0
        %3942 = vmatpush1.msra.mxu0 0.0
        %3943 = vmatprep.subr.mxu0 0.0
        %3944 = vmatpush1.msra.mxu0 0.0
        %3945 = vmatprep.subr.mxu0 0.0
        %3946 = vmatpush1.msra.mxu0 0.0
        %3947 = vmatprep.subr.mxu0 0.0
        %3948 = vmatpush1.msra.mxu0 0.0
        %3949 = vmatprep.subr.mxu0 0.0
        %3950 = vmatpush1.msra.mxu0 0.0
        %3951 = vmatprep.mubr.f32.mxu0 0.0
        %3952 = vmatmul.mubr.f32.gmra.mrb[0].mxu0 %v3885
        %v3953 = vpop.f32.mrb[0].mxu0
        %v3954 = vadd.f32 0.0, %v3953
        %v3955 = vpop.f32.mrb[0].mxu0
        %3956 = vdwg.mxu0
        %v3957 = vadd.f32 %v3723, %v3954
        %3958 = vrot.lane.b32.xlu0 %v3176, 104
        %v3959 = vpop.permute.xlu0 %3958
        %3960 = vrot.lane.b32.xlu0 %v3250, 104
        %v3961 = vpop.permute.xlu0 %3960
        %v3962 = vsel %vm725, %v3959, 0
        %v3964 = vsel %vm725, %v3961, 0
        %3966 = vmatprep.subr.mxu0 0.0
        %3967 = vmatpush1.xpose.msra.mxu0 %v3964
        %3968 = vmatprep.subr.mxu0 0.0
        %3969 = vmatpush1.xpose.msra.mxu0 0.0
        %3970 = vmatprep.subr.mxu0 0.0
        %3971 = vmatpush1.xpose.msra.mxu0 0.0
        %3972 = vmatprep.subr.mxu0 0.0
        %3973 = vmatpush1.xpose.msra.mxu0 0.0
        %3974 = vmatprep.subr.mxu0 0.0
        %3975 = vmatpush1.xpose.msra.mxu0 0.0
        %3976 = vmatprep.subr.mxu0 0.0
        %3977 = vmatpush1.xpose.msra.mxu0 0.0
        %3978 = vmatprep.subr.mxu0 0.0
        %3979 = vmatpush1.xpose.msra.mxu0 0.0
        %3980 = vmatprep.subr.mxu0 0.0
        %3981 = vmatpush1.xpose.msra.mxu0 0.0
        %3982 = vmatprep.subr.mxu0 0.0
        %3983 = vmatpush1.xpose.msra.mxu0 0.0
        %3984 = vmatprep.subr.mxu0 0.0
        %3985 = vmatpush1.xpose.msra.mxu0 0.0
        %3986 = vmatprep.subr.mxu0 0.0
        %3987 = vmatpush1.xpose.msra.mxu0 0.0
        %3988 = vmatprep.subr.mxu0 0.0
        %3989 = vmatpush1.xpose.msra.mxu0 0.0
        %3990 = vmatprep.subr.mxu0 0.0
        %3991 = vmatpush1.xpose.msra.mxu0 0.0
        %3992 = vmatprep.subr.mxu0 0.0
        %3993 = vmatpush1.xpose.msra.mxu0 0.0
        %3994 = vmatprep.subr.mxu0 0.0
        %3995 = vmatpush1.xpose.msra.mxu0 0.0
        %3996 = vmatprep.subr.mxu0 0.0
        %3997 = vmatpush1.xpose.msra.mxu0 0.0
        %3998 = vmatprep.subr.mxu0 0.0
        %3999 = vmatpush1.xpose.msra.mxu0 0.0
        %4000 = vmatprep.subr.mxu0 0.0
        %4001 = vmatpush1.xpose.msra.mxu0 0.0
        %4002 = vmatprep.subr.mxu0 0.0
        %4003 = vmatpush1.xpose.msra.mxu0 0.0
        %4004 = vmatprep.subr.mxu0 0.0
        %4005 = vmatpush1.xpose.msra.mxu0 0.0
        %4006 = vmatprep.subr.mxu0 0.0
        %4007 = vmatpush1.xpose.msra.mxu0 0.0
        %4008 = vmatprep.subr.mxu0 0.0
        %4009 = vmatpush1.xpose.msra.mxu0 0.0
        %4010 = vmatprep.subr.mxu0 0.0
        %4011 = vmatpush1.xpose.msra.mxu0 0.0
        %4012 = vmatprep.subr.mxu0 0.0
        %4013 = vmatpush1.xpose.msra.mxu0 0.0
        %4014 = vmatprep.subr.mxu0 0.0
        %4015 = vmatpush1.xpose.msra.mxu0 0.0
        %4016 = vmatprep.subr.mxu0 0.0
        %4017 = vmatpush1.xpose.msra.mxu0 0.0
        %4018 = vmatprep.subr.mxu0 0.0
        %4019 = vmatpush1.xpose.msra.mxu0 0.0
        %4020 = vmatprep.subr.mxu0 0.0
        %4021 = vmatpush1.xpose.msra.mxu0 0.0
        %4022 = vmatprep.subr.mxu0 0.0
        %4023 = vmatpush1.xpose.msra.mxu0 0.0
        %4024 = vmatprep.subr.mxu0 0.0
        %4025 = vmatpush1.xpose.msra.mxu0 0.0
        %4026 = vmatprep.subr.mxu0 0.0
        %4027 = vmatpush1.xpose.msra.mxu0 0.0
        %4028 = vmatprep.subr.mxu0 0.0
        %4029 = vmatpush1.xpose.msra.mxu0 0.0
        %4030 = vmatprep.mubr.f32.mxu0 0.0
        %4031 = vmatmul.mubr.f32.gmra.mrb[0].mxu0 %v3962
        %v4032 = vpop.f32.mrb[0].mxu0
        %v4033 = vadd.f32 0.0, %v4032
        %v4034 = vpop.f32.mrb[0].mxu0
        %4035 = vdwg.mxu0
        %v4036 = vmul.f32 %v4033, 0.35355338
        %v4037 = vsel %vm725, %v4036, -inf
        %4038 = vmax.xlane.f32.xlu0 %v4037
        %v4039 = vpop.xlane.xlu0 %4038
        %v4040 = vsub.f32 %v4036, %v4039
        %v4041 = vmul.f32 %v4040, 1.442695
        %v4042 = vpow.pop %v4041
        %v4043 = vsel %vm725, %v4042, 0.0
        %4044 = vadd.xlane.f32.xlu0 %v4043
        %v4045 = vpop.xlane.xlu0 %4044
        %v4046 = vrcp.pop %v4045
        %v4047 = vmul.f32 %v4042, %v4046
        %4048 = vmatprep.subr.mxu0 0.0
        %4049 = vmatpush1.msra.mxu0 %v3076
        %4050 = vmatprep.subr.mxu0 0.0
        %4051 = vmatpush1.msra.mxu0 %v3077
        %4052 = vmatprep.subr.mxu0 0.0
        %4053 = vmatpush1.msra.mxu0 %v3078
        %4054 = vmatprep.subr.mxu0 0.0
        %4055 = vmatpush1.msra.mxu0 %v3079
        %4056 = vmatprep.subr.mxu0 0.0
        %4057 = vmatpush1.msra.mxu0 0.0
        %4058 = vmatprep.subr.mxu0 0.0
        %4059 = vmatpush1.msra.mxu0 0.0
        %4060 = vmatprep.subr.mxu0 0.0
        %4061 = vmatpush1.msra.mxu0 0.0
        %4062 = vmatprep.subr.mxu0 0.0
        %4063 = vmatpush1.msra.mxu0 0.0
        %4064 = vmatprep.subr.mxu0 0.0
        %4065 = vmatpush1.msra.mxu0 0.0
        %4066 = vmatprep.subr.mxu0 0.0
        %4067 = vmatpush1.msra.mxu0 0.0
        %4068 = vmatprep.subr.mxu0 0.0
        %4069 = vmatpush1.msra.mxu0 0.0
        %4070 = vmatprep.subr.mxu0 0.0
        %4071 = vmatpush1.msra.mxu0 0.0
        %4072 = vmatprep.subr.mxu0 0.0
        %4073 = vmatpush1.msra.mxu0 0.0
        %4074 = vmatprep.subr.mxu0 0.0
        %4075 = vmatpush1.msra.mxu0 0.0
        %4076 = vmatprep.subr.mxu0 0.0
        %4077 = vmatpush1.msra.mxu0 0.0
        %4078 = vmatprep.subr.mxu0 0.0
        %4079 = vmatpush1.msra.mxu0 0.0
        %4080 = vmatprep.subr.mxu0 0.0
        %4081 = vmatpush1.msra.mxu0 0.0
        %4082 = vmatprep.subr.mxu0 0.0
        %4083 = vmatpush1.msra.mxu0 0.0
        %4084 = vmatprep.subr.mxu0 0.0
        %4085 = vmatpush1.msra.mxu0 0.0
        %4086 = vmatprep.subr.mxu0 0.0
        %4087 = vmatpush1.msra.mxu0 0.0
        %4088 = vmatprep.subr.mxu0 0.0
        %4089 = vmatpush1.msra.mxu0 0.0
        %4090 = vmatprep.subr.mxu0 0.0
        %4091 = vmatpush1.msra.mxu0 0.0
        %4092 = vmatprep.subr.mxu0 0.0
        %4093 = vmatpush1.msra.mxu0 0.0
        %4094 = vmatprep.subr.mxu0 0.0
        %4095 = vmatpush1.msra.mxu0 0.0
        %4096 = vmatprep.subr.mxu0 0.0
        %4097 = vmatpush1.msra.mxu0 0.0
        %4098 = vmatprep.subr.mxu0 0.0
        %4099 = vmatpush1.msra.mxu0 0.0
        %4100 = vmatprep.subr.mxu0 0.0
        %4101 = vmatpush1.msra.mxu0 0.0
        %4102 = vmatprep.subr.mxu0 0.0
        %4103 = vmatpush1.msra.mxu0 0.0
        %4104 = vmatprep.subr.mxu0 0.0
        %4105 = vmatpush1.msra.mxu0 0.0
        %4106 = vmatprep.subr.mxu0 0.0
        %4107 = vmatpush1.msra.mxu0 0.0
        %4108 = vmatprep.subr.mxu0 0.0
        %4109 = vmatpush1.msra.mxu0 0.0
        %4110 = vmatprep.subr.mxu0 0.0
        %4111 = vmatpush1.msra.mxu0 0.0
        %4112 = vmatprep.mubr.f32.mxu0 0.0
        %4113 = vmatmul.mubr.f32.gmra.mrb[0].mxu0 %v3107
        %v4114 = vpop.f32.mrb[0].mxu0
        %v4115 = vadd.f32 0.0, %v4114
        %v4116 = vpop.f32.mrb[0].mxu0
        %4117 = vdwg.mxu0
        %v4119 = vsel %vm725, %v4047, 0
        %4121 = vmatprep.subr.mxu0 0.0
        %4122 = vmatpush1.msra.mxu0 %v4115
        %4123 = vmatprep.subr.mxu0 0.0
        %4124 = vmatpush1.msra.mxu0 0.0
        %4125 = vmatprep.subr.mxu0 0.0
        %4126 = vmatpush1.msra.mxu0 0.0
        %4127 = vmatprep.subr.mxu0 0.0
        %4128 = vmatpush1.msra.mxu0 0.0
        %4129 = vmatprep.subr.mxu0 0.0
        %4130 = vmatpush1.msra.mxu0 0.0
        %4131 = vmatprep.subr.mxu0 0.0
        %4132 = vmatpush1.msra.mxu0 0.0
        %4133 = vmatprep.subr.mxu0 0.0
        %4134 = vmatpush1.msra.mxu0 0.0
        %4135 = vmatprep.subr.mxu0 0.0
        %4136 = vmatpush1.msra.mxu0 0.0
        %4137 = vmatprep.subr.mxu0 0.0
        %4138 = vmatpush1.msra.mxu0 0.0
        %4139 = vmatprep.subr.mxu0 0.0
        %4140 = vmatpush1.msra.mxu0 0.0
        %4141 = vmatprep.subr.mxu0 0.0
        %4142 = vmatpush1.msra.mxu0 0.0
        %4143 = vmatprep.subr.mxu0 0.0
        %4144 = vmatpush1.msra.mxu0 0.0
        %4145 = vmatprep.subr.mxu0 0.0
        %4146 = vmatpush1.msra.mxu0 0.0
        %4147 = vmatprep.subr.mxu0 0.0
        %4148 = vmatpush1.msra.mxu0 0.0
        %4149 = vmatprep.subr.mxu0 0.0
        %4150 = vmatpush1.msra.mxu0 0.0
        %4151 = vmatprep.subr.mxu0 0.0
        %4152 = vmatpush1.msra.mxu0 0.0
        %4153 = vmatprep.subr.mxu0 0.0
        %4154 = vmatpush1.msra.mxu0 0.0
        %4155 = vmatprep.subr.mxu0 0.0
        %4156 = vmatpush1.msra.mxu0 0.0
        %4157 = vmatprep.subr.mxu0 0.0
        %4158 = vmatpush1.msra.mxu0 0.0
        %4159 = vmatprep.subr.mxu0 0.0
        %4160 = vmatpush1.msra.mxu0 0.0
        %4161 = vmatprep.subr.mxu0 0.0
        %4162 = vmatpush1.msra.mxu0 0.0
        %4163 = vmatprep.subr.mxu0 0.0
        %4164 = vmatpush1.msra.mxu0 0.0
        %4165 = vmatprep.subr.mxu0 0.0
        %4166 = vmatpush1.msra.mxu0 0.0
        %4167 = vmatprep.subr.mxu0 0.0
        %4168 = vmatpush1.msra.mxu0 0.0
        %4169 = vmatprep.subr.mxu0 0.0
        %4170 = vmatpush1.msra.mxu0 0.0
        %4171 = vmatprep.subr.mxu0 0.0
        %4172 = vmatpush1.msra.mxu0 0.0
        %4173 = vmatprep.subr.mxu0 0.0
        %4174 = vmatpush1.msra.mxu0 0.0
        %4175 = vmatprep.subr.mxu0 0.0
        %4176 = vmatpush1.msra.mxu0 0.0
        %4177 = vmatprep.subr.mxu0 0.0
        %4178 = vmatpush1.msra.mxu0 0.0
        %4179 = vmatprep.subr.mxu0 0.0
        %4180 = vmatpush1.msra.mxu0 0.0
        %4181 = vmatprep.subr.mxu0 0.0
        %4182 = vmatpush1.msra.mxu0 0.0
        %4183 = vmatprep.subr.mxu0 0.0
        %4184 = vmatpush1.msra.mxu0 0.0
        %4185 = vmatprep.mubr.f32.mxu0 0.0
        %4186 = vmatmul.mubr.f32.gmra.mrb[0].mxu0 %v4119
        %v4187 = vpop.f32.mrb[0].mxu0
        %v4188 = vadd.f32 0.0, %v4187
        %v4189 = vpop.f32.mrb[0].mxu0
        %4190 = vdwg.mxu0
        %v4191 = vadd.f32 %v3957, %v4188
        %v4192 = vadd.f32 %v3043, %v4191
        %v4193 = vsel %vm572, %v4192, 0.0
        %4194 = vadd.xlane.f32.xlu0 %v4193
        %v4195 = vpop.xlane.xlu0 %4194
        %v4196 = vmul.f32 %v4195, %v1664
        %v4197 = vsub.f32 %v4192, %v4196
        %v4198 = vmul.f32 %v4197, %v4197
        %v4199 = vsel %vm572, %v4198, 0.0
        %4200 = vadd.xlane.f32.xlu0 %v4199
        %v4201 = vpop.xlane.xlu0 %4200
        %v4202 = vmul.f32 %v4201, %v1664
        %v4203 = vadd.f32 %v4202, 1e-05
        %v4204 = vrsqrt.pop %v4203
        %v4205 = vmul.f32 %v4197, %v4204
        %v4206 = vlaneseq
        %v4207 = vshrl.u32 %v4206, 7
        %v4208 = vsub.s32 0, %v4207
        %v4209 = vrot.slane %v3099, %v4208
        %v4210 = vmul.f32 %v4205, %v4209
        %v4211 = vlaneseq
        %v4212 = vshrl.u32 %v4211, 7
        %v4213 = vsub.s32 0, %v4212
        %v4214 = vrot.slane %v3101, %v4213
        %v4215 = vadd.f32 %v4210, %v4214
        %v4216 = vlaneseq
        %v4217 = vshrl.u32 %v4216, 7
        %v4218 = vsub.s32 2, %v4217
        %v4219 = vrot.slane %v3062, %v4218
        %v4221 = vsel %vm572, %v4215, 0
        %4223 = vmatprep.subr.mxu0 0.0
        %4224 = vmatpush1.msra.mxu0 %v3053
        %4225 = vmatprep.subr.mxu0 0.0
        %4226 = vmatpush1.msra.mxu0 %v3054
        %4227 = vmatprep.subr.mxu0 0.0
        %4228 = vmatpush1.msra.mxu0 %v3055
        %4229 = vmatprep.subr.mxu0 0.0
        %4230 = vmatpush1.msra.mxu0 %v3056
        %4231 = vmatprep.subr.mxu0 0.0
        %4232 = vmatpush1.msra.mxu0 0.0
        %4233 = vmatprep.subr.mxu0 0.0
        %4234 = vmatpush1.msra.mxu0 0.0
        %4235 = vmatprep.subr.mxu0 0.0
        %4236 = vmatpush1.msra.mxu0 0.0
        %4237 = vmatprep.subr.mxu0 0.0
        %4238 = vmatpush1.msra.mxu0 0.0
        %4239 = vmatprep.subr.mxu0 0.0
        %4240 = vmatpush1.msra.mxu0 0.0
        %4241 = vmatprep.subr.mxu0 0.0
        %4242 = vmatpush1.msra.mxu0 0.0
        %4243 = vmatprep.subr.mxu0 0.0
        %4244 = vmatpush1.msra.mxu0 0.0
        %4245 = vmatprep.subr.mxu0 0.0
        %4246 = vmatpush1.msra.mxu0 0.0
        %4247 = vmatprep.subr.mxu0 0.0
        %4248 = vmatpush1.msra.mxu0 0.0
        %4249 = vmatprep.subr.mxu0 0.0
        %4250 = vmatpush1.msra.mxu0 0.0
        %4251 = vmatprep.subr.mxu0 0.0
        %4252 = vmatpush1.msra.mxu0 0.0
        %4253 = vmatprep.subr.mxu0 0.0
        %4254 = vmatpush1.msra.mxu0 0.0
        %4255 = vmatprep.subr.mxu0 0.0
        %4256 = vmatpush1.msra.mxu0 0.0
        %4257 = vmatprep.subr.mxu0 0.0
        %4258 = vmatpush1.msra.mxu0 0.0
        %4259 = vmatprep.subr.mxu0 0.0
        %4260 = vmatpush1.msra.mxu0 0.0
        %4261 = vmatprep.subr.mxu0 0.0
        %4262 = vmatpush1.msra.mxu0 0.0
        %4263 = vmatprep.subr.mxu0 0.0
        %4264 = vmatpush1.msra.mxu0 0.0
        %4265 = vmatprep.subr.mxu0 0.0
        %4266 = vmatpush1.msra.mxu0 0.0
        %4267 = vmatprep.subr.mxu0 0.0
        %4268 = vmatpush1.msra.mxu0 0.0
        %4269 = vmatprep.subr.mxu0 0.0
        %4270 = vmatpush1.msra.mxu0 0.0
        %4271 = vmatprep.subr.mxu0 0.0
        %4272 = vmatpush1.msra.mxu0 0.0
        %4273 = vmatprep.subr.mxu0 0.0
        %4274 = vmatpush1.msra.mxu0 0.0
        %4275 = vmatprep.subr.mxu0 0.0
        %4276 = vmatpush1.msra.mxu0 0.0
        %4277 = vmatprep.subr.mxu0 0.0
        %4278 = vmatpush1.msra.mxu0 0.0
        %4279 = vmatprep.subr.mxu0 0.0
        %4280 = vmatpush1.msra.mxu0 0.0
        %4281 = vmatprep.subr.mxu0 0.0
        %4282 = vmatpush1.msra.mxu0 0.0
        %4283 = vmatprep.subr.mxu0 0.0
        %4284 = vmatpush1.msra.mxu0 0.0
        %4285 = vmatprep.subr.mxu0 0.0
        %4286 = vmatpush1.msra.mxu0 0.0
        %4287 = vmatprep.mubr.f32.mxu0 0.0
        %4288 = vmatmul.mubr.f32.gmra.mrb[0].mxu0 %v4221
        %v4289 = vpop.f32.mrb[0].mxu0
        %v4290 = vadd.f32 %v4219, %v4289
        %v4291 = vpop.f32.mrb[0].mxu0
        %4292 = vdwg.mxu0
        %v4293 = vlaneseq
        %v4294 = vshrl.u32 %v4293, 7
        %v4295 = vsub.s32 3, %v4294
        %v4296 = vrot.slane %v3062, %v4295
        %4297 = vmatprep.subr.mxu0 0.0
        %4298 = vmatpush1.msra.mxu0 %v3057
        %4299 = vmatprep.subr.mxu0 0.0
        %4300 = vmatpush1.msra.mxu0 %v3058
        %4301 = vmatprep.subr.mxu0 0.0
        %4302 = vmatpush1.msra.mxu0 %v3059
        %4303 = vmatprep.subr.mxu0 0.0
        %4304 = vmatpush1.msra.mxu0 %v3060
        %4305 = vmatprep.subr.mxu0 0.0
        %4306 = vmatpush1.msra.mxu0 0.0
        %4307 = vmatprep.subr.mxu0 0.0
        %4308 = vmatpush1.msra.mxu0 0.0
        %4309 = vmatprep.subr.mxu0 0.0
        %4310 = vmatpush1.msra.mxu0 0.0
        %4311 = vmatprep.subr.mxu0 0.0
        %4312 = vmatpush1.msra.mxu0 0.0
        %4313 = vmatprep.subr.mxu0 0.0
        %4314 = vmatpush1.msra.mxu0 0.0
        %4315 = vmatprep.subr.mxu0 0.0
        %4316 = vmatpush1.msra.mxu0 0.0
        %4317 = vmatprep.subr.mxu0 0.0
        %4318 = vmatpush1.msra.mxu0 0.0
        %4319 = vmatprep.subr.mxu0 0.0
        %4320 = vmatpush1.msra.mxu0 0.0
        %4321 = vmatprep.subr.mxu0 0.0
        %4322 = vmatpush1.msra.mxu0 0.0
        %4323 = vmatprep.subr.mxu0 0.0
        %4324 = vmatpush1.msra.mxu0 0.0
        %4325 = vmatprep.subr.mxu0 0.0
        %4326 = vmatpush1.msra.mxu0 0.0
        %4327 = vmatprep.subr.mxu0 0.0
        %4328 = vmatpush1.msra.mxu0 0.0
        %4329 = vmatprep.subr.mxu0 0.0
        %4330 = vmatpush1.msra.mxu0 0.0
        %4331 = vmatprep.subr.mxu0 0.0
        %4332 = vmatpush1.msra.mxu0 0.0
        %4333 = vmatprep.subr.mxu0 0.0
        %4334 = vmatpush1.msra.mxu0 0.0
        %4335 = vmatprep.subr.mxu0 0.0
        %4336 = vmatpush1.msra.mxu0 0.0
        %4337 = vmatprep.subr.mxu0 0.0
        %4338 = vmatpush1.msra.mxu0 0.0
        %4339 = vmatprep.subr.mxu0 0.0
        %4340 = vmatpush1.msra.mxu0 0.0
        %4341 = vmatprep.subr.mxu0 0.0
        %4342 = vmatpush1.msra.mxu0 0.0
        %4343 = vmatprep.subr.mxu0 0.0
        %4344 = vmatpush1.msra.mxu0 0.0
        %4345 = vmatprep.subr.mxu0 0.0
        %4346 = vmatpush1.msra.mxu0 0.0
        %4347 = vmatprep.subr.mxu0 0.0
        %4348 = vmatpush1.msra.mxu0 0.0
        %4349 = vmatprep.subr.mxu0 0.0
        %4350 = vmatpush1.msra.mxu0 0.0
        %4351 = vmatprep.subr.mxu0 0.0
        %4352 = vmatpush1.msra.mxu0 0.0
        %4353 = vmatprep.subr.mxu0 0.0
        %4354 = vmatpush1.msra.mxu0 0.0
        %4355 = vmatprep.subr.mxu0 0.0
        %4356 = vmatpush1.msra.mxu0 0.0
        %4357 = vmatprep.subr.mxu0 0.0
        %4358 = vmatpush1.msra.mxu0 0.0
        %4359 = vmatprep.subr.mxu0 0.0
        %4360 = vmatpush1.msra.mxu0 0.0
        %4361 = vmatprep.mubr.f32.mxu0 0.0
        %4362 = vmatmul.mubr.f32.gmra.mrb[0].mxu0 %v1767
        %v4363 = vpop.f32.mrb[0].mxu0
        %v4364 = vadd.f32 %v4296, %v4363
        %v4365 = vpop.f32.mrb[0].mxu0
        %4366 = vmatprep.mubr.f32.mxu0 0.0
        %4367 = vmatmul.mubr.f32.gmra.mrb[0].mxu0 %v1770
        %v4368 = vpop.f32.mrb[0].mxu0
        %v4369 = vadd.f32 %v4296, %v4368
        %v4370 = vpop.f32.mrb[0].mxu0
        %4371 = vdwg.mxu0
        %v4372 = vlaneseq
        %v4373 = vshrl.u32 %v4372, 7
        %v4374 = vsub.s32 1, %v4373
        %v4375 = vrot.slane %v3097, %v4374
        %v4376 = vadd.f32 %v4375, 0.0
        %v4378 = vsel %vm725, %v4290, 0
        %v4381 = vsel %vm725, %v4364, 0
        %v4384 = vsel %vm725, %v4369, 0
        %4386 = vmatprep.subr.mxu0 0.0
        %4387 = vmatpush1.xpose.msra.mxu0 %v4381
        %4388 = vmatprep.subr.mxu0 0.0
        %4389 = vmatpush1.xpose.msra.mxu0 %v4384
        %4390 = vmatprep.subr.mxu0 0.0
        %4391 = vmatpush1.xpose.msra.mxu0 0.0
        %4392 = vmatprep.subr.mxu0 0.0
        %4393 = vmatpush1.xpose.msra.mxu0 0.0
        %4394 = vmatprep.subr.mxu0 0.0
        %4395 = vmatpush1.xpose.msra.mxu0 0.0
        %4396 = vmatprep.subr.mxu0 0.0
        %4397 = vmatpush1.xpose.msra.mxu0 0.0
        %4398 = vmatprep.subr.mxu0 0.0
        %4399 = vmatpush1.xpose.msra.mxu0 0.0
        %4400 = vmatprep.subr.mxu0 0.0
        %4401 = vmatpush1.xpose.msra.mxu0 0.0
        %4402 = vmatprep.subr.mxu0 0.0
        %4403 = vmatpush1.xpose.msra.mxu0 0.0
        %4404 = vmatprep.subr.mxu0 0.0
        %4405 = vmatpush1.xpose.msra.mxu0 0.0
        %4406 = vmatprep.subr.mxu0 0.0
        %4407 = vmatpush1.xpose.msra.mxu0 0.0
        %4408 = vmatprep.subr.mxu0 0.0
        %4409 = vmatpush1.xpose.msra.mxu0 0.0
        %4410 = vmatprep.subr.mxu0 0.0
        %4411 = vmatpush1.xpose.msra.mxu0 0.0
        %4412 = vmatprep.subr.mxu0 0.0
        %4413 = vmatpush1.xpose.msra.mxu0 0.0
        %4414 = vmatprep.subr.mxu0 0.0
        %4415 = vmatpush1.xpose.msra.mxu0 0.0
        %4416 = vmatprep.subr.mxu0 0.0
        %4417 = vmatpush1.xpose.msra.mxu0 0.0
        %4418 = vmatprep.subr.mxu0 0.0
        %4419 = vmatpush1.xpose.msra.mxu0 0.0
        %4420 = vmatprep.subr.mxu0 0.0
        %4421 = vmatpush1.xpose.msra.mxu0 0.0
        %4422 = vmatprep.subr.mxu0 0.0
        %4423 = vmatpush1.xpose.msra.mxu0 0.0
        %4424 = vmatprep.subr.mxu0 0.0
        %4425 = vmatpush1.xpose.msra.mxu0 0.0
        %4426 = vmatprep.subr.mxu0 0.0
        %4427 = vmatpush1.xpose.msra.mxu0 0.0
        %4428 = vmatprep.subr.mxu0 0.0
        %4429 = vmatpush1.xpose.msra.mxu0 0.0
        %4430 = vmatprep.subr.mxu0 0.0
        %4431 = vmatpush1.xpose.msra.mxu0 0.0
        %4432 = vmatprep.subr.mxu0 0.0
        %4433 = vmatpush1.xpose.msra.mxu0 0.0
        %4434 = vmatprep.subr.mxu0 0.0
        %4435 = vmatpush1.xpose.msra.mxu0 0.0
        %4436 = vmatprep.subr.mxu0 0.0
        %4437 = vmatpush1.xpose.msra.mxu0 0.0
        %4438 = vmatprep.subr.mxu0 0.0
        %4439 = vmatpush1.xpose.msra.mxu0 0.0
        %4440 = vmatprep.subr.mxu0 0.0
        %4441 = vmatpush1.xpose.msra.mxu0 0.0
        %4442 = vmatprep.subr.mxu0 0.0
        %4443 = vmatpush1.xpose.msra.mxu0 0.0
        %4444 = vmatprep.subr.mxu0 0.0
        %4445 = vmatpush1.xpose.msra.mxu0 0.0
        %4446 = vmatprep.subr.mxu0 0.0
        %4447 = vmatpush1.xpose.msra.mxu0 0.0
        %4448 = vmatprep.subr.mxu0 0.0
        %4449 = vmatpush1.xpose.msra.mxu0 0.0
        %4450 = vmatprep.mubr.f32.mxu0 0.0
        %4451 = vmatmul.mubr.f32.gmra.mrb[0].mxu0 %v4378
        %v4452 = vpop.f32.mrb[0].mxu0
        %v4453 = vadd.f32 0.0, %v4452
        %v4454 = vpop.f32.mrb[0].mxu0
        %4455 = vdwg.mxu0
        %v4456 = vmul.f32 %v4453, 0.35355338
        %v4457 = vsel %vm1932, %v4456, -inf
        %4458 = vmax.xlane.f32.xlu0 %v4457
        %v4459 = vpop.xlane.xlu0 %4458
        %v4460 = vsub.f32 %v4456, %v4459
        %v4461 = vmul.f32 %v4460, 1.442695
        %v4462 = vpow.pop %v4461
        %v4463 = vsel %vm1932, %v4462, 0.0
        %4464 = vadd.xlane.f32.xlu0 %v4463
        %v4465 = vpop.xlane.xlu0 %4464
        %v4466 = vrcp.pop %v4465
        %v4467 = vmul.f32 %v4462, %v4466
        %4468 = vmatprep.subr.mxu0 0.0
        %4469 = vmatpush1.msra.mxu0 %v3080
        %4470 = vmatprep.subr.mxu0 0.0
        %4471 = vmatpush1.msra.mxu0 %v3081
        %4472 = vmatprep.subr.mxu0 0.0
        %4473 = vmatpush1.msra.mxu0 %v3082
        %4474 = vmatprep.subr.mxu0 0.0
        %4475 = vmatpush1.msra.mxu0 %v3083
        %4476 = vmatprep.subr.mxu0 0.0
        %4477 = vmatpush1.msra.mxu0 0.0
        %4478 = vmatprep.subr.mxu0 0.0
        %4479 = vmatpush1.msra.mxu0 0.0
        %4480 = vmatprep.subr.mxu0 0.0
        %4481 = vmatpush1.msra.mxu0 0.0
        %4482 = vmatprep.subr.mxu0 0.0
        %4483 = vmatpush1.msra.mxu0 0.0
        %4484 = vmatprep.subr.mxu0 0.0
        %4485 = vmatpush1.msra.mxu0 0.0
        %4486 = vmatprep.subr.mxu0 0.0
        %4487 = vmatpush1.msra.mxu0 0.0
        %4488 = vmatprep.subr.mxu0 0.0
        %4489 = vmatpush1.msra.mxu0 0.0
        %4490 = vmatprep.subr.mxu0 0.0
        %4491 = vmatpush1.msra.mxu0 0.0
        %4492 = vmatprep.subr.mxu0 0.0
        %4493 = vmatpush1.msra.mxu0 0.0
        %4494 = vmatprep.subr.mxu0 0.0
        %4495 = vmatpush1.msra.mxu0 0.0
        %4496 = vmatprep.subr.mxu0 0.0
        %4497 = vmatpush1.msra.mxu0 0.0
        %4498 = vmatprep.subr.mxu0 0.0
        %4499 = vmatpush1.msra.mxu0 0.0
        %4500 = vmatprep.subr.mxu0 0.0
        %4501 = vmatpush1.msra.mxu0 0.0
        %4502 = vmatprep.subr.mxu0 0.0
        %4503 = vmatpush1.msra.mxu0 0.0
        %4504 = vmatprep.subr.mxu0 0.0
        %4505 = vmatpush1.msra.mxu0 0.0
        %4506 = vmatprep.subr.mxu0 0.0
        %4507 = vmatpush1.msra.mxu0 0.0
        %4508 = vmatprep.subr.mxu0 0.0
        %4509 = vmatpush1.msra.mxu0 0.0
        %4510 = vmatprep.subr.mxu0 0.0
        %4511 = vmatpush1.msra.mxu0 0.0
        %4512 = vmatprep.subr.mxu0 0.0
        %4513 = vmatpush1.msra.mxu0 0.0
        %4514 = vmatprep.subr.mxu0 0.0
        %4515 = vmatpush1.msra.mxu0 0.0
        %4516 = vmatprep.subr.mxu0 0.0
        %4517 = vmatpush1.msra.mxu0 0.0
        %4518 = vmatprep.subr.mxu0 0.0
        %4519 = vmatpush1.msra.mxu0 0.0
        %4520 = vmatprep.subr.mxu0 0.0
        %4521 = vmatpush1.msra.mxu0 0.0
        %4522 = vmatprep.subr.mxu0 0.0
        %4523 = vmatpush1.msra.mxu0 0.0
        %4524 = vmatprep.subr.mxu0 0.0
        %4525 = vmatpush1.msra.mxu0 0.0
        %4526 = vmatprep.subr.mxu0 0.0
        %4527 = vmatpush1.msra.mxu0 0.0
        %4528 = vmatprep.subr.mxu0 0.0
        %4529 = vmatpush1.msra.mxu0 0.0
        %4530 = vmatprep.subr.mxu0 0.0
        %4531 = vmatpush1.msra.mxu0 0.0
        %4532 = vmatprep.mubr.f32.mxu0 0.0
        %4533 = vmatmul.mubr.f32.gmra.mrb[0].mxu0 %v1767
        %v4534 = vpop.f32.mrb[0].mxu0
        %v4535 = vadd.f32 0.0, %v4534
        %v4536 = vpop.f32.mrb[0].mxu0
        %4537 = vmatprep.mubr.f32.mxu0 0.0
        %4538 = vmatmul.mubr.f32.gmra.mrb[0].mxu0 %v1770
        %v4539 = vpop.f32.mrb[0].mxu0
        %v4540 = vadd.f32 0.0, %v4539
        %v4541 = vpop.f32.mrb[0].mxu0
        %4542 = vdwg.mxu0
        %v4544 = vsel %vm1932, %v4467, 0
        %4546 = vmatprep.subr.mxu0 0.0
        %4547 = vmatpush1.msra.mxu0 %v4535
        %4548 = vmatprep.subr.mxu0 0.0
        %4549 = vmatpush1.msra.mxu0 %v4540
        %4550 = vmatprep.subr.mxu0 0.0
        %4551 = vmatpush1.msra.mxu0 0.0
        %4552 = vmatprep.subr.mxu0 0.0
        %4553 = vmatpush1.msra.mxu0 0.0
        %4554 = vmatprep.subr.mxu0 0.0
        %4555 = vmatpush1.msra.mxu0 0.0
        %4556 = vmatprep.subr.mxu0 0.0
        %4557 = vmatpush1.msra.mxu0 0.0
        %4558 = vmatprep.subr.mxu0 0.0
        %4559 = vmatpush1.msra.mxu0 0.0
        %4560 = vmatprep.subr.mxu0 0.0
        %4561 = vmatpush1.msra.mxu0 0.0
        %4562 = vmatprep.subr.mxu0 0.0
        %4563 = vmatpush1.msra.mxu0 0.0
        %4564 = vmatprep.subr.mxu0 0.0
        %4565 = vmatpush1.msra.mxu0 0.0
        %4566 = vmatprep.subr.mxu0 0.0
        %4567 = vmatpush1.msra.mxu0 0.0
        %4568 = vmatprep.subr.mxu0 0.0
        %4569 = vmatpush1.msra.mxu0 0.0
        %4570 = vmatprep.subr.mxu0 0.0
        %4571 = vmatpush1.msra.mxu0 0.0
        %4572 = vmatprep.subr.mxu0 0.0
        %4573 = vmatpush1.msra.mxu0 0.0
        %4574 = vmatprep.subr.mxu0 0.0
        %4575 = vmatpush1.msra.mxu0 0.0
        %4576 = vmatprep.subr.mxu0 0.0
        %4577 = vmatpush1.msra.mxu0 0.0
        %4578 = vmatprep.subr.mxu0 0.0
        %4579 = vmatpush1.msra.mxu0 0.0
        %4580 = vmatprep.subr.mxu0 0.0
        %4581 = vmatpush1.msra.mxu0 0.0
        %4582 = vmatprep.subr.mxu0 0.0
        %4583 = vmatpush1.msra.mxu0 0.0
        %4584 = vmatprep.subr.mxu0 0.0
        %4585 = vmatpush1.msra.mxu0 0.0
        %4586 = vmatprep.subr.mxu0 0.0
        %4587 = vmatpush1.msra.mxu0 0.0
        %4588 = vmatprep.subr.mxu0 0.0
        %4589 = vmatpush1.msra.mxu0 0.0
        %4590 = vmatprep.subr.mxu0 0.0
        %4591 = vmatpush1.msra.mxu0 0.0
        %4592 = vmatprep.subr.mxu0 0.0
        %4593 = vmatpush1.msra.mxu0 0.0
        %4594 = vmatprep.subr.mxu0 0.0
        %4595 = vmatpush1.msra.mxu0 0.0
        %4596 = vmatprep.subr.mxu0 0.0
        %4597 = vmatpush1.msra.mxu0 0.0
        %4598 = vmatprep.subr.mxu0 0.0
        %4599 = vmatpush1.msra.mxu0 0.0
        %4600 = vmatprep.subr.mxu0 0.0
        %4601 = vmatpush1.msra.mxu0 0.0
        %4602 = vmatprep.subr.mxu0 0.0
        %4603 = vmatpush1.msra.mxu0 0.0
        %4604 = vmatprep.subr.mxu0 0.0
        %4605 = vmatpush1.msra.mxu0 0.0
        %4606 = vmatprep.subr.mxu0 0.0
        %4607 = vmatpush1.msra.mxu0 0.0
        %4608 = vmatprep.subr.mxu0 0.0
        %4609 = vmatpush1.msra.mxu0 0.0
        %4610 = vmatprep.mubr.f32.mxu0 0.0
        %4611 = vmatmul.mubr.f32.gmra.mrb[0].mxu0 %v4544
        %v4612 = vpop.f32.mrb[0].mxu0
        %v4613 = vadd.f32 0.0, %v4612
        %v4614 = vpop.f32.mrb[0].mxu0
        %4615 = vdwg.mxu0
        %v4616 = vadd.f32 %v4376, %v4613
        %4617 = vrot.lane.b32.xlu0 %v4290, 120
        %v4618 = vpop.permute.xlu0 %4617
        %4619 = vrot.lane.b32.xlu0 %v4364, 120
        %v4620 = vpop.permute.xlu0 %4619
        %4621 = vrot.lane.b32.xlu0 %v4369, 120
        %v4622 = vpop.permute.xlu0 %4621
        %v4623 = vsel %vm725, %v4618, 0
        %v4625 = vsel %vm725, %v4620, 0
        %v4627 = vsel %vm725, %v4622, 0
        %4629 = vmatprep.subr.mxu0 0.0
        %4630 = vmatpush1.xpose.msra.mxu0 %v4625
        %4631 = vmatprep.subr.mxu0 0.0
        %4632 = vmatpush1.xpose.msra.mxu0 %v4627
        %4633 = vmatprep.subr.mxu0 0.0
        %4634 = vmatpush1.xpose.msra.mxu0 0.0
        %4635 = vmatprep.subr.mxu0 0.0
        %4636 = vmatpush1.xpose.msra.mxu0 0.0
        %4637 = vmatprep.subr.mxu0 0.0
        %4638 = vmatpush1.xpose.msra.mxu0 0.0
        %4639 = vmatprep.subr.mxu0 0.0
        %4640 = vmatpush1.xpose.msra.mxu0 0.0
        %4641 = vmatprep.subr.mxu0 0.0
        %4642 = vmatpush1.xpose.msra.mxu0 0.0
        %4643 = vmatprep.subr.mxu0 0.0
        %4644 = vmatpush1.xpose.msra.mxu0 0.0
        %4645 = vmatprep.subr.mxu0 0.0
        %4646 = vmatpush1.xpose.msra.mxu0 0.0
        %4647 = vmatprep.subr.mxu0 0.0
        %4648 = vmatpush1.xpose.msra.mxu0 0.0
        %4649 = vmatprep.subr.mxu0 0.0
        %4650 = vmatpush1.xpose.msra.mxu0 0.0
        %4651 = vmatprep.subr.mxu0 0.0
        %4652 = vmatpush1.xpose.msra.mxu0 0.0
        %4653 = vmatprep.subr.mxu0 0.0
        %4654 = vmatpush1.xpose.msra.mxu0 0.0
        %4655 = vmatprep.subr.mxu0 0.0
        %4656 = vmatpush1.xpose.msra.mxu0 0.0
        %4657 = vmatprep.subr.mxu0 0.0
        %4658 = vmatpush1.xpose.msra.mxu0 0.0
        %4659 = vmatprep.subr.mxu0 0.0
        %4660 = vmatpush1.xpose.msra.mxu0 0.0
        %4661 = vmatprep.subr.mxu0 0.0
        %4662 = vmatpush1.xpose.msra.mxu0 0.0
        %4663 = vmatprep.subr.mxu0 0.0
        %4664 = vmatpush1.xpose.msra.mxu0 0.0
        %4665 = vmatprep.subr.mxu0 0.0
        %4666 = vmatpush1.xpose.msra.mxu0 0.0
        %4667 = vmatprep.subr.mxu0 0.0
        %4668 = vmatpush1.xpose.msra.mxu0 0.0
        %4669 = vmatprep.subr.mxu0 0.0
        %4670 = vmatpush1.xpose.msra.mxu0 0.0
        %4671 = vmatprep.subr.mxu0 0.0
        %4672 = vmatpush1.xpose.msra.mxu0 0.0
        %4673 = vmatprep.subr.mxu0 0.0
        %4674 = vmatpush1.xpose.msra.mxu0 0.0
        %4675 = vmatprep.subr.mxu0 0.0
        %4676 = vmatpush1.xpose.msra.mxu0 0.0
        %4677 = vmatprep.subr.mxu0 0.0
        %4678 = vmatpush1.xpose.msra.mxu0 0.0
        %4679 = vmatprep.subr.mxu0 0.0
        %4680 = vmatpush1.xpose.msra.mxu0 0.0
        %4681 = vmatprep.subr.mxu0 0.0
        %4682 = vmatpush1.xpose.msra.mxu0 0.0
        %4683 = vmatprep.subr.mxu0 0.0
        %4684 = vmatpush1.xpose.msra.mxu0 0.0
        %4685 = vmatprep.subr.mxu0 0.0
        %4686 = vmatpush1.xpose.msra.mxu0 0.0
        %4687 = vmatprep.subr.mxu0 0.0
        %4688 = vmatpush1.xpose.msra.mxu0 0.0
        %4689 = vmatprep.subr.mxu0 0.0
        %4690 = vmatpush1.xpose.msra.mxu0 0.0
        %4691 = vmatprep.subr.mxu0 0.0
        %4692 = vmatpush1.xpose.msra.mxu0 0.0
        %4693 = vmatprep.mubr.f32.mxu0 0.0
        %4694 = vmatmul.mubr.f32.gmra.mrb[0].mxu0 %v4623
        %v4695 = vpop.f32.mrb[0].mxu0
        %v4696 = vadd.f32 0.0, %v4695
        %v4697 = vpop.f32.mrb[0].mxu0
        %4698 = vdwg.mxu0
        %v4699 = vmul.f32 %v4696, 0.35355338
        %v4700 = vsel %vm1932, %v4699, -inf
        %4701 = vmax.xlane.f32.xlu0 %v4700
        %v4702 = vpop.xlane.xlu0 %4701
        %v4703 = vsub.f32 %v4699, %v4702
        %v4704 = vmul.f32 %v4703, 1.442695
        %v4705 = vpow.pop %v4704
        %v4706 = vsel %vm1932, %v4705, 0.0
        %4707 = vadd.xlane.f32.xlu0 %v4706
        %v4708 = vpop.xlane.xlu0 %4707
        %v4709 = vrcp.pop %v4708
        %v4710 = vmul.f32 %v4705, %v4709
        %4711 = vmatprep.subr.mxu0 0.0
        %4712 = vmatpush1.msra.mxu0 %v3084
        %4713 = vmatprep.subr.mxu0 0.0
        %4714 = vmatpush1.msra.mxu0 %v3085
        %4715 = vmatprep.subr.mxu0 0.0
        %4716 = vmatpush1.msra.mxu0 %v3086
        %4717 = vmatprep.subr.mxu0 0.0
        %4718 = vmatpush1.msra.mxu0 %v3087
        %4719 = vmatprep.subr.mxu0 0.0
        %4720 = vmatpush1.msra.mxu0 0.0
        %4721 = vmatprep.subr.mxu0 0.0
        %4722 = vmatpush1.msra.mxu0 0.0
        %4723 = vmatprep.subr.mxu0 0.0
        %4724 = vmatpush1.msra.mxu0 0.0
        %4725 = vmatprep.subr.mxu0 0.0
        %4726 = vmatpush1.msra.mxu0 0.0
        %4727 = vmatprep.subr.mxu0 0.0
        %4728 = vmatpush1.msra.mxu0 0.0
        %4729 = vmatprep.subr.mxu0 0.0
        %4730 = vmatpush1.msra.mxu0 0.0
        %4731 = vmatprep.subr.mxu0 0.0
        %4732 = vmatpush1.msra.mxu0 0.0
        %4733 = vmatprep.subr.mxu0 0.0
        %4734 = vmatpush1.msra.mxu0 0.0
        %4735 = vmatprep.subr.mxu0 0.0
        %4736 = vmatpush1.msra.mxu0 0.0
        %4737 = vmatprep.subr.mxu0 0.0
        %4738 = vmatpush1.msra.mxu0 0.0
        %4739 = vmatprep.subr.mxu0 0.0
        %4740 = vmatpush1.msra.mxu0 0.0
        %4741 = vmatprep.subr.mxu0 0.0
        %4742 = vmatpush1.msra.mxu0 0.0
        %4743 = vmatprep.subr.mxu0 0.0
        %4744 = vmatpush1.msra.mxu0 0.0
        %4745 = vmatprep.subr.mxu0 0.0
        %4746 = vmatpush1.msra.mxu0 0.0
        %4747 = vmatprep.subr.mxu0 0.0
        %4748 = vmatpush1.msra.mxu0 0.0
        %4749 = vmatprep.subr.mxu0 0.0
        %4750 = vmatpush1.msra.mxu0 0.0
        %4751 = vmatprep.subr.mxu0 0.0
        %4752 = vmatpush1.msra.mxu0 0.0
        %4753 = vmatprep.subr.mxu0 0.0
        %4754 = vmatpush1.msra.mxu0 0.0
        %4755 = vmatprep.subr.mxu0 0.0
        %4756 = vmatpush1.msra.mxu0 0.0
        %4757 = vmatprep.subr.mxu0 0.0
        %4758 = vmatpush1.msra.mxu0 0.0
        %4759 = vmatprep.subr.mxu0 0.0
        %4760 = vmatpush1.msra.mxu0 0.0
        %4761 = vmatprep.subr.mxu0 0.0
        %4762 = vmatpush1.msra.mxu0 0.0
        %4763 = vmatprep.subr.mxu0 0.0
        %4764 = vmatpush1.msra.mxu0 0.0
        %4765 = vmatprep.subr.mxu0 0.0
        %4766 = vmatpush1.msra.mxu0 0.0
        %4767 = vmatprep.subr.mxu0 0.0
        %4768 = vmatpush1.msra.mxu0 0.0
        %4769 = vmatprep.subr.mxu0 0.0
        %4770 = vmatpush1.msra.mxu0 0.0
        %4771 = vmatprep.subr.mxu0 0.0
        %4772 = vmatpush1.msra.mxu0 0.0
        %4773 = vmatprep.subr.mxu0 0.0
        %4774 = vmatpush1.msra.mxu0 0.0
        %4775 = vmatprep.mubr.f32.mxu0 0.0
        %4776 = vmatmul.mubr.f32.gmra.mrb[0].mxu0 %v1767
        %v4777 = vpop.f32.mrb[0].mxu0
        %v4778 = vadd.f32 0.0, %v4777
        %v4779 = vpop.f32.mrb[0].mxu0
        %4780 = vmatprep.mubr.f32.mxu0 0.0
        %4781 = vmatmul.mubr.f32.gmra.mrb[0].mxu0 %v1770
        %v4782 = vpop.f32.mrb[0].mxu0
        %v4783 = vadd.f32 0.0, %v4782
        %v4784 = vpop.f32.mrb[0].mxu0
        %4785 = vdwg.mxu0
        %v4787 = vsel %vm1932, %v4710, 0
        %4789 = vmatprep.subr.mxu0 0.0
        %4790 = vmatpush1.msra.mxu0 %v4778
        %4791 = vmatprep.subr.mxu0 0.0
        %4792 = vmatpush1.msra.mxu0 %v4783
        %4793 = vmatprep.subr.mxu0 0.0
        %4794 = vmatpush1.msra.mxu0 0.0
        %4795 = vmatprep.subr.mxu0 0.0
        %4796 = vmatpush1.msra.mxu0 0.0
        %4797 = vmatprep.subr.mxu0 0.0
        %4798 = vmatpush1.msra.mxu0 0.0
        %4799 = vmatprep.subr.mxu0 0.0
        %4800 = vmatpush1.msra.mxu0 0.0
        %4801 = vmatprep.subr.mxu0 0.0
        %4802 = vmatpush1.msra.mxu0 0.0
        %4803 = vmatprep.subr.mxu0 0.0
        %4804 = vmatpush1.msra.mxu0 0.0
        %4805 = vmatprep.subr.mxu0 0.0
        %4806 = vmatpush1.msra.mxu0 0.0
        %4807 = vmatprep.subr.mxu0 0.0
        %4808 = vmatpush1.msra.mxu0 0.0
        %4809 = vmatprep.subr.mxu0 0.0
        %4810 = vmatpush1.msra.mxu0 0.0
        %4811 = vmatprep.subr.mxu0 0.0
        %4812 = vmatpush1.msra.mxu0 0.0
        %4813 = vmatprep.subr.mxu0 0.0
        %4814 = vmatpush1.msra.mxu0 0.0
        %4815 = vmatprep.subr.mxu0 0.0
        %4816 = vmatpush1.msra.mxu0 0.0
        %4817 = vmatprep.subr.mxu0 0.0
        %4818 = vmatpush1.msra.mxu0 0.0
        %4819 = vmatprep.subr.mxu0 0.0
        %4820 = vmatpush1.msra.mxu0 0.0
        %4821 = vmatprep.subr.mxu0 0.0
        %4822 = vmatpush1.msra.mxu0 0.0
        %4823 = vmatprep.subr.mxu0 0.0
        %4824 = vmatpush1.msra.mxu0 0.0
        %4825 = vmatprep.subr.mxu0 0.0
        %4826 = vmatpush1.msra.mxu0 0.0
        %4827 = vmatprep.subr.mxu0 0.0
        %4828 = vmatpush1.msra.mxu0 0.0
        %4829 = vmatprep.subr.mxu0 0.0
        %4830 = vmatpush1.msra.mxu0 0.0
        %4831 = vmatprep.subr.mxu0 0.0
        %4832 = vmatpush1.msra.mxu0 0.0
        %4833 = vmatprep.subr.mxu0 0.0
        %4834 = vmatpush1.msra.mxu0 0.0
        %4835 = vmatprep.subr.mxu0 0.0
        %4836 = vmatpush1.msra.mxu0 0.0
        %4837 = vmatprep.subr.mxu0 0.0
        %4838 = vmatpush1.msra.mxu0 0.0
        %4839 = vmatprep.subr.mxu0 0.0
        %4840 = vmatpush1.msra.mxu0 0.0
        %4841 = vmatprep.subr.mxu0 0.0
        %4842 = vmatpush1.msra.mxu0 0.0
        %4843 = vmatprep.subr.mxu0 0.0
        %4844 = vmatpush1.msra.mxu0 0.0
        %4845 = vmatprep.subr.mxu0 0.0
        %4846 = vmatpush1.msra.mxu0 0.0
        %4847 = vmatprep.subr.mxu0 0.0
        %4848 = vmatpush1.msra.mxu0 0.0
        %4849 = vmatprep.subr.mxu0 0.0
        %4850 = vmatpush1.msra.mxu0 0.0
        %4851 = vmatprep.subr.mxu0 0.0
        %4852 = vmatpush1.msra.mxu0 0.0
        %4853 = vmatprep.mubr.f32.mxu0 0.0
        %4854 = vmatmul.mubr.f32.gmra.mrb[0].mxu0 %v4787
        %v4855 = vpop.f32.mrb[0].mxu0
        %v4856 = vadd.f32 0.0, %v4855
        %v4857 = vpop.f32.mrb[0].mxu0
        %4858 = vdwg.mxu0
        %v4859 = vadd.f32 %v4616, %v4856
        %4860 = vrot.lane.b32.xlu0 %v4290, 112
        %v4861 = vpop.permute.xlu0 %4860
        %4862 = vrot.lane.b32.xlu0 %v4364, 112
        %v4863 = vpop.permute.xlu0 %4862
        %4864 = vrot.lane.b32.xlu0 %v4369, 112
        %v4865 = vpop.permute.xlu0 %4864
        %v4866 = vsel %vm725, %v4861, 0
        %v4868 = vsel %vm725, %v4863, 0
        %v4870 = vsel %vm725, %v4865, 0
        %4872 = vmatprep.subr.mxu0 0.0
        %4873 = vmatpush1.xpose.msra.mxu0 %v4868
        %4874 = vmatprep.subr.mxu0 0.0
        %4875 = vmatpush1.xpose.msra.mxu0 %v4870
        %4876 = vmatprep.subr.mxu0 0.0
        %4877 = vmatpush1.xpose.msra.mxu0 0.0
        %4878 = vmatprep.subr.mxu0 0.0
        %4879 = vmatpush1.xpose.msra.mxu0 0.0
        %4880 = vmatprep.subr.mxu0 0.0
        %4881 = vmatpush1.xpose.msra.mxu0 0.0
        %4882 = vmatprep.subr.mxu0 0.0
        %4883 = vmatpush1.xpose.msra.mxu0 0.0
        %4884 = vmatprep.subr.mxu0 0.0
        %4885 = vmatpush1.xpose.msra.mxu0 0.0
        %4886 = vmatprep.subr.mxu0 0.0
        %4887 = vmatpush1.xpose.msra.mxu0 0.0
        %4888 = vmatprep.subr.mxu0 0.0
        %4889 = vmatpush1.xpose.msra.mxu0 0.0
        %4890 = vmatprep.subr.mxu0 0.0
        %4891 = vmatpush1.xpose.msra.mxu0 0.0
        %4892 = vmatprep.subr.mxu0 0.0
        %4893 = vmatpush1.xpose.msra.mxu0 0.0
        %4894 = vmatprep.subr.mxu0 0.0
        %4895 = vmatpush1.xpose.msra.mxu0 0.0
        %4896 = vmatprep.subr.mxu0 0.0
        %4897 = vmatpush1.xpose.msra.mxu0 0.0
        %4898 = vmatprep.subr.mxu0 0.0
        %4899 = vmatpush1.xpose.msra.mxu0 0.0
        %4900 = vmatprep.subr.mxu0 0.0
        %4901 = vmatpush1.xpose.msra.mxu0 0.0
        %4902 = vmatprep.subr.mxu0 0.0
        %4903 = vmatpush1.xpose.msra.mxu0 0.0
        %4904 = vmatprep.subr.mxu0 0.0
        %4905 = vmatpush1.xpose.msra.mxu0 0.0
        %4906 = vmatprep.subr.mxu0 0.0
        %4907 = vmatpush1.xpose.msra.mxu0 0.0
        %4908 = vmatprep.subr.mxu0 0.0
        %4909 = vmatpush1.xpose.msra.mxu0 0.0
        %4910 = vmatprep.subr.mxu0 0.0
        %4911 = vmatpush1.xpose.msra.mxu0 0.0
        %4912 = vmatprep.subr.mxu0 0.0
        %4913 = vmatpush1.xpose.msra.mxu0 0.0
        %4914 = vmatprep.subr.mxu0 0.0
        %4915 = vmatpush1.xpose.msra.mxu0 0.0
        %4916 = vmatprep.subr.mxu0 0.0
        %4917 = vmatpush1.xpose.msra.mxu0 0.0
        %4918 = vmatprep.subr.mxu0 0.0
        %4919 = vmatpush1.xpose.msra.mxu0 0.0
        %4920 = vmatprep.subr.mxu0 0.0
        %4921 = vmatpush1.xpose.msra.mxu0 0.0
        %4922 = vmatprep.subr.mxu0 0.0
        %4923 = vmatpush1.xpose.msra.mxu0 0.0
        %4924 = vmatprep.subr.mxu0 0.0
        %4925 = vmatpush1.xpose.msra.mxu0 0.0
        %4926 = vmatprep.subr.mxu0 0.0
        %4927 = vmatpush1.xpose.msra.mxu0 0.0
        %4928 = vmatprep.subr.mxu0 0.0
        %4929 = vmatpush1.xpose.msra.mxu0 0.0
        %4930 = vmatprep.subr.mxu0 0.0
        %4931 = vmatpush1.xpose.msra.mxu0 0.0
        %4932 = vmatprep.subr.mxu0 0.0
        %4933 = vmatpush1.xpose.msra.mxu0 0.0
        %4934 = vmatprep.subr.mxu0 0.0
        %4935 = vmatpush1.xpose.msra.mxu0 0.0
        %4936 = vmatprep.mubr.f32.mxu0 0.0
        %4937 = vmatmul.mubr.f32.gmra.mrb[0].mxu0 %v4866
        %v4938 = vpop.f32.mrb[0].mxu0
        %v4939 = vadd.f32 0.0, %v4938
        %v4940 = vpop.f32.mrb[0].mxu0
        %4941 = vdwg.mxu0
        %v4942 = vmul.f32 %v4939, 0.35355338
        %v4943 = vsel %vm1932, %v4942, -inf
        %4944 = vmax.xlane.f32.xlu0 %v4943
        %v4945 = vpop.xlane.xlu0 %4944
        %v4946 = vsub.f32 %v4942, %v4945
        %v4947 = vmul.f32 %v4946, 1.442695
        %v4948 = vpow.pop %v4947
        %v4949 = vsel %vm1932, %v4948, 0.0
        %4950 = vadd.xlane.f32.xlu0 %v4949
        %v4951 = vpop.xlane.xlu0 %4950
        %v4952 = vrcp.pop %v4951
        %v4953 = vmul.f32 %v4948, %v4952
        %4954 = vmatprep.subr.mxu0 0.0
        %4955 = vmatpush1.msra.mxu0 %v3088
        %4956 = vmatprep.subr.mxu0 0.0
        %4957 = vmatpush1.msra.mxu0 %v3089
        %4958 = vmatprep.subr.mxu0 0.0
        %4959 = vmatpush1.msra.mxu0 %v3090
        %4960 = vmatprep.subr.mxu0 0.0
        %4961 = vmatpush1.msra.mxu0 %v3091
        %4962 = vmatprep.subr.mxu0 0.0
        %4963 = vmatpush1.msra.mxu0 0.0
        %4964 = vmatprep.subr.mxu0 0.0
        %4965 = vmatpush1.msra.mxu0 0.0
        %4966 = vmatprep.subr.mxu0 0.0
        %4967 = vmatpush1.msra.mxu0 0.0
        %4968 = vmatprep.subr.mxu0 0.0
        %4969 = vmatpush1.msra.mxu0 0.0
        %4970 = vmatprep.subr.mxu0 0.0
        %4971 = vmatpush1.msra.mxu0 0.0
        %4972 = vmatprep.subr.mxu0 0.0
        %4973 = vmatpush1.msra.mxu0 0.0
        %4974 = vmatprep.subr.mxu0 0.0
        %4975 = vmatpush1.msra.mxu0 0.0
        %4976 = vmatprep.subr.mxu0 0.0
        %4977 = vmatpush1.msra.mxu0 0.0
        %4978 = vmatprep.subr.mxu0 0.0
        %4979 = vmatpush1.msra.mxu0 0.0
        %4980 = vmatprep.subr.mxu0 0.0
        %4981 = vmatpush1.msra.mxu0 0.0
        %4982 = vmatprep.subr.mxu0 0.0
        %4983 = vmatpush1.msra.mxu0 0.0
        %4984 = vmatprep.subr.mxu0 0.0
        %4985 = vmatpush1.msra.mxu0 0.0
        %4986 = vmatprep.subr.mxu0 0.0
        %4987 = vmatpush1.msra.mxu0 0.0
        %4988 = vmatprep.subr.mxu0 0.0
        %4989 = vmatpush1.msra.mxu0 0.0
        %4990 = vmatprep.subr.mxu0 0.0
        %4991 = vmatpush1.msra.mxu0 0.0
        %4992 = vmatprep.subr.mxu0 0.0
        %4993 = vmatpush1.msra.mxu0 0.0
        %4994 = vmatprep.subr.mxu0 0.0
        %4995 = vmatpush1.msra.mxu0 0.0
        %4996 = vmatprep.subr.mxu0 0.0
        %4997 = vmatpush1.msra.mxu0 0.0
        %4998 = vmatprep.subr.mxu0 0.0
        %4999 = vmatpush1.msra.mxu0 0.0
        %5000 = vmatprep.subr.mxu0 0.0
        %5001 = vmatpush1.msra.mxu0 0.0
        %5002 = vmatprep.subr.mxu0 0.0
        %5003 = vmatpush1.msra.mxu0 0.0
        %5004 = vmatprep.subr.mxu0 0.0
        %5005 = vmatpush1.msra.mxu0 0.0
        %5006 = vmatprep.subr.mxu0 0.0
        %5007 = vmatpush1.msra.mxu0 0.0
        %5008 = vmatprep.subr.mxu0 0.0
        %5009 = vmatpush1.msra.mxu0 0.0
        %5010 = vmatprep.subr.mxu0 0.0
        %5011 = vmatpush1.msra.mxu0 0.0
        %5012 = vmatprep.subr.mxu0 0.0
        %5013 = vmatpush1.msra.mxu0 0.0
        %5014 = vmatprep.subr.mxu0 0.0
        %5015 = vmatpush1.msra.mxu0 0.0
        %5016 = vmatprep.subr.mxu0 0.0
        %5017 = vmatpush1.msra.mxu0 0.0
        %5018 = vmatprep.mubr.f32.mxu0 0.0
        %5019 = vmatmul.mubr.f32.gmra.mrb[0].mxu0 %v1767
        %v5020 = vpop.f32.mrb[0].mxu0
        %v5021 = vadd.f32 0.0, %v5020
        %v5022 = vpop.f32.mrb[0].mxu0
        %5023 = vmatprep.mubr.f32.mxu0 0.0
        %5024 = vmatmul.mubr.f32.gmra.mrb[0].mxu0 %v1770
        %v5025 = vpop.f32.mrb[0].mxu0
        %v5026 = vadd.f32 0.0, %v5025
        %v5027 = vpop.f32.mrb[0].mxu0
        %5028 = vdwg.mxu0
        %v5030 = vsel %vm1932, %v4953, 0
        %5032 = vmatprep.subr.mxu0 0.0
        %5033 = vmatpush1.msra.mxu0 %v5021
        %5034 = vmatprep.subr.mxu0 0.0
        %5035 = vmatpush1.msra.mxu0 %v5026
        %5036 = vmatprep.subr.mxu0 0.0
        %5037 = vmatpush1.msra.mxu0 0.0
        %5038 = vmatprep.subr.mxu0 0.0
        %5039 = vmatpush1.msra.mxu0 0.0
        %5040 = vmatprep.subr.mxu0 0.0
        %5041 = vmatpush1.msra.mxu0 0.0
        %5042 = vmatprep.subr.mxu0 0.0
        %5043 = vmatpush1.msra.mxu0 0.0
        %5044 = vmatprep.subr.mxu0 0.0
        %5045 = vmatpush1.msra.mxu0 0.0
        %5046 = vmatprep.subr.mxu0 0.0
        %5047 = vmatpush1.msra.mxu0 0.0
        %5048 = vmatprep.subr.mxu0 0.0
        %5049 = vmatpush1.msra.mxu0 0.0
        %5050 = vmatprep.subr.mxu0 0.0
        %5051 = vmatpush1.msra.mxu0 0.0
        %5052 = vmatprep.subr.mxu0 0.0
        %5053 = vmatpush1.msra.mxu0 0.0
        %5054 = vmatprep.subr.mxu0 0.0
        %5055 = vmatpush1.msra.mxu0 0.0
        %5056 = vmatprep.subr.mxu0 0.0
        %5057 = vmatpush1.msra.mxu0 0.0
        %5058 = vmatprep.subr.mxu0 0.0
        %5059 = vmatpush1.msra.mxu0 0.0
        %5060 = vmatprep.subr.mxu0 0.0
        %5061 = vmatpush1.msra.mxu0 0.0
        %5062 = vmatprep.subr.mxu0 0.0
        %5063 = vmatpush1.msra.mxu0 0.0
        %5064 = vmatprep.subr.mxu0 0.0
        %5065 = vmatpush1.msra.mxu0 0.0
        %5066 = vmatprep.subr.mxu0 0.0
        %5067 = vmatpush1.msra.mxu0 0.0
        %5068 = vmatprep.subr.mxu0 0.0
        %5069 = vmatpush1.msra.mxu0 0.0
        %5070 = vmatprep.subr.mxu0 0.0
        %5071 = vmatpush1.msra.mxu0 0.0
        %5072 = vmatprep.subr.mxu0 0.0
        %5073 = vmatpush1.msra.mxu0 0.0
        %5074 = vmatprep.subr.mxu0 0.0
        %5075 = vmatpush1.msra.mxu0 0.0
        %5076 = vmatprep.subr.mxu0 0.0
        %5077 = vmatpush1.msra.mxu0 0.0
        %5078 = vmatprep.subr.mxu0 0.0
        %5079 = vmatpush1.msra.mxu0 0.0
        %5080 = vmatprep.subr.mxu0 0.0
        %5081 = vmatpush1.msra.mxu0 0.0
        %5082 = vmatprep.subr.mxu0 0.0
        %5083 = vmatpush1.msra.mxu0 0.0
        %5084 = vmatprep.subr.mxu0 0.0
        %5085 = vmatpush1.msra.mxu0 0.0
        %5086 = vmatprep.subr.mxu0 0.0
        %5087 = vmatpush1.msra.mxu0 0.0
        %5088 = vmatprep.subr.mxu0 0.0
        %5089 = vmatpush1.msra.mxu0 0.0
        %5090 = vmatprep.subr.mxu0 0.0
        %5091 = vmatpush1.msra.mxu0 0.0
        %5092 = vmatprep.subr.mxu0 0.0
        %5093 = vmatpush1.msra.mxu0 0.0
        %5094 = vmatprep.subr.mxu0 0.0
        %5095 = vmatpush1.msra.mxu0 0.0
        %5096 = vmatprep.mubr.f32.mxu0 0.0
        %5097 = vmatmul.mubr.f32.gmra.mrb[0].mxu0 %v5030
        %v5098 = vpop.f32.mrb[0].mxu0
        %v5099 = vadd.f32 0.0, %v5098
        %v5100 = vpop.f32.mrb[0].mxu0
        %5101 = vdwg.mxu0
        %v5102 = vadd.f32 %v4859, %v5099
        %5103 = vrot.lane.b32.xlu0 %v4290, 104
        %v5104 = vpop.permute.xlu0 %5103
        %5105 = vrot.lane.b32.xlu0 %v4364, 104
        %v5106 = vpop.permute.xlu0 %5105
        %5107 = vrot.lane.b32.xlu0 %v4369, 104
        %v5108 = vpop.permute.xlu0 %5107
        %v5109 = vsel %vm725, %v5104, 0
        %v5111 = vsel %vm725, %v5106, 0
        %v5113 = vsel %vm725, %v5108, 0
        %5115 = vmatprep.subr.mxu0 0.0
        %5116 = vmatpush1.xpose.msra.mxu0 %v5111
        %5117 = vmatprep.subr.mxu0 0.0
        %5118 = vmatpush1.xpose.msra.mxu0 %v5113
        %5119 = vmatprep.subr.mxu0 0.0
        %5120 = vmatpush1.xpose.msra.mxu0 0.0
        %5121 = vmatprep.subr.mxu0 0.0
        %5122 = vmatpush1.xpose.msra.mxu0 0.0
        %5123 = vmatprep.subr.mxu0 0.0
        %5124 = vmatpush1.xpose.msra.mxu0 0.0
        %5125 = vmatprep.subr.mxu0 0.0
        %5126 = vmatpush1.xpose.msra.mxu0 0.0
        %5127 = vmatprep.subr.mxu0 0.0
        %5128 = vmatpush1.xpose.msra.mxu0 0.0
        %5129 = vmatprep.subr.mxu0 0.0
        %5130 = vmatpush1.xpose.msra.mxu0 0.0
        %5131 = vmatprep.subr.mxu0 0.0
        %5132 = vmatpush1.xpose.msra.mxu0 0.0
        %5133 = vmatprep.subr.mxu0 0.0
        %5134 = vmatpush1.xpose.msra.mxu0 0.0
        %5135 = vmatprep.subr.mxu0 0.0
        %5136 = vmatpush1.xpose.msra.mxu0 0.0
        %5137 = vmatprep.subr.mxu0 0.0
        %5138 = vmatpush1.xpose.msra.mxu0 0.0
        %5139 = vmatprep.subr.mxu0 0.0
        %5140 = vmatpush1.xpose.msra.mxu0 0.0
        %5141 = vmatprep.subr.mxu0 0.0
        %5142 = vmatpush1.xpose.msra.mxu0 0.0
        %5143 = vmatprep.subr.mxu0 0.0
        %5144 = vmatpush1.xpose.msra.mxu0 0.0
        %5145 = vmatprep.subr.mxu0 0.0
        %5146 = vmatpush1.xpose.msra.mxu0 0.0
        %5147 = vmatprep.subr.mxu0 0.0
        %5148 = vmatpush1.xpose.msra.mxu0 0.0
        %5149 = vmatprep.subr.mxu0 0.0
        %5150 = vmatpush1.xpose.msra.mxu0 0.0
        %5151 = vmatprep.subr.mxu0 0.0
        %5152 = vmatpush1.xpose.msra.mxu0 0.0
        %5153 = vmatprep.subr.mxu0 0.0
        %5154 = vmatpush1.xpose.msra.mxu0 0.0
        %5155 = vmatprep.subr.mxu0 0.0
        %5156 = vmatpush1.xpose.msra.mxu0 0.0
        %5157 = vmatprep.subr.mxu0 0.0
        %5158 = vmatpush1.xpose.msra.mxu0 0.0
        %5159 = vmatprep.subr.mxu0 0.0
        %5160 = vmatpush1.xpose.msra.mxu0 0.0
        %5161 = vmatprep.subr.mxu0 0.0
        %5162 = vmatpush1.xpose.msra.mxu0 0.0
        %5163 = vmatprep.subr.mxu0 0.0
        %5164 = vmatpush1.xpose.msra.mxu0 0.0
        %5165 = vmatprep.subr.mxu0 0.0
        %5166 = vmatpush1.xpose.msra.mxu0 0.0
        %5167 = vmatprep.subr.mxu0 0.0
        %5168 = vmatpush1.xpose.msra.mxu0 0.0
        %5169 = vmatprep.subr.mxu0 0.0
        %5170 = vmatpush1.xpose.msra.mxu0 0.0
        %5171 = vmatprep.subr.mxu0 0.0
        %5172 = vmatpush1.xpose.msra.mxu0 0.0
        %5173 = vmatprep.subr.mxu0 0.0
        %5174 = vmatpush1.xpose.msra.mxu0 0.0
        %5175 = vmatprep.subr.mxu0 0.0
        %5176 = vmatpush1.xpose.msra.mxu0 0.0
        %5177 = vmatprep.subr.mxu0 0.0
        %5178 = vmatpush1.xpose.msra.mxu0 0.0
        %5179 = vmatprep.mubr.f32.mxu0 0.0
        %5180 = vmatmul.mubr.f32.gmra.mrb[0].mxu0 %v5109
        %v5181 = vpop.f32.mrb[0].mxu0
        %v5182 = vadd.f32 0.0, %v5181
        %v5183 = vpop.f32.mrb[0].mxu0
        %5184 = vdwg.mxu0
        %v5185 = vmul.f32 %v5182, 0.35355338
        %v5186 = vsel %vm1932, %v5185, -inf
        %5187 = vmax.xlane.f32.xlu0 %v5186
        %v5188 = vpop.xlane.xlu0 %5187
        %v5189 = vsub.f32 %v5185, %v5188
        %v5190 = vmul.f32 %v5189, 1.442695
        %v5191 = vpow.pop %v5190
        %v5192 = vsel %vm1932, %v5191, 0.0
        %5193 = vadd.xlane.f32.xlu0 %v5192
        %v5194 = vpop.xlane.xlu0 %5193
        %v5195 = vrcp.pop %v5194
        %v5196 = vmul.f32 %v5191, %v5195
        %5197 = vmatprep.subr.mxu0 0.0
        %5198 = vmatpush1.msra.mxu0 %v3092
        %5199 = vmatprep.subr.mxu0 0.0
        %5200 = vmatpush1.msra.mxu0 %v3093
        %5201 = vmatprep.subr.mxu0 0.0
        %5202 = vmatpush1.msra.mxu0 %v3094
        %5203 = vmatprep.subr.mxu0 0.0
        %5204 = vmatpush1.msra.mxu0 %v3095
        %5205 = vmatprep.subr.mxu0 0.0
        %5206 = vmatpush1.msra.mxu0 0.0
        %5207 = vmatprep.subr.mxu0 0.0
        %5208 = vmatpush1.msra.mxu0 0.0
        %5209 = vmatprep.subr.mxu0 0.0
        %5210 = vmatpush1.msra.mxu0 0.0
        %5211 = vmatprep.subr.mxu0 0.0
        %5212 = vmatpush1.msra.mxu0 0.0
        %5213 = vmatprep.subr.mxu0 0.0
        %5214 = vmatpush1.msra.mxu0 0.0
        %5215 = vmatprep.subr.mxu0 0.0
        %5216 = vmatpush1.msra.mxu0 0.0
        %5217 = vmatprep.subr.mxu0 0.0
        %5218 = vmatpush1.msra.mxu0 0.0
        %5219 = vmatprep.subr.mxu0 0.0
        %5220 = vmatpush1.msra.mxu0 0.0
        %5221 = vmatprep.subr.mxu0 0.0
        %5222 = vmatpush1.msra.mxu0 0.0
        %5223 = vmatprep.subr.mxu0 0.0
        %5224 = vmatpush1.msra.mxu0 0.0
        %5225 = vmatprep.subr.mxu0 0.0
        %5226 = vmatpush1.msra.mxu0 0.0
        %5227 = vmatprep.subr.mxu0 0.0
        %5228 = vmatpush1.msra.mxu0 0.0
        %5229 = vmatprep.subr.mxu0 0.0
        %5230 = vmatpush1.msra.mxu0 0.0
        %5231 = vmatprep.subr.mxu0 0.0
        %5232 = vmatpush1.msra.mxu0 0.0
        %5233 = vmatprep.subr.mxu0 0.0
        %5234 = vmatpush1.msra.mxu0 0.0
        %5235 = vmatprep.subr.mxu0 0.0
        %5236 = vmatpush1.msra.mxu0 0.0
        %5237 = vmatprep.subr.mxu0 0.0
        %5238 = vmatpush1.msra.mxu0 0.0
        %5239 = vmatprep.subr.mxu0 0.0
        %5240 = vmatpush1.msra.mxu0 0.0
        %5241 = vmatprep.subr.mxu0 0.0
        %5242 = vmatpush1.msra.mxu0 0.0
        %5243 = vmatprep.subr.mxu0 0.0
        %5244 = vmatpush1.msra.mxu0 0.0
        %5245 = vmatprep.subr.mxu0 0.0
        %5246 = vmatpush1.msra.mxu0 0.0
        %5247 = vmatprep.subr.mxu0 0.0
        %5248 = vmatpush1.msra.mxu0 0.0
        %5249 = vmatprep.subr.mxu0 0.0
        %5250 = vmatpush1.msra.mxu0 0.0
        %5251 = vmatprep.subr.mxu0 0.0
        %5252 = vmatpush1.msra.mxu0 0.0
        %5253 = vmatprep.subr.mxu0 0.0
        %5254 = vmatpush1.msra.mxu0 0.0
        %5255 = vmatprep.subr.mxu0 0.0
        %5256 = vmatpush1.msra.mxu0 0.0
        %5257 = vmatprep.subr.mxu0 0.0
        %5258 = vmatpush1.msra.mxu0 0.0
        %5259 = vmatprep.subr.mxu0 0.0
        %5260 = vmatpush1.msra.mxu0 0.0
        %5261 = vmatprep.mubr.f32.mxu0 0.0
        %5262 = vmatmul.mubr.f32.gmra.mrb[0].mxu0 %v1767
        %v5263 = vpop.f32.mrb[0].mxu0
        %v5264 = vadd.f32 0.0, %v5263
        %v5265 = vpop.f32.mrb[0].mxu0
        %5266 = vmatprep.mubr.f32.mxu0 0.0
        %5267 = vmatmul.mubr.f32.gmra.mrb[0].mxu0 %v1770
        %v5268 = vpop.f32.mrb[0].mxu0
        %v5269 = vadd.f32 0.0, %v5268
        %v5270 = vpop.f32.mrb[0].mxu0
        %5271 = vdwg.mxu0
        %v5273 = vsel %vm1932, %v5196, 0
        %5275 = vmatprep.subr.mxu0 0.0
        %5276 = vmatpush1.msra.mxu0 %v5264
        %5277 = vmatprep.subr.mxu0 0.0
        %5278 = vmatpush1.msra.mxu0 %v5269
        %5279 = vmatprep.subr.mxu0 0.0
        %5280 = vmatpush1.msra.mxu0 0.0
        %5281 = vmatprep.subr.mxu0 0.0
        %5282 = vmatpush1.msra.mxu0 0.0
        %5283 = vmatprep.subr.mxu0 0.0
        %5284 = vmatpush1.msra.mxu0 0.0
        %5285 = vmatprep.subr.mxu0 0.0
        %5286 = vmatpush1.msra.mxu0 0.0
        %5287 = vmatprep.subr.mxu0 0.0
        %5288 = vmatpush1.msra.mxu0 0.0
        %5289 = vmatprep.subr.mxu0 0.0
        %5290 = vmatpush1.msra.mxu0 0.0
        %5291 = vmatprep.subr.mxu0 0.0
        %5292 = vmatpush1.msra.mxu0 0.0
        %5293 = vmatprep.subr.mxu0 0.0
        %5294 = vmatpush1.msra.mxu0 0.0
        %5295 = vmatprep.subr.mxu0 0.0
        %5296 = vmatpush1.msra.mxu0 0.0
        %5297 = vmatprep.subr.mxu0 0.0
        %5298 = vmatpush1.msra.mxu0 0.0
        %5299 = vmatprep.subr.mxu0 0.0
        %5300 = vmatpush1.msra.mxu0 0.0
        %5301 = vmatprep.subr.mxu0 0.0
        %5302 = vmatpush1.msra.mxu0 0.0
        %5303 = vmatprep.subr.mxu0 0.0
        %5304 = vmatpush1.msra.mxu0 0.0
        %5305 = vmatprep.subr.mxu0 0.0
        %5306 = vmatpush1.msra.mxu0 0.0
        %5307 = vmatprep.subr.mxu0 0.0
        %5308 = vmatpush1.msra.mxu0 0.0
        %5309 = vmatprep.subr.mxu0 0.0
        %5310 = vmatpush1.msra.mxu0 0.0
        %5311 = vmatprep.subr.mxu0 0.0
        %5312 = vmatpush1.msra.mxu0 0.0
        %5313 = vmatprep.subr.mxu0 0.0
        %5314 = vmatpush1.msra.mxu0 0.0
        %5315 = vmatprep.subr.mxu0 0.0
        %5316 = vmatpush1.msra.mxu0 0.0
        %5317 = vmatprep.subr.mxu0 0.0
        %5318 = vmatpush1.msra.mxu0 0.0
        %5319 = vmatprep.subr.mxu0 0.0
        %5320 = vmatpush1.msra.mxu0 0.0
        %5321 = vmatprep.subr.mxu0 0.0
        %5322 = vmatpush1.msra.mxu0 0.0
        %5323 = vmatprep.subr.mxu0 0.0
        %5324 = vmatpush1.msra.mxu0 0.0
        %5325 = vmatprep.subr.mxu0 0.0
        %5326 = vmatpush1.msra.mxu0 0.0
        %5327 = vmatprep.subr.mxu0 0.0
        %5328 = vmatpush1.msra.mxu0 0.0
        %5329 = vmatprep.subr.mxu0 0.0
        %5330 = vmatpush1.msra.mxu0 0.0
        %5331 = vmatprep.subr.mxu0 0.0
        %5332 = vmatpush1.msra.mxu0 0.0
        %5333 = vmatprep.subr.mxu0 0.0
        %5334 = vmatpush1.msra.mxu0 0.0
        %5335 = vmatprep.subr.mxu0 0.0
        %5336 = vmatpush1.msra.mxu0 0.0
        %5337 = vmatprep.subr.mxu0 0.0
        %5338 = vmatpush1.msra.mxu0 0.0
        %5339 = vmatprep.mubr.f32.mxu0 0.0
        %5340 = vmatmul.mubr.f32.gmra.mrb[0].mxu0 %v5273
        %v5341 = vpop.f32.mrb[0].mxu0
        %v5342 = vadd.f32 0.0, %v5341
        %v5343 = vpop.f32.mrb[0].mxu0
        %5344 = vdwg.mxu0
        %v5345 = vadd.f32 %v5102, %v5342
        %v5346 = vadd.f32 %v4215, %v5345
        %v5347 = vsel %vm572, %v5346, 0.0
        %5348 = vadd.xlane.f32.xlu0 %v5347
        %v5349 = vpop.xlane.xlu0 %5348
        %v5350 = vmul.f32 %v5349, %v1664
        %v5351 = vsub.f32 %v5346, %v5350
        %v5352 = vmul.f32 %v5351, %v5351
        %v5353 = vsel %vm572, %v5352, 0.0
        %5354 = vadd.xlane.f32.xlu0 %v5353
        %v5355 = vpop.xlane.xlu0 %5354
        %v5356 = vmul.f32 %v5355, %v1664
        %v5357 = vadd.f32 %v5356, 1e-05
        %v5358 = vrsqrt.pop %v5357
        %v5359 = vmul.f32 %v5351, %v5358
        %v5360 = vlaneseq
        %v5361 = vshrl.u32 %v5360, 7
        %v5362 = vsub.s32 1, %v5361
        %v5363 = vrot.slane %v3099, %v5362
        %v5364 = vmul.f32 %v5359, %v5363
        %v5365 = vlaneseq
        %v5366 = vshrl.u32 %v5365, 7
        %v5367 = vsub.s32 1, %v5366
        %v5368 = vrot.slane %v3101, %v5367
        %v5369 = vadd.f32 %v5364, %v5368
        %s5370 = scalar_lea.vmem %s6, 32
        %v5371 = vld [vmem:[%s5370] sm:$0xff]
        %v5372 = vld [vmem:[%s5370 + $0x8] sm:$0xff]
        %v5373 = vld [vmem:[%s5370 + $0x10] sm:$0xff]
        %v5374 = vld [vmem:[%s5370 + $0x18] sm:$0xff]
        %s5375 = scalar_lea.vmem %s7, 1
        %v5376 = vld [vmem:[%s5375] sm:$0x1]
        %v5378 = vlaneseq
        %v5379 = vshrl.u32 %v5378, 7
        %v5380 = vsub.s32 0, %v5379
        %v5381 = vrot.slane %v5376, %v5380
        %v5384 = vsel %vm572, %v5369, 0
        %5386 = vmatprep.subr.mxu0 0.0
        %5387 = vmatpush1.msra.mxu0 %v5371
        %5388 = vmatprep.subr.mxu0 0.0
        %5389 = vmatpush1.msra.mxu0 %v5372
        %5390 = vmatprep.subr.mxu0 0.0
        %5391 = vmatpush1.msra.mxu0 %v5373
        %5392 = vmatprep.subr.mxu0 0.0
        %5393 = vmatpush1.msra.mxu0 %v5374
        %5394 = vmatprep.subr.mxu0 0.0
        %5395 = vmatpush1.msra.mxu0 0.0
        %5396 = vmatprep.subr.mxu0 0.0
        %5397 = vmatpush1.msra.mxu0 0.0
        %5398 = vmatprep.subr.mxu0 0.0
        %5399 = vmatpush1.msra.mxu0 0.0
        %5400 = vmatprep.subr.mxu0 0.0
        %5401 = vmatpush1.msra.mxu0 0.0
        %5402 = vmatprep.subr.mxu0 0.0
        %5403 = vmatpush1.msra.mxu0 0.0
        %5404 = vmatprep.subr.mxu0 0.0
        %5405 = vmatpush1.msra.mxu0 0.0
        %5406 = vmatprep.subr.mxu0 0.0
        %5407 = vmatpush1.msra.mxu0 0.0
        %5408 = vmatprep.subr.mxu0 0.0
        %5409 = vmatpush1.msra.mxu0 0.0
        %5410 = vmatprep.subr.mxu0 0.0
        %5411 = vmatpush1.msra.mxu0 0.0
        %5412 = vmatprep.subr.mxu0 0.0
        %5413 = vmatpush1.msra.mxu0 0.0
        %5414 = vmatprep.subr.mxu0 0.0
        %5415 = vmatpush1.msra.mxu0 0.0
        %5416 = vmatprep.subr.mxu0 0.0
        %5417 = vmatpush1.msra.mxu0 0.0
        %5418 = vmatprep.subr.mxu0 0.0
        %5419 = vmatpush1.msra.mxu0 0.0
        %5420 = vmatprep.subr.mxu0 0.0
        %5421 = vmatpush1.msra.mxu0 0.0
        %5422 = vmatprep.subr.mxu0 0.0
        %5423 = vmatpush1.msra.mxu0 0.0
        %5424 = vmatprep.subr.mxu0 0.0
        %5425 = vmatpush1.msra.mxu0 0.0
        %5426 = vmatprep.subr.mxu0 0.0
        %5427 = vmatpush1.msra.mxu0 0.0
        %5428 = vmatprep.subr.mxu0 0.0
        %5429 = vmatpush1.msra.mxu0 0.0
        %5430 = vmatprep.subr.mxu0 0.0
        %5431 = vmatpush1.msra.mxu0 0.0
        %5432 = vmatprep.subr.mxu0 0.0
        %5433 = vmatpush1.msra.mxu0 0.0
        %5434 = vmatprep.subr.mxu0 0.0
        %5435 = vmatpush1.msra.mxu0 0.0
        %5436 = vmatprep.subr.mxu0 0.0
        %5437 = vmatpush1.msra.mxu0 0.0
        %5438 = vmatprep.subr.mxu0 0.0
        %5439 = vmatpush1.msra.mxu0 0.0
        %5440 = vmatprep.subr.mxu0 0.0
        %5441 = vmatpush1.msra.mxu0 0.0
        %5442 = vmatprep.subr.mxu0 0.0
        %5443 = vmatpush1.msra.mxu0 0.0
        %5444 = vmatprep.subr.mxu0 0.0
        %5445 = vmatpush1.msra.mxu0 0.0
        %5446 = vmatprep.subr.mxu0 0.0
        %5447 = vmatpush1.msra.mxu0 0.0
        %5448 = vmatprep.subr.mxu0 0.0
        %5449 = vmatpush1.msra.mxu0 0.0
        %5450 = vmatprep.mubr.f32.mxu0 0.0
        %5451 = vmatmul.mubr.f32.gmra.mrb[0].mxu0 %v5384
        %v5452 = vpop.f32.mrb[0].mxu0
        %v5453 = vadd.f32 %v5381, %v5452
        %v5454 = vpop.f32.mrb[0].mxu0
        %5455 = vdwg.mxu0
        %v5456 = vmax.f32 %v5453, 0.0
        %s5457 = scalar_lea.vmem %s8, 64
        %v5458 = vld [vmem:[%s5457] sm:$0xff]
        %v5459 = vld [vmem:[%s5457 + $0x8] sm:$0xff]
        %v5460 = vld [vmem:[%s5457 + $0x10] sm:$0xff]
        %v5461 = vld [vmem:[%s5457 + $0x18] sm:$0xff]
        %v5462 = vld [vmem:[%s5457 + $0x20] sm:$0xff]
        %v5463 = vld [vmem:[%s5457 + $0x28] sm:$0xff]
        %v5464 = vld [vmem:[%s5457 + $0x30] sm:$0xff]
        %v5465 = vld [vmem:[%s5457 + $0x38] sm:$0xff]
        %s5466 = scalar_lea.vmem %s9, 1
        %v5467 = vld [vmem:[%s5466] sm:$0x1]
        %v5469 = vlaneseq
        %v5470 = vshrl.u32 %v5469, 7
        %v5471 = vsub.s32 0, %v5470
        %v5472 = vrot.slane %v5467, %v5471
        %v5475 = vsel %vm2946, %v5456, 0
        %5477 = vmatprep.subr.mxu0 0.0
        %5478 = vmatpush1.msra.mxu0 %v5458
        %5479 = vmatprep.subr.mxu0 0.0
        %5480 = vmatpush1.msra.mxu0 %v5459
        %5481 = vmatprep.subr.mxu0 0.0
        %5482 = vmatpush1.msra.mxu0 %v5460
        %5483 = vmatprep.subr.mxu0 0.0
        %5484 = vmatpush1.msra.mxu0 %v5461
        %5485 = vmatprep.subr.mxu0 0.0
        %5486 = vmatpush1.msra.mxu0 %v5462
        %5487 = vmatprep.subr.mxu0 0.0
        %5488 = vmatpush1.msra.mxu0 %v5463
        %5489 = vmatprep.subr.mxu0 0.0
        %5490 = vmatpush1.msra.mxu0 %v5464
        %5491 = vmatprep.subr.mxu0 0.0
        %5492 = vmatpush1.msra.mxu0 %v5465
        %5493 = vmatprep.subr.mxu0 0.0
        %5494 = vmatpush1.msra.mxu0 0.0
        %5495 = vmatprep.subr.mxu0 0.0
        %5496 = vmatpush1.msra.mxu0 0.0
        %5497 = vmatprep.subr.mxu0 0.0
        %5498 = vmatpush1.msra.mxu0 0.0
        %5499 = vmatprep.subr.mxu0 0.0
        %5500 = vmatpush1.msra.mxu0 0.0
        %5501 = vmatprep.subr.mxu0 0.0
        %5502 = vmatpush1.msra.mxu0 0.0
        %5503 = vmatprep.subr.mxu0 0.0
        %5504 = vmatpush1.msra.mxu0 0.0
        %5505 = vmatprep.subr.mxu0 0.0
        %5506 = vmatpush1.msra.mxu0 0.0
        %5507 = vmatprep.subr.mxu0 0.0
        %5508 = vmatpush1.msra.mxu0 0.0
        %5509 = vmatprep.subr.mxu0 0.0
        %5510 = vmatpush1.msra.mxu0 0.0
        %5511 = vmatprep.subr.mxu0 0.0
        %5512 = vmatpush1.msra.mxu0 0.0
        %5513 = vmatprep.subr.mxu0 0.0
        %5514 = vmatpush1.msra.mxu0 0.0
        %5515 = vmatprep.subr.mxu0 0.0
        %5516 = vmatpush1.msra.mxu0 0.0
        %5517 = vmatprep.subr.mxu0 0.0
        %5518 = vmatpush1.msra.mxu0 0.0
        %5519 = vmatprep.subr.mxu0 0.0
        %5520 = vmatpush1.msra.mxu0 0.0
        %5521 = vmatprep.subr.mxu0 0.0
        %5522 = vmatpush1.msra.mxu0 0.0
        %5523 = vmatprep.subr.mxu0 0.0
        %5524 = vmatpush1.msra.mxu0 0.0
        %5525 = vmatprep.subr.mxu0 0.0
        %5526 = vmatpush1.msra.mxu0 0.0
        %5527 = vmatprep.subr.mxu0 0.0
        %5528 = vmatpush1.msra.mxu0 0.0
        %5529 = vmatprep.subr.mxu0 0.0
        %5530 = vmatpush1.msra.mxu0 0.0
        %5531 = vmatprep.subr.mxu0 0.0
        %5532 = vmatpush1.msra.mxu0 0.0
        %5533 = vmatprep.subr.mxu0 0.0
        %5534 = vmatpush1.msra.mxu0 0.0
        %5535 = vmatprep.subr.mxu0 0.0
        %5536 = vmatpush1.msra.mxu0 0.0
        %5537 = vmatprep.subr.mxu0 0.0
        %5538 = vmatpush1.msra.mxu0 0.0
        %5539 = vmatprep.subr.mxu0 0.0
        %5540 = vmatpush1.msra.mxu0 0.0
        %5541 = vmatprep.mubr.f32.mxu0 0.0
        %5542 = vmatmul.mubr.f32.gmra.mrb[0].mxu0 %v5475
        %v5543 = vpop.f32.mrb[0].mxu0
        %v5544 = vadd.f32 %v5472, %v5543
        %v5545 = vpop.f32.mrb[0].mxu0
        %5546 = vdwg.mxu0
        %v5547 = vadd.f32 %v5369, %v5544
        %v5548 = vsel %vm572, %v5547, 0.0
        %5549 = vadd.xlane.f32.xlu0 %v5548
        %v5550 = vpop.xlane.xlu0 %5549
        %v5551 = vmul.f32 %v5550, %v1664
        %v5552 = vsub.f32 %v5547, %v5551
        %v5553 = vmul.f32 %v5552, %v5552
        %v5554 = vsel %vm572, %v5553, 0.0
        %5555 = vadd.xlane.f32.xlu0 %v5554
        %v5556 = vpop.xlane.xlu0 %5555
        %v5557 = vmul.f32 %v5556, %v1664
        %v5558 = vadd.f32 %v5557, 1e-05
        %v5559 = vrsqrt.pop %v5558
        %v5560 = vmul.f32 %v5552, %v5559
        %v5561 = vlaneseq
        %v5562 = vshrl.u32 %v5561, 7
        %v5563 = vsub.s32 2, %v5562
        %v5564 = vrot.slane %v3099, %v5563
        %v5565 = vmul.f32 %v5560, %v5564
        %v5566 = vlaneseq
        %v5567 = vshrl.u32 %v5566, 7
        %v5568 = vsub.s32 2, %v5567
        %v5569 = vrot.slane %v3101, %v5568
        %v5570 = vadd.f32 %v5565, %v5569
        %v5571 = vld [vmem:[%s12] sm:$0x1]
        %v5572 = vld [vmem:[%s13] sm:$0x1]
        %v5573 = vsel %vm572, %v5570, 0.0
        %5574 = vadd.xlane.f32.xlu0 %v5573
        %v5575 = vpop.xlane.xlu0 %5574
        %v5576 = vmul.f32 %v5575, %v1664
        %v5577 = vsub.f32 %v5570, %v5576
        %v5578 = vmul.f32 %v5577, %v5577
        %v5579 = vsel %vm572, %v5578, 0.0
        %5580 = vadd.xlane.f32.xlu0 %v5579
        %v5581 = vpop.xlane.xlu0 %5580
        %v5582 = vmul.f32 %v5581, %v1664
        %v5583 = vadd.f32 %v5582, 1e-05
        %v5584 = vrsqrt.pop %v5583
        %v5585 = vmul.f32 %v5577, %v5584
        %v5587 = vlaneseq
        %v5588 = vshrl.u32 %v5587, 7
        %v5589 = vsub.s32 0, %v5588
        %v5590 = vrot.slane %v5571, %v5589
        %v5592 = vmul.f32 %v5585, %v5590
        %v5594 = vlaneseq
        %v5595 = vshrl.u32 %v5594, 7
        %v5596 = vsub.s32 0, %v5595
        %v5597 = vrot.slane %v5572, %v5596
        %v5599 = vadd.f32 %v5592, %v5597
        %5600 = vst.msk [vmem:[%s503] sm:$0xff] %vm572, %v5599
        %s5601 = sand.u32 %s342, 1
        %s5602 = scalar_lea.sflag [#allocation4], %s5601
        %s5603 = sand.u32 %s342, 1
        %s5604 = smul.addr %s5603, 8
        %s5605 = scalar_lea.vmem [#allocation7], %s5604
        // Predicated region
        $region85: #{tpu_custom_call.1} parent=75 // pred_check
          %p5606 = pneg %p352
        $region86: #{tpu_custom_call.1} parent=75 // pred_check_branch
          %5608 = sbr.rel (%p5606) target = $region88
        $region87: #{tpu_custom_call.1} parent=75 // pred_region
          %s5610 = ssub.s32 128, 128
          %5611 = vsyncadd %s5602, %s5610
          %s5612 = smul.addr %s30, 128
          %s5613 = scalar_lea.hbm %s14, %s5612
          %s5615 = sshll.u32 %s5605, 4
          %s5616 = int_to_ptr.vmem [resolvable:$true] %s5615
          %5618 = dma.vmem_to_hbm [thread:$0]  %s5616, 128, %s5613, %s5602
        $region88: #{tpu_custom_call.1} parent=75 // pred_fallthru
          _
      $region76: #{tpu_custom_call.1} parent=5 // pred_fallthru
        _
      %p5619 = scmp.le.s32.totalorder 2, %s25
      // Predicated region
      $region89: #{tpu_custom_call.1} parent=5 // pred_check
        %p5620 = pneg %p5619
      $region90: #{tpu_custom_call.1} parent=5 // pred_check_branch
        %5622 = sbr.rel (%p5620) target = $region92
      $region91: #{tpu_custom_call.1} parent=5 // pred_region
        %s5623 = ssub.s32 %s25, 2
        // Predicated region
        $region93: #{tpu_custom_call.1} parent=91 // pred_check
          %p5624 = pneg %p358
        $region94: #{tpu_custom_call.1} parent=91 // pred_check_branch
          %5626 = sbr.rel (%p5624) target = $region96
        $region95: #{tpu_custom_call.1} parent=91 // pred_region
          %s5627 = sand.u32 %s343, 1
          %s5628 = scalar_lea.sflag [#allocation4], %s5627
          %s5629 = sand.u32 %s343, 1
          %s5630 = smul.addr %s5629, 8
          %s5631 = scalar_lea.vmem [#allocation7], %s5630
          %5632 = dma.done %s5628, 128
        $region96: #{tpu_custom_call.1} parent=91 // pred_fallthru
          _
      $region92: #{tpu_custom_call.1} parent=5 // pred_fallthru
        _
    $region6: #{tpu_custom_call.1} parent=1 // loop_footer
      %s29 = sadd.s32 1, %s25
    $region7: #{tpu_custom_call.1} parent=1 // loop_footer_branch
      %24 = sbr.rel target = $region3
    $region8: #{tpu_custom_call.1} parent=1 // loop_exit
      _
    %5633 = vsyncpa [#allocation3], 1
    %s5634 = scalar_lea.sflag [#allocation3], 1
    %5635 = vsyncpa %s5634, 1
    %5636 = vsyncpa [#allocation6], 1
    %5637 = vsyncpa [#allocation4], 1
    %s5638 = scalar_lea.sflag [#allocation4], 1
    %5639 = vsyncpa %s5638, 1

</llo_original>
